<compile_context>
chip_gen: v7x
topology: tpu7x:2x2x1
jax: 0.10.0
libtpu: 0.0.40
codegen_flags: <defaults>
</compile_context>

<pallas_src>
import functools

import numpy as np
import jax
import jax.numpy as jnp
from jax.experimental import pallas as pl
from jax.experimental.pallas import tpu as pltpu

NEG_SLOPE = 0.01   # nn.LeakyReLU default
BN_EPS = 1e-5


# ----------------------------------------------------------------------------
# Pallas kernels
# ----------------------------------------------------------------------------
def _quad_kernel(n_out, x_ref, wrg_ref, wb_ref, brg_ref, bb_ref, o_ref):
    # ConvQuadraticOperation fused with (pre-folded) eval-mode BN and LeakyReLU:
    #   rg = x @ [wr | wg*scale] + [br | bg*scale]
    #   q  = x^2 @ (wb*scale) + (bb*scale + shift)
    #   out = leaky_relu(rg[:, :N] * rg[:, N:] + q)
    x = x_ref[...]                                                     # (tm, K) bf16
    rg = jnp.dot(x, wrg_ref[...], preferred_element_type=jnp.float32) + brg_ref[...]
    q = jnp.dot(x * x, wb_ref[...], preferred_element_type=jnp.float32) + bb_ref[...]
    y = rg[:, :n_out] * rg[:, n_out:] + q
    o_ref[...] = jnp.where(y > 0, y, NEG_SLOPE * y)


def _affine_kernel(x_ref, w_ref, b_ref, o_ref):
    # Conv-as-matmul fused with (pre-folded) BN and LeakyReLU.
    y = jnp.dot(x_ref[...], w_ref[...], preferred_element_type=jnp.float32) + b_ref[...]
    o_ref[...] = jnp.where(y > 0, y, NEG_SLOPE * y)


def _grid_and_tm(m):
    # Tile M only when it divides cleanly; otherwise a single full-extent block.
    tm = 256 if (m % 256 == 0) else m
    return m // tm, tm


def quad_matmul(x, wrg, wb, brg, bb, n_out):
    # x: (G, M, K) bf16; wrg: (G, K, 2N) bf16; wb: (G, K, N) bf16
    # brg: (G, 1, 2N) f32; bb: (G, 1, N) f32   ->   (G, M, N) f32
    G, M, K = x.shape
    N = n_out
    mt, tm = _grid_and_tm(M)
    return pl.pallas_call(
        functools.partial(_quad_kernel, N),
        out_shape=jax.ShapeDtypeStruct((G, M, N), jnp.float32),
        grid_spec=pltpu.PrefetchScalarGridSpec(
            num_scalar_prefetch=0,
            grid=(G, mt),
            in_specs=[
                pl.BlockSpec((None, tm, K), lambda g, m: (g, m, 0)),
                pl.BlockSpec((None, K, 2 * N), lambda g, m: (g, 0, 0)),
                pl.BlockSpec((None, K, N), lambda g, m: (g, 0, 0)),
                pl.BlockSpec((None, 1, 2 * N), lambda g, m: (g, 0, 0)),
                pl.BlockSpec((None, 1, N), lambda g, m: (g, 0, 0)),
            ],
            out_specs=pl.BlockSpec((None, tm, N), lambda g, m: (g, m, 0)),
        ),
        compiler_params=pltpu.CompilerParams(
            dimension_semantics=("parallel", "parallel")),
    )(x, wrg, wb, brg, bb)


def affine_matmul(x, w, b):
    # x: (G, M, K) bf16; w: (G, K, N) bf16; b: (G, 1, N) f32 -> (G, M, N) f32
    G, M, K = x.shape
    N = w.shape[-1]
    mt, tm = _grid_and_tm(M)
    return pl.pallas_call(
        _affine_kernel,
        out_shape=jax.ShapeDtypeStruct((G, M, N), jnp.float32),
        grid_spec=pltpu.PrefetchScalarGridSpec(
            num_scalar_prefetch=0,
            grid=(G, mt),
            in_specs=[
                pl.BlockSpec((None, tm, K), lambda g, m: (g, m, 0)),
                pl.BlockSpec((None, K, N), lambda g, m: (g, 0, 0)),
                pl.BlockSpec((None, 1, N), lambda g, m: (g, 0, 0)),
            ],
            out_specs=pl.BlockSpec((None, tm, N), lambda g, m: (g, m, 0)),
        ),
        compiler_params=pltpu.CompilerParams(
            dimension_semantics=("parallel", "parallel")),
    )(x, w, b)


# ----------------------------------------------------------------------------
# JAX glue (channels-last): im2col, pooling, attention blocks
# ----------------------------------------------------------------------------
def im2col_nlc(x, k, stride, pad_left, pad_right, dilation=1):
    # x: (B, L, C) channels-last -> patches (B*L_out, k*C). No transposes.
    B, L, C = x.shape
    xp = jnp.pad(x, ((0, 0), (pad_left, pad_right), (0, 0)))
    Lp = L + pad_left + pad_right
    L_out = (Lp - dilation * (k - 1) - 1) // stride + 1
    idx = (np.arange(L_out)[:, None] * stride
           + np.arange(k)[None, :] * dilation)            # static indices
    patches = xp[:, idx, :]                                # (B, L_out, k, C)
    return patches.reshape(B * L_out, k * C), L_out


def maxpool_nlc(x, k):
    # floor-mode MaxPool1d over the length axis of (..., L, C).
    L, C = x.shape[-2], x.shape[-1]
    Lo = L // k
    xs = x[..., :Lo * k, :]
    return jnp.max(xs.reshape(xs.shape[:-2] + (Lo, k, C)), axis=-2)


def eca_nlc(x, w):
    # ECA: GAP over length, k=3 conv over the channel axis (pad 1, no bias),
    # sigmoid gate, channel re-weighting.  x: (..., L, C); w broadcastable.
    y = jnp.mean(x, axis=-2)                              # (..., C)
    yp = jnp.pad(y, [(0, 0)] * (y.ndim - 1) + [(1, 1)])
    conv = (w[..., 0:1] * yp[..., :-2] + w[..., 1:2] * yp[..., 1:-1]
            + w[..., 2:3] * yp[..., 2:])
    gate = jax.nn.sigmoid(conv)[..., None, :]
    return x * gate


def sage_nlc(x, p):
    # DRSN-style shrinkage attention (gap_size=1).  Tiny M=B matmuls -> XLA.
    x_abs = jnp.abs(x)
    gap = jnp.mean(x_abs, axis=1)                         # (B, C)
    h = jnp.maximum(jnp.dot(gap, p["w1"]) + p["b1"], 0.0)   # Linear + folded BN + ReLU
    s = jax.nn.sigmoid(jnp.dot(h, p["w2"]) + p["b2"])
    thres = (gap * s)[:, None, :]
    return jnp.sign(x) * jnp.maximum(x_abs - thres, 0.0)


def quad_conv(x, qp, k, stride, pad_l, pad_r, n_out):
    # ConvQuadraticOperation + BN + LeakyReLU on NLC input -> NLC output.
    B = x.shape[0]
    pat, L_out = im2col_nlc(x, k, stride, pad_l, pad_r)
    y = quad_matmul(pat.astype(jnp.bfloat16)[None],
                    qp["wrg"], qp["wb"], qp["brg"], qp["bb"], n_out)
    return y[0].reshape(B, L_out, n_out)


def side_branches(x, sp):
    # p3/p4/p5 (dilations 5/3/1) stacked on a leading group axis: 2 Pallas calls
    # instead of 6; ECA / maxpool glue is vectorized over the branch axis.
    B = x.shape[0]
    dils = (5, 3, 1)
    pats = jnp.stack([im2col_nlc(x, 3, 2, 2 * d, 0, d)[0] for d in dils])  # (3, B*64, 48)
    h = affine_matmul(pats.astype(jnp.bfloat16), sp["wd"], sp["bd"])       # (3, B*64, 32)
    h = maxpool_nlc(h.reshape(3, B, 64, 32), 2)                            # (3, B, 32, 32)

    pat2, _ = im2col_nlc(h.reshape(3 * B, 32, 32), 3, 1, 1, 1)             # (3*B*32, 96)
    pat2 = pat2.reshape(3, B * 32, 96)
    y = quad_matmul(pat2.astype(jnp.bfloat16), sp["wrg"], sp["wb"],
                    sp["brg"], sp["bb"], 64)                               # (3, B*32, 64)
    y = y.reshape(3, B, 32, 64)
    y = eca_nlc(y, sp["eca_w"][:, None, :])                                # per-branch ECA
    y = maxpool_nlc(y, 2)                                                  # (3, B, 16, 64)
    return (y[0] + y[1]) + y[2]                                            # p3+p4 then +p5


# ----------------------------------------------------------------------------
# Full forward pass
# ----------------------------------------------------------------------------
def forward(kp, x):
    B = x.shape[0]
    x = jnp.transpose(x, (0, 2, 1))                       # NCL -> NLC (once, tiny)

    # p1: quad conv 1->16 (k64, s8, p28) + BN + LReLU, MaxPool(2,2)
    x = quad_conv(x, kp["p1"], 64, 8, 28, 28, 16)         # (B, 256, 16)
    x = maxpool_nlc(x, 2)                                 # (B, 128, 16)

    p345 = side_branches(x, kp["side"])                   # (B, 16, 64)

    h = quad_conv(x, kp["p1_1"], 3, 1, 1, 1, 32)          # (B, 128, 32)
    h = quad_conv(h, kp["p1_2"], 3, 1, 1, 1, 64)          # (B, 128, 64)
    h = h + sage_nlc(h, kp["p2_1"])                       # residual shrinkage
    h = eca_nlc(h, kp["p2_2_eca"])
    h = quad_conv(h, kp["p2_3"], 32, 4, 16, 16, 64)       # (B, 33, 64)
    p1out = maxpool_nlc(h, 2)                             # (B, 16, 64)

    out = p1out + p345                                    # (B, 16, 64)
    out = eca_nlc(out, kp["eca_w"])
    # flatten channel-major, matching the PyTorch .view on (B, C, L)
    flat = jnp.transpose(out, (0, 2, 1)).reshape(B, -1)   # (B, 1024)
    # fc1/fc2 at M=B are too small to benefit from Pallas -> plain XLA.
    h = jnp.dot(flat, kp["fc1_w"]) + kp["fc1_b"]
    h = jnp.where(h > 0, h, NEG_SLOPE * h)
    # Dropout(0.5) is identity in eval mode.
    return jnp.dot(h, kp["fc2_w"]) + kp["fc2_b"]


# ----------------------------------------------------------------------------
# Deterministic parameter initialization + inference-time folding
# ----------------------------------------------------------------------------
def init_params(key):
    counter = [0]

    def nk():
        counter[0] += 1
        return jax.random.fold_in(key, counter[0])

    def bn(c):
        gamma = 1.0 + 0.1 * jax.random.normal(nk(), (c,), jnp.float32)
        beta = 0.1 * jax.random.normal(nk(), (c,), jnp.float32)
        rmean = 0.1 * jax.random.normal(nk(), (c,), jnp.float32)
        rvar = 1.0 + 0.1 * jnp.abs(jax.random.normal(nk(), (c,), jnp.float32))
        scale = gamma / jnp.sqrt(rvar + BN_EPS)
        shift = beta - rmean * scale
        return scale, shift

    def quad(cin, cout, k):
        std = (cin * k) ** -0.5
        p = {n: std * jax.random.normal(nk(), (cin * k, cout), jnp.float32)
             for n in ("wr", "wg", "wb")}
        p.update({n: 0.1 * jax.random.normal(nk(), (cout,), jnp.float32)
                  for n in ("br", "bg", "bb")})
        p["scale"], p["shift"] = bn(cout)
        return p

    def dconv(cin, cout, k):
        std = (cin * k) ** -0.5
        p = {"w": std * jax.random.normal(nk(), (cin * k, cout), jnp.float32),
             "b": 0.1 * jax.random.normal(nk(), (cout,), jnp.float32)}
        p["scale"], p["shift"] = bn(cout)
        return p

    def linear(cin, cout):
        std = cin ** -0.5
        return (std * jax.random.normal(nk(), (cin, cout), jnp.float32),
                0.1 * jax.random.normal(nk(), (cout,), jnp.float32))

    def eca_w():
        return 0.5 * jax.random.normal(nk(), (3,), jnp.float32)

    def sage(c):
        w1, b1 = linear(c, c)
        w2, b2 = linear(c, c)
        s, t = bn(c)
        return {"w1": w1, "b1": b1, "bn_scale": s, "bn_shift": t,
                "w2": w2, "b2": b2}

    def side(cin, cmid, cout):
        return {"dconv": dconv(cin, cmid, 3),
                "qconv": quad(cmid, cout, 3),
                "eca_w": eca_w()}

    params = {
        "p1": quad(1, 16, 64),
        "p1_1": quad(16, 32, 3),
        "p1_2": quad(32, 64, 3),
        "p2_1": sage(64),
        "p2_2_eca": eca_w(),
        "p2_3": quad(64, 64, 32),
        "p3": side(16, 32, 64),
        "p4": side(16, 32, 64),
        "p5": side(16, 32, 64),
        "eca_w": eca_w(),
    }
    fc1_w, fc1_b = linear(1024, 100)
    fc2_w, fc2_b = linear(100, 10)
    params.update({"fc1_w": fc1_w, "fc1_b": fc1_b,
                   "fc2_w": fc2_w, "fc2_b": fc2_b})
    return params


def _fold_quad(p):
    # (r*g + b)*scale + shift  ==  r*(g*scale) + (b*scale + shift)
    s, t = p["scale"], p["shift"]
    wrg = jnp.concatenate([p["wr"], p["wg"] * s[None, :]], axis=1)
    brg = jnp.concatenate([p["br"], p["bg"] * s], axis=0)
    return dict(wrg=wrg.astype(jnp.bfloat16),
                wb=(p["wb"] * s[None, :]).astype(jnp.bfloat16),
                brg=brg.reshape(1, -1).astype(jnp.float32),
                bb=(p["bb"] * s + t).reshape(1, -1).astype(jnp.float32))


def _fold_dconv(p):
    s, t = p["scale"], p["shift"]
    return dict(w=(p["w"] * s[None, :]).astype(jnp.bfloat16),
                b=(p["b"] * s + t).reshape(1, -1).astype(jnp.float32))


def fold_params(params):
    kp = {}
    # Single quad convs: add a size-1 leading group axis for the shared kernel.
    for name in ("p1", "p1_1", "p1_2", "p2_3"):
        kp[name] = {k: v[None] for k, v in _fold_quad(params[name]).items()}

    # Stack the three side branches (p3/p4/p5) along a leading group axis.
    dfold = [_fold_dconv(params[n]["dconv"]) for n in ("p3", "p4", "p5")]
    qfold = [_fold_quad(params[n]["qconv"]) for n in ("p3", "p4", "p5")]
    kp["side"] = {
        "wd": jnp.stack([d["w"] for d in dfold]),
        "bd": jnp.stack([d["b"] for d in dfold]),
        "wrg": jnp.stack([q["wrg"] for q in qfold]),
        "wb": jnp.stack([q["wb"] for q in qfold]),
        "brg": jnp.stack([q["brg"] for q in qfold]),
        "bb": jnp.stack([q["bb"] for q in qfold]),
        "eca_w": jnp.stack([params[n]["eca_w"] for n in ("p3", "p4", "p5")]),
    }

    sg = params["p2_1"]
    kp["p2_1"] = {"w1": sg["w1"] * sg["bn_scale"][None, :],
                  "b1": sg["b1"] * sg["bn_scale"] + sg["bn_shift"],
                  "w2": sg["w2"], "b2": sg["b2"]}
    kp["p2_2_eca"] = params["p2_2_eca"]
    kp["eca_w"] = params["eca_w"]
    for n in ("fc1_w", "fc1_b", "fc2_w", "fc2_b"):
        kp[n] = params[n]
    return kp


if __name__ == "__main__":
    key = jax.random.PRNGKey(0)
    params = init_params(key)
    kparams = fold_params(params)          # BN-fold / concat / stack / bf16, once
    # fc1 = Linear(1024, 100) implies 64 channels * 16 length after the trunk,
    # which fixes the input signal length to 2048.  Small batch = 2.
    x = jax.random.normal(jax.random.fold_in(key, 12345), (2, 1, 2048), jnp.float32)
    out = jax.jit(forward)(kparams, x)
    jax.block_until_ready(out)
    assert out.shape == (2, 10) and out.dtype == jnp.float32
    print("KERNEL_OK")
</pallas_src>

<mosaic_0001>
module attributes {stable_mosaic.version = 11 : i64} {
  func.func @_quad_kernel(%arg0: i32, %arg1: i32, %arg2: memref<1x256x64xbf16, #tpu.memory_space<vmem>>, %arg3: memref<1x64x32xbf16, #tpu.memory_space<vmem>>, %arg4: memref<1x64x16xbf16, #tpu.memory_space<vmem>>, %arg5: memref<1x1x32xf32, #tpu.memory_space<vmem>>, %arg6: memref<1x1x16xf32, #tpu.memory_space<vmem>>, %arg7: memref<1x256x16xf32, #tpu.memory_space<vmem>>) attributes {dimension_semantics = [#tpu.dimension_semantics<parallel>, #tpu.dimension_semantics<parallel>], iteration_bounds = array<i64: 1, 2>, scalar_prefetch = 0 : i64, scratch_operands = 0 : i64, tpu.core_type = #tpu.core_type<tc>, window_params = [{transform_indices = @transform_0, window_bounds = array<i64: 1, 256, 64>}, {transform_indices = @transform_1, window_bounds = array<i64: 1, 64, 32>}, {transform_indices = @transform_2, window_bounds = array<i64: 1, 64, 16>}, {transform_indices = @transform_3, window_bounds = array<i64: 1, 1, 32>}, {transform_indices = @transform_4, window_bounds = array<i64: 1, 1, 16>}, {transform_indices = @transform_5, window_bounds = array<i64: 1, 256, 16>}]} {
    %c0 = arith.constant 0 : index
    %c0_0 = arith.constant 0 : index
    %c0_1 = arith.constant 0 : index
    %0 = vector.load %arg2[%c0, %c0_0, %c0_1] : memref<1x256x64xbf16, #tpu.memory_space<vmem>>, vector<1x256x64xbf16>
    %1 = vector.shape_cast %0 : vector<1x256x64xbf16> to vector<256x64xbf16>
    %c0_2 = arith.constant 0 : index
    %c0_3 = arith.constant 0 : index
    %c0_4 = arith.constant 0 : index
    %2 = vector.load %arg3[%c0_2, %c0_3, %c0_4] : memref<1x64x32xbf16, #tpu.memory_space<vmem>>, vector<1x64x32xbf16>
    %3 = vector.shape_cast %2 : vector<1x64x32xbf16> to vector<64x32xbf16>
    %cst = arith.constant dense<0.000000e+00> : vector<256x32xf32>
    %4 = tpu.matmul %1, %3, %cst {dimension_numbers = #tpu.dot_dimension_numbers<[1], [0], [0], [1], [0, 0, 1, 1], [], []>} : vector<256x64xbf16>, vector<64x32xbf16>, vector<256x32xf32> -> vector<256x32xf32>
    %c0_5 = arith.constant 0 : index
    %c0_6 = arith.constant 0 : index
    %c0_7 = arith.constant 0 : index
    %5 = vector.load %arg5[%c0_5, %c0_6, %c0_7] : memref<1x1x32xf32, #tpu.memory_space<vmem>>, vector<1x1x32xf32>
    %6 = vector.shape_cast %5 : vector<1x1x32xf32> to vector<1x32xf32>
    %7 = vector.broadcast %6 : vector<1x32xf32> to vector<256x32xf32>
    %8 = arith.addf %4, %7 : vector<256x32xf32>
    %9 = arith.mulf %1, %1 : vector<256x64xbf16>
    %c0_8 = arith.constant 0 : index
    %c0_9 = arith.constant 0 : index
    %c0_10 = arith.constant 0 : index
    %10 = vector.load %arg4[%c0_8, %c0_9, %c0_10] : memref<1x64x16xbf16, #tpu.memory_space<vmem>>, vector<1x64x16xbf16>
    %11 = vector.shape_cast %10 : vector<1x64x16xbf16> to vector<64x16xbf16>
    %cst_11 = arith.constant dense<0.000000e+00> : vector<256x16xf32>
    %12 = tpu.matmul %9, %11, %cst_11 {dimension_numbers = #tpu.dot_dimension_numbers<[1], [0], [0], [1], [0, 0, 1, 1], [], []>} : vector<256x64xbf16>, vector<64x16xbf16>, vector<256x16xf32> -> vector<256x16xf32>
    %c0_12 = arith.constant 0 : index
    %c0_13 = arith.constant 0 : index
    %c0_14 = arith.constant 0 : index
    %13 = vector.load %arg6[%c0_12, %c0_13, %c0_14] : memref<1x1x16xf32, #tpu.memory_space<vmem>>, vector<1x1x16xf32>
    %14 = vector.shape_cast %13 : vector<1x1x16xf32> to vector<1x16xf32>
    %15 = vector.broadcast %14 : vector<1x16xf32> to vector<256x16xf32>
    %16 = arith.addf %12, %15 : vector<256x16xf32>
    %17 = vector.extract_strided_slice %8 {offsets = [0, 0], sizes = [256, 16], strides = [1, 1]} : vector<256x32xf32> to vector<256x16xf32>
    %18 = vector.extract_strided_slice %8 {offsets = [0, 16], sizes = [256, 16], strides = [1, 1]} : vector<256x32xf32> to vector<256x16xf32>
    %19 = arith.mulf %17, %18 : vector<256x16xf32>
    %20 = arith.addf %19, %16 : vector<256x16xf32>
    %cst_15 = arith.constant 0.000000e+00 : f32
    %21 = vector.broadcast %cst_15 : f32 to vector<256x16xf32>
    %22 = arith.cmpf ogt, %20, %21 : vector<256x16xf32>
    %cst_16 = arith.constant 0.00999999977 : f32
    %23 = vector.broadcast %cst_16 : f32 to vector<256x16xf32>
    %24 = arith.mulf %23, %20 : vector<256x16xf32>
    %25 = arith.select %22, %20, %24 : vector<256x16xi1>, vector<256x16xf32>
    %c0_17 = arith.constant 0 : index
    %c0_18 = arith.constant 0 : index
    %c0_19 = arith.constant 0 : index
    %26 = vector.load %arg7[%c0_17, %c0_18, %c0_19] : memref<1x256x16xf32, #tpu.memory_space<vmem>>, vector<1x256x16xf32>
    %27 = vector.shape_cast %26 : vector<1x256x16xf32> to vector<256x16xf32>
    %28 = vector.shape_cast %25 : vector<256x16xf32> to vector<1x256x16xf32>
    tpu.vector_store %arg7[%c0_17, %c0_18, %c0_19], %28 {strides = array<i32>} : memref<1x256x16xf32, #tpu.memory_space<vmem>>, vector<1x256x16xf32>,
    return
  }
  func.func @transform_0(%arg0: i32, %arg1: i32) -> (i32, i32, i32) {
    %c0_i32 = arith.constant 0 : i32
    %c0_i32_0 = arith.constant 0 : i32
    return %arg0, %arg1, %c0_i32 : i32, i32, i32
  }
  func.func @transform_1(%arg0: i32, %arg1: i32) -> (i32, i32, i32) {
    %c0_i32 = arith.constant 0 : i32
    %c0_i32_0 = arith.constant 0 : i32
    %c0_i32_1 = arith.constant 0 : i32
    return %arg0, %c0_i32, %c0_i32_0 : i32, i32, i32
  }
  func.func @transform_2(%arg0: i32, %arg1: i32) -> (i32, i32, i32) {
    %c0_i32 = arith.constant 0 : i32
    %c0_i32_0 = arith.constant 0 : i32
    %c0_i32_1 = arith.constant 0 : i32
    return %arg0, %c0_i32, %c0_i32_0 : i32, i32, i32
  }
  func.func @transform_3(%arg0: i32, %arg1: i32) -> (i32, i32, i32) {
    %c0_i32 = arith.constant 0 : i32
    %c0_i32_0 = arith.constant 0 : i32
    %c0_i32_1 = arith.constant 0 : i32
    return %arg0, %c0_i32, %c0_i32_0 : i32, i32, i32
  }
  func.func @transform_4(%arg0: i32, %arg1: i32) -> (i32, i32, i32) {
    %c0_i32 = arith.constant 0 : i32
    %c0_i32_0 = arith.constant 0 : i32
    %c0_i32_1 = arith.constant 0 : i32
    return %arg0, %c0_i32, %c0_i32_0 : i32, i32, i32
  }
  func.func @transform_5(%arg0: i32, %arg1: i32) -> (i32, i32, i32) {
    %c0_i32 = arith.constant 0 : i32
    %c0_i32_0 = arith.constant 0 : i32
    return %arg0, %arg1, %c0_i32 : i32, i32, i32
  }
}

module attributes {stable_mosaic.version = 11 : i64} {
  func.func @_quad_kernel(%arg0: i32, %arg1: i32, %arg2: memref<1x256x48xbf16, #tpu.memory_space<vmem>>, %arg3: memref<1x48x64xbf16, #tpu.memory_space<vmem>>, %arg4: memref<1x48x32xbf16, #tpu.memory_space<vmem>>, %arg5: memref<1x1x64xf32, #tpu.memory_space<vmem>>, %arg6: memref<1x1x32xf32, #tpu.memory_space<vmem>>, %arg7: memref<1x256x32xf32, #tpu.memory_space<vmem>>) attributes {dimension_semantics = [#tpu.dimension_semantics<parallel>, #tpu.dimension_semantics<parallel>], iteration_bounds = array<i64: 1, 1>, scalar_prefetch = 0 : i64, scratch_operands = 0 : i64, tpu.core_type = #tpu.core_type<tc>, window_params = [{transform_indices = @transform_0, window_bounds = array<i64: 1, 256, 48>}, {transform_indices = @transform_1, window_bounds = array<i64: 1, 48, 64>}, {transform_indices = @transform_2, window_bounds = array<i64: 1, 48, 32>}, {transform_indices = @transform_3, window_bounds = array<i64: 1, 1, 64>}, {transform_indices = @transform_4, window_bounds = array<i64: 1, 1, 32>}, {transform_indices = @transform_5, window_bounds = array<i64: 1, 256, 32>}]} {
    %c0 = arith.constant 0 : index
    %c0_0 = arith.constant 0 : index
    %c0_1 = arith.constant 0 : index
    %0 = vector.load %arg2[%c0, %c0_0, %c0_1] : memref<1x256x48xbf16, #tpu.memory_space<vmem>>, vector<1x256x48xbf16>
    %1 = vector.shape_cast %0 : vector<1x256x48xbf16> to vector<256x48xbf16>
    %c0_2 = arith.constant 0 : index
    %c0_3 = arith.constant 0 : index
    %c0_4 = arith.constant 0 : index
    %2 = vector.load %arg3[%c0_2, %c0_3, %c0_4] : memref<1x48x64xbf16, #tpu.memory_space<vmem>>, vector<1x48x64xbf16>
    %3 = vector.shape_cast %2 : vector<1x48x64xbf16> to vector<48x64xbf16>
    %cst = arith.constant dense<0.000000e+00> : vector<256x64xf32>
    %4 = tpu.matmul %1, %3, %cst {dimension_numbers = #tpu.dot_dimension_numbers<[1], [0], [0], [1], [0, 0, 1, 1], [], []>} : vector<256x48xbf16>, vector<48x64xbf16>, vector<256x64xf32> -> vector<256x64xf32>
    %c0_5 = arith.constant 0 : index
    %c0_6 = arith.constant 0 : index
    %c0_7 = arith.constant 0 : index
    %5 = vector.load %arg5[%c0_5, %c0_6, %c0_7] : memref<1x1x64xf32, #tpu.memory_space<vmem>>, vector<1x1x64xf32>
    %6 = vector.shape_cast %5 : vector<1x1x64xf32> to vector<1x64xf32>
    %7 = vector.broadcast %6 : vector<1x64xf32> to vector<256x64xf32>
    %8 = arith.addf %4, %7 : vector<256x64xf32>
    %9 = arith.mulf %1, %1 : vector<256x48xbf16>
    %c0_8 = arith.constant 0 : index
    %c0_9 = arith.constant 0 : index
    %c0_10 = arith.constant 0 : index
    %10 = vector.load %arg4[%c0_8, %c0_9, %c0_10] : memref<1x48x32xbf16, #tpu.memory_space<vmem>>, vector<1x48x32xbf16>
    %11 = vector.shape_cast %10 : vector<1x48x32xbf16> to vector<48x32xbf16>
    %cst_11 = arith.constant dense<0.000000e+00> : vector<256x32xf32>
    %12 = tpu.matmul %9, %11, %cst_11 {dimension_numbers = #tpu.dot_dimension_numbers<[1], [0], [0], [1], [0, 0, 1, 1], [], []>} : vector<256x48xbf16>, vector<48x32xbf16>, vector<256x32xf32> -> vector<256x32xf32>
    %c0_12 = arith.constant 0 : index
    %c0_13 = arith.constant 0 : index
    %c0_14 = arith.constant 0 : index
    %13 = vector.load %arg6[%c0_12, %c0_13, %c0_14] : memref<1x1x32xf32, #tpu.memory_space<vmem>>, vector<1x1x32xf32>
    %14 = vector.shape_cast %13 : vector<1x1x32xf32> to vector<1x32xf32>
    %15 = vector.broadcast %14 : vector<1x32xf32> to vector<256x32xf32>
    %16 = arith.addf %12, %15 : vector<256x32xf32>
    %17 = vector.extract_strided_slice %8 {offsets = [0, 0], sizes = [256, 32], strides = [1, 1]} : vector<256x64xf32> to vector<256x32xf32>
    %18 = vector.extract_strided_slice %8 {offsets = [0, 32], sizes = [256, 32], strides = [1, 1]} : vector<256x64xf32> to vector<256x32xf32>
    %19 = arith.mulf %17, %18 : vector<256x32xf32>
    %20 = arith.addf %19, %16 : vector<256x32xf32>
    %cst_15 = arith.constant 0.000000e+00 : f32
    %21 = vector.broadcast %cst_15 : f32 to vector<256x32xf32>
    %22 = arith.cmpf ogt, %20, %21 : vector<256x32xf32>
    %cst_16 = arith.constant 0.00999999977 : f32
    %23 = vector.broadcast %cst_16 : f32 to vector<256x32xf32>
    %24 = arith.mulf %23, %20 : vector<256x32xf32>
    %25 = arith.select %22, %20, %24 : vector<256x32xi1>, vector<256x32xf32>
    %c0_17 = arith.constant 0 : index
    %c0_18 = arith.constant 0 : index
    %c0_19 = arith.constant 0 : index
    %26 = vector.load %arg7[%c0_17, %c0_18, %c0_19] : memref<1x256x32xf32, #tpu.memory_space<vmem>>, vector<1x256x32xf32>
    %27 = vector.shape_cast %26 : vector<1x256x32xf32> to vector<256x32xf32>
    %28 = vector.shape_cast %25 : vector<256x32xf32> to vector<1x256x32xf32>
    tpu.vector_store %arg7[%c0_17, %c0_18, %c0_19], %28 {strides = array<i32>} : memref<1x256x32xf32, #tpu.memory_space<vmem>>, vector<1x256x32xf32>,
    return
  }
  func.func @transform_0(%arg0: i32, %arg1: i32) -> (i32, i32, i32) {
    %c0_i32 = arith.constant 0 : i32
    %c0_i32_0 = arith.constant 0 : i32
    return %arg0, %arg1, %c0_i32 : i32, i32, i32
  }
  func.func @transform_1(%arg0: i32, %arg1: i32) -> (i32, i32, i32) {
    %c0_i32 = arith.constant 0 : i32
    %c0_i32_0 = arith.constant 0 : i32
    %c0_i32_1 = arith.constant 0 : i32
    return %arg0, %c0_i32, %c0_i32_0 : i32, i32, i32
  }
  func.func @transform_2(%arg0: i32, %arg1: i32) -> (i32, i32, i32) {
    %c0_i32 = arith.constant 0 : i32
    %c0_i32_0 = arith.constant 0 : i32
    %c0_i32_1 = arith.constant 0 : i32
    return %arg0, %c0_i32, %c0_i32_0 : i32, i32, i32
  }
  func.func @transform_3(%arg0: i32, %arg1: i32) -> (i32, i32, i32) {
    %c0_i32 = arith.constant 0 : i32
    %c0_i32_0 = arith.constant 0 : i32
    %c0_i32_1 = arith.constant 0 : i32
    return %arg0, %c0_i32, %c0_i32_0 : i32, i32, i32
  }
  func.func @transform_4(%arg0: i32, %arg1: i32) -> (i32, i32, i32) {
    %c0_i32 = arith.constant 0 : i32
    %c0_i32_0 = arith.constant 0 : i32
    %c0_i32_1 = arith.constant 0 : i32
    return %arg0, %c0_i32, %c0_i32_0 : i32, i32, i32
  }
  func.func @transform_5(%arg0: i32, %arg1: i32) -> (i32, i32, i32) {
    %c0_i32 = arith.constant 0 : i32
    %c0_i32_0 = arith.constant 0 : i32
    return %arg0, %arg1, %c0_i32 : i32, i32, i32
  }
}

module attributes {stable_mosaic.version = 11 : i64} {
  func.func @_quad_kernel(%arg0: i32, %arg1: i32, %arg2: memref<1x256x96xbf16, #tpu.memory_space<vmem>>, %arg3: memref<1x96x128xbf16, #tpu.memory_space<vmem>>, %arg4: memref<1x96x64xbf16, #tpu.memory_space<vmem>>, %arg5: memref<1x1x128xf32, #tpu.memory_space<vmem>>, %arg6: memref<1x1x64xf32, #tpu.memory_space<vmem>>, %arg7: memref<1x256x64xf32, #tpu.memory_space<vmem>>) attributes {dimension_semantics = [#tpu.dimension_semantics<parallel>, #tpu.dimension_semantics<parallel>], iteration_bounds = array<i64: 1, 1>, scalar_prefetch = 0 : i64, scratch_operands = 0 : i64, tpu.core_type = #tpu.core_type<tc>, window_params = [{transform_indices = @transform_0, window_bounds = array<i64: 1, 256, 96>}, {transform_indices = @transform_1, window_bounds = array<i64: 1, 96, 128>}, {transform_indices = @transform_2, window_bounds = array<i64: 1, 96, 64>}, {transform_indices = @transform_3, window_bounds = array<i64: 1, 1, 128>}, {transform_indices = @transform_4, window_bounds = array<i64: 1, 1, 64>}, {transform_indices = @transform_5, window_bounds = array<i64: 1, 256, 64>}]} {
    %c0 = arith.constant 0 : index
    %c0_0 = arith.constant 0 : index
    %c0_1 = arith.constant 0 : index
    %0 = vector.load %arg2[%c0, %c0_0, %c0_1] : memref<1x256x96xbf16, #tpu.memory_space<vmem>>, vector<1x256x96xbf16>
    %1 = vector.shape_cast %0 : vector<1x256x96xbf16> to vector<256x96xbf16>
    %c0_2 = arith.constant 0 : index
    %c0_3 = arith.constant 0 : index
    %c0_4 = arith.constant 0 : index
    %2 = vector.load %arg3[%c0_2, %c0_3, %c0_4] : memref<1x96x128xbf16, #tpu.memory_space<vmem>>, vector<1x96x128xbf16>
    %3 = vector.shape_cast %2 : vector<1x96x128xbf16> to vector<96x128xbf16>
    %cst = arith.constant dense<0.000000e+00> : vector<256x128xf32>
    %4 = tpu.matmul %1, %3, %cst {dimension_numbers = #tpu.dot_dimension_numbers<[1], [0], [0], [1], [0, 0, 1, 1], [], []>} : vector<256x96xbf16>, vector<96x128xbf16>, vector<256x128xf32> -> vector<256x128xf32>
    %c0_5 = arith.constant 0 : index
    %c0_6 = arith.constant 0 : index
    %c0_7 = arith.constant 0 : index
    %5 = vector.load %arg5[%c0_5, %c0_6, %c0_7] : memref<1x1x128xf32, #tpu.memory_space<vmem>>, vector<1x1x128xf32>
    %6 = vector.shape_cast %5 : vector<1x1x128xf32> to vector<1x128xf32>
    %7 = vector.broadcast %6 : vector<1x128xf32> to vector<256x128xf32>
    %8 = arith.addf %4, %7 : vector<256x128xf32>
    %9 = arith.mulf %1, %1 : vector<256x96xbf16>
    %c0_8 = arith.constant 0 : index
    %c0_9 = arith.constant 0 : index
    %c0_10 = arith.constant 0 : index
    %10 = vector.load %arg4[%c0_8, %c0_9, %c0_10] : memref<1x96x64xbf16, #tpu.memory_space<vmem>>, vector<1x96x64xbf16>
    %11 = vector.shape_cast %10 : vector<1x96x64xbf16> to vector<96x64xbf16>
    %cst_11 = arith.constant dense<0.000000e+00> : vector<256x64xf32>
    %12 = tpu.matmul %9, %11, %cst_11 {dimension_numbers = #tpu.dot_dimension_numbers<[1], [0], [0], [1], [0, 0, 1, 1], [], []>} : vector<256x96xbf16>, vector<96x64xbf16>, vector<256x64xf32> -> vector<256x64xf32>
    %c0_12 = arith.constant 0 : index
    %c0_13 = arith.constant 0 : index
    %c0_14 = arith.constant 0 : index
    %13 = vector.load %arg6[%c0_12, %c0_13, %c0_14] : memref<1x1x64xf32, #tpu.memory_space<vmem>>, vector<1x1x64xf32>
    %14 = vector.shape_cast %13 : vector<1x1x64xf32> to vector<1x64xf32>
    %15 = vector.broadcast %14 : vector<1x64xf32> to vector<256x64xf32>
    %16 = arith.addf %12, %15 : vector<256x64xf32>
    %17 = vector.extract_strided_slice %8 {offsets = [0, 0], sizes = [256, 64], strides = [1, 1]} : vector<256x128xf32> to vector<256x64xf32>
    %18 = vector.extract_strided_slice %8 {offsets = [0, 64], sizes = [256, 64], strides = [1, 1]} : vector<256x128xf32> to vector<256x64xf32>
    %19 = arith.mulf %17, %18 : vector<256x64xf32>
    %20 = arith.addf %19, %16 : vector<256x64xf32>
    %cst_15 = arith.constant 0.000000e+00 : f32
    %21 = vector.broadcast %cst_15 : f32 to vector<256x64xf32>
    %22 = arith.cmpf ogt, %20, %21 : vector<256x64xf32>
    %cst_16 = arith.constant 0.00999999977 : f32
    %23 = vector.broadcast %cst_16 : f32 to vector<256x64xf32>
    %24 = arith.mulf %23, %20 : vector<256x64xf32>
    %25 = arith.select %22, %20, %24 : vector<256x64xi1>, vector<256x64xf32>
    %c0_17 = arith.constant 0 : index
    %c0_18 = arith.constant 0 : index
    %c0_19 = arith.constant 0 : index
    %26 = vector.load %arg7[%c0_17, %c0_18, %c0_19] : memref<1x256x64xf32, #tpu.memory_space<vmem>>, vector<1x256x64xf32>
    %27 = vector.shape_cast %26 : vector<1x256x64xf32> to vector<256x64xf32>
    %28 = vector.shape_cast %25 : vector<256x64xf32> to vector<1x256x64xf32>
    tpu.vector_store %arg7[%c0_17, %c0_18, %c0_19], %28 {strides = array<i32>} : memref<1x256x64xf32, #tpu.memory_space<vmem>>, vector<1x256x64xf32>,
    return
  }
  func.func @transform_0(%arg0: i32, %arg1: i32) -> (i32, i32, i32) {
    %c0_i32 = arith.constant 0 : i32
    %c0_i32_0 = arith.constant 0 : i32
    return %arg0, %arg1, %c0_i32 : i32, i32, i32
  }
  func.func @transform_1(%arg0: i32, %arg1: i32) -> (i32, i32, i32) {
    %c0_i32 = arith.constant 0 : i32
    %c0_i32_0 = arith.constant 0 : i32
    %c0_i32_1 = arith.constant 0 : i32
    return %arg0, %c0_i32, %c0_i32_0 : i32, i32, i32
  }
  func.func @transform_2(%arg0: i32, %arg1: i32) -> (i32, i32, i32) {
    %c0_i32 = arith.constant 0 : i32
    %c0_i32_0 = arith.constant 0 : i32
    %c0_i32_1 = arith.constant 0 : i32
    return %arg0, %c0_i32, %c0_i32_0 : i32, i32, i32
  }
  func.func @transform_3(%arg0: i32, %arg1: i32) -> (i32, i32, i32) {
    %c0_i32 = arith.constant 0 : i32
    %c0_i32_0 = arith.constant 0 : i32
    %c0_i32_1 = arith.constant 0 : i32
    return %arg0, %c0_i32, %c0_i32_0 : i32, i32, i32
  }
  func.func @transform_4(%arg0: i32, %arg1: i32) -> (i32, i32, i32) {
    %c0_i32 = arith.constant 0 : i32
    %c0_i32_0 = arith.constant 0 : i32
    %c0_i32_1 = arith.constant 0 : i32
    return %arg0, %c0_i32, %c0_i32_0 : i32, i32, i32
  }
  func.func @transform_5(%arg0: i32, %arg1: i32) -> (i32, i32, i32) {
    %c0_i32 = arith.constant 0 : i32
    %c0_i32_0 = arith.constant 0 : i32
    return %arg0, %arg1, %c0_i32 : i32, i32, i32
  }
}

module attributes {stable_mosaic.version = 11 : i64} {
  func.func @_quad_kernel(%arg0: i32, %arg1: i32, %arg2: memref<1x66x2048xbf16, #tpu.memory_space<vmem>>, %arg3: memref<1x2048x128xbf16, #tpu.memory_space<vmem>>, %arg4: memref<1x2048x64xbf16, #tpu.memory_space<vmem>>, %arg5: memref<1x1x128xf32, #tpu.memory_space<vmem>>, %arg6: memref<1x1x64xf32, #tpu.memory_space<vmem>>, %arg7: memref<1x66x64xf32, #tpu.memory_space<vmem>>) attributes {dimension_semantics = [#tpu.dimension_semantics<parallel>, #tpu.dimension_semantics<parallel>], iteration_bounds = array<i64: 1, 1>, scalar_prefetch = 0 : i64, scratch_operands = 0 : i64, tpu.core_type = #tpu.core_type<tc>, window_params = [{transform_indices = @transform_0, window_bounds = array<i64: 1, 66, 2048>}, {transform_indices = @transform_1, window_bounds = array<i64: 1, 2048, 128>}, {transform_indices = @transform_2, window_bounds = array<i64: 1, 2048, 64>}, {transform_indices = @transform_3, window_bounds = array<i64: 1, 1, 128>}, {transform_indices = @transform_4, window_bounds = array<i64: 1, 1, 64>}, {transform_indices = @transform_5, window_bounds = array<i64: 1, 66, 64>}]} {
    %c0 = arith.constant 0 : index
    %c0_0 = arith.constant 0 : index
    %c0_1 = arith.constant 0 : index
    %0 = vector.load %arg2[%c0, %c0_0, %c0_1] : memref<1x66x2048xbf16, #tpu.memory_space<vmem>>, vector<1x66x2048xbf16>
    %1 = vector.shape_cast %0 : vector<1x66x2048xbf16> to vector<66x2048xbf16>
    %c0_2 = arith.constant 0 : index
    %c0_3 = arith.constant 0 : index
    %c0_4 = arith.constant 0 : index
    %2 = vector.load %arg3[%c0_2, %c0_3, %c0_4] : memref<1x2048x128xbf16, #tpu.memory_space<vmem>>, vector<1x2048x128xbf16>
    %3 = vector.shape_cast %2 : vector<1x2048x128xbf16> to vector<2048x128xbf16>
    %cst = arith.constant dense<0.000000e+00> : vector<66x128xf32>
    %4 = tpu.matmul %1, %3, %cst {dimension_numbers = #tpu.dot_dimension_numbers<[1], [0], [0], [1], [0, 0, 1, 1], [], []>} : vector<66x2048xbf16>, vector<2048x128xbf16>, vector<66x128xf32> -> vector<66x128xf32>
    %c0_5 = arith.constant 0 : index
    %c0_6 = arith.constant 0 : index
    %c0_7 = arith.constant 0 : index
    %5 = vector.load %arg5[%c0_5, %c0_6, %c0_7] : memref<1x1x128xf32, #tpu.memory_space<vmem>>, vector<1x1x128xf32>
    %6 = vector.shape_cast %5 : vector<1x1x128xf32> to vector<1x128xf32>
    %7 = vector.broadcast %6 : vector<1x128xf32> to vector<66x128xf32>
    %8 = arith.addf %4, %7 : vector<66x128xf32>
    %9 = arith.mulf %1, %1 : vector<66x2048xbf16>
    %c0_8 = arith.constant 0 : index
    %c0_9 = arith.constant 0 : index
    %c0_10 = arith.constant 0 : index
    %10 = vector.load %arg4[%c0_8, %c0_9, %c0_10] : memref<1x2048x64xbf16, #tpu.memory_space<vmem>>, vector<1x2048x64xbf16>
    %11 = vector.shape_cast %10 : vector<1x2048x64xbf16> to vector<2048x64xbf16>
    %cst_11 = arith.constant dense<0.000000e+00> : vector<66x64xf32>
    %12 = tpu.matmul %9, %11, %cst_11 {dimension_numbers = #tpu.dot_dimension_numbers<[1], [0], [0], [1], [0, 0, 1, 1], [], []>} : vector<66x2048xbf16>, vector<2048x64xbf16>, vector<66x64xf32> -> vector<66x64xf32>
    %c0_12 = arith.constant 0 : index
    %c0_13 = arith.constant 0 : index
    %c0_14 = arith.constant 0 : index
    %13 = vector.load %arg6[%c0_12, %c0_13, %c0_14] : memref<1x1x64xf32, #tpu.memory_space<vmem>>, vector<1x1x64xf32>
    %14 = vector.shape_cast %13 : vector<1x1x64xf32> to vector<1x64xf32>
    %15 = vector.broadcast %14 : vector<1x64xf32> to vector<66x64xf32>
    %16 = arith.addf %12, %15 : vector<66x64xf32>
    %17 = vector.extract_strided_slice %8 {offsets = [0, 0], sizes = [66, 64], strides = [1, 1]} : vector<66x128xf32> to vector<66x64xf32>
    %18 = vector.extract_strided_slice %8 {offsets = [0, 64], sizes = [66, 64], strides = [1, 1]} : vector<66x128xf32> to vector<66x64xf32>
    %19 = arith.mulf %17, %18 : vector<66x64xf32>
    %20 = arith.addf %19, %16 : vector<66x64xf32>
    %cst_15 = arith.constant 0.000000e+00 : f32
    %21 = vector.broadcast %cst_15 : f32 to vector<66x64xf32>
    %22 = arith.cmpf ogt, %20, %21 : vector<66x64xf32>
    %cst_16 = arith.constant 0.00999999977 : f32
    %23 = vector.broadcast %cst_16 : f32 to vector<66x64xf32>
    %24 = arith.mulf %23, %20 : vector<66x64xf32>
    %25 = arith.select %22, %20, %24 : vector<66x64xi1>, vector<66x64xf32>
    %c0_17 = arith.constant 0 : index
    %c0_18 = arith.constant 0 : index
    %c0_19 = arith.constant 0 : index
    %26 = vector.load %arg7[%c0_17, %c0_18, %c0_19] : memref<1x66x64xf32, #tpu.memory_space<vmem>>, vector<1x66x64xf32>
    %27 = vector.shape_cast %26 : vector<1x66x64xf32> to vector<66x64xf32>
    %28 = vector.shape_cast %25 : vector<66x64xf32> to vector<1x66x64xf32>
    tpu.vector_store %arg7[%c0_17, %c0_18, %c0_19], %28 {strides = array<i32>} : memref<1x66x64xf32, #tpu.memory_space<vmem>>, vector<1x66x64xf32>,
    return
  }
  func.func @transform_0(%arg0: i32, %arg1: i32) -> (i32, i32, i32) {
    %c0_i32 = arith.constant 0 : i32
    %c0_i32_0 = arith.constant 0 : i32
    return %arg0, %arg1, %c0_i32 : i32, i32, i32
  }
  func.func @transform_1(%arg0: i32, %arg1: i32) -> (i32, i32, i32) {
    %c0_i32 = arith.constant 0 : i32
    %c0_i32_0 = arith.constant 0 : i32
    %c0_i32_1 = arith.constant 0 : i32
    return %arg0, %c0_i32, %c0_i32_0 : i32, i32, i32
  }
  func.func @transform_2(%arg0: i32, %arg1: i32) -> (i32, i32, i32) {
    %c0_i32 = arith.constant 0 : i32
    %c0_i32_0 = arith.constant 0 : i32
    %c0_i32_1 = arith.constant 0 : i32
    return %arg0, %c0_i32, %c0_i32_0 : i32, i32, i32
  }
  func.func @transform_3(%arg0: i32, %arg1: i32) -> (i32, i32, i32) {
    %c0_i32 = arith.constant 0 : i32
    %c0_i32_0 = arith.constant 0 : i32
    %c0_i32_1 = arith.constant 0 : i32
    return %arg0, %c0_i32, %c0_i32_0 : i32, i32, i32
  }
  func.func @transform_4(%arg0: i32, %arg1: i32) -> (i32, i32, i32) {
    %c0_i32 = arith.constant 0 : i32
    %c0_i32_0 = arith.constant 0 : i32
    %c0_i32_1 = arith.constant 0 : i32
    return %arg0, %c0_i32, %c0_i32_0 : i32, i32, i32
  }
  func.func @transform_5(%arg0: i32, %arg1: i32) -> (i32, i32, i32) {
    %c0_i32 = arith.constant 0 : i32
    %c0_i32_0 = arith.constant 0 : i32
    return %arg0, %arg1, %c0_i32 : i32, i32, i32
  }
}

module attributes {stable_mosaic.version = 11 : i64} {
  func.func @_affine_kernel(%arg0: i32, %arg1: i32, %arg2: memref<1x128x48xbf16, #tpu.memory_space<vmem>>, %arg3: memref<1x48x32xbf16, #tpu.memory_space<vmem>>, %arg4: memref<1x1x32xf32, #tpu.memory_space<vmem>>, %arg5: memref<1x128x32xf32, #tpu.memory_space<vmem>>) attributes {dimension_semantics = [#tpu.dimension_semantics<parallel>, #tpu.dimension_semantics<parallel>], iteration_bounds = array<i64: 3, 1>, scalar_prefetch = 0 : i64, scratch_operands = 0 : i64, tpu.core_type = #tpu.core_type<tc>, window_params = [{transform_indices = @transform_0, window_bounds = array<i64: 1, 128, 48>}, {transform_indices = @transform_1, window_bounds = array<i64: 1, 48, 32>}, {transform_indices = @transform_2, window_bounds = array<i64: 1, 1, 32>}, {transform_indices = @transform_3, window_bounds = array<i64: 1, 128, 32>}]} {
    %c0 = arith.constant 0 : index
    %c0_0 = arith.constant 0 : index
    %c0_1 = arith.constant 0 : index
    %0 = vector.load %arg2[%c0, %c0_0, %c0_1] : memref<1x128x48xbf16, #tpu.memory_space<vmem>>, vector<1x128x48xbf16>
    %1 = vector.shape_cast %0 : vector<1x128x48xbf16> to vector<128x48xbf16>
    %c0_2 = arith.constant 0 : index
    %c0_3 = arith.constant 0 : index
    %c0_4 = arith.constant 0 : index
    %2 = vector.load %arg3[%c0_2, %c0_3, %c0_4] : memref<1x48x32xbf16, #tpu.memory_space<vmem>>, vector<1x48x32xbf16>
    %3 = vector.shape_cast %2 : vector<1x48x32xbf16> to vector<48x32xbf16>
    %cst = arith.constant dense<0.000000e+00> : vector<128x32xf32>
    %4 = tpu.matmul %1, %3, %cst {dimension_numbers = #tpu.dot_dimension_numbers<[1], [0], [0], [1], [0, 0, 1, 1], [], []>} : vector<128x48xbf16>, vector<48x32xbf16>, vector<128x32xf32> -> vector<128x32xf32>
    %c0_5 = arith.constant 0 : index
    %c0_6 = arith.constant 0 : index
    %c0_7 = arith.constant 0 : index
    %5 = vector.load %arg4[%c0_5, %c0_6, %c0_7] : memref<1x1x32xf32, #tpu.memory_space<vmem>>, vector<1x1x32xf32>
    %6 = vector.shape_cast %5 : vector<1x1x32xf32> to vector<1x32xf32>
    %7 = vector.broadcast %6 : vector<1x32xf32> to vector<128x32xf32>
    %8 = arith.addf %4, %7 : vector<128x32xf32>
    %cst_8 = arith.constant 0.000000e+00 : f32
    %9 = vector.broadcast %cst_8 : f32 to vector<128x32xf32>
    %10 = arith.cmpf ogt, %8, %9 : vector<128x32xf32>
    %cst_9 = arith.constant 0.00999999977 : f32
    %11 = vector.broadcast %cst_9 : f32 to vector<128x32xf32>
    %12 = arith.mulf %11, %8 : vector<128x32xf32>
    %13 = arith.select %10, %8, %12 : vector<128x32xi1>, vector<128x32xf32>
    %c0_10 = arith.constant 0 : index
    %c0_11 = arith.constant 0 : index
    %c0_12 = arith.constant 0 : index
    %14 = vector.load %arg5[%c0_10, %c0_11, %c0_12] : memref<1x128x32xf32, #tpu.memory_space<vmem>>, vector<1x128x32xf32>
    %15 = vector.shape_cast %14 : vector<1x128x32xf32> to vector<128x32xf32>
    %16 = vector.shape_cast %13 : vector<128x32xf32> to vector<1x128x32xf32>
    tpu.vector_store %arg5[%c0_10, %c0_11, %c0_12], %16 {strides = array<i32>} : memref<1x128x32xf32, #tpu.memory_space<vmem>>, vector<1x128x32xf32>,
    return
  }
  func.func @transform_0(%arg0: i32, %arg1: i32) -> (i32, i32, i32) {
    %c0_i32 = arith.constant 0 : i32
    %c0_i32_0 = arith.constant 0 : i32
    return %arg0, %arg1, %c0_i32 : i32, i32, i32
  }
  func.func @transform_1(%arg0: i32, %arg1: i32) -> (i32, i32, i32) {
    %c0_i32 = arith.constant 0 : i32
    %c0_i32_0 = arith.constant 0 : i32
    %c0_i32_1 = arith.constant 0 : i32
    return %arg0, %c0_i32, %c0_i32_0 : i32, i32, i32
  }
  func.func @transform_2(%arg0: i32, %arg1: i32) -> (i32, i32, i32) {
    %c0_i32 = arith.constant 0 : i32
    %c0_i32_0 = arith.constant 0 : i32
    %c0_i32_1 = arith.constant 0 : i32
    return %arg0, %c0_i32, %c0_i32_0 : i32, i32, i32
  }
  func.func @transform_3(%arg0: i32, %arg1: i32) -> (i32, i32, i32) {
    %c0_i32 = arith.constant 0 : i32
    %c0_i32_0 = arith.constant 0 : i32
    return %arg0, %arg1, %c0_i32 : i32, i32, i32
  }
}

module attributes {stable_mosaic.version = 11 : i64} {
  func.func @_quad_kernel(%arg0: i32, %arg1: i32, %arg2: memref<1x64x96xbf16, #tpu.memory_space<vmem>>, %arg3: memref<1x96x128xbf16, #tpu.memory_space<vmem>>, %arg4: memref<1x96x64xbf16, #tpu.memory_space<vmem>>, %arg5: memref<1x1x128xf32, #tpu.memory_space<vmem>>, %arg6: memref<1x1x64xf32, #tpu.memory_space<vmem>>, %arg7: memref<1x64x64xf32, #tpu.memory_space<vmem>>) attributes {dimension_semantics = [#tpu.dimension_semantics<parallel>, #tpu.dimension_semantics<parallel>], iteration_bounds = array<i64: 3, 1>, scalar_prefetch = 0 : i64, scratch_operands = 0 : i64, tpu.core_type = #tpu.core_type<tc>, window_params = [{transform_indices = @transform_0, window_bounds = array<i64: 1, 64, 96>}, {transform_indices = @transform_1, window_bounds = array<i64: 1, 96, 128>}, {transform_indices = @transform_2, window_bounds = array<i64: 1, 96, 64>}, {transform_indices = @transform_3, window_bounds = array<i64: 1, 1, 128>}, {transform_indices = @transform_4, window_bounds = array<i64: 1, 1, 64>}, {transform_indices = @transform_5, window_bounds = array<i64: 1, 64, 64>}]} {
    %c0 = arith.constant 0 : index
    %c0_0 = arith.constant 0 : index
    %c0_1 = arith.constant 0 : index
    %0 = vector.load %arg2[%c0, %c0_0, %c0_1] : memref<1x64x96xbf16, #tpu.memory_space<vmem>>, vector<1x64x96xbf16>
    %1 = vector.shape_cast %0 : vector<1x64x96xbf16> to vector<64x96xbf16>
    %c0_2 = arith.constant 0 : index
    %c0_3 = arith.constant 0 : index
    %c0_4 = arith.constant 0 : index
    %2 = vector.load %arg3[%c0_2, %c0_3, %c0_4] : memref<1x96x128xbf16, #tpu.memory_space<vmem>>, vector<1x96x128xbf16>
    %3 = vector.shape_cast %2 : vector<1x96x128xbf16> to vector<96x128xbf16>
    %cst = arith.constant dense<0.000000e+00> : vector<64x128xf32>
    %4 = tpu.matmul %1, %3, %cst {dimension_numbers = #tpu.dot_dimension_numbers<[1], [0], [0], [1], [0, 0, 1, 1], [], []>} : vector<64x96xbf16>, vector<96x128xbf16>, vector<64x128xf32> -> vector<64x128xf32>
    %c0_5 = arith.constant 0 : index
    %c0_6 = arith.constant 0 : index
    %c0_7 = arith.constant 0 : index
    %5 = vector.load %arg5[%c0_5, %c0_6, %c0_7] : memref<1x1x128xf32, #tpu.memory_space<vmem>>, vector<1x1x128xf32>
    %6 = vector.shape_cast %5 : vector<1x1x128xf32> to vector<1x128xf32>
    %7 = vector.broadcast %6 : vector<1x128xf32> to vector<64x128xf32>
    %8 = arith.addf %4, %7 : vector<64x128xf32>
    %9 = arith.mulf %1, %1 : vector<64x96xbf16>
    %c0_8 = arith.constant 0 : index
    %c0_9 = arith.constant 0 : index
    %c0_10 = arith.constant 0 : index
    %10 = vector.load %arg4[%c0_8, %c0_9, %c0_10] : memref<1x96x64xbf16, #tpu.memory_space<vmem>>, vector<1x96x64xbf16>
    %11 = vector.shape_cast %10 : vector<1x96x64xbf16> to vector<96x64xbf16>
    %cst_11 = arith.constant dense<0.000000e+00> : vector<64x64xf32>
    %12 = tpu.matmul %9, %11, %cst_11 {dimension_numbers = #tpu.dot_dimension_numbers<[1], [0], [0], [1], [0, 0, 1, 1], [], []>} : vector<64x96xbf16>, vector<96x64xbf16>, vector<64x64xf32> -> vector<64x64xf32>
    %c0_12 = arith.constant 0 : index
    %c0_13 = arith.constant 0 : index
    %c0_14 = arith.constant 0 : index
    %13 = vector.load %arg6[%c0_12, %c0_13, %c0_14] : memref<1x1x64xf32, #tpu.memory_space<vmem>>, vector<1x1x64xf32>
    %14 = vector.shape_cast %13 : vector<1x1x64xf32> to vector<1x64xf32>
    %15 = vector.broadcast %14 : vector<1x64xf32> to vector<64x64xf32>
    %16 = arith.addf %12, %15 : vector<64x64xf32>
    %17 = vector.extract_strided_slice %8 {offsets = [0, 0], sizes = [64, 64], strides = [1, 1]} : vector<64x128xf32> to vector<64x64xf32>
    %18 = vector.extract_strided_slice %8 {offsets = [0, 64], sizes = [64, 64], strides = [1, 1]} : vector<64x128xf32> to vector<64x64xf32>
    %19 = arith.mulf %17, %18 : vector<64x64xf32>
    %20 = arith.addf %19, %16 : vector<64x64xf32>
    %cst_15 = arith.constant 0.000000e+00 : f32
    %21 = vector.broadcast %cst_15 : f32 to vector<64x64xf32>
    %22 = arith.cmpf ogt, %20, %21 : vector<64x64xf32>
    %cst_16 = arith.constant 0.00999999977 : f32
    %23 = vector.broadcast %cst_16 : f32 to vector<64x64xf32>
    %24 = arith.mulf %23, %20 : vector<64x64xf32>
    %25 = arith.select %22, %20, %24 : vector<64x64xi1>, vector<64x64xf32>
    %c0_17 = arith.constant 0 : index
    %c0_18 = arith.constant 0 : index
    %c0_19 = arith.constant 0 : index
    %26 = vector.load %arg7[%c0_17, %c0_18, %c0_19] : memref<1x64x64xf32, #tpu.memory_space<vmem>>, vector<1x64x64xf32>
    %27 = vector.shape_cast %26 : vector<1x64x64xf32> to vector<64x64xf32>
    %28 = vector.shape_cast %25 : vector<64x64xf32> to vector<1x64x64xf32>
    tpu.vector_store %arg7[%c0_17, %c0_18, %c0_19], %28 {strides = array<i32>} : memref<1x64x64xf32, #tpu.memory_space<vmem>>, vector<1x64x64xf32>,
    return
  }
  func.func @transform_0(%arg0: i32, %arg1: i32) -> (i32, i32, i32) {
    %c0_i32 = arith.constant 0 : i32
    %c0_i32_0 = arith.constant 0 : i32
    return %arg0, %arg1, %c0_i32 : i32, i32, i32
  }
  func.func @transform_1(%arg0: i32, %arg1: i32) -> (i32, i32, i32) {
    %c0_i32 = arith.constant 0 : i32
    %c0_i32_0 = arith.constant 0 : i32
    %c0_i32_1 = arith.constant 0 : i32
    return %arg0, %c0_i32, %c0_i32_0 : i32, i32, i32
  }
  func.func @transform_2(%arg0: i32, %arg1: i32) -> (i32, i32, i32) {
    %c0_i32 = arith.constant 0 : i32
    %c0_i32_0 = arith.constant 0 : i32
    %c0_i32_1 = arith.constant 0 : i32
    return %arg0, %c0_i32, %c0_i32_0 : i32, i32, i32
  }
  func.func @transform_3(%arg0: i32, %arg1: i32) -> (i32, i32, i32) {
    %c0_i32 = arith.constant 0 : i32
    %c0_i32_0 = arith.constant 0 : i32
    %c0_i32_1 = arith.constant 0 : i32
    return %arg0, %c0_i32, %c0_i32_0 : i32, i32, i32
  }
  func.func @transform_4(%arg0: i32, %arg1: i32) -> (i32, i32, i32) {
    %c0_i32 = arith.constant 0 : i32
    %c0_i32_0 = arith.constant 0 : i32
    %c0_i32_1 = arith.constant 0 : i32
    return %arg0, %c0_i32, %c0_i32_0 : i32, i32, i32
  }
  func.func @transform_5(%arg0: i32, %arg1: i32) -> (i32, i32, i32) {
    %c0_i32 = arith.constant 0 : i32
    %c0_i32_0 = arith.constant 0 : i32
    return %arg0, %arg1, %c0_i32 : i32, i32, i32
  }
}

</mosaic_0001>

<llo_original>
// kernel: forward.6
$region0: #{forward.6}
  #allocation0 [shape = 'u32[]', space=smem, size = 0x4, offset = 0x4, fixed_abs, tag = 'smem constant byte address 0x4 - core index']
  #allocation1 [shape = 'u32[144,128]{1,0:T(1,128)}', space=vmem, size = 0x12000, scoped, tag = 'internal scratch']
  %s0 = inlined_call_operand.vmem [shape: bf16[1,512,64], index: 0, kind: input, shape index: {}]
  %s1 = inlined_call_operand.vmem [shape: bf16[1,64,32], index: 1, kind: input, shape index: {}]
  %s2 = inlined_call_operand.vmem [shape: bf16[1,64,16], index: 2, kind: input, shape index: {}]
  %s3 = inlined_call_operand.vmem [shape: f32[1,1,32], index: 3, kind: input, shape index: {}]
  %s4 = inlined_call_operand.vmem [shape: f32[1,1,16], index: 4, kind: input, shape index: {}]
  %s5 = inlined_call_operand.vmem [shape: f32[1,512,16], index: 5, kind: output, shape index: {}]
  %s6 = sld [smem:[#allocation0]]
  $region53: #{forward.6} parent=0
    _
  %s8 = ssub.s32 1, %s6
  %s9 = scalar_select 0, %s8, %s6
  loop: start=0, step=1, limit=4
  $region2: #{forward.6} parent=0 // loop_pre_header
    _
  $region3: #{forward.6} parent=0 // loop_header
    %s11 = sphi 0, %s15
    %p12 = scmp.ge.s32.totalorder %s11, 4
    %s18 = sphi 0, %s30
    %s19 = sphi 0, %s26
    %s20 = sphi 0, %s18
    %s21 = sphi 0, %s19
    %s22 = sphi 0, %s20
    %s23 = sphi 0, %s21
    %s35 = sphi 0, %s37
    %s38 = sphi 0, %s35
    %s39 = sphi 0, %s38
    %s55 = sphi 0, %s39
    %s61 = sphi 0, %s63
    %s64 = sphi 0, %s61
    %s65 = sphi 0, %s64
    %s81 = sphi 0, %s65
    %s87 = sphi 0, %s89
    %s90 = sphi 0, %s87
    %s91 = sphi 0, %s90
    %s107 = sphi 0, %s91
    %s113 = sphi 0, %s115
    %s116 = sphi 0, %s113
    %s117 = sphi 0, %s116
    %s133 = sphi 0, %s117
    %s139 = sphi 0, %s141
    %s142 = sphi 0, %s139
    %s143 = sphi 0, %s142
    %s159 = sphi 0, %s143
    %s167 = sphi 0, %s169
    %s170 = sphi 0, %s167
    %s171 = sphi 0, %s170
    %s187 = sphi 0, %s171
  $region4: #{forward.6} parent=0 // loop_header_branch
    %14 = sbr.rel (%p12) target = $region8
  $region5: #{forward.6} parent=0 // loop_body
    %s16 = ssub.s32 %s11, 1
    %s17 = ssub.s32 %s11, 2
    %s24 = sadd.s32 1, %s19
    %p25 = scmp.ge.s32.totalorder %s24, 2
    %s26 = scalar_select %p25, 0, %s24
    %s27 = sadd.s32 1, %s18
    %s28 = scalar_select %p25, %s27, %s18
    %p29 = scmp.ge.s32.totalorder %s28, 1
    %s30 = scalar_select %p29, 0, %s28
    %s31 = ssub.s32 %s18, %s30
    %s32 = ssub.s32 %s19, %s26
    %s33 = sor.u32 %s31, %s32
    %p34 = scmp.eq.s32.totalorder %s33, 0
    %s36 = sadd.s32 %s35, 1
    %s37 = scalar_select %p34, %s35, %s36
    %p40 = pneg %p34
    %p41 = scmp.eq.s32.totalorder %s11, 1
    %p42 = por %p40, %p41
    %p43 = scmp.ne.s32.totalorder %s35, %s38
    %p44 = scmp.eq.s32.totalorder %s11, 0
    %p45 = por %p43, %p44
    %p46 = scmp.ne.s32.totalorder %s35, %s38
    %p47 = scmp.eq.s32.totalorder %s16, 1
    %p48 = por %p46, %p47
    %p49 = scmp.ne.s32.totalorder %s38, %s39
    %p50 = scmp.eq.s32.totalorder %s16, 0
    %p51 = por %p49, %p50
    %p52 = scmp.ne.s32.totalorder %s38, %s39
    %p53 = scmp.eq.s32.totalorder %s17, 1
    %p54 = por %p52, %p53
    %p56 = scmp.ne.s32.totalorder %s39, %s55
    %p57 = scmp.eq.s32.totalorder %s17, 0
    %p58 = por %p56, %p57
    %s59 = ssub.s32 %s18, %s30
    %p60 = scmp.eq.s32.totalorder %s59, 0
    %s62 = sadd.s32 %s61, 1
    %s63 = scalar_select %p60, %s61, %s62
    %p66 = pneg %p60
    %p67 = scmp.eq.s32.totalorder %s11, 1
    %p68 = por %p66, %p67
    %p69 = scmp.ne.s32.totalorder %s61, %s64
    %p70 = scmp.eq.s32.totalorder %s11, 0
    %p71 = por %p69, %p70
    %p72 = scmp.ne.s32.totalorder %s61, %s64
    %p73 = scmp.eq.s32.totalorder %s16, 1
    %p74 = por %p72, %p73
    %p75 = scmp.ne.s32.totalorder %s64, %s65
    %p76 = scmp.eq.s32.totalorder %s16, 0
    %p77 = por %p75, %p76
    %p78 = scmp.ne.s32.totalorder %s64, %s65
    %p79 = scmp.eq.s32.totalorder %s17, 1
    %p80 = por %p78, %p79
    %p82 = scmp.ne.s32.totalorder %s65, %s81
    %p83 = scmp.eq.s32.totalorder %s17, 0
    %p84 = por %p82, %p83
    %s85 = ssub.s32 %s18, %s30
    %p86 = scmp.eq.s32.totalorder %s85, 0
    %s88 = sadd.s32 %s87, 1
    %s89 = scalar_select %p86, %s87, %s88
    %p92 = pneg %p86
    %p93 = scmp.eq.s32.totalorder %s11, 1
    %p94 = por %p92, %p93
    %p95 = scmp.ne.s32.totalorder %s87, %s90
    %p96 = scmp.eq.s32.totalorder %s11, 0
    %p97 = por %p95, %p96
    %p98 = scmp.ne.s32.totalorder %s87, %s90
    %p99 = scmp.eq.s32.totalorder %s16, 1
    %p100 = por %p98, %p99
    %p101 = scmp.ne.s32.totalorder %s90, %s91
    %p102 = scmp.eq.s32.totalorder %s16, 0
    %p103 = por %p101, %p102
    %p104 = scmp.ne.s32.totalorder %s90, %s91
    %p105 = scmp.eq.s32.totalorder %s17, 1
    %p106 = por %p104, %p105
    %p108 = scmp.ne.s32.totalorder %s91, %s107
    %p109 = scmp.eq.s32.totalorder %s17, 0
    %p110 = por %p108, %p109
    %s111 = ssub.s32 %s18, %s30
    %p112 = scmp.eq.s32.totalorder %s111, 0
    %s114 = sadd.s32 %s113, 1
    %s115 = scalar_select %p112, %s113, %s114
    %p118 = pneg %p112
    %p119 = scmp.eq.s32.totalorder %s11, 1
    %p120 = por %p118, %p119
    %p121 = scmp.ne.s32.totalorder %s113, %s116
    %p122 = scmp.eq.s32.totalorder %s11, 0
    %p123 = por %p121, %p122
    %p124 = scmp.ne.s32.totalorder %s113, %s116
    %p125 = scmp.eq.s32.totalorder %s16, 1
    %p126 = por %p124, %p125
    %p127 = scmp.ne.s32.totalorder %s116, %s117
    %p128 = scmp.eq.s32.totalorder %s16, 0
    %p129 = por %p127, %p128
    %p130 = scmp.ne.s32.totalorder %s116, %s117
    %p131 = scmp.eq.s32.totalorder %s17, 1
    %p132 = por %p130, %p131
    %p134 = scmp.ne.s32.totalorder %s117, %s133
    %p135 = scmp.eq.s32.totalorder %s17, 0
    %p136 = por %p134, %p135
    %s137 = ssub.s32 %s18, %s30
    %p138 = scmp.eq.s32.totalorder %s137, 0
    %s140 = sadd.s32 %s139, 1
    %s141 = scalar_select %p138, %s139, %s140
    %p144 = pneg %p138
    %p145 = scmp.eq.s32.totalorder %s11, 1
    %p146 = por %p144, %p145
    %p147 = scmp.ne.s32.totalorder %s139, %s142
    %p148 = scmp.eq.s32.totalorder %s11, 0
    %p149 = por %p147, %p148
    %p150 = scmp.ne.s32.totalorder %s139, %s142
    %p151 = scmp.eq.s32.totalorder %s16, 1
    %p152 = por %p150, %p151
    %p153 = scmp.ne.s32.totalorder %s142, %s143
    %p154 = scmp.eq.s32.totalorder %s16, 0
    %p155 = por %p153, %p154
    %p156 = scmp.ne.s32.totalorder %s142, %s143
    %p157 = scmp.eq.s32.totalorder %s17, 1
    %p158 = por %p156, %p157
    %p160 = scmp.ne.s32.totalorder %s143, %s159
    %p161 = scmp.eq.s32.totalorder %s17, 0
    %p162 = por %p160, %p161
    %s163 = ssub.s32 %s18, %s30
    %s164 = ssub.s32 %s19, %s26
    %s165 = sor.u32 %s163, %s164
    %p166 = scmp.eq.s32.totalorder %s165, 0
    %s168 = sadd.s32 %s167, 1
    %s169 = scalar_select %p166, %s167, %s168
    %p172 = pneg %p166
    %p173 = scmp.eq.s32.totalorder %s11, 1
    %p174 = por %p172, %p173
    %p175 = scmp.ne.s32.totalorder %s167, %s170
    %p176 = scmp.eq.s32.totalorder %s11, 0
    %p177 = por %p175, %p176
    %p178 = scmp.ne.s32.totalorder %s167, %s170
    %p179 = scmp.eq.s32.totalorder %s16, 1
    %p180 = por %p178, %p179
    %p181 = scmp.ne.s32.totalorder %s170, %s171
    %p182 = scmp.eq.s32.totalorder %s16, 0
    %p183 = por %p181, %p182
    %p184 = scmp.ne.s32.totalorder %s170, %s171
    %p185 = scmp.eq.s32.totalorder %s17, 1
    %p186 = por %p184, %p185
    %p188 = scmp.ne.s32.totalorder %s171, %s187
    %p189 = scmp.eq.s32.totalorder %s17, 0
    %p190 = por %p188, %p189
    %p191 = scmp.le.s32.totalorder 1, %s11
    %p192 = scmp.lt.s32.totalorder %s11, 3
    %p193 = pnand %p191, %p192
    %p194 = pneg %p193
    // Predicated region
    $region9: #{forward.6} parent=5 // pred_check
      _
    $region10: #{forward.6} parent=5 // pred_check_branch
      %196 = sbr.rel (%p193) target = $region12
    $region11: #{forward.6} parent=5 // pred_region
      %s197 = ssub.s32 %s11, 1
      // Predicated region
      $region13: #{forward.6} parent=11 // pred_check
        %p198 = pneg %p77
      $region14: #{forward.6} parent=11 // pred_check_branch
        %200 = sbr.rel (%p198) target = $region16
      $region15: #{forward.6} parent=11 // pred_region
        %p201 = scmp.lt.s32.totalorder %s20, 0
        %s202 = scalar_select %p201, %s20, 0
        %s203 = smul.addr %s202, 8
        %s204 = smul.addr %s203, 4
        %s205 = scalar_lea.vmem %s1, %s204
      $region16: #{forward.6} parent=11 // pred_fallthru
        _
      // Predicated region
      $region17: #{forward.6} parent=11 // pred_check
        %p206 = pneg %p103
      $region18: #{forward.6} parent=11 // pred_check_branch
        %208 = sbr.rel (%p206) target = $region20
      $region19: #{forward.6} parent=11 // pred_region
        %p209 = scmp.lt.s32.totalorder %s20, 0
        %s210 = scalar_select %p209, %s20, 0
        %s211 = smul.addr %s210, 8
        %s212 = smul.addr %s211, 4
        %s213 = scalar_lea.vmem %s2, %s212
      $region20: #{forward.6} parent=11 // pred_fallthru
        _
      // Predicated region
      $region21: #{forward.6} parent=11 // pred_check
        %p214 = pneg %p129
      $region22: #{forward.6} parent=11 // pred_check_branch
        %216 = sbr.rel (%p214) target = $region24
      $region23: #{forward.6} parent=11 // pred_region
        %p217 = scmp.lt.s32.totalorder %s20, 0
        %s218 = scalar_select %p217, %s20, 0
        %s219 = scalar_lea.vmem %s3, %s218
      $region24: #{forward.6} parent=11 // pred_fallthru
        _
      // Predicated region
      $region25: #{forward.6} parent=11 // pred_check
        %p220 = pneg %p155
      $region26: #{forward.6} parent=11 // pred_check_branch
        %222 = sbr.rel (%p220) target = $region28
      $region27: #{forward.6} parent=11 // pred_region
        %p223 = scmp.lt.s32.totalorder %s20, 0
        %s224 = scalar_select %p223, %s20, 0
        %s225 = scalar_lea.vmem %s4, %s224
      $region28: #{forward.6} parent=11 // pred_fallthru
        _
    $region12: #{forward.6} parent=5 // pred_fallthru
      _
    %p226 = scmp.lt.s32.totalorder %s11, 2
    // Predicated region
    $region29: #{forward.6} parent=5 // pred_check
      %p227 = pneg %p226
    $region30: #{forward.6} parent=5 // pred_check_branch
      %229 = sbr.rel (%p227) target = $region32
    $region31: #{forward.6} parent=5 // pred_region
      // Predicated region
      $region33: #{forward.6} parent=31 // pred_check
        %p230 = pneg %p45
      $region34: #{forward.6} parent=31 // pred_check_branch
        %232 = sbr.rel (%p230) target = $region36
      $region35: #{forward.6} parent=31 // pred_region
        %s233 = smul.u32 32, %s19
        %p234 = scmp.lt.s32.totalorder %s18, 0
        %s235 = scalar_select %p234, %s18, 0
        %p236 = scmp.lt.s32.totalorder %s233, 63
        %s237 = scalar_select %p236, %s233, 63
        %s238 = smul.addr %s235, 64
        %s239 = sadd.s32 %s237, %s238
        %s240 = smul.addr %s239, 4
        %s241 = scalar_lea.vmem %s0, %s240
        %s242 = smul.u32 32, %s19
      $region36: #{forward.6} parent=31 // pred_fallthru
        _
    $region32: #{forward.6} parent=5 // pred_fallthru
      _
    %p243 = scmp.le.s32.totalorder 1, %s11
    %p244 = scmp.lt.s32.totalorder %s11, 3
    %p245 = pnand %p243, %p244
    %p246 = pneg %p245
    // Predicated region
    $region37: #{forward.6} parent=5 // pred_check
      _
    $region38: #{forward.6} parent=5 // pred_check_branch
      %248 = sbr.rel (%p245) target = $region40
    $region39: #{forward.6} parent=5 // pred_region
      %s249 = ssub.s32 %s11, 1
      %s250 = smul.u32 32, %s21
      %p251 = scmp.lt.s32.totalorder %s20, 0
      %s252 = scalar_select %p251, %s20, 0
      %p253 = scmp.lt.s32.totalorder %s250, 63
      %s254 = scalar_select %p253, %s250, 63
      %s255 = smul.addr %s252, 64
      %s256 = sadd.s32 %s254, %s255
      %s257 = smul.addr %s256, 4
      %s258 = scalar_lea.vmem %s0, %s257
      %p259 = pneg %p51
      %p260 = pneg %p48
      %p261 = scmp.lt.s32.totalorder %s20, 0
      %s262 = scalar_select %p261, %s20, 0
      %s263 = smul.addr %s262, 8
      %s264 = smul.addr %s263, 4
      %s265 = scalar_lea.vmem %s1, %s264
      %p266 = pneg %p77
      %p267 = pneg %p74
      %p268 = scmp.lt.s32.totalorder %s20, 0
      %s269 = scalar_select %p268, %s20, 0
      %s270 = smul.addr %s269, 8
      %s271 = smul.addr %s270, 4
      %s272 = scalar_lea.vmem %s2, %s271
      %p273 = pneg %p103
      %p274 = pneg %p100
      %p275 = scmp.lt.s32.totalorder %s20, 0
      %s276 = scalar_select %p275, %s20, 0
      %s277 = scalar_lea.vmem %s3, %s276
      %p278 = pneg %p129
      %p279 = pneg %p126
      %p280 = scmp.lt.s32.totalorder %s20, 0
      %s281 = scalar_select %p280, %s20, 0
      %s282 = scalar_lea.vmem %s4, %s281
      %p283 = pneg %p155
      %p284 = pneg %p152
      %p285 = pneg %p183
      %p286 = pneg %p180
      %s287 = smul.u32 32, %s21
      %p288 = scmp.lt.s32.totalorder %s20, 0
      %s289 = scalar_select %p288, %s20, 0
      %p290 = scmp.lt.s32.totalorder %s287, 63
      %s291 = scalar_select %p290, %s287, 63
      %s292 = smul.addr %s289, 64
      %s293 = sadd.s32 %s291, %s292
      %s294 = smul.addr %s293, 8
      %s295 = scalar_lea.vmem %s5, %s294
      %s296 = smul.u32 32, %s21
      %p297 = scmp.lt.s32.totalorder %s20, 0
      %s298 = scalar_select %p297, %s20, 0
      %p299 = scmp.lt.s32.totalorder %s296, 63
      %s300 = scalar_select %p299, %s296, 63
      %s301 = smul.addr %s298, 64
      %s302 = sadd.s32 %s300, %s301
      %s303 = smul.addr %s302, 4
      %s304 = scalar_lea.vmem %s0, %s303
      %s305 = smul.u32 32, %s21
      %p306 = scmp.lt.s32.totalorder %s20, 0
      %s307 = scalar_select %p306, %s20, 0
      %s308 = smul.addr %s307, 8
      %s309 = smul.addr %s308, 4
      %s310 = scalar_lea.vmem %s1, %s309
      %p311 = scmp.lt.s32.totalorder %s20, 0
      %s312 = scalar_select %p311, %s20, 0
      %s313 = smul.addr %s312, 8
      %s314 = smul.addr %s313, 4
      %s315 = scalar_lea.vmem %s2, %s314
      %p316 = scmp.lt.s32.totalorder %s20, 0
      %s317 = scalar_select %p316, %s20, 0
      %s318 = scalar_lea.vmem %s3, %s317
      %p319 = scmp.lt.s32.totalorder %s20, 0
      %s320 = scalar_select %p319, %s20, 0
      %s321 = scalar_lea.vmem %s4, %s320
      %s322 = smul.u32 32, %s21
      %p323 = scmp.lt.s32.totalorder %s20, 0
      %s324 = scalar_select %p323, %s20, 0
      %p325 = scmp.lt.s32.totalorder %s322, 63
      %s326 = scalar_select %p325, %s322, 63
      %s327 = smul.addr %s324, 64
      %s328 = sadd.s32 %s326, %s327
      %s329 = smul.addr %s328, 8
      %s330 = scalar_lea.vmem %s5, %s329
      %s331 = smul.u32 32, %s21
      %v333 = vld [vmem:[%s304] sm:$0xf]
      %v334 = vld [vmem:[%s304 + $0x4] sm:$0xf]
      %v335 = vld [vmem:[%s304 + $0x8] sm:$0xf]
      %v336 = vld [vmem:[%s304 + $0xc] sm:$0xf]
      %v337 = vld [vmem:[%s304 + $0x10] sm:$0xf]
      %v338 = vld [vmem:[%s304 + $0x14] sm:$0xf]
      %v339 = vld [vmem:[%s304 + $0x18] sm:$0xf]
      %v340 = vld [vmem:[%s304 + $0x1c] sm:$0xf]
      %v341 = vld [vmem:[%s304 + $0x20] sm:$0xf]
      %v342 = vld [vmem:[%s304 + $0x24] sm:$0xf]
      %v343 = vld [vmem:[%s304 + $0x28] sm:$0xf]
      %v344 = vld [vmem:[%s304 + $0x2c] sm:$0xf]
      %v345 = vld [vmem:[%s304 + $0x30] sm:$0xf]
      %v346 = vld [vmem:[%s304 + $0x34] sm:$0xf]
      %v347 = vld [vmem:[%s304 + $0x38] sm:$0xf]
      %v348 = vld [vmem:[%s304 + $0x3c] sm:$0xf]
      %v349 = vld [vmem:[%s304 + $0x40] sm:$0xf]
      %v350 = vld [vmem:[%s304 + $0x44] sm:$0xf]
      %v351 = vld [vmem:[%s304 + $0x48] sm:$0xf]
      %v352 = vld [vmem:[%s304 + $0x4c] sm:$0xf]
      %v353 = vld [vmem:[%s304 + $0x50] sm:$0xf]
      %v354 = vld [vmem:[%s304 + $0x54] sm:$0xf]
      %v355 = vld [vmem:[%s304 + $0x58] sm:$0xf]
      %v356 = vld [vmem:[%s304 + $0x5c] sm:$0xf]
      %v357 = vld [vmem:[%s304 + $0x60] sm:$0xf]
      %v358 = vld [vmem:[%s304 + $0x64] sm:$0xf]
      %v359 = vld [vmem:[%s304 + $0x68] sm:$0xf]
      %v360 = vld [vmem:[%s304 + $0x6c] sm:$0xf]
      %v361 = vld [vmem:[%s304 + $0x70] sm:$0xf]
      %v362 = vld [vmem:[%s304 + $0x74] sm:$0xf]
      %v363 = vld [vmem:[%s304 + $0x78] sm:$0xf]
      %v364 = vld [vmem:[%s304 + $0x7c] sm:$0xf]
      %v365 = vld [vmem:[%s310] sm:$0xf]
      %v366 = vld [vmem:[%s310 + $0x4] sm:$0xf]
      %v367 = vld [vmem:[%s310 + $0x8] sm:$0xf]
      %v368 = vld [vmem:[%s310 + $0xc] sm:$0xf]
      %v369 = vld [vmem:[%s310 + $0x10] sm:$0xf]
      %v370 = vld [vmem:[%s310 + $0x14] sm:$0xf]
      %v371 = vld [vmem:[%s310 + $0x18] sm:$0xf]
      %v372 = vld [vmem:[%s310 + $0x1c] sm:$0xf]
      %v373 = vld [vmem:[%s318] sm:$0x1]
      %v375 = vlaneseq
      %v376 = vshrl.u32 %v375, 7
      %v377 = vsub.s32 0, %v376
      %v378 = vrot.slane %v373, %v377
      %v412 = vunpack.c.l.b16 %v333
      %v413 = vunpack.c.l.b16 %v334
      %v414 = vunpack.c.l.b16 %v335
      %v415 = vunpack.c.l.b16 %v336
      %v416 = vunpack.c.l.b16 %v337
      %v417 = vunpack.c.l.b16 %v338
      %v418 = vunpack.c.l.b16 %v339
      %v419 = vunpack.c.l.b16 %v340
      %v420 = vunpack.c.l.b16 %v341
      %v421 = vunpack.c.l.b16 %v342
      %v422 = vunpack.c.l.b16 %v343
      %v423 = vunpack.c.l.b16 %v344
      %v424 = vunpack.c.l.b16 %v345
      %v425 = vunpack.c.l.b16 %v346
      %v426 = vunpack.c.l.b16 %v347
      %v427 = vunpack.c.l.b16 %v348
      %v428 = vunpack.c.l.b16 %v349
      %v429 = vunpack.c.l.b16 %v350
      %v430 = vunpack.c.l.b16 %v351
      %v431 = vunpack.c.l.b16 %v352
      %v432 = vunpack.c.l.b16 %v353
      %v433 = vunpack.c.l.b16 %v354
      %v434 = vunpack.c.l.b16 %v355
      %v435 = vunpack.c.l.b16 %v356
      %v436 = vunpack.c.l.b16 %v357
      %v437 = vunpack.c.l.b16 %v358
      %v438 = vunpack.c.l.b16 %v359
      %v439 = vunpack.c.l.b16 %v360
      %v440 = vunpack.c.l.b16 %v361
      %v441 = vunpack.c.l.b16 %v362
      %v442 = vunpack.c.l.b16 %v363
      %v443 = vunpack.c.l.b16 %v364
      %v444 = vpack.c.b16 %v413, %v412
      %v445 = vpack.c.b16 %v415, %v414
      %v446 = vpack.c.b16 %v417, %v416
      %v447 = vpack.c.b16 %v419, %v418
      %v448 = vpack.c.b16 %v421, %v420
      %v449 = vpack.c.b16 %v423, %v422
      %v450 = vpack.c.b16 %v425, %v424
      %v451 = vpack.c.b16 %v427, %v426
      %v452 = vpack.c.b16 %v429, %v428
      %v453 = vpack.c.b16 %v431, %v430
      %v454 = vpack.c.b16 %v433, %v432
      %v455 = vpack.c.b16 %v435, %v434
      %v456 = vpack.c.b16 %v437, %v436
      %v457 = vpack.c.b16 %v439, %v438
      %v458 = vpack.c.b16 %v441, %v440
      %v459 = vpack.c.b16 %v443, %v442
      %v468 = vunpack.c.l.b16 %v365
      %v469 = vunpack.c.l.b16 %v366
      %v470 = vunpack.c.l.b16 %v367
      %v471 = vunpack.c.l.b16 %v368
      %v472 = vunpack.c.l.b16 %v369
      %v473 = vunpack.c.l.b16 %v370
      %v474 = vunpack.c.l.b16 %v371
      %v475 = vunpack.c.l.b16 %v372
      %v476 = vpack.c.b16 %v469, %v468
      %v477 = vpack.c.b16 %v471, %v470
      %v478 = vpack.c.b16 %v473, %v472
      %v479 = vpack.c.b16 %v475, %v474
      %vm484 = vcmask 523264
      %v486 = vsel %vm484, %v444, 0
      %v489 = vsel %vm484, %v445, 0
      %v492 = vsel %vm484, %v446, 0
      %v495 = vsel %vm484, %v447, 0
      %v498 = vsel %vm484, %v448, 0
      %v501 = vsel %vm484, %v449, 0
      %v504 = vsel %vm484, %v450, 0
      %v507 = vsel %vm484, %v451, 0
      %v510 = vsel %vm484, %v452, 0
      %v513 = vsel %vm484, %v453, 0
      %v516 = vsel %vm484, %v454, 0
      %v519 = vsel %vm484, %v455, 0
      %v522 = vsel %vm484, %v456, 0
      %v525 = vsel %vm484, %v457, 0
      %v528 = vsel %vm484, %v458, 0
      %v531 = vsel %vm484, %v459, 0
      %533 = vmatprep.subr.bf16.mxu0 0
      %534 = vmatpush1.bf16.msra.mxu0 %v476
      %535 = vmatprep.subr.bf16.mxu0 0
      %536 = vmatpush1.bf16.msra.mxu0 %v477
      %537 = vmatprep.subr.bf16.mxu0 0
      %538 = vmatpush1.bf16.msra.mxu0 %v478
      %539 = vmatprep.subr.bf16.mxu0 0
      %540 = vmatpush1.bf16.msra.mxu0 %v479
      %541 = vmatprep.subr.bf16.mxu0 0
      %542 = vmatpush1.bf16.msra.mxu0 0
      %543 = vmatprep.subr.bf16.mxu0 0
      %544 = vmatpush1.bf16.msra.mxu0 0
      %545 = vmatprep.subr.bf16.mxu0 0
      %546 = vmatpush1.bf16.msra.mxu0 0
      %547 = vmatprep.subr.bf16.mxu0 0
      %548 = vmatpush1.bf16.msra.mxu0 0
      %549 = vmatprep.subr.bf16.mxu0 0
      %550 = vmatpush1.bf16.msra.mxu0 0
      %551 = vmatprep.subr.bf16.mxu0 0
      %552 = vmatpush1.bf16.msra.mxu0 0
      %553 = vmatprep.subr.bf16.mxu0 0
      %554 = vmatpush1.bf16.msra.mxu0 0
      %555 = vmatprep.subr.bf16.mxu0 0
      %556 = vmatpush1.bf16.msra.mxu0 0
      %557 = vmatprep.subr.bf16.mxu0 0
      %558 = vmatpush1.bf16.msra.mxu0 0
      %559 = vmatprep.subr.bf16.mxu0 0
      %560 = vmatpush1.bf16.msra.mxu0 0
      %561 = vmatprep.subr.bf16.mxu0 0
      %562 = vmatpush1.bf16.msra.mxu0 0
      %563 = vmatprep.subr.bf16.mxu0 0
      %564 = vmatpush1.bf16.msra.mxu0 0
      %565 = vmatprep.mubr.bf16.mxu0 0
      %566 = vmatmul.mubr.bf16.gmra.mrb[0].mxu0 %v486
      %v567 = vpop.f32.mrb[0].mxu0
      %v568 = vadd.f32 %v378, %v567
      %v569 = vpop.f32.mrb[0].mxu0
      %v570 = vpop.f32.mrb[0].mxu0
      %v571 = vadd.f32 %v378, %v570
      %v572 = vpop.f32.mrb[0].mxu0
      %573 = vmatprep.mubr.bf16.mxu0 0
      %574 = vmatmul.mubr.bf16.gmra.mrb[0].mxu0 %v489
      %v575 = vpop.f32.mrb[0].mxu0
      %v576 = vadd.f32 %v378, %v575
      %v577 = vpop.f32.mrb[0].mxu0
      %v578 = vpop.f32.mrb[0].mxu0
      %v579 = vadd.f32 %v378, %v578
      %v580 = vpop.f32.mrb[0].mxu0
      %581 = vmatprep.mubr.bf16.mxu0 0
      %582 = vmatmul.mubr.bf16.gmra.mrb[0].mxu0 %v492
      %v583 = vpop.f32.mrb[0].mxu0
      %v584 = vadd.f32 %v378, %v583
      %v585 = vpop.f32.mrb[0].mxu0
      %v586 = vpop.f32.mrb[0].mxu0
      %v587 = vadd.f32 %v378, %v586
      %v588 = vpop.f32.mrb[0].mxu0
      %589 = vmatprep.mubr.bf16.mxu0 0
      %590 = vmatmul.mubr.bf16.gmra.mrb[0].mxu0 %v495
      %v591 = vpop.f32.mrb[0].mxu0
      %v592 = vadd.f32 %v378, %v591
      %v593 = vpop.f32.mrb[0].mxu0
      %v594 = vpop.f32.mrb[0].mxu0
      %v595 = vadd.f32 %v378, %v594
      %v596 = vpop.f32.mrb[0].mxu0
      %597 = vmatprep.mubr.bf16.mxu0 0
      %598 = vmatmul.mubr.bf16.gmra.mrb[0].mxu0 %v498
      %v599 = vpop.f32.mrb[0].mxu0
      %v600 = vadd.f32 %v378, %v599
      %v601 = vpop.f32.mrb[0].mxu0
      %v602 = vpop.f32.mrb[0].mxu0
      %v603 = vadd.f32 %v378, %v602
      %v604 = vpop.f32.mrb[0].mxu0
      %605 = vmatprep.mubr.bf16.mxu0 0
      %606 = vmatmul.mubr.bf16.gmra.mrb[0].mxu0 %v501
      %v607 = vpop.f32.mrb[0].mxu0
      %v608 = vadd.f32 %v378, %v607
      %v609 = vpop.f32.mrb[0].mxu0
      %v610 = vpop.f32.mrb[0].mxu0
      %v611 = vadd.f32 %v378, %v610
      %v612 = vpop.f32.mrb[0].mxu0
      %613 = vmatprep.mubr.bf16.mxu0 0
      %614 = vmatmul.mubr.bf16.gmra.mrb[0].mxu0 %v504
      %v615 = vpop.f32.mrb[0].mxu0
      %v616 = vadd.f32 %v378, %v615
      %v617 = vpop.f32.mrb[0].mxu0
      %v618 = vpop.f32.mrb[0].mxu0
      %v619 = vadd.f32 %v378, %v618
      %v620 = vpop.f32.mrb[0].mxu0
      %621 = vmatprep.mubr.bf16.mxu0 0
      %622 = vmatmul.mubr.bf16.gmra.mrb[0].mxu0 %v507
      %v623 = vpop.f32.mrb[0].mxu0
      %v624 = vadd.f32 %v378, %v623
      %v625 = vpop.f32.mrb[0].mxu0
      %v626 = vpop.f32.mrb[0].mxu0
      %v627 = vadd.f32 %v378, %v626
      %v628 = vpop.f32.mrb[0].mxu0
      %629 = vmatprep.mubr.bf16.mxu0 0
      %630 = vmatmul.mubr.bf16.gmra.mrb[0].mxu0 %v510
      %v631 = vpop.f32.mrb[0].mxu0
      %v632 = vadd.f32 %v378, %v631
      %v633 = vpop.f32.mrb[0].mxu0
      %v634 = vpop.f32.mrb[0].mxu0
      %v635 = vadd.f32 %v378, %v634
      %v636 = vpop.f32.mrb[0].mxu0
      %637 = vmatprep.mubr.bf16.mxu0 0
      %638 = vmatmul.mubr.bf16.gmra.mrb[0].mxu0 %v513
      %v639 = vpop.f32.mrb[0].mxu0
      %v640 = vadd.f32 %v378, %v639
      %v641 = vpop.f32.mrb[0].mxu0
      %v642 = vpop.f32.mrb[0].mxu0
      %v643 = vadd.f32 %v378, %v642
      %v644 = vpop.f32.mrb[0].mxu0
      %645 = vmatprep.mubr.bf16.mxu0 0
      %646 = vmatmul.mubr.bf16.gmra.mrb[0].mxu0 %v516
      %v647 = vpop.f32.mrb[0].mxu0
      %v648 = vadd.f32 %v378, %v647
      %v649 = vpop.f32.mrb[0].mxu0
      %v650 = vpop.f32.mrb[0].mxu0
      %v651 = vadd.f32 %v378, %v650
      %v652 = vpop.f32.mrb[0].mxu0
      %653 = vmatprep.mubr.bf16.mxu0 0
      %654 = vmatmul.mubr.bf16.gmra.mrb[0].mxu0 %v519
      %v655 = vpop.f32.mrb[0].mxu0
      %v656 = vadd.f32 %v378, %v655
      %v657 = vpop.f32.mrb[0].mxu0
      %v658 = vpop.f32.mrb[0].mxu0
      %v659 = vadd.f32 %v378, %v658
      %v660 = vpop.f32.mrb[0].mxu0
      %661 = vmatprep.mubr.bf16.mxu0 0
      %662 = vmatmul.mubr.bf16.gmra.mrb[0].mxu0 %v522
      %v663 = vpop.f32.mrb[0].mxu0
      %v664 = vadd.f32 %v378, %v663
      %v665 = vpop.f32.mrb[0].mxu0
      %v666 = vpop.f32.mrb[0].mxu0
      %v667 = vadd.f32 %v378, %v666
      %v668 = vpop.f32.mrb[0].mxu0
      %669 = vmatprep.mubr.bf16.mxu0 0
      %670 = vmatmul.mubr.bf16.gmra.mrb[0].mxu0 %v525
      %v671 = vpop.f32.mrb[0].mxu0
      %v672 = vadd.f32 %v378, %v671
      %v673 = vpop.f32.mrb[0].mxu0
      %v674 = vpop.f32.mrb[0].mxu0
      %v675 = vadd.f32 %v378, %v674
      %v676 = vpop.f32.mrb[0].mxu0
      %677 = vmatprep.mubr.bf16.mxu0 0
      %678 = vmatmul.mubr.bf16.gmra.mrb[0].mxu0 %v528
      %v679 = vpop.f32.mrb[0].mxu0
      %v680 = vadd.f32 %v378, %v679
      %v681 = vpop.f32.mrb[0].mxu0
      %v682 = vpop.f32.mrb[0].mxu0
      %v683 = vadd.f32 %v378, %v682
      %v684 = vpop.f32.mrb[0].mxu0
      %685 = vmatprep.mubr.bf16.mxu0 0
      %686 = vmatmul.mubr.bf16.gmra.mrb[0].mxu0 %v531
      %v687 = vpop.f32.mrb[0].mxu0
      %v688 = vadd.f32 %v378, %v687
      %v689 = vpop.f32.mrb[0].mxu0
      %v690 = vpop.f32.mrb[0].mxu0
      %v691 = vadd.f32 %v378, %v690
      %v692 = vpop.f32.mrb[0].mxu0
      %693 = vdwg.mxu0
      %v694 = vmul.bf16 %v333, %v333
      %v695 = vmul.bf16 %v334, %v334
      %v696 = vmul.bf16 %v335, %v335
      %v697 = vmul.bf16 %v336, %v336
      %v698 = vmul.bf16 %v337, %v337
      %v699 = vmul.bf16 %v338, %v338
      %v700 = vmul.bf16 %v339, %v339
      %v701 = vmul.bf16 %v340, %v340
      %v702 = vmul.bf16 %v341, %v341
      %v703 = vmul.bf16 %v342, %v342
      %v704 = vmul.bf16 %v343, %v343
      %v705 = vmul.bf16 %v344, %v344
      %v706 = vmul.bf16 %v345, %v345
      %v707 = vmul.bf16 %v346, %v346
      %v708 = vmul.bf16 %v347, %v347
      %v709 = vmul.bf16 %v348, %v348
      %v710 = vmul.bf16 %v349, %v349
      %v711 = vmul.bf16 %v350, %v350
      %v712 = vmul.bf16 %v351, %v351
      %v713 = vmul.bf16 %v352, %v352
      %v714 = vmul.bf16 %v353, %v353
      %v715 = vmul.bf16 %v354, %v354
      %v716 = vmul.bf16 %v355, %v355
      %v717 = vmul.bf16 %v356, %v356
      %v718 = vmul.bf16 %v357, %v357
      %v719 = vmul.bf16 %v358, %v358
      %v720 = vmul.bf16 %v359, %v359
      %v721 = vmul.bf16 %v360, %v360
      %v722 = vmul.bf16 %v361, %v361
      %v723 = vmul.bf16 %v362, %v362
      %v724 = vmul.bf16 %v363, %v363
      %v725 = vmul.bf16 %v364, %v364
      %v726 = vld [vmem:[%s315] sm:$0xf]
      %v727 = vld [vmem:[%s315 + $0x4] sm:$0xf]
      %v728 = vld [vmem:[%s315 + $0x8] sm:$0xf]
      %v729 = vld [vmem:[%s315 + $0xc] sm:$0xf]
      %v730 = vld [vmem:[%s315 + $0x10] sm:$0xf]
      %v731 = vld [vmem:[%s315 + $0x14] sm:$0xf]
      %v732 = vld [vmem:[%s315 + $0x18] sm:$0xf]
      %v733 = vld [vmem:[%s315 + $0x1c] sm:$0xf]
      %v734 = vld [vmem:[%s321] sm:$0x1]
      %v736 = vlaneseq
      %v737 = vshrl.u32 %v736, 7
      %v738 = vsub.s32 0, %v737
      %v739 = vrot.slane %v734, %v738
      %v773 = vunpack.c.l.b16 %v694
      %v774 = vunpack.c.l.b16 %v695
      %v775 = vunpack.c.l.b16 %v696
      %v776 = vunpack.c.l.b16 %v697
      %v777 = vunpack.c.l.b16 %v698
      %v778 = vunpack.c.l.b16 %v699
      %v779 = vunpack.c.l.b16 %v700
      %v780 = vunpack.c.l.b16 %v701
      %v781 = vunpack.c.l.b16 %v702
      %v782 = vunpack.c.l.b16 %v703
      %v783 = vunpack.c.l.b16 %v704
      %v784 = vunpack.c.l.b16 %v705
      %v785 = vunpack.c.l.b16 %v706
      %v786 = vunpack.c.l.b16 %v707
      %v787 = vunpack.c.l.b16 %v708
      %v788 = vunpack.c.l.b16 %v709
      %v789 = vunpack.c.l.b16 %v710
      %v790 = vunpack.c.l.b16 %v711
      %v791 = vunpack.c.l.b16 %v712
      %v792 = vunpack.c.l.b16 %v713
      %v793 = vunpack.c.l.b16 %v714
      %v794 = vunpack.c.l.b16 %v715
      %v795 = vunpack.c.l.b16 %v716
      %v796 = vunpack.c.l.b16 %v717
      %v797 = vunpack.c.l.b16 %v718
      %v798 = vunpack.c.l.b16 %v719
      %v799 = vunpack.c.l.b16 %v720
      %v800 = vunpack.c.l.b16 %v721
      %v801 = vunpack.c.l.b16 %v722
      %v802 = vunpack.c.l.b16 %v723
      %v803 = vunpack.c.l.b16 %v724
      %v804 = vunpack.c.l.b16 %v725
      %v805 = vpack.c.b16 %v774, %v773
      %v806 = vpack.c.b16 %v776, %v775
      %v807 = vpack.c.b16 %v778, %v777
      %v808 = vpack.c.b16 %v780, %v779
      %v809 = vpack.c.b16 %v782, %v781
      %v810 = vpack.c.b16 %v784, %v783
      %v811 = vpack.c.b16 %v786, %v785
      %v812 = vpack.c.b16 %v788, %v787
      %v813 = vpack.c.b16 %v790, %v789
      %v814 = vpack.c.b16 %v792, %v791
      %v815 = vpack.c.b16 %v794, %v793
      %v816 = vpack.c.b16 %v796, %v795
      %v817 = vpack.c.b16 %v798, %v797
      %v818 = vpack.c.b16 %v800, %v799
      %v819 = vpack.c.b16 %v802, %v801
      %v820 = vpack.c.b16 %v804, %v803
      %v829 = vunpack.c.l.b16 %v726
      %v830 = vunpack.c.l.b16 %v727
      %v831 = vunpack.c.l.b16 %v728
      %v832 = vunpack.c.l.b16 %v729
      %v833 = vunpack.c.l.b16 %v730
      %v834 = vunpack.c.l.b16 %v731
      %v835 = vunpack.c.l.b16 %v732
      %v836 = vunpack.c.l.b16 %v733
      %v837 = vpack.c.b16 %v830, %v829
      %v838 = vpack.c.b16 %v832, %v831
      %v839 = vpack.c.b16 %v834, %v833
      %v840 = vpack.c.b16 %v836, %v835
      %v846 = vsel %vm484, %v805, 0
      %v849 = vsel %vm484, %v806, 0
      %v852 = vsel %vm484, %v807, 0
      %v855 = vsel %vm484, %v808, 0
      %v858 = vsel %vm484, %v809, 0
      %v861 = vsel %vm484, %v810, 0
      %v864 = vsel %vm484, %v811, 0
      %v867 = vsel %vm484, %v812, 0
      %v870 = vsel %vm484, %v813, 0
      %v873 = vsel %vm484, %v814, 0
      %v876 = vsel %vm484, %v815, 0
      %v879 = vsel %vm484, %v816, 0
      %v882 = vsel %vm484, %v817, 0
      %v885 = vsel %vm484, %v818, 0
      %v888 = vsel %vm484, %v819, 0
      %v891 = vsel %vm484, %v820, 0
      %893 = vmatprep.subr.bf16.mxu0 0
      %894 = vmatpush1.bf16.msra.mxu0 %v837
      %895 = vmatprep.subr.bf16.mxu0 0
      %896 = vmatpush1.bf16.msra.mxu0 %v838
      %897 = vmatprep.subr.bf16.mxu0 0
      %898 = vmatpush1.bf16.msra.mxu0 %v839
      %899 = vmatprep.subr.bf16.mxu0 0
      %900 = vmatpush1.bf16.msra.mxu0 %v840
      %901 = vmatprep.subr.bf16.mxu0 0
      %902 = vmatpush1.bf16.msra.mxu0 0
      %903 = vmatprep.subr.bf16.mxu0 0
      %904 = vmatpush1.bf16.msra.mxu0 0
      %905 = vmatprep.subr.bf16.mxu0 0
      %906 = vmatpush1.bf16.msra.mxu0 0
      %907 = vmatprep.subr.bf16.mxu0 0
      %908 = vmatpush1.bf16.msra.mxu0 0
      %909 = vmatprep.subr.bf16.mxu0 0
      %910 = vmatpush1.bf16.msra.mxu0 0
      %911 = vmatprep.subr.bf16.mxu0 0
      %912 = vmatpush1.bf16.msra.mxu0 0
      %913 = vmatprep.subr.bf16.mxu0 0
      %914 = vmatpush1.bf16.msra.mxu0 0
      %915 = vmatprep.subr.bf16.mxu0 0
      %916 = vmatpush1.bf16.msra.mxu0 0
      %917 = vmatprep.subr.bf16.mxu0 0
      %918 = vmatpush1.bf16.msra.mxu0 0
      %919 = vmatprep.subr.bf16.mxu0 0
      %920 = vmatpush1.bf16.msra.mxu0 0
      %921 = vmatprep.subr.bf16.mxu0 0
      %922 = vmatpush1.bf16.msra.mxu0 0
      %923 = vmatprep.subr.bf16.mxu0 0
      %924 = vmatpush1.bf16.msra.mxu0 0
      %925 = vmatprep.mubr.bf16.mxu0 0
      %926 = vmatmul.mubr.bf16.gmra.mrb[0].mxu0 %v846
      %v927 = vpop.f32.mrb[0].mxu0
      %v928 = vadd.f32 %v739, %v927
      %v929 = vpop.f32.mrb[0].mxu0
      %v930 = vpop.f32.mrb[0].mxu0
      %v931 = vadd.f32 %v739, %v930
      %v932 = vpop.f32.mrb[0].mxu0
      %933 = vmatprep.mubr.bf16.mxu0 0
      %934 = vmatmul.mubr.bf16.gmra.mrb[0].mxu0 %v849
      %v935 = vpop.f32.mrb[0].mxu0
      %v936 = vadd.f32 %v739, %v935
      %v937 = vpop.f32.mrb[0].mxu0
      %v938 = vpop.f32.mrb[0].mxu0
      %v939 = vadd.f32 %v739, %v938
      %v940 = vpop.f32.mrb[0].mxu0
      %941 = vmatprep.mubr.bf16.mxu0 0
      %942 = vmatmul.mubr.bf16.gmra.mrb[0].mxu0 %v852
      %v943 = vpop.f32.mrb[0].mxu0
      %v944 = vadd.f32 %v739, %v943
      %v945 = vpop.f32.mrb[0].mxu0
      %v946 = vpop.f32.mrb[0].mxu0
      %v947 = vadd.f32 %v739, %v946
      %v948 = vpop.f32.mrb[0].mxu0
      %949 = vmatprep.mubr.bf16.mxu0 0
      %950 = vmatmul.mubr.bf16.gmra.mrb[0].mxu0 %v855
      %v951 = vpop.f32.mrb[0].mxu0
      %v952 = vadd.f32 %v739, %v951
      %v953 = vpop.f32.mrb[0].mxu0
      %v954 = vpop.f32.mrb[0].mxu0
      %v955 = vadd.f32 %v739, %v954
      %v956 = vpop.f32.mrb[0].mxu0
      %957 = vmatprep.mubr.bf16.mxu0 0
      %958 = vmatmul.mubr.bf16.gmra.mrb[0].mxu0 %v858
      %v959 = vpop.f32.mrb[0].mxu0
      %v960 = vadd.f32 %v739, %v959
      %v961 = vpop.f32.mrb[0].mxu0
      %v962 = vpop.f32.mrb[0].mxu0
      %v963 = vadd.f32 %v739, %v962
      %v964 = vpop.f32.mrb[0].mxu0
      %965 = vmatprep.mubr.bf16.mxu0 0
      %966 = vmatmul.mubr.bf16.gmra.mrb[0].mxu0 %v861
      %v967 = vpop.f32.mrb[0].mxu0
      %v968 = vadd.f32 %v739, %v967
      %v969 = vpop.f32.mrb[0].mxu0
      %v970 = vpop.f32.mrb[0].mxu0
      %v971 = vadd.f32 %v739, %v970
      %v972 = vpop.f32.mrb[0].mxu0
      %973 = vmatprep.mubr.bf16.mxu0 0
      %974 = vmatmul.mubr.bf16.gmra.mrb[0].mxu0 %v864
      %v975 = vpop.f32.mrb[0].mxu0
      %v976 = vadd.f32 %v739, %v975
      %v977 = vpop.f32.mrb[0].mxu0
      %v978 = vpop.f32.mrb[0].mxu0
      %v979 = vadd.f32 %v739, %v978
      %v980 = vpop.f32.mrb[0].mxu0
      %981 = vmatprep.mubr.bf16.mxu0 0
      %982 = vmatmul.mubr.bf16.gmra.mrb[0].mxu0 %v867
      %v983 = vpop.f32.mrb[0].mxu0
      %v984 = vadd.f32 %v739, %v983
      %v985 = vpop.f32.mrb[0].mxu0
      %v986 = vpop.f32.mrb[0].mxu0
      %v987 = vadd.f32 %v739, %v986
      %v988 = vpop.f32.mrb[0].mxu0
      %989 = vmatprep.mubr.bf16.mxu0 0
      %990 = vmatmul.mubr.bf16.gmra.mrb[0].mxu0 %v870
      %v991 = vpop.f32.mrb[0].mxu0
      %v992 = vadd.f32 %v739, %v991
      %v993 = vpop.f32.mrb[0].mxu0
      %v994 = vpop.f32.mrb[0].mxu0
      %v995 = vadd.f32 %v739, %v994
      %v996 = vpop.f32.mrb[0].mxu0
      %997 = vmatprep.mubr.bf16.mxu0 0
      %998 = vmatmul.mubr.bf16.gmra.mrb[0].mxu0 %v873
      %v999 = vpop.f32.mrb[0].mxu0
      %v1000 = vadd.f32 %v739, %v999
      %v1001 = vpop.f32.mrb[0].mxu0
      %v1002 = vpop.f32.mrb[0].mxu0
      %v1003 = vadd.f32 %v739, %v1002
      %v1004 = vpop.f32.mrb[0].mxu0
      %1005 = vmatprep.mubr.bf16.mxu0 0
      %1006 = vmatmul.mubr.bf16.gmra.mrb[0].mxu0 %v876
      %v1007 = vpop.f32.mrb[0].mxu0
      %v1008 = vadd.f32 %v739, %v1007
      %v1009 = vpop.f32.mrb[0].mxu0
      %v1010 = vpop.f32.mrb[0].mxu0
      %v1011 = vadd.f32 %v739, %v1010
      %v1012 = vpop.f32.mrb[0].mxu0
      %1013 = vmatprep.mubr.bf16.mxu0 0
      %1014 = vmatmul.mubr.bf16.gmra.mrb[0].mxu0 %v879
      %v1015 = vpop.f32.mrb[0].mxu0
      %v1016 = vadd.f32 %v739, %v1015
      %v1017 = vpop.f32.mrb[0].mxu0
      %v1018 = vpop.f32.mrb[0].mxu0
      %v1019 = vadd.f32 %v739, %v1018
      %v1020 = vpop.f32.mrb[0].mxu0
      %1021 = vmatprep.mubr.bf16.mxu0 0
      %1022 = vmatmul.mubr.bf16.gmra.mrb[0].mxu0 %v882
      %v1023 = vpop.f32.mrb[0].mxu0
      %v1024 = vadd.f32 %v739, %v1023
      %v1025 = vpop.f32.mrb[0].mxu0
      %v1026 = vpop.f32.mrb[0].mxu0
      %v1027 = vadd.f32 %v739, %v1026
      %v1028 = vpop.f32.mrb[0].mxu0
      %1029 = vmatprep.mubr.bf16.mxu0 0
      %1030 = vmatmul.mubr.bf16.gmra.mrb[0].mxu0 %v885
      %v1031 = vpop.f32.mrb[0].mxu0
      %v1032 = vadd.f32 %v739, %v1031
      %v1033 = vpop.f32.mrb[0].mxu0
      %v1034 = vpop.f32.mrb[0].mxu0
      %v1035 = vadd.f32 %v739, %v1034
      %v1036 = vpop.f32.mrb[0].mxu0
      %1037 = vmatprep.mubr.bf16.mxu0 0
      %1038 = vmatmul.mubr.bf16.gmra.mrb[0].mxu0 %v888
      %v1039 = vpop.f32.mrb[0].mxu0
      %v1040 = vadd.f32 %v739, %v1039
      %v1041 = vpop.f32.mrb[0].mxu0
      %v1042 = vpop.f32.mrb[0].mxu0
      %v1043 = vadd.f32 %v739, %v1042
      %v1044 = vpop.f32.mrb[0].mxu0
      %1045 = vmatprep.mubr.bf16.mxu0 0
      %1046 = vmatmul.mubr.bf16.gmra.mrb[0].mxu0 %v891
      %v1047 = vpop.f32.mrb[0].mxu0
      %v1048 = vadd.f32 %v739, %v1047
      %v1049 = vpop.f32.mrb[0].mxu0
      %v1050 = vpop.f32.mrb[0].mxu0
      %v1051 = vadd.f32 %v739, %v1050
      %v1052 = vpop.f32.mrb[0].mxu0
      %1053 = vdwg.mxu0
      %1086 = vrot.lane.b32.xlu0 %v568, 112
      %v1087 = vpop.permute.xlu0 %1086
      %1088 = vrot.lane.b32.xlu0 %v571, 112
      %v1089 = vpop.permute.xlu0 %1088
      %1090 = vrot.lane.b32.xlu0 %v576, 112
      %v1091 = vpop.permute.xlu0 %1090
      %1092 = vrot.lane.b32.xlu0 %v579, 112
      %v1093 = vpop.permute.xlu0 %1092
      %1094 = vrot.lane.b32.xlu0 %v584, 112
      %v1095 = vpop.permute.xlu0 %1094
      %1096 = vrot.lane.b32.xlu0 %v587, 112
      %v1097 = vpop.permute.xlu0 %1096
      %1098 = vrot.lane.b32.xlu0 %v592, 112
      %v1099 = vpop.permute.xlu0 %1098
      %1100 = vrot.lane.b32.xlu0 %v595, 112
      %v1101 = vpop.permute.xlu0 %1100
      %1102 = vrot.lane.b32.xlu0 %v600, 112
      %v1103 = vpop.permute.xlu0 %1102
      %1104 = vrot.lane.b32.xlu0 %v603, 112
      %v1105 = vpop.permute.xlu0 %1104
      %1106 = vrot.lane.b32.xlu0 %v608, 112
      %v1107 = vpop.permute.xlu0 %1106
      %1108 = vrot.lane.b32.xlu0 %v611, 112
      %v1109 = vpop.permute.xlu0 %1108
      %1110 = vrot.lane.b32.xlu0 %v616, 112
      %v1111 = vpop.permute.xlu0 %1110
      %1112 = vrot.lane.b32.xlu0 %v619, 112
      %v1113 = vpop.permute.xlu0 %1112
      %1114 = vrot.lane.b32.xlu0 %v624, 112
      %v1115 = vpop.permute.xlu0 %1114
      %1116 = vrot.lane.b32.xlu0 %v627, 112
      %v1117 = vpop.permute.xlu0 %1116
      %1118 = vrot.lane.b32.xlu0 %v632, 112
      %v1119 = vpop.permute.xlu0 %1118
      %1120 = vrot.lane.b32.xlu0 %v635, 112
      %v1121 = vpop.permute.xlu0 %1120
      %1122 = vrot.lane.b32.xlu0 %v640, 112
      %v1123 = vpop.permute.xlu0 %1122
      %1124 = vrot.lane.b32.xlu0 %v643, 112
      %v1125 = vpop.permute.xlu0 %1124
      %1126 = vrot.lane.b32.xlu0 %v648, 112
      %v1127 = vpop.permute.xlu0 %1126
      %1128 = vrot.lane.b32.xlu0 %v651, 112
      %v1129 = vpop.permute.xlu0 %1128
      %1130 = vrot.lane.b32.xlu0 %v656, 112
      %v1131 = vpop.permute.xlu0 %1130
      %1132 = vrot.lane.b32.xlu0 %v659, 112
      %v1133 = vpop.permute.xlu0 %1132
      %1134 = vrot.lane.b32.xlu0 %v664, 112
      %v1135 = vpop.permute.xlu0 %1134
      %1136 = vrot.lane.b32.xlu0 %v667, 112
      %v1137 = vpop.permute.xlu0 %1136
      %1138 = vrot.lane.b32.xlu0 %v672, 112
      %v1139 = vpop.permute.xlu0 %1138
      %1140 = vrot.lane.b32.xlu0 %v675, 112
      %v1141 = vpop.permute.xlu0 %1140
      %1142 = vrot.lane.b32.xlu0 %v680, 112
      %v1143 = vpop.permute.xlu0 %1142
      %1144 = vrot.lane.b32.xlu0 %v683, 112
      %v1145 = vpop.permute.xlu0 %1144
      %1146 = vrot.lane.b32.xlu0 %v688, 112
      %v1147 = vpop.permute.xlu0 %1146
      %1148 = vrot.lane.b32.xlu0 %v691, 112
      %v1149 = vpop.permute.xlu0 %1148
      %v1182 = vmul.f32 %v568, %v1087
      %v1183 = vmul.f32 %v571, %v1089
      %v1184 = vmul.f32 %v576, %v1091
      %v1185 = vmul.f32 %v579, %v1093
      %v1186 = vmul.f32 %v584, %v1095
      %v1187 = vmul.f32 %v587, %v1097
      %v1188 = vmul.f32 %v592, %v1099
      %v1189 = vmul.f32 %v595, %v1101
      %v1190 = vmul.f32 %v600, %v1103
      %v1191 = vmul.f32 %v603, %v1105
      %v1192 = vmul.f32 %v608, %v1107
      %v1193 = vmul.f32 %v611, %v1109
      %v1194 = vmul.f32 %v616, %v1111
      %v1195 = vmul.f32 %v619, %v1113
      %v1196 = vmul.f32 %v624, %v1115
      %v1197 = vmul.f32 %v627, %v1117
      %v1198 = vmul.f32 %v632, %v1119
      %v1199 = vmul.f32 %v635, %v1121
      %v1200 = vmul.f32 %v640, %v1123
      %v1201 = vmul.f32 %v643, %v1125
      %v1202 = vmul.f32 %v648, %v1127
      %v1203 = vmul.f32 %v651, %v1129
      %v1204 = vmul.f32 %v656, %v1131
      %v1205 = vmul.f32 %v659, %v1133
      %v1206 = vmul.f32 %v664, %v1135
      %v1207 = vmul.f32 %v667, %v1137
      %v1208 = vmul.f32 %v672, %v1139
      %v1209 = vmul.f32 %v675, %v1141
      %v1210 = vmul.f32 %v680, %v1143
      %v1211 = vmul.f32 %v683, %v1145
      %v1212 = vmul.f32 %v688, %v1147
      %v1213 = vmul.f32 %v691, %v1149
      %v1214 = vadd.f32 %v1182, %v928
      %v1215 = vadd.f32 %v1183, %v931
      %v1216 = vadd.f32 %v1184, %v936
      %v1217 = vadd.f32 %v1185, %v939
      %v1218 = vadd.f32 %v1186, %v944
      %v1219 = vadd.f32 %v1187, %v947
      %v1220 = vadd.f32 %v1188, %v952
      %v1221 = vadd.f32 %v1189, %v955
      %v1222 = vadd.f32 %v1190, %v960
      %v1223 = vadd.f32 %v1191, %v963
      %v1224 = vadd.f32 %v1192, %v968
      %v1225 = vadd.f32 %v1193, %v971
      %v1226 = vadd.f32 %v1194, %v976
      %v1227 = vadd.f32 %v1195, %v979
      %v1228 = vadd.f32 %v1196, %v984
      %v1229 = vadd.f32 %v1197, %v987
      %v1230 = vadd.f32 %v1198, %v992
      %v1231 = vadd.f32 %v1199, %v995
      %v1232 = vadd.f32 %v1200, %v1000
      %v1233 = vadd.f32 %v1201, %v1003
      %v1234 = vadd.f32 %v1202, %v1008
      %v1235 = vadd.f32 %v1203, %v1011
      %v1236 = vadd.f32 %v1204, %v1016
      %v1237 = vadd.f32 %v1205, %v1019
      %v1238 = vadd.f32 %v1206, %v1024
      %v1239 = vadd.f32 %v1207, %v1027
      %v1240 = vadd.f32 %v1208, %v1032
      %v1241 = vadd.f32 %v1209, %v1035
      %v1242 = vadd.f32 %v1210, %v1040
      %v1243 = vadd.f32 %v1211, %v1043
      %v1244 = vadd.f32 %v1212, %v1048
      %v1245 = vadd.f32 %v1213, %v1051
      %vm1246 = vcmp.gt.f32.partialorder %v1214, 0.0
      %vm1247 = vcmp.gt.f32.partialorder %v1215, 0.0
      %vm1248 = vcmp.gt.f32.partialorder %v1216, 0.0
      %vm1249 = vcmp.gt.f32.partialorder %v1217, 0.0
      %vm1250 = vcmp.gt.f32.partialorder %v1218, 0.0
      %vm1251 = vcmp.gt.f32.partialorder %v1219, 0.0
      %vm1252 = vcmp.gt.f32.partialorder %v1220, 0.0
      %vm1253 = vcmp.gt.f32.partialorder %v1221, 0.0
      %vm1254 = vcmp.gt.f32.partialorder %v1222, 0.0
      %vm1255 = vcmp.gt.f32.partialorder %v1223, 0.0
      %vm1256 = vcmp.gt.f32.partialorder %v1224, 0.0
      %vm1257 = vcmp.gt.f32.partialorder %v1225, 0.0
      %vm1258 = vcmp.gt.f32.partialorder %v1226, 0.0
      %vm1259 = vcmp.gt.f32.partialorder %v1227, 0.0
      %vm1260 = vcmp.gt.f32.partialorder %v1228, 0.0
      %vm1261 = vcmp.gt.f32.partialorder %v1229, 0.0
      %vm1262 = vcmp.gt.f32.partialorder %v1230, 0.0
      %vm1263 = vcmp.gt.f32.partialorder %v1231, 0.0
      %vm1264 = vcmp.gt.f32.partialorder %v1232, 0.0
      %vm1265 = vcmp.gt.f32.partialorder %v1233, 0.0
      %vm1266 = vcmp.gt.f32.partialorder %v1234, 0.0
      %vm1267 = vcmp.gt.f32.partialorder %v1235, 0.0
      %vm1268 = vcmp.gt.f32.partialorder %v1236, 0.0
      %vm1269 = vcmp.gt.f32.partialorder %v1237, 0.0
      %vm1270 = vcmp.gt.f32.partialorder %v1238, 0.0
      %vm1271 = vcmp.gt.f32.partialorder %v1239, 0.0
      %vm1272 = vcmp.gt.f32.partialorder %v1240, 0.0
      %vm1273 = vcmp.gt.f32.partialorder %v1241, 0.0
      %vm1274 = vcmp.gt.f32.partialorder %v1242, 0.0
      %vm1275 = vcmp.gt.f32.partialorder %v1243, 0.0
      %vm1276 = vcmp.gt.f32.partialorder %v1244, 0.0
      %vm1277 = vcmp.gt.f32.partialorder %v1245, 0.0
      %v1278 = vmul.f32 %v1214, 0.01
      %v1279 = vmul.f32 %v1215, 0.01
      %v1280 = vmul.f32 %v1216, 0.01
      %v1281 = vmul.f32 %v1217, 0.01
      %v1282 = vmul.f32 %v1218, 0.01
      %v1283 = vmul.f32 %v1219, 0.01
      %v1284 = vmul.f32 %v1220, 0.01
      %v1285 = vmul.f32 %v1221, 0.01
      %v1286 = vmul.f32 %v1222, 0.01
      %v1287 = vmul.f32 %v1223, 0.01
      %v1288 = vmul.f32 %v1224, 0.01
      %v1289 = vmul.f32 %v1225, 0.01
      %v1290 = vmul.f32 %v1226, 0.01
      %v1291 = vmul.f32 %v1227, 0.01
      %v1292 = vmul.f32 %v1228, 0.01
      %v1293 = vmul.f32 %v1229, 0.01
      %v1294 = vmul.f32 %v1230, 0.01
      %v1295 = vmul.f32 %v1231, 0.01
      %v1296 = vmul.f32 %v1232, 0.01
      %v1297 = vmul.f32 %v1233, 0.01
      %v1298 = vmul.f32 %v1234, 0.01
      %v1299 = vmul.f32 %v1235, 0.01
      %v1300 = vmul.f32 %v1236, 0.01
      %v1301 = vmul.f32 %v1237, 0.01
      %v1302 = vmul.f32 %v1238, 0.01
      %v1303 = vmul.f32 %v1239, 0.01
      %v1304 = vmul.f32 %v1240, 0.01
      %v1305 = vmul.f32 %v1241, 0.01
      %v1306 = vmul.f32 %v1242, 0.01
      %v1307 = vmul.f32 %v1243, 0.01
      %v1308 = vmul.f32 %v1244, 0.01
      %v1309 = vmul.f32 %v1245, 0.01
      %v1310 = vsel %vm1246, %v1214, %v1278
      %v1311 = vsel %vm1247, %v1215, %v1279
      %v1312 = vsel %vm1248, %v1216, %v1280
      %v1313 = vsel %vm1249, %v1217, %v1281
      %v1314 = vsel %vm1250, %v1218, %v1282
      %v1315 = vsel %vm1251, %v1219, %v1283
      %v1316 = vsel %vm1252, %v1220, %v1284
      %v1317 = vsel %vm1253, %v1221, %v1285
      %v1318 = vsel %vm1254, %v1222, %v1286
      %v1319 = vsel %vm1255, %v1223, %v1287
      %v1320 = vsel %vm1256, %v1224, %v1288
      %v1321 = vsel %vm1257, %v1225, %v1289
      %v1322 = vsel %vm1258, %v1226, %v1290
      %v1323 = vsel %vm1259, %v1227, %v1291
      %v1324 = vsel %vm1260, %v1228, %v1292
      %v1325 = vsel %vm1261, %v1229, %v1293
      %v1326 = vsel %vm1262, %v1230, %v1294
      %v1327 = vsel %vm1263, %v1231, %v1295
      %v1328 = vsel %vm1264, %v1232, %v1296
      %v1329 = vsel %vm1265, %v1233, %v1297
      %v1330 = vsel %vm1266, %v1234, %v1298
      %v1331 = vsel %vm1267, %v1235, %v1299
      %v1332 = vsel %vm1268, %v1236, %v1300
      %v1333 = vsel %vm1269, %v1237, %v1301
      %v1334 = vsel %vm1270, %v1238, %v1302
      %v1335 = vsel %vm1271, %v1239, %v1303
      %v1336 = vsel %vm1272, %v1240, %v1304
      %v1337 = vsel %vm1273, %v1241, %v1305
      %v1338 = vsel %vm1274, %v1242, %v1306
      %v1339 = vsel %vm1275, %v1243, %v1307
      %v1340 = vsel %vm1276, %v1244, %v1308
      %v1341 = vsel %vm1277, %v1245, %v1309
      %vm1342 = vcmask 130048
      %1343 = vst.msk [vmem:[%s330] sm:$0xff] %vm1342, %v1310
      %1344 = vst.msk [vmem:[%s330 + $0x8] sm:$0xff] %vm1342, %v1311
      %1345 = vst.msk [vmem:[%s330 + $0x10] sm:$0xff] %vm1342, %v1312
      %1346 = vst.msk [vmem:[%s330 + $0x18] sm:$0xff] %vm1342, %v1313
      %1347 = vst.msk [vmem:[%s330 + $0x20] sm:$0xff] %vm1342, %v1314
      %1348 = vst.msk [vmem:[%s330 + $0x28] sm:$0xff] %vm1342, %v1315
      %1349 = vst.msk [vmem:[%s330 + $0x30] sm:$0xff] %vm1342, %v1316
      %1350 = vst.msk [vmem:[%s330 + $0x38] sm:$0xff] %vm1342, %v1317
      %1351 = vst.msk [vmem:[%s330 + $0x40] sm:$0xff] %vm1342, %v1318
      %1352 = vst.msk [vmem:[%s330 + $0x48] sm:$0xff] %vm1342, %v1319
      %1353 = vst.msk [vmem:[%s330 + $0x50] sm:$0xff] %vm1342, %v1320
      %1354 = vst.msk [vmem:[%s330 + $0x58] sm:$0xff] %vm1342, %v1321
      %1355 = vst.msk [vmem:[%s330 + $0x60] sm:$0xff] %vm1342, %v1322
      %1356 = vst.msk [vmem:[%s330 + $0x68] sm:$0xff] %vm1342, %v1323
      %1357 = vst.msk [vmem:[%s330 + $0x70] sm:$0xff] %vm1342, %v1324
      %1358 = vst.msk [vmem:[%s330 + $0x78] sm:$0xff] %vm1342, %v1325
      %1359 = vst.msk [vmem:[%s330 + $0x80] sm:$0xff] %vm1342, %v1326
      %1360 = vst.msk [vmem:[%s330 + $0x88] sm:$0xff] %vm1342, %v1327
      %1361 = vst.msk [vmem:[%s330 + $0x90] sm:$0xff] %vm1342, %v1328
      %1362 = vst.msk [vmem:[%s330 + $0x98] sm:$0xff] %vm1342, %v1329
      %1363 = vst.msk [vmem:[%s330 + $0xa0] sm:$0xff] %vm1342, %v1330
      %1364 = vst.msk [vmem:[%s330 + $0xa8] sm:$0xff] %vm1342, %v1331
      %1365 = vst.msk [vmem:[%s330 + $0xb0] sm:$0xff] %vm1342, %v1332
      %1366 = vst.msk [vmem:[%s330 + $0xb8] sm:$0xff] %vm1342, %v1333
      %1367 = vst.msk [vmem:[%s330 + $0xc0] sm:$0xff] %vm1342, %v1334
      %1368 = vst.msk [vmem:[%s330 + $0xc8] sm:$0xff] %vm1342, %v1335
      %1369 = vst.msk [vmem:[%s330 + $0xd0] sm:$0xff] %vm1342, %v1336
      %1370 = vst.msk [vmem:[%s330 + $0xd8] sm:$0xff] %vm1342, %v1337
      %1371 = vst.msk [vmem:[%s330 + $0xe0] sm:$0xff] %vm1342, %v1338
      %1372 = vst.msk [vmem:[%s330 + $0xe8] sm:$0xff] %vm1342, %v1339
      %1373 = vst.msk [vmem:[%s330 + $0xf0] sm:$0xff] %vm1342, %v1340
      %1374 = vst.msk [vmem:[%s330 + $0xf8] sm:$0xff] %vm1342, %v1341
      %s1375 = smul.u32 32, %s21
      %p1376 = scmp.lt.s32.totalorder %s20, 0
      %s1377 = scalar_select %p1376, %s20, 0
      %p1378 = scmp.lt.s32.totalorder %s1375, 63
      %s1379 = scalar_select %p1378, %s1375, 63
      %s1380 = smul.addr %s1377, 64
      %s1381 = sadd.s32 %s1379, %s1380
      %s1382 = smul.addr %s1381, 8
      %s1383 = scalar_lea.vmem %s5, %s1382
      // Predicated region
      $region41: #{forward.6} parent=39 // pred_check
        %p1384 = pneg %p180
      $region42: #{forward.6} parent=39 // pred_check_branch
        %1386 = sbr.rel (%p1384) target = $region44
      $region43: #{forward.6} parent=39 // pred_region
        %s1387 = smul.u32 32, %s21
      $region44: #{forward.6} parent=39 // pred_fallthru
        _
    $region40: #{forward.6} parent=5 // pred_fallthru
      _
    %p1388 = scmp.le.s32.totalorder 2, %s11
    // Predicated region
    $region45: #{forward.6} parent=5 // pred_check
      %p1389 = pneg %p1388
    $region46: #{forward.6} parent=5 // pred_check_branch
      %1391 = sbr.rel (%p1389) target = $region48
    $region47: #{forward.6} parent=5 // pred_region
      %s1392 = ssub.s32 %s11, 2
      // Predicated region
      $region49: #{forward.6} parent=47 // pred_check
        %p1393 = pneg %p186
      $region50: #{forward.6} parent=47 // pred_check_branch
        %1395 = sbr.rel (%p1393) target = $region52
      $region51: #{forward.6} parent=47 // pred_region
        %s1396 = smul.u32 32, %s23
        %p1397 = scmp.lt.s32.totalorder %s22, 0
        %s1398 = scalar_select %p1397, %s22, 0
        %p1399 = scmp.lt.s32.totalorder %s1396, 63
        %s1400 = scalar_select %p1399, %s1396, 63
        %s1401 = smul.addr %s1398, 64
        %s1402 = sadd.s32 %s1400, %s1401
        %s1403 = smul.addr %s1402, 8
        %s1404 = scalar_lea.vmem %s5, %s1403
      $region52: #{forward.6} parent=47 // pred_fallthru
        _
    $region48: #{forward.6} parent=5 // pred_fallthru
      _
  $region6: #{forward.6} parent=0 // loop_footer
    %s15 = sadd.s32 1, %s11
  $region7: #{forward.6} parent=0 // loop_footer_branch
    %10 = sbr.rel target = $region3
  $region8: #{forward.6} parent=0 // loop_exit
    _

// kernel: forward.9
$region0: #{forward.9}
  #allocation0 [shape = 'u32[]', space=smem, size = 0x4, offset = 0x4, fixed_abs, tag = 'smem constant byte address 0x4 - core index']
  #allocation1 [shape = 'u32[144,128]{1,0:T(1,128)}', space=vmem, size = 0x12000, scoped, tag = 'internal scratch']
  %s0 = inlined_call_operand.vmem [shape: bf16[1,256,48], index: 0, kind: input, shape index: {}]
  %s1 = inlined_call_operand.vmem [shape: bf16[1,48,64], index: 1, kind: input, shape index: {}]
  %s2 = inlined_call_operand.vmem [shape: bf16[1,48,32], index: 2, kind: input, shape index: {}]
  %s3 = inlined_call_operand.vmem [shape: f32[1,1,64], index: 3, kind: input, shape index: {}]
  %s4 = inlined_call_operand.vmem [shape: f32[1,1,32], index: 4, kind: input, shape index: {}]
  %s5 = inlined_call_operand.vmem [shape: f32[1,256,32], index: 5, kind: output, shape index: {}]
  %s6 = sld [smem:[#allocation0]]
  $region30: #{forward.9} parent=0
    _
  %s8 = ssub.s32 1, %s6
  %s9 = scalar_select 0, %s8, %s6
  // Predicated region
  $region2: #{forward.9} parent=0 // pred_check
    _
  $region3: #{forward.9} parent=0 // pred_check_branch
    %11 = sbr.rel (0) target = $region5
  $region4: #{forward.9} parent=0 // pred_region
    _
  $region5: #{forward.9} parent=0 // pred_fallthru
    _
  // Predicated region
  $region6: #{forward.9} parent=0 // pred_check
    _
  $region7: #{forward.9} parent=0 // pred_check_branch
    %13 = sbr.rel (0) target = $region9
  $region8: #{forward.9} parent=0 // pred_region
    _
  $region9: #{forward.9} parent=0 // pred_fallthru
    _
  // Predicated region
  $region10: #{forward.9} parent=0 // pred_check
    _
  $region11: #{forward.9} parent=0 // pred_check_branch
    %15 = sbr.rel (0) target = $region13
  $region12: #{forward.9} parent=0 // pred_region
    _
  $region13: #{forward.9} parent=0 // pred_fallthru
    _
  // Predicated region
  $region14: #{forward.9} parent=0 // pred_check
    _
  $region15: #{forward.9} parent=0 // pred_check_branch
    %17 = sbr.rel (0) target = $region17
  $region16: #{forward.9} parent=0 // pred_region
    _
  $region17: #{forward.9} parent=0 // pred_fallthru
    _
  // Predicated region
  $region18: #{forward.9} parent=0 // pred_check
    _
  $region19: #{forward.9} parent=0 // pred_check_branch
    %19 = sbr.rel (0) target = $region21
  $region20: #{forward.9} parent=0 // pred_region
    _
  $region21: #{forward.9} parent=0 // pred_fallthru
    _
  %v21 = vld [vmem:[%s0] sm:$0xf]
  %v22 = vld [vmem:[%s0 + $0x4] sm:$0xf]
  %v23 = vld [vmem:[%s0 + $0x8] sm:$0xf]
  %v24 = vld [vmem:[%s0 + $0xc] sm:$0xf]
  %v25 = vld [vmem:[%s0 + $0x10] sm:$0xf]
  %v26 = vld [vmem:[%s0 + $0x14] sm:$0xf]
  %v27 = vld [vmem:[%s0 + $0x18] sm:$0xf]
  %v28 = vld [vmem:[%s0 + $0x1c] sm:$0xf]
  %v29 = vld [vmem:[%s0 + $0x20] sm:$0xf]
  %v30 = vld [vmem:[%s0 + $0x24] sm:$0xf]
  %v31 = vld [vmem:[%s0 + $0x28] sm:$0xf]
  %v32 = vld [vmem:[%s0 + $0x2c] sm:$0xf]
  %v33 = vld [vmem:[%s0 + $0x30] sm:$0xf]
  %v34 = vld [vmem:[%s0 + $0x34] sm:$0xf]
  %v35 = vld [vmem:[%s0 + $0x38] sm:$0xf]
  %v36 = vld [vmem:[%s0 + $0x3c] sm:$0xf]
  %v37 = vld [vmem:[%s0 + $0x40] sm:$0xf]
  %v38 = vld [vmem:[%s0 + $0x44] sm:$0xf]
  %v39 = vld [vmem:[%s0 + $0x48] sm:$0xf]
  %v40 = vld [vmem:[%s0 + $0x4c] sm:$0xf]
  %v41 = vld [vmem:[%s0 + $0x50] sm:$0xf]
  %v42 = vld [vmem:[%s0 + $0x54] sm:$0xf]
  %v43 = vld [vmem:[%s0 + $0x58] sm:$0xf]
  %v44 = vld [vmem:[%s0 + $0x5c] sm:$0xf]
  %v45 = vld [vmem:[%s0 + $0x60] sm:$0xf]
  %v46 = vld [vmem:[%s0 + $0x64] sm:$0xf]
  %v47 = vld [vmem:[%s0 + $0x68] sm:$0xf]
  %v48 = vld [vmem:[%s0 + $0x6c] sm:$0xf]
  %v49 = vld [vmem:[%s0 + $0x70] sm:$0xf]
  %v50 = vld [vmem:[%s0 + $0x74] sm:$0xf]
  %v51 = vld [vmem:[%s0 + $0x78] sm:$0xf]
  %v52 = vld [vmem:[%s0 + $0x7c] sm:$0xf]
  %v53 = vld [vmem:[%s1] sm:$0xf]
  %v54 = vld [vmem:[%s1 + $0x4] sm:$0xf]
  %v55 = vld [vmem:[%s1 + $0x8] sm:$0xf]
  %v56 = vld [vmem:[%s1 + $0xc] sm:$0xf]
  %v57 = vld [vmem:[%s1 + $0x10] sm:$0xf]
  %v58 = vld [vmem:[%s1 + $0x14] sm:$0xf]
  %v59 = vld [vmem:[%s3] sm:$0x1]
  %v61 = vlaneseq
  %v62 = vshrl.u32 %v61, 7
  %v63 = vsub.s32 0, %v62
  %v64 = vrot.slane %v59, %v63
  %v98 = vunpack.c.l.b16 %v21
  %v99 = vunpack.c.l.b16 %v22
  %v100 = vunpack.c.l.b16 %v23
  %v101 = vunpack.c.l.b16 %v24
  %v102 = vunpack.c.l.b16 %v25
  %v103 = vunpack.c.l.b16 %v26
  %v104 = vunpack.c.l.b16 %v27
  %v105 = vunpack.c.l.b16 %v28
  %v106 = vunpack.c.l.b16 %v29
  %v107 = vunpack.c.l.b16 %v30
  %v108 = vunpack.c.l.b16 %v31
  %v109 = vunpack.c.l.b16 %v32
  %v110 = vunpack.c.l.b16 %v33
  %v111 = vunpack.c.l.b16 %v34
  %v112 = vunpack.c.l.b16 %v35
  %v113 = vunpack.c.l.b16 %v36
  %v114 = vunpack.c.l.b16 %v37
  %v115 = vunpack.c.l.b16 %v38
  %v116 = vunpack.c.l.b16 %v39
  %v117 = vunpack.c.l.b16 %v40
  %v118 = vunpack.c.l.b16 %v41
  %v119 = vunpack.c.l.b16 %v42
  %v120 = vunpack.c.l.b16 %v43
  %v121 = vunpack.c.l.b16 %v44
  %v122 = vunpack.c.l.b16 %v45
  %v123 = vunpack.c.l.b16 %v46
  %v124 = vunpack.c.l.b16 %v47
  %v125 = vunpack.c.l.b16 %v48
  %v126 = vunpack.c.l.b16 %v49
  %v127 = vunpack.c.l.b16 %v50
  %v128 = vunpack.c.l.b16 %v51
  %v129 = vunpack.c.l.b16 %v52
  %v130 = vpack.c.b16 %v99, %v98
  %v131 = vpack.c.b16 %v101, %v100
  %v132 = vpack.c.b16 %v103, %v102
  %v133 = vpack.c.b16 %v105, %v104
  %v134 = vpack.c.b16 %v107, %v106
  %v135 = vpack.c.b16 %v109, %v108
  %v136 = vpack.c.b16 %v111, %v110
  %v137 = vpack.c.b16 %v113, %v112
  %v138 = vpack.c.b16 %v115, %v114
  %v139 = vpack.c.b16 %v117, %v116
  %v140 = vpack.c.b16 %v119, %v118
  %v141 = vpack.c.b16 %v121, %v120
  %v142 = vpack.c.b16 %v123, %v122
  %v143 = vpack.c.b16 %v125, %v124
  %v144 = vpack.c.b16 %v127, %v126
  %v145 = vpack.c.b16 %v129, %v128
  %v152 = vunpack.c.l.b16 %v53
  %v153 = vunpack.c.l.b16 %v54
  %v154 = vunpack.c.l.b16 %v55
  %v155 = vunpack.c.l.b16 %v56
  %v156 = vunpack.c.l.b16 %v57
  %v157 = vunpack.c.l.b16 %v58
  %v158 = vpack.c.b16 %v153, %v152
  %v159 = vpack.c.b16 %v155, %v154
  %v160 = vpack.c.b16 %v157, %v156
  %vm164 = vcmask 392192
  %v166 = vsel %vm164, %v130, 0
  %v169 = vsel %vm164, %v131, 0
  %v172 = vsel %vm164, %v132, 0
  %v175 = vsel %vm164, %v133, 0
  %v178 = vsel %vm164, %v134, 0
  %v181 = vsel %vm164, %v135, 0
  %v184 = vsel %vm164, %v136, 0
  %v187 = vsel %vm164, %v137, 0
  %v190 = vsel %vm164, %v138, 0
  %v193 = vsel %vm164, %v139, 0
  %v196 = vsel %vm164, %v140, 0
  %v199 = vsel %vm164, %v141, 0
  %v202 = vsel %vm164, %v142, 0
  %v205 = vsel %vm164, %v143, 0
  %v208 = vsel %vm164, %v144, 0
  %v211 = vsel %vm164, %v145, 0
  %213 = vmatprep.subr.bf16.mxu0 0
  %214 = vmatpush1.bf16.msra.mxu0 %v158
  %215 = vmatprep.subr.bf16.mxu0 0
  %216 = vmatpush1.bf16.msra.mxu0 %v159
  %217 = vmatprep.subr.bf16.mxu0 0
  %218 = vmatpush1.bf16.msra.mxu0 %v160
  %219 = vmatprep.subr.bf16.mxu0 0
  %220 = vmatpush1.bf16.msra.mxu0 0
  %221 = vmatprep.subr.bf16.mxu0 0
  %222 = vmatpush1.bf16.msra.mxu0 0
  %223 = vmatprep.subr.bf16.mxu0 0
  %224 = vmatpush1.bf16.msra.mxu0 0
  %225 = vmatprep.subr.bf16.mxu0 0
  %226 = vmatpush1.bf16.msra.mxu0 0
  %227 = vmatprep.subr.bf16.mxu0 0
  %228 = vmatpush1.bf16.msra.mxu0 0
  %229 = vmatprep.subr.bf16.mxu0 0
  %230 = vmatpush1.bf16.msra.mxu0 0
  %231 = vmatprep.subr.bf16.mxu0 0
  %232 = vmatpush1.bf16.msra.mxu0 0
  %233 = vmatprep.subr.bf16.mxu0 0
  %234 = vmatpush1.bf16.msra.mxu0 0
  %235 = vmatprep.subr.bf16.mxu0 0
  %236 = vmatpush1.bf16.msra.mxu0 0
  %237 = vmatprep.subr.bf16.mxu0 0
  %238 = vmatpush1.bf16.msra.mxu0 0
  %239 = vmatprep.subr.bf16.mxu0 0
  %240 = vmatpush1.bf16.msra.mxu0 0
  %241 = vmatprep.subr.bf16.mxu0 0
  %242 = vmatpush1.bf16.msra.mxu0 0
  %243 = vmatprep.subr.bf16.mxu0 0
  %244 = vmatpush1.bf16.msra.mxu0 0
  %245 = vmatprep.mubr.bf16.mxu0 0
  %246 = vmatmul.mubr.bf16.gmra.mrb[0].mxu0 %v166
  %v247 = vpop.f32.mrb[0].mxu0
  %v248 = vadd.f32 %v64, %v247
  %v249 = vpop.f32.mrb[0].mxu0
  %v250 = vpop.f32.mrb[0].mxu0
  %v251 = vadd.f32 %v64, %v250
  %v252 = vpop.f32.mrb[0].mxu0
  %253 = vmatprep.mubr.bf16.mxu0 0
  %254 = vmatmul.mubr.bf16.gmra.mrb[0].mxu0 %v169
  %v255 = vpop.f32.mrb[0].mxu0
  %v256 = vadd.f32 %v64, %v255
  %v257 = vpop.f32.mrb[0].mxu0
  %v258 = vpop.f32.mrb[0].mxu0
  %v259 = vadd.f32 %v64, %v258
  %v260 = vpop.f32.mrb[0].mxu0
  %261 = vmatprep.mubr.bf16.mxu0 0
  %262 = vmatmul.mubr.bf16.gmra.mrb[0].mxu0 %v172
  %v263 = vpop.f32.mrb[0].mxu0
  %v264 = vadd.f32 %v64, %v263
  %v265 = vpop.f32.mrb[0].mxu0
  %v266 = vpop.f32.mrb[0].mxu0
  %v267 = vadd.f32 %v64, %v266
  %v268 = vpop.f32.mrb[0].mxu0
  %269 = vmatprep.mubr.bf16.mxu0 0
  %270 = vmatmul.mubr.bf16.gmra.mrb[0].mxu0 %v175
  %v271 = vpop.f32.mrb[0].mxu0
  %v272 = vadd.f32 %v64, %v271
  %v273 = vpop.f32.mrb[0].mxu0
  %v274 = vpop.f32.mrb[0].mxu0
  %v275 = vadd.f32 %v64, %v274
  %v276 = vpop.f32.mrb[0].mxu0
  %277 = vmatprep.mubr.bf16.mxu0 0
  %278 = vmatmul.mubr.bf16.gmra.mrb[0].mxu0 %v178
  %v279 = vpop.f32.mrb[0].mxu0
  %v280 = vadd.f32 %v64, %v279
  %v281 = vpop.f32.mrb[0].mxu0
  %v282 = vpop.f32.mrb[0].mxu0
  %v283 = vadd.f32 %v64, %v282
  %v284 = vpop.f32.mrb[0].mxu0
  %285 = vmatprep.mubr.bf16.mxu0 0
  %286 = vmatmul.mubr.bf16.gmra.mrb[0].mxu0 %v181
  %v287 = vpop.f32.mrb[0].mxu0
  %v288 = vadd.f32 %v64, %v287
  %v289 = vpop.f32.mrb[0].mxu0
  %v290 = vpop.f32.mrb[0].mxu0
  %v291 = vadd.f32 %v64, %v290
  %v292 = vpop.f32.mrb[0].mxu0
  %293 = vmatprep.mubr.bf16.mxu0 0
  %294 = vmatmul.mubr.bf16.gmra.mrb[0].mxu0 %v184
  %v295 = vpop.f32.mrb[0].mxu0
  %v296 = vadd.f32 %v64, %v295
  %v297 = vpop.f32.mrb[0].mxu0
  %v298 = vpop.f32.mrb[0].mxu0
  %v299 = vadd.f32 %v64, %v298
  %v300 = vpop.f32.mrb[0].mxu0
  %301 = vmatprep.mubr.bf16.mxu0 0
  %302 = vmatmul.mubr.bf16.gmra.mrb[0].mxu0 %v187
  %v303 = vpop.f32.mrb[0].mxu0
  %v304 = vadd.f32 %v64, %v303
  %v305 = vpop.f32.mrb[0].mxu0
  %v306 = vpop.f32.mrb[0].mxu0
  %v307 = vadd.f32 %v64, %v306
  %v308 = vpop.f32.mrb[0].mxu0
  %309 = vmatprep.mubr.bf16.mxu0 0
  %310 = vmatmul.mubr.bf16.gmra.mrb[0].mxu0 %v190
  %v311 = vpop.f32.mrb[0].mxu0
  %v312 = vadd.f32 %v64, %v311
  %v313 = vpop.f32.mrb[0].mxu0
  %v314 = vpop.f32.mrb[0].mxu0
  %v315 = vadd.f32 %v64, %v314
  %v316 = vpop.f32.mrb[0].mxu0
  %317 = vmatprep.mubr.bf16.mxu0 0
  %318 = vmatmul.mubr.bf16.gmra.mrb[0].mxu0 %v193
  %v319 = vpop.f32.mrb[0].mxu0
  %v320 = vadd.f32 %v64, %v319
  %v321 = vpop.f32.mrb[0].mxu0
  %v322 = vpop.f32.mrb[0].mxu0
  %v323 = vadd.f32 %v64, %v322
  %v324 = vpop.f32.mrb[0].mxu0
  %325 = vmatprep.mubr.bf16.mxu0 0
  %326 = vmatmul.mubr.bf16.gmra.mrb[0].mxu0 %v196
  %v327 = vpop.f32.mrb[0].mxu0
  %v328 = vadd.f32 %v64, %v327
  %v329 = vpop.f32.mrb[0].mxu0
  %v330 = vpop.f32.mrb[0].mxu0
  %v331 = vadd.f32 %v64, %v330
  %v332 = vpop.f32.mrb[0].mxu0
  %333 = vmatprep.mubr.bf16.mxu0 0
  %334 = vmatmul.mubr.bf16.gmra.mrb[0].mxu0 %v199
  %v335 = vpop.f32.mrb[0].mxu0
  %v336 = vadd.f32 %v64, %v335
  %v337 = vpop.f32.mrb[0].mxu0
  %v338 = vpop.f32.mrb[0].mxu0
  %v339 = vadd.f32 %v64, %v338
  %v340 = vpop.f32.mrb[0].mxu0
  %341 = vmatprep.mubr.bf16.mxu0 0
  %342 = vmatmul.mubr.bf16.gmra.mrb[0].mxu0 %v202
  %v343 = vpop.f32.mrb[0].mxu0
  %v344 = vadd.f32 %v64, %v343
  %v345 = vpop.f32.mrb[0].mxu0
  %v346 = vpop.f32.mrb[0].mxu0
  %v347 = vadd.f32 %v64, %v346
  %v348 = vpop.f32.mrb[0].mxu0
  %349 = vmatprep.mubr.bf16.mxu0 0
  %350 = vmatmul.mubr.bf16.gmra.mrb[0].mxu0 %v205
  %v351 = vpop.f32.mrb[0].mxu0
  %v352 = vadd.f32 %v64, %v351
  %v353 = vpop.f32.mrb[0].mxu0
  %v354 = vpop.f32.mrb[0].mxu0
  %v355 = vadd.f32 %v64, %v354
  %v356 = vpop.f32.mrb[0].mxu0
  %357 = vmatprep.mubr.bf16.mxu0 0
  %358 = vmatmul.mubr.bf16.gmra.mrb[0].mxu0 %v208
  %v359 = vpop.f32.mrb[0].mxu0
  %v360 = vadd.f32 %v64, %v359
  %v361 = vpop.f32.mrb[0].mxu0
  %v362 = vpop.f32.mrb[0].mxu0
  %v363 = vadd.f32 %v64, %v362
  %v364 = vpop.f32.mrb[0].mxu0
  %365 = vmatprep.mubr.bf16.mxu0 0
  %366 = vmatmul.mubr.bf16.gmra.mrb[0].mxu0 %v211
  %v367 = vpop.f32.mrb[0].mxu0
  %v368 = vadd.f32 %v64, %v367
  %v369 = vpop.f32.mrb[0].mxu0
  %v370 = vpop.f32.mrb[0].mxu0
  %v371 = vadd.f32 %v64, %v370
  %v372 = vpop.f32.mrb[0].mxu0
  %373 = vdwg.mxu0
  %v374 = vmul.bf16 %v21, %v21
  %v375 = vmul.bf16 %v22, %v22
  %v376 = vmul.bf16 %v23, %v23
  %v377 = vmul.bf16 %v24, %v24
  %v378 = vmul.bf16 %v25, %v25
  %v379 = vmul.bf16 %v26, %v26
  %v380 = vmul.bf16 %v27, %v27
  %v381 = vmul.bf16 %v28, %v28
  %v382 = vmul.bf16 %v29, %v29
  %v383 = vmul.bf16 %v30, %v30
  %v384 = vmul.bf16 %v31, %v31
  %v385 = vmul.bf16 %v32, %v32
  %v386 = vmul.bf16 %v33, %v33
  %v387 = vmul.bf16 %v34, %v34
  %v388 = vmul.bf16 %v35, %v35
  %v389 = vmul.bf16 %v36, %v36
  %v390 = vmul.bf16 %v37, %v37
  %v391 = vmul.bf16 %v38, %v38
  %v392 = vmul.bf16 %v39, %v39
  %v393 = vmul.bf16 %v40, %v40
  %v394 = vmul.bf16 %v41, %v41
  %v395 = vmul.bf16 %v42, %v42
  %v396 = vmul.bf16 %v43, %v43
  %v397 = vmul.bf16 %v44, %v44
  %v398 = vmul.bf16 %v45, %v45
  %v399 = vmul.bf16 %v46, %v46
  %v400 = vmul.bf16 %v47, %v47
  %v401 = vmul.bf16 %v48, %v48
  %v402 = vmul.bf16 %v49, %v49
  %v403 = vmul.bf16 %v50, %v50
  %v404 = vmul.bf16 %v51, %v51
  %v405 = vmul.bf16 %v52, %v52
  %v406 = vld [vmem:[%s2] sm:$0xf]
  %v407 = vld [vmem:[%s2 + $0x4] sm:$0xf]
  %v408 = vld [vmem:[%s2 + $0x8] sm:$0xf]
  %v409 = vld [vmem:[%s2 + $0xc] sm:$0xf]
  %v410 = vld [vmem:[%s2 + $0x10] sm:$0xf]
  %v411 = vld [vmem:[%s2 + $0x14] sm:$0xf]
  %v412 = vld [vmem:[%s4] sm:$0x1]
  %v414 = vlaneseq
  %v415 = vshrl.u32 %v414, 7
  %v416 = vsub.s32 0, %v415
  %v417 = vrot.slane %v412, %v416
  %v451 = vunpack.c.l.b16 %v374
  %v452 = vunpack.c.l.b16 %v375
  %v453 = vunpack.c.l.b16 %v376
  %v454 = vunpack.c.l.b16 %v377
  %v455 = vunpack.c.l.b16 %v378
  %v456 = vunpack.c.l.b16 %v379
  %v457 = vunpack.c.l.b16 %v380
  %v458 = vunpack.c.l.b16 %v381
  %v459 = vunpack.c.l.b16 %v382
  %v460 = vunpack.c.l.b16 %v383
  %v461 = vunpack.c.l.b16 %v384
  %v462 = vunpack.c.l.b16 %v385
  %v463 = vunpack.c.l.b16 %v386
  %v464 = vunpack.c.l.b16 %v387
  %v465 = vunpack.c.l.b16 %v388
  %v466 = vunpack.c.l.b16 %v389
  %v467 = vunpack.c.l.b16 %v390
  %v468 = vunpack.c.l.b16 %v391
  %v469 = vunpack.c.l.b16 %v392
  %v470 = vunpack.c.l.b16 %v393
  %v471 = vunpack.c.l.b16 %v394
  %v472 = vunpack.c.l.b16 %v395
  %v473 = vunpack.c.l.b16 %v396
  %v474 = vunpack.c.l.b16 %v397
  %v475 = vunpack.c.l.b16 %v398
  %v476 = vunpack.c.l.b16 %v399
  %v477 = vunpack.c.l.b16 %v400
  %v478 = vunpack.c.l.b16 %v401
  %v479 = vunpack.c.l.b16 %v402
  %v480 = vunpack.c.l.b16 %v403
  %v481 = vunpack.c.l.b16 %v404
  %v482 = vunpack.c.l.b16 %v405
  %v483 = vpack.c.b16 %v452, %v451
  %v484 = vpack.c.b16 %v454, %v453
  %v485 = vpack.c.b16 %v456, %v455
  %v486 = vpack.c.b16 %v458, %v457
  %v487 = vpack.c.b16 %v460, %v459
  %v488 = vpack.c.b16 %v462, %v461
  %v489 = vpack.c.b16 %v464, %v463
  %v490 = vpack.c.b16 %v466, %v465
  %v491 = vpack.c.b16 %v468, %v467
  %v492 = vpack.c.b16 %v470, %v469
  %v493 = vpack.c.b16 %v472, %v471
  %v494 = vpack.c.b16 %v474, %v473
  %v495 = vpack.c.b16 %v476, %v475
  %v496 = vpack.c.b16 %v478, %v477
  %v497 = vpack.c.b16 %v480, %v479
  %v498 = vpack.c.b16 %v482, %v481
  %v505 = vunpack.c.l.b16 %v406
  %v506 = vunpack.c.l.b16 %v407
  %v507 = vunpack.c.l.b16 %v408
  %v508 = vunpack.c.l.b16 %v409
  %v509 = vunpack.c.l.b16 %v410
  %v510 = vunpack.c.l.b16 %v411
  %v511 = vpack.c.b16 %v506, %v505
  %v512 = vpack.c.b16 %v508, %v507
  %v513 = vpack.c.b16 %v510, %v509
  %v518 = vsel %vm164, %v483, 0
  %v521 = vsel %vm164, %v484, 0
  %v524 = vsel %vm164, %v485, 0
  %v527 = vsel %vm164, %v486, 0
  %v530 = vsel %vm164, %v487, 0
  %v533 = vsel %vm164, %v488, 0
  %v536 = vsel %vm164, %v489, 0
  %v539 = vsel %vm164, %v490, 0
  %v542 = vsel %vm164, %v491, 0
  %v545 = vsel %vm164, %v492, 0
  %v548 = vsel %vm164, %v493, 0
  %v551 = vsel %vm164, %v494, 0
  %v554 = vsel %vm164, %v495, 0
  %v557 = vsel %vm164, %v496, 0
  %v560 = vsel %vm164, %v497, 0
  %v563 = vsel %vm164, %v498, 0
  %565 = vmatprep.subr.bf16.mxu0 0
  %566 = vmatpush1.bf16.msra.mxu0 %v511
  %567 = vmatprep.subr.bf16.mxu0 0
  %568 = vmatpush1.bf16.msra.mxu0 %v512
  %569 = vmatprep.subr.bf16.mxu0 0
  %570 = vmatpush1.bf16.msra.mxu0 %v513
  %571 = vmatprep.subr.bf16.mxu0 0
  %572 = vmatpush1.bf16.msra.mxu0 0
  %573 = vmatprep.subr.bf16.mxu0 0
  %574 = vmatpush1.bf16.msra.mxu0 0
  %575 = vmatprep.subr.bf16.mxu0 0
  %576 = vmatpush1.bf16.msra.mxu0 0
  %577 = vmatprep.subr.bf16.mxu0 0
  %578 = vmatpush1.bf16.msra.mxu0 0
  %579 = vmatprep.subr.bf16.mxu0 0
  %580 = vmatpush1.bf16.msra.mxu0 0
  %581 = vmatprep.subr.bf16.mxu0 0
  %582 = vmatpush1.bf16.msra.mxu0 0
  %583 = vmatprep.subr.bf16.mxu0 0
  %584 = vmatpush1.bf16.msra.mxu0 0
  %585 = vmatprep.subr.bf16.mxu0 0
  %586 = vmatpush1.bf16.msra.mxu0 0
  %587 = vmatprep.subr.bf16.mxu0 0
  %588 = vmatpush1.bf16.msra.mxu0 0
  %589 = vmatprep.subr.bf16.mxu0 0
  %590 = vmatpush1.bf16.msra.mxu0 0
  %591 = vmatprep.subr.bf16.mxu0 0
  %592 = vmatpush1.bf16.msra.mxu0 0
  %593 = vmatprep.subr.bf16.mxu0 0
  %594 = vmatpush1.bf16.msra.mxu0 0
  %595 = vmatprep.subr.bf16.mxu0 0
  %596 = vmatpush1.bf16.msra.mxu0 0
  %597 = vmatprep.mubr.bf16.mxu0 0
  %598 = vmatmul.mubr.bf16.gmra.mrb[0].mxu0 %v518
  %v599 = vpop.f32.mrb[0].mxu0
  %v600 = vadd.f32 %v417, %v599
  %v601 = vpop.f32.mrb[0].mxu0
  %v602 = vpop.f32.mrb[0].mxu0
  %v603 = vadd.f32 %v417, %v602
  %v604 = vpop.f32.mrb[0].mxu0
  %605 = vmatprep.mubr.bf16.mxu0 0
  %606 = vmatmul.mubr.bf16.gmra.mrb[0].mxu0 %v521
  %v607 = vpop.f32.mrb[0].mxu0
  %v608 = vadd.f32 %v417, %v607
  %v609 = vpop.f32.mrb[0].mxu0
  %v610 = vpop.f32.mrb[0].mxu0
  %v611 = vadd.f32 %v417, %v610
  %v612 = vpop.f32.mrb[0].mxu0
  %613 = vmatprep.mubr.bf16.mxu0 0
  %614 = vmatmul.mubr.bf16.gmra.mrb[0].mxu0 %v524
  %v615 = vpop.f32.mrb[0].mxu0
  %v616 = vadd.f32 %v417, %v615
  %v617 = vpop.f32.mrb[0].mxu0
  %v618 = vpop.f32.mrb[0].mxu0
  %v619 = vadd.f32 %v417, %v618
  %v620 = vpop.f32.mrb[0].mxu0
  %621 = vmatprep.mubr.bf16.mxu0 0
  %622 = vmatmul.mubr.bf16.gmra.mrb[0].mxu0 %v527
  %v623 = vpop.f32.mrb[0].mxu0
  %v624 = vadd.f32 %v417, %v623
  %v625 = vpop.f32.mrb[0].mxu0
  %v626 = vpop.f32.mrb[0].mxu0
  %v627 = vadd.f32 %v417, %v626
  %v628 = vpop.f32.mrb[0].mxu0
  %629 = vmatprep.mubr.bf16.mxu0 0
  %630 = vmatmul.mubr.bf16.gmra.mrb[0].mxu0 %v530
  %v631 = vpop.f32.mrb[0].mxu0
  %v632 = vadd.f32 %v417, %v631
  %v633 = vpop.f32.mrb[0].mxu0
  %v634 = vpop.f32.mrb[0].mxu0
  %v635 = vadd.f32 %v417, %v634
  %v636 = vpop.f32.mrb[0].mxu0
  %637 = vmatprep.mubr.bf16.mxu0 0
  %638 = vmatmul.mubr.bf16.gmra.mrb[0].mxu0 %v533
  %v639 = vpop.f32.mrb[0].mxu0
  %v640 = vadd.f32 %v417, %v639
  %v641 = vpop.f32.mrb[0].mxu0
  %v642 = vpop.f32.mrb[0].mxu0
  %v643 = vadd.f32 %v417, %v642
  %v644 = vpop.f32.mrb[0].mxu0
  %645 = vmatprep.mubr.bf16.mxu0 0
  %646 = vmatmul.mubr.bf16.gmra.mrb[0].mxu0 %v536
  %v647 = vpop.f32.mrb[0].mxu0
  %v648 = vadd.f32 %v417, %v647
  %v649 = vpop.f32.mrb[0].mxu0
  %v650 = vpop.f32.mrb[0].mxu0
  %v651 = vadd.f32 %v417, %v650
  %v652 = vpop.f32.mrb[0].mxu0
  %653 = vmatprep.mubr.bf16.mxu0 0
  %654 = vmatmul.mubr.bf16.gmra.mrb[0].mxu0 %v539
  %v655 = vpop.f32.mrb[0].mxu0
  %v656 = vadd.f32 %v417, %v655
  %v657 = vpop.f32.mrb[0].mxu0
  %v658 = vpop.f32.mrb[0].mxu0
  %v659 = vadd.f32 %v417, %v658
  %v660 = vpop.f32.mrb[0].mxu0
  %661 = vmatprep.mubr.bf16.mxu0 0
  %662 = vmatmul.mubr.bf16.gmra.mrb[0].mxu0 %v542
  %v663 = vpop.f32.mrb[0].mxu0
  %v664 = vadd.f32 %v417, %v663
  %v665 = vpop.f32.mrb[0].mxu0
  %v666 = vpop.f32.mrb[0].mxu0
  %v667 = vadd.f32 %v417, %v666
  %v668 = vpop.f32.mrb[0].mxu0
  %669 = vmatprep.mubr.bf16.mxu0 0
  %670 = vmatmul.mubr.bf16.gmra.mrb[0].mxu0 %v545
  %v671 = vpop.f32.mrb[0].mxu0
  %v672 = vadd.f32 %v417, %v671
  %v673 = vpop.f32.mrb[0].mxu0
  %v674 = vpop.f32.mrb[0].mxu0
  %v675 = vadd.f32 %v417, %v674
  %v676 = vpop.f32.mrb[0].mxu0
  %677 = vmatprep.mubr.bf16.mxu0 0
  %678 = vmatmul.mubr.bf16.gmra.mrb[0].mxu0 %v548
  %v679 = vpop.f32.mrb[0].mxu0
  %v680 = vadd.f32 %v417, %v679
  %v681 = vpop.f32.mrb[0].mxu0
  %v682 = vpop.f32.mrb[0].mxu0
  %v683 = vadd.f32 %v417, %v682
  %v684 = vpop.f32.mrb[0].mxu0
  %685 = vmatprep.mubr.bf16.mxu0 0
  %686 = vmatmul.mubr.bf16.gmra.mrb[0].mxu0 %v551
  %v687 = vpop.f32.mrb[0].mxu0
  %v688 = vadd.f32 %v417, %v687
  %v689 = vpop.f32.mrb[0].mxu0
  %v690 = vpop.f32.mrb[0].mxu0
  %v691 = vadd.f32 %v417, %v690
  %v692 = vpop.f32.mrb[0].mxu0
  %693 = vmatprep.mubr.bf16.mxu0 0
  %694 = vmatmul.mubr.bf16.gmra.mrb[0].mxu0 %v554
  %v695 = vpop.f32.mrb[0].mxu0
  %v696 = vadd.f32 %v417, %v695
  %v697 = vpop.f32.mrb[0].mxu0
  %v698 = vpop.f32.mrb[0].mxu0
  %v699 = vadd.f32 %v417, %v698
  %v700 = vpop.f32.mrb[0].mxu0
  %701 = vmatprep.mubr.bf16.mxu0 0
  %702 = vmatmul.mubr.bf16.gmra.mrb[0].mxu0 %v557
  %v703 = vpop.f32.mrb[0].mxu0
  %v704 = vadd.f32 %v417, %v703
  %v705 = vpop.f32.mrb[0].mxu0
  %v706 = vpop.f32.mrb[0].mxu0
  %v707 = vadd.f32 %v417, %v706
  %v708 = vpop.f32.mrb[0].mxu0
  %709 = vmatprep.mubr.bf16.mxu0 0
  %710 = vmatmul.mubr.bf16.gmra.mrb[0].mxu0 %v560
  %v711 = vpop.f32.mrb[0].mxu0
  %v712 = vadd.f32 %v417, %v711
  %v713 = vpop.f32.mrb[0].mxu0
  %v714 = vpop.f32.mrb[0].mxu0
  %v715 = vadd.f32 %v417, %v714
  %v716 = vpop.f32.mrb[0].mxu0
  %717 = vmatprep.mubr.bf16.mxu0 0
  %718 = vmatmul.mubr.bf16.gmra.mrb[0].mxu0 %v563
  %v719 = vpop.f32.mrb[0].mxu0
  %v720 = vadd.f32 %v417, %v719
  %v721 = vpop.f32.mrb[0].mxu0
  %v722 = vpop.f32.mrb[0].mxu0
  %v723 = vadd.f32 %v417, %v722
  %v724 = vpop.f32.mrb[0].mxu0
  %725 = vdwg.mxu0
  %758 = vrot.lane.b32.xlu0 %v248, 96
  %v759 = vpop.permute.xlu0 %758
  %760 = vrot.lane.b32.xlu0 %v251, 96
  %v761 = vpop.permute.xlu0 %760
  %762 = vrot.lane.b32.xlu0 %v256, 96
  %v763 = vpop.permute.xlu0 %762
  %764 = vrot.lane.b32.xlu0 %v259, 96
  %v765 = vpop.permute.xlu0 %764
  %766 = vrot.lane.b32.xlu0 %v264, 96
  %v767 = vpop.permute.xlu0 %766
  %768 = vrot.lane.b32.xlu0 %v267, 96
  %v769 = vpop.permute.xlu0 %768
  %770 = vrot.lane.b32.xlu0 %v272, 96
  %v771 = vpop.permute.xlu0 %770
  %772 = vrot.lane.b32.xlu0 %v275, 96
  %v773 = vpop.permute.xlu0 %772
  %774 = vrot.lane.b32.xlu0 %v280, 96
  %v775 = vpop.permute.xlu0 %774
  %776 = vrot.lane.b32.xlu0 %v283, 96
  %v777 = vpop.permute.xlu0 %776
  %778 = vrot.lane.b32.xlu0 %v288, 96
  %v779 = vpop.permute.xlu0 %778
  %780 = vrot.lane.b32.xlu0 %v291, 96
  %v781 = vpop.permute.xlu0 %780
  %782 = vrot.lane.b32.xlu0 %v296, 96
  %v783 = vpop.permute.xlu0 %782
  %784 = vrot.lane.b32.xlu0 %v299, 96
  %v785 = vpop.permute.xlu0 %784
  %786 = vrot.lane.b32.xlu0 %v304, 96
  %v787 = vpop.permute.xlu0 %786
  %788 = vrot.lane.b32.xlu0 %v307, 96
  %v789 = vpop.permute.xlu0 %788
  %790 = vrot.lane.b32.xlu0 %v312, 96
  %v791 = vpop.permute.xlu0 %790
  %792 = vrot.lane.b32.xlu0 %v315, 96
  %v793 = vpop.permute.xlu0 %792
  %794 = vrot.lane.b32.xlu0 %v320, 96
  %v795 = vpop.permute.xlu0 %794
  %796 = vrot.lane.b32.xlu0 %v323, 96
  %v797 = vpop.permute.xlu0 %796
  %798 = vrot.lane.b32.xlu0 %v328, 96
  %v799 = vpop.permute.xlu0 %798
  %800 = vrot.lane.b32.xlu0 %v331, 96
  %v801 = vpop.permute.xlu0 %800
  %802 = vrot.lane.b32.xlu0 %v336, 96
  %v803 = vpop.permute.xlu0 %802
  %804 = vrot.lane.b32.xlu0 %v339, 96
  %v805 = vpop.permute.xlu0 %804
  %806 = vrot.lane.b32.xlu0 %v344, 96
  %v807 = vpop.permute.xlu0 %806
  %808 = vrot.lane.b32.xlu0 %v347, 96
  %v809 = vpop.permute.xlu0 %808
  %810 = vrot.lane.b32.xlu0 %v352, 96
  %v811 = vpop.permute.xlu0 %810
  %812 = vrot.lane.b32.xlu0 %v355, 96
  %v813 = vpop.permute.xlu0 %812
  %814 = vrot.lane.b32.xlu0 %v360, 96
  %v815 = vpop.permute.xlu0 %814
  %816 = vrot.lane.b32.xlu0 %v363, 96
  %v817 = vpop.permute.xlu0 %816
  %818 = vrot.lane.b32.xlu0 %v368, 96
  %v819 = vpop.permute.xlu0 %818
  %820 = vrot.lane.b32.xlu0 %v371, 96
  %v821 = vpop.permute.xlu0 %820
  %v854 = vmul.f32 %v248, %v759
  %v855 = vmul.f32 %v251, %v761
  %v856 = vmul.f32 %v256, %v763
  %v857 = vmul.f32 %v259, %v765
  %v858 = vmul.f32 %v264, %v767
  %v859 = vmul.f32 %v267, %v769
  %v860 = vmul.f32 %v272, %v771
  %v861 = vmul.f32 %v275, %v773
  %v862 = vmul.f32 %v280, %v775
  %v863 = vmul.f32 %v283, %v777
  %v864 = vmul.f32 %v288, %v779
  %v865 = vmul.f32 %v291, %v781
  %v866 = vmul.f32 %v296, %v783
  %v867 = vmul.f32 %v299, %v785
  %v868 = vmul.f32 %v304, %v787
  %v869 = vmul.f32 %v307, %v789
  %v870 = vmul.f32 %v312, %v791
  %v871 = vmul.f32 %v315, %v793
  %v872 = vmul.f32 %v320, %v795
  %v873 = vmul.f32 %v323, %v797
  %v874 = vmul.f32 %v328, %v799
  %v875 = vmul.f32 %v331, %v801
  %v876 = vmul.f32 %v336, %v803
  %v877 = vmul.f32 %v339, %v805
  %v878 = vmul.f32 %v344, %v807
  %v879 = vmul.f32 %v347, %v809
  %v880 = vmul.f32 %v352, %v811
  %v881 = vmul.f32 %v355, %v813
  %v882 = vmul.f32 %v360, %v815
  %v883 = vmul.f32 %v363, %v817
  %v884 = vmul.f32 %v368, %v819
  %v885 = vmul.f32 %v371, %v821
  %v886 = vadd.f32 %v854, %v600
  %v887 = vadd.f32 %v855, %v603
  %v888 = vadd.f32 %v856, %v608
  %v889 = vadd.f32 %v857, %v611
  %v890 = vadd.f32 %v858, %v616
  %v891 = vadd.f32 %v859, %v619
  %v892 = vadd.f32 %v860, %v624
  %v893 = vadd.f32 %v861, %v627
  %v894 = vadd.f32 %v862, %v632
  %v895 = vadd.f32 %v863, %v635
  %v896 = vadd.f32 %v864, %v640
  %v897 = vadd.f32 %v865, %v643
  %v898 = vadd.f32 %v866, %v648
  %v899 = vadd.f32 %v867, %v651
  %v900 = vadd.f32 %v868, %v656
  %v901 = vadd.f32 %v869, %v659
  %v902 = vadd.f32 %v870, %v664
  %v903 = vadd.f32 %v871, %v667
  %v904 = vadd.f32 %v872, %v672
  %v905 = vadd.f32 %v873, %v675
  %v906 = vadd.f32 %v874, %v680
  %v907 = vadd.f32 %v875, %v683
  %v908 = vadd.f32 %v876, %v688
  %v909 = vadd.f32 %v877, %v691
  %v910 = vadd.f32 %v878, %v696
  %v911 = vadd.f32 %v879, %v699
  %v912 = vadd.f32 %v880, %v704
  %v913 = vadd.f32 %v881, %v707
  %v914 = vadd.f32 %v882, %v712
  %v915 = vadd.f32 %v883, %v715
  %v916 = vadd.f32 %v884, %v720
  %v917 = vadd.f32 %v885, %v723
  %vm918 = vcmp.gt.f32.partialorder %v886, 0.0
  %vm919 = vcmp.gt.f32.partialorder %v887, 0.0
  %vm920 = vcmp.gt.f32.partialorder %v888, 0.0
  %vm921 = vcmp.gt.f32.partialorder %v889, 0.0
  %vm922 = vcmp.gt.f32.partialorder %v890, 0.0
  %vm923 = vcmp.gt.f32.partialorder %v891, 0.0
  %vm924 = vcmp.gt.f32.partialorder %v892, 0.0
  %vm925 = vcmp.gt.f32.partialorder %v893, 0.0
  %vm926 = vcmp.gt.f32.partialorder %v894, 0.0
  %vm927 = vcmp.gt.f32.partialorder %v895, 0.0
  %vm928 = vcmp.gt.f32.partialorder %v896, 0.0
  %vm929 = vcmp.gt.f32.partialorder %v897, 0.0
  %vm930 = vcmp.gt.f32.partialorder %v898, 0.0
  %vm931 = vcmp.gt.f32.partialorder %v899, 0.0
  %vm932 = vcmp.gt.f32.partialorder %v900, 0.0
  %vm933 = vcmp.gt.f32.partialorder %v901, 0.0
  %vm934 = vcmp.gt.f32.partialorder %v902, 0.0
  %vm935 = vcmp.gt.f32.partialorder %v903, 0.0
  %vm936 = vcmp.gt.f32.partialorder %v904, 0.0
  %vm937 = vcmp.gt.f32.partialorder %v905, 0.0
  %vm938 = vcmp.gt.f32.partialorder %v906, 0.0
  %vm939 = vcmp.gt.f32.partialorder %v907, 0.0
  %vm940 = vcmp.gt.f32.partialorder %v908, 0.0
  %vm941 = vcmp.gt.f32.partialorder %v909, 0.0
  %vm942 = vcmp.gt.f32.partialorder %v910, 0.0
  %vm943 = vcmp.gt.f32.partialorder %v911, 0.0
  %vm944 = vcmp.gt.f32.partialorder %v912, 0.0
  %vm945 = vcmp.gt.f32.partialorder %v913, 0.0
  %vm946 = vcmp.gt.f32.partialorder %v914, 0.0
  %vm947 = vcmp.gt.f32.partialorder %v915, 0.0
  %vm948 = vcmp.gt.f32.partialorder %v916, 0.0
  %vm949 = vcmp.gt.f32.partialorder %v917, 0.0
  %v950 = vmul.f32 %v886, 0.01
  %v951 = vmul.f32 %v887, 0.01
  %v952 = vmul.f32 %v888, 0.01
  %v953 = vmul.f32 %v889, 0.01
  %v954 = vmul.f32 %v890, 0.01
  %v955 = vmul.f32 %v891, 0.01
  %v956 = vmul.f32 %v892, 0.01
  %v957 = vmul.f32 %v893, 0.01
  %v958 = vmul.f32 %v894, 0.01
  %v959 = vmul.f32 %v895, 0.01
  %v960 = vmul.f32 %v896, 0.01
  %v961 = vmul.f32 %v897, 0.01
  %v962 = vmul.f32 %v898, 0.01
  %v963 = vmul.f32 %v899, 0.01
  %v964 = vmul.f32 %v900, 0.01
  %v965 = vmul.f32 %v901, 0.01
  %v966 = vmul.f32 %v902, 0.01
  %v967 = vmul.f32 %v903, 0.01
  %v968 = vmul.f32 %v904, 0.01
  %v969 = vmul.f32 %v905, 0.01
  %v970 = vmul.f32 %v906, 0.01
  %v971 = vmul.f32 %v907, 0.01
  %v972 = vmul.f32 %v908, 0.01
  %v973 = vmul.f32 %v909, 0.01
  %v974 = vmul.f32 %v910, 0.01
  %v975 = vmul.f32 %v911, 0.01
  %v976 = vmul.f32 %v912, 0.01
  %v977 = vmul.f32 %v913, 0.01
  %v978 = vmul.f32 %v914, 0.01
  %v979 = vmul.f32 %v915, 0.01
  %v980 = vmul.f32 %v916, 0.01
  %v981 = vmul.f32 %v917, 0.01
  %v982 = vsel %vm918, %v886, %v950
  %v983 = vsel %vm919, %v887, %v951
  %v984 = vsel %vm920, %v888, %v952
  %v985 = vsel %vm921, %v889, %v953
  %v986 = vsel %vm922, %v890, %v954
  %v987 = vsel %vm923, %v891, %v955
  %v988 = vsel %vm924, %v892, %v956
  %v989 = vsel %vm925, %v893, %v957
  %v990 = vsel %vm926, %v894, %v958
  %v991 = vsel %vm927, %v895, %v959
  %v992 = vsel %vm928, %v896, %v960
  %v993 = vsel %vm929, %v897, %v961
  %v994 = vsel %vm930, %v898, %v962
  %v995 = vsel %vm931, %v899, %v963
  %v996 = vsel %vm932, %v900, %v964
  %v997 = vsel %vm933, %v901, %v965
  %v998 = vsel %vm934, %v902, %v966
  %v999 = vsel %vm935, %v903, %v967
  %v1000 = vsel %vm936, %v904, %v968
  %v1001 = vsel %vm937, %v905, %v969
  %v1002 = vsel %vm938, %v906, %v970
  %v1003 = vsel %vm939, %v907, %v971
  %v1004 = vsel %vm940, %v908, %v972
  %v1005 = vsel %vm941, %v909, %v973
  %v1006 = vsel %vm942, %v910, %v974
  %v1007 = vsel %vm943, %v911, %v975
  %v1008 = vsel %vm944, %v912, %v976
  %v1009 = vsel %vm945, %v913, %v977
  %v1010 = vsel %vm946, %v914, %v978
  %v1011 = vsel %vm947, %v915, %v979
  %v1012 = vsel %vm948, %v916, %v980
  %v1013 = vsel %vm949, %v917, %v981
  %vm1014 = vcmask 261120
  %1015 = vst.msk [vmem:[%s5] sm:$0xff] %vm1014, %v982
  %1016 = vst.msk [vmem:[%s5 + $0x8] sm:$0xff] %vm1014, %v983
  %1017 = vst.msk [vmem:[%s5 + $0x10] sm:$0xff] %vm1014, %v984
  %1018 = vst.msk [vmem:[%s5 + $0x18] sm:$0xff] %vm1014, %v985
  %1019 = vst.msk [vmem:[%s5 + $0x20] sm:$0xff] %vm1014, %v986
  %1020 = vst.msk [vmem:[%s5 + $0x28] sm:$0xff] %vm1014, %v987
  %1021 = vst.msk [vmem:[%s5 + $0x30] sm:$0xff] %vm1014, %v988
  %1022 = vst.msk [vmem:[%s5 + $0x38] sm:$0xff] %vm1014, %v989
  %1023 = vst.msk [vmem:[%s5 + $0x40] sm:$0xff] %vm1014, %v990
  %1024 = vst.msk [vmem:[%s5 + $0x48] sm:$0xff] %vm1014, %v991
  %1025 = vst.msk [vmem:[%s5 + $0x50] sm:$0xff] %vm1014, %v992
  %1026 = vst.msk [vmem:[%s5 + $0x58] sm:$0xff] %vm1014, %v993
  %1027 = vst.msk [vmem:[%s5 + $0x60] sm:$0xff] %vm1014, %v994
  %1028 = vst.msk [vmem:[%s5 + $0x68] sm:$0xff] %vm1014, %v995
  %1029 = vst.msk [vmem:[%s5 + $0x70] sm:$0xff] %vm1014, %v996
  %1030 = vst.msk [vmem:[%s5 + $0x78] sm:$0xff] %vm1014, %v997
  %1031 = vst.msk [vmem:[%s5 + $0x80] sm:$0xff] %vm1014, %v998
  %1032 = vst.msk [vmem:[%s5 + $0x88] sm:$0xff] %vm1014, %v999
  %1033 = vst.msk [vmem:[%s5 + $0x90] sm:$0xff] %vm1014, %v1000
  %1034 = vst.msk [vmem:[%s5 + $0x98] sm:$0xff] %vm1014, %v1001
  %1035 = vst.msk [vmem:[%s5 + $0xa0] sm:$0xff] %vm1014, %v1002
  %1036 = vst.msk [vmem:[%s5 + $0xa8] sm:$0xff] %vm1014, %v1003
  %1037 = vst.msk [vmem:[%s5 + $0xb0] sm:$0xff] %vm1014, %v1004
  %1038 = vst.msk [vmem:[%s5 + $0xb8] sm:$0xff] %vm1014, %v1005
  %1039 = vst.msk [vmem:[%s5 + $0xc0] sm:$0xff] %vm1014, %v1006
  %1040 = vst.msk [vmem:[%s5 + $0xc8] sm:$0xff] %vm1014, %v1007
  %1041 = vst.msk [vmem:[%s5 + $0xd0] sm:$0xff] %vm1014, %v1008
  %1042 = vst.msk [vmem:[%s5 + $0xd8] sm:$0xff] %vm1014, %v1009
  %1043 = vst.msk [vmem:[%s5 + $0xe0] sm:$0xff] %vm1014, %v1010
  %1044 = vst.msk [vmem:[%s5 + $0xe8] sm:$0xff] %vm1014, %v1011
  %1045 = vst.msk [vmem:[%s5 + $0xf0] sm:$0xff] %vm1014, %v1012
  %1046 = vst.msk [vmem:[%s5 + $0xf8] sm:$0xff] %vm1014, %v1013
  // Predicated region
  $region22: #{forward.9} parent=0 // pred_check
    _
  $region23: #{forward.9} parent=0 // pred_check_branch
    %1048 = sbr.rel (0) target = $region25
  $region24: #{forward.9} parent=0 // pred_region
    _
  $region25: #{forward.9} parent=0 // pred_fallthru
    _
  // Predicated region
  $region26: #{forward.9} parent=0 // pred_check
    _
  $region27: #{forward.9} parent=0 // pred_check_branch
    %1050 = sbr.rel (0) target = $region29
  $region28: #{forward.9} parent=0 // pred_region
    _
  $region29: #{forward.9} parent=0 // pred_fallthru
    _

// kernel: forward.10
$region0: #{forward.10}
  #allocation0 [shape = 'u32[]', space=smem, size = 0x4, offset = 0x4, fixed_abs, tag = 'smem constant byte address 0x4 - core index']
  #allocation1 [shape = 'u32[144,128]{1,0:T(1,128)}', space=vmem, size = 0x12000, scoped, tag = 'internal scratch']
  %s0 = inlined_call_operand.vmem [shape: bf16[1,256,96], index: 0, kind: input, shape index: {}]
  %s1 = inlined_call_operand.vmem [shape: bf16[1,96,128], index: 1, kind: input, shape index: {}]
  %s2 = inlined_call_operand.vmem [shape: bf16[1,96,64], index: 2, kind: input, shape index: {}]
  %s3 = inlined_call_operand.vmem [shape: f32[1,1,128], index: 3, kind: input, shape index: {}]
  %s4 = inlined_call_operand.vmem [shape: f32[1,1,64], index: 4, kind: input, shape index: {}]
  %s5 = inlined_call_operand.vmem [shape: f32[1,256,64], index: 5, kind: output, shape index: {}]
  %s6 = sld [smem:[#allocation0]]
  $region30: #{forward.10} parent=0
    _
  %s8 = ssub.s32 1, %s6
  %s9 = scalar_select 0, %s8, %s6
  // Predicated region
  $region2: #{forward.10} parent=0 // pred_check
    _
  $region3: #{forward.10} parent=0 // pred_check_branch
    %11 = sbr.rel (0) target = $region5
  $region4: #{forward.10} parent=0 // pred_region
    _
  $region5: #{forward.10} parent=0 // pred_fallthru
    _
  // Predicated region
  $region6: #{forward.10} parent=0 // pred_check
    _
  $region7: #{forward.10} parent=0 // pred_check_branch
    %13 = sbr.rel (0) target = $region9
  $region8: #{forward.10} parent=0 // pred_region
    _
  $region9: #{forward.10} parent=0 // pred_fallthru
    _
  // Predicated region
  $region10: #{forward.10} parent=0 // pred_check
    _
  $region11: #{forward.10} parent=0 // pred_check_branch
    %15 = sbr.rel (0) target = $region13
  $region12: #{forward.10} parent=0 // pred_region
    _
  $region13: #{forward.10} parent=0 // pred_fallthru
    _
  // Predicated region
  $region14: #{forward.10} parent=0 // pred_check
    _
  $region15: #{forward.10} parent=0 // pred_check_branch
    %17 = sbr.rel (0) target = $region17
  $region16: #{forward.10} parent=0 // pred_region
    _
  $region17: #{forward.10} parent=0 // pred_fallthru
    _
  // Predicated region
  $region18: #{forward.10} parent=0 // pred_check
    _
  $region19: #{forward.10} parent=0 // pred_check_branch
    %19 = sbr.rel (0) target = $region21
  $region20: #{forward.10} parent=0 // pred_region
    _
  $region21: #{forward.10} parent=0 // pred_fallthru
    _
  %v21 = vld [vmem:[%s0] sm:$0xf]
  %v22 = vld [vmem:[%s0 + $0x4] sm:$0xf]
  %v23 = vld [vmem:[%s0 + $0x8] sm:$0xf]
  %v24 = vld [vmem:[%s0 + $0xc] sm:$0xf]
  %v25 = vld [vmem:[%s0 + $0x10] sm:$0xf]
  %v26 = vld [vmem:[%s0 + $0x14] sm:$0xf]
  %v27 = vld [vmem:[%s0 + $0x18] sm:$0xf]
  %v28 = vld [vmem:[%s0 + $0x1c] sm:$0xf]
  %v29 = vld [vmem:[%s0 + $0x20] sm:$0xf]
  %v30 = vld [vmem:[%s0 + $0x24] sm:$0xf]
  %v31 = vld [vmem:[%s0 + $0x28] sm:$0xf]
  %v32 = vld [vmem:[%s0 + $0x2c] sm:$0xf]
  %v33 = vld [vmem:[%s0 + $0x30] sm:$0xf]
  %v34 = vld [vmem:[%s0 + $0x34] sm:$0xf]
  %v35 = vld [vmem:[%s0 + $0x38] sm:$0xf]
  %v36 = vld [vmem:[%s0 + $0x3c] sm:$0xf]
  %v37 = vld [vmem:[%s0 + $0x40] sm:$0xf]
  %v38 = vld [vmem:[%s0 + $0x44] sm:$0xf]
  %v39 = vld [vmem:[%s0 + $0x48] sm:$0xf]
  %v40 = vld [vmem:[%s0 + $0x4c] sm:$0xf]
  %v41 = vld [vmem:[%s0 + $0x50] sm:$0xf]
  %v42 = vld [vmem:[%s0 + $0x54] sm:$0xf]
  %v43 = vld [vmem:[%s0 + $0x58] sm:$0xf]
  %v44 = vld [vmem:[%s0 + $0x5c] sm:$0xf]
  %v45 = vld [vmem:[%s0 + $0x60] sm:$0xf]
  %v46 = vld [vmem:[%s0 + $0x64] sm:$0xf]
  %v47 = vld [vmem:[%s0 + $0x68] sm:$0xf]
  %v48 = vld [vmem:[%s0 + $0x6c] sm:$0xf]
  %v49 = vld [vmem:[%s0 + $0x70] sm:$0xf]
  %v50 = vld [vmem:[%s0 + $0x74] sm:$0xf]
  %v51 = vld [vmem:[%s0 + $0x78] sm:$0xf]
  %v52 = vld [vmem:[%s0 + $0x7c] sm:$0xf]
  %v53 = vld [vmem:[%s1] sm:$0xf]
  %v54 = vld [vmem:[%s1 + $0x4] sm:$0xf]
  %v55 = vld [vmem:[%s1 + $0x8] sm:$0xf]
  %v56 = vld [vmem:[%s1 + $0xc] sm:$0xf]
  %v57 = vld [vmem:[%s1 + $0x10] sm:$0xf]
  %v58 = vld [vmem:[%s1 + $0x14] sm:$0xf]
  %v59 = vld [vmem:[%s1 + $0x18] sm:$0xf]
  %v60 = vld [vmem:[%s1 + $0x1c] sm:$0xf]
  %v61 = vld [vmem:[%s1 + $0x20] sm:$0xf]
  %v62 = vld [vmem:[%s1 + $0x24] sm:$0xf]
  %v63 = vld [vmem:[%s1 + $0x28] sm:$0xf]
  %v64 = vld [vmem:[%s1 + $0x2c] sm:$0xf]
  %v65 = vld [vmem:[%s3] sm:$0x1]
  %v67 = vlaneseq
  %v68 = vshrl.u32 %v67, 7
  %v69 = vsub.s32 0, %v68
  %v70 = vrot.slane %v65, %v69
  %v104 = vunpack.c.l.b16 %v21
  %v105 = vunpack.c.l.b16 %v22
  %v106 = vunpack.c.l.b16 %v23
  %v107 = vunpack.c.l.b16 %v24
  %v108 = vunpack.c.l.b16 %v25
  %v109 = vunpack.c.l.b16 %v26
  %v110 = vunpack.c.l.b16 %v27
  %v111 = vunpack.c.l.b16 %v28
  %v112 = vunpack.c.l.b16 %v29
  %v113 = vunpack.c.l.b16 %v30
  %v114 = vunpack.c.l.b16 %v31
  %v115 = vunpack.c.l.b16 %v32
  %v116 = vunpack.c.l.b16 %v33
  %v117 = vunpack.c.l.b16 %v34
  %v118 = vunpack.c.l.b16 %v35
  %v119 = vunpack.c.l.b16 %v36
  %v120 = vunpack.c.l.b16 %v37
  %v121 = vunpack.c.l.b16 %v38
  %v122 = vunpack.c.l.b16 %v39
  %v123 = vunpack.c.l.b16 %v40
  %v124 = vunpack.c.l.b16 %v41
  %v125 = vunpack.c.l.b16 %v42
  %v126 = vunpack.c.l.b16 %v43
  %v127 = vunpack.c.l.b16 %v44
  %v128 = vunpack.c.l.b16 %v45
  %v129 = vunpack.c.l.b16 %v46
  %v130 = vunpack.c.l.b16 %v47
  %v131 = vunpack.c.l.b16 %v48
  %v132 = vunpack.c.l.b16 %v49
  %v133 = vunpack.c.l.b16 %v50
  %v134 = vunpack.c.l.b16 %v51
  %v135 = vunpack.c.l.b16 %v52
  %v136 = vpack.c.b16 %v105, %v104
  %v137 = vpack.c.b16 %v107, %v106
  %v138 = vpack.c.b16 %v109, %v108
  %v139 = vpack.c.b16 %v111, %v110
  %v140 = vpack.c.b16 %v113, %v112
  %v141 = vpack.c.b16 %v115, %v114
  %v142 = vpack.c.b16 %v117, %v116
  %v143 = vpack.c.b16 %v119, %v118
  %v144 = vpack.c.b16 %v121, %v120
  %v145 = vpack.c.b16 %v123, %v122
  %v146 = vpack.c.b16 %v125, %v124
  %v147 = vpack.c.b16 %v127, %v126
  %v148 = vpack.c.b16 %v129, %v128
  %v149 = vpack.c.b16 %v131, %v130
  %v150 = vpack.c.b16 %v133, %v132
  %v151 = vpack.c.b16 %v135, %v134
  %v164 = vunpack.c.l.b16 %v53
  %v165 = vunpack.c.l.b16 %v54
  %v166 = vunpack.c.l.b16 %v55
  %v167 = vunpack.c.l.b16 %v56
  %v168 = vunpack.c.l.b16 %v57
  %v169 = vunpack.c.l.b16 %v58
  %v170 = vunpack.c.l.b16 %v59
  %v171 = vunpack.c.l.b16 %v60
  %v172 = vunpack.c.l.b16 %v61
  %v173 = vunpack.c.l.b16 %v62
  %v174 = vunpack.c.l.b16 %v63
  %v175 = vunpack.c.l.b16 %v64
  %v176 = vpack.c.b16 %v165, %v164
  %v177 = vpack.c.b16 %v167, %v166
  %v178 = vpack.c.b16 %v169, %v168
  %v179 = vpack.c.b16 %v171, %v170
  %v180 = vpack.c.b16 %v173, %v172
  %v181 = vpack.c.b16 %v175, %v174
  %vm188 = vcmask 785408
  %v190 = vsel %vm188, %v136, 0
  %v193 = vsel %vm188, %v137, 0
  %v196 = vsel %vm188, %v138, 0
  %v199 = vsel %vm188, %v139, 0
  %v202 = vsel %vm188, %v140, 0
  %v205 = vsel %vm188, %v141, 0
  %v208 = vsel %vm188, %v142, 0
  %v211 = vsel %vm188, %v143, 0
  %v214 = vsel %vm188, %v144, 0
  %v217 = vsel %vm188, %v145, 0
  %v220 = vsel %vm188, %v146, 0
  %v223 = vsel %vm188, %v147, 0
  %v226 = vsel %vm188, %v148, 0
  %v229 = vsel %vm188, %v149, 0
  %v232 = vsel %vm188, %v150, 0
  %v235 = vsel %vm188, %v151, 0
  %237 = vmatprep.subr.bf16.mxu0 0
  %238 = vmatpush1.bf16.msra.mxu0 %v176
  %239 = vmatprep.subr.bf16.mxu0 0
  %240 = vmatpush1.bf16.msra.mxu0 %v177
  %241 = vmatprep.subr.bf16.mxu0 0
  %242 = vmatpush1.bf16.msra.mxu0 %v178
  %243 = vmatprep.subr.bf16.mxu0 0
  %244 = vmatpush1.bf16.msra.mxu0 %v179
  %245 = vmatprep.subr.bf16.mxu0 0
  %246 = vmatpush1.bf16.msra.mxu0 %v180
  %247 = vmatprep.subr.bf16.mxu0 0
  %248 = vmatpush1.bf16.msra.mxu0 %v181
  %249 = vmatprep.subr.bf16.mxu0 0
  %250 = vmatpush1.bf16.msra.mxu0 0
  %251 = vmatprep.subr.bf16.mxu0 0
  %252 = vmatpush1.bf16.msra.mxu0 0
  %253 = vmatprep.subr.bf16.mxu0 0
  %254 = vmatpush1.bf16.msra.mxu0 0
  %255 = vmatprep.subr.bf16.mxu0 0
  %256 = vmatpush1.bf16.msra.mxu0 0
  %257 = vmatprep.subr.bf16.mxu0 0
  %258 = vmatpush1.bf16.msra.mxu0 0
  %259 = vmatprep.subr.bf16.mxu0 0
  %260 = vmatpush1.bf16.msra.mxu0 0
  %261 = vmatprep.subr.bf16.mxu0 0
  %262 = vmatpush1.bf16.msra.mxu0 0
  %263 = vmatprep.subr.bf16.mxu0 0
  %264 = vmatpush1.bf16.msra.mxu0 0
  %265 = vmatprep.subr.bf16.mxu0 0
  %266 = vmatpush1.bf16.msra.mxu0 0
  %267 = vmatprep.subr.bf16.mxu0 0
  %268 = vmatpush1.bf16.msra.mxu0 0
  %269 = vmatprep.mubr.bf16.mxu0 0
  %270 = vmatmul.mubr.bf16.gmra.mrb[0].mxu0 %v190
  %v271 = vpop.f32.mrb[0].mxu0
  %v272 = vadd.f32 %v70, %v271
  %v273 = vpop.f32.mrb[0].mxu0
  %v274 = vpop.f32.mrb[0].mxu0
  %v275 = vadd.f32 %v70, %v274
  %v276 = vpop.f32.mrb[0].mxu0
  %277 = vmatprep.mubr.bf16.mxu0 0
  %278 = vmatmul.mubr.bf16.gmra.mrb[0].mxu0 %v193
  %v279 = vpop.f32.mrb[0].mxu0
  %v280 = vadd.f32 %v70, %v279
  %v281 = vpop.f32.mrb[0].mxu0
  %v282 = vpop.f32.mrb[0].mxu0
  %v283 = vadd.f32 %v70, %v282
  %v284 = vpop.f32.mrb[0].mxu0
  %285 = vmatprep.mubr.bf16.mxu0 0
  %286 = vmatmul.mubr.bf16.gmra.mrb[0].mxu0 %v196
  %v287 = vpop.f32.mrb[0].mxu0
  %v288 = vadd.f32 %v70, %v287
  %v289 = vpop.f32.mrb[0].mxu0
  %v290 = vpop.f32.mrb[0].mxu0
  %v291 = vadd.f32 %v70, %v290
  %v292 = vpop.f32.mrb[0].mxu0
  %293 = vmatprep.mubr.bf16.mxu0 0
  %294 = vmatmul.mubr.bf16.gmra.mrb[0].mxu0 %v199
  %v295 = vpop.f32.mrb[0].mxu0
  %v296 = vadd.f32 %v70, %v295
  %v297 = vpop.f32.mrb[0].mxu0
  %v298 = vpop.f32.mrb[0].mxu0
  %v299 = vadd.f32 %v70, %v298
  %v300 = vpop.f32.mrb[0].mxu0
  %301 = vmatprep.mubr.bf16.mxu0 0
  %302 = vmatmul.mubr.bf16.gmra.mrb[0].mxu0 %v202
  %v303 = vpop.f32.mrb[0].mxu0
  %v304 = vadd.f32 %v70, %v303
  %v305 = vpop.f32.mrb[0].mxu0
  %v306 = vpop.f32.mrb[0].mxu0
  %v307 = vadd.f32 %v70, %v306
  %v308 = vpop.f32.mrb[0].mxu0
  %309 = vmatprep.mubr.bf16.mxu0 0
  %310 = vmatmul.mubr.bf16.gmra.mrb[0].mxu0 %v205
  %v311 = vpop.f32.mrb[0].mxu0
  %v312 = vadd.f32 %v70, %v311
  %v313 = vpop.f32.mrb[0].mxu0
  %v314 = vpop.f32.mrb[0].mxu0
  %v315 = vadd.f32 %v70, %v314
  %v316 = vpop.f32.mrb[0].mxu0
  %317 = vmatprep.mubr.bf16.mxu0 0
  %318 = vmatmul.mubr.bf16.gmra.mrb[0].mxu0 %v208
  %v319 = vpop.f32.mrb[0].mxu0
  %v320 = vadd.f32 %v70, %v319
  %v321 = vpop.f32.mrb[0].mxu0
  %v322 = vpop.f32.mrb[0].mxu0
  %v323 = vadd.f32 %v70, %v322
  %v324 = vpop.f32.mrb[0].mxu0
  %325 = vmatprep.mubr.bf16.mxu0 0
  %326 = vmatmul.mubr.bf16.gmra.mrb[0].mxu0 %v211
  %v327 = vpop.f32.mrb[0].mxu0
  %v328 = vadd.f32 %v70, %v327
  %v329 = vpop.f32.mrb[0].mxu0
  %v330 = vpop.f32.mrb[0].mxu0
  %v331 = vadd.f32 %v70, %v330
  %v332 = vpop.f32.mrb[0].mxu0
  %333 = vmatprep.mubr.bf16.mxu0 0
  %334 = vmatmul.mubr.bf16.gmra.mrb[0].mxu0 %v214
  %v335 = vpop.f32.mrb[0].mxu0
  %v336 = vadd.f32 %v70, %v335
  %v337 = vpop.f32.mrb[0].mxu0
  %v338 = vpop.f32.mrb[0].mxu0
  %v339 = vadd.f32 %v70, %v338
  %v340 = vpop.f32.mrb[0].mxu0
  %341 = vmatprep.mubr.bf16.mxu0 0
  %342 = vmatmul.mubr.bf16.gmra.mrb[0].mxu0 %v217
  %v343 = vpop.f32.mrb[0].mxu0
  %v344 = vadd.f32 %v70, %v343
  %v345 = vpop.f32.mrb[0].mxu0
  %v346 = vpop.f32.mrb[0].mxu0
  %v347 = vadd.f32 %v70, %v346
  %v348 = vpop.f32.mrb[0].mxu0
  %349 = vmatprep.mubr.bf16.mxu0 0
  %350 = vmatmul.mubr.bf16.gmra.mrb[0].mxu0 %v220
  %v351 = vpop.f32.mrb[0].mxu0
  %v352 = vadd.f32 %v70, %v351
  %v353 = vpop.f32.mrb[0].mxu0
  %v354 = vpop.f32.mrb[0].mxu0
  %v355 = vadd.f32 %v70, %v354
  %v356 = vpop.f32.mrb[0].mxu0
  %357 = vmatprep.mubr.bf16.mxu0 0
  %358 = vmatmul.mubr.bf16.gmra.mrb[0].mxu0 %v223
  %v359 = vpop.f32.mrb[0].mxu0
  %v360 = vadd.f32 %v70, %v359
  %v361 = vpop.f32.mrb[0].mxu0
  %v362 = vpop.f32.mrb[0].mxu0
  %v363 = vadd.f32 %v70, %v362
  %v364 = vpop.f32.mrb[0].mxu0
  %365 = vmatprep.mubr.bf16.mxu0 0
  %366 = vmatmul.mubr.bf16.gmra.mrb[0].mxu0 %v226
  %v367 = vpop.f32.mrb[0].mxu0
  %v368 = vadd.f32 %v70, %v367
  %v369 = vpop.f32.mrb[0].mxu0
  %v370 = vpop.f32.mrb[0].mxu0
  %v371 = vadd.f32 %v70, %v370
  %v372 = vpop.f32.mrb[0].mxu0
  %373 = vmatprep.mubr.bf16.mxu0 0
  %374 = vmatmul.mubr.bf16.gmra.mrb[0].mxu0 %v229
  %v375 = vpop.f32.mrb[0].mxu0
  %v376 = vadd.f32 %v70, %v375
  %v377 = vpop.f32.mrb[0].mxu0
  %v378 = vpop.f32.mrb[0].mxu0
  %v379 = vadd.f32 %v70, %v378
  %v380 = vpop.f32.mrb[0].mxu0
  %381 = vmatprep.mubr.bf16.mxu0 0
  %382 = vmatmul.mubr.bf16.gmra.mrb[0].mxu0 %v232
  %v383 = vpop.f32.mrb[0].mxu0
  %v384 = vadd.f32 %v70, %v383
  %v385 = vpop.f32.mrb[0].mxu0
  %v386 = vpop.f32.mrb[0].mxu0
  %v387 = vadd.f32 %v70, %v386
  %v388 = vpop.f32.mrb[0].mxu0
  %389 = vmatprep.mubr.bf16.mxu0 0
  %390 = vmatmul.mubr.bf16.gmra.mrb[0].mxu0 %v235
  %v391 = vpop.f32.mrb[0].mxu0
  %v392 = vadd.f32 %v70, %v391
  %v393 = vpop.f32.mrb[0].mxu0
  %v394 = vpop.f32.mrb[0].mxu0
  %v395 = vadd.f32 %v70, %v394
  %v396 = vpop.f32.mrb[0].mxu0
  %397 = vdwg.mxu0
  %v398 = vmul.bf16 %v21, %v21
  %v399 = vmul.bf16 %v22, %v22
  %v400 = vmul.bf16 %v23, %v23
  %v401 = vmul.bf16 %v24, %v24
  %v402 = vmul.bf16 %v25, %v25
  %v403 = vmul.bf16 %v26, %v26
  %v404 = vmul.bf16 %v27, %v27
  %v405 = vmul.bf16 %v28, %v28
  %v406 = vmul.bf16 %v29, %v29
  %v407 = vmul.bf16 %v30, %v30
  %v408 = vmul.bf16 %v31, %v31
  %v409 = vmul.bf16 %v32, %v32
  %v410 = vmul.bf16 %v33, %v33
  %v411 = vmul.bf16 %v34, %v34
  %v412 = vmul.bf16 %v35, %v35
  %v413 = vmul.bf16 %v36, %v36
  %v414 = vmul.bf16 %v37, %v37
  %v415 = vmul.bf16 %v38, %v38
  %v416 = vmul.bf16 %v39, %v39
  %v417 = vmul.bf16 %v40, %v40
  %v418 = vmul.bf16 %v41, %v41
  %v419 = vmul.bf16 %v42, %v42
  %v420 = vmul.bf16 %v43, %v43
  %v421 = vmul.bf16 %v44, %v44
  %v422 = vmul.bf16 %v45, %v45
  %v423 = vmul.bf16 %v46, %v46
  %v424 = vmul.bf16 %v47, %v47
  %v425 = vmul.bf16 %v48, %v48
  %v426 = vmul.bf16 %v49, %v49
  %v427 = vmul.bf16 %v50, %v50
  %v428 = vmul.bf16 %v51, %v51
  %v429 = vmul.bf16 %v52, %v52
  %v430 = vld [vmem:[%s2] sm:$0xf]
  %v431 = vld [vmem:[%s2 + $0x4] sm:$0xf]
  %v432 = vld [vmem:[%s2 + $0x8] sm:$0xf]
  %v433 = vld [vmem:[%s2 + $0xc] sm:$0xf]
  %v434 = vld [vmem:[%s2 + $0x10] sm:$0xf]
  %v435 = vld [vmem:[%s2 + $0x14] sm:$0xf]
  %v436 = vld [vmem:[%s2 + $0x18] sm:$0xf]
  %v437 = vld [vmem:[%s2 + $0x1c] sm:$0xf]
  %v438 = vld [vmem:[%s2 + $0x20] sm:$0xf]
  %v439 = vld [vmem:[%s2 + $0x24] sm:$0xf]
  %v440 = vld [vmem:[%s2 + $0x28] sm:$0xf]
  %v441 = vld [vmem:[%s2 + $0x2c] sm:$0xf]
  %v442 = vld [vmem:[%s4] sm:$0x1]
  %v444 = vlaneseq
  %v445 = vshrl.u32 %v444, 7
  %v446 = vsub.s32 0, %v445
  %v447 = vrot.slane %v442, %v446
  %v481 = vunpack.c.l.b16 %v398
  %v482 = vunpack.c.l.b16 %v399
  %v483 = vunpack.c.l.b16 %v400
  %v484 = vunpack.c.l.b16 %v401
  %v485 = vunpack.c.l.b16 %v402
  %v486 = vunpack.c.l.b16 %v403
  %v487 = vunpack.c.l.b16 %v404
  %v488 = vunpack.c.l.b16 %v405
  %v489 = vunpack.c.l.b16 %v406
  %v490 = vunpack.c.l.b16 %v407
  %v491 = vunpack.c.l.b16 %v408
  %v492 = vunpack.c.l.b16 %v409
  %v493 = vunpack.c.l.b16 %v410
  %v494 = vunpack.c.l.b16 %v411
  %v495 = vunpack.c.l.b16 %v412
  %v496 = vunpack.c.l.b16 %v413
  %v497 = vunpack.c.l.b16 %v414
  %v498 = vunpack.c.l.b16 %v415
  %v499 = vunpack.c.l.b16 %v416
  %v500 = vunpack.c.l.b16 %v417
  %v501 = vunpack.c.l.b16 %v418
  %v502 = vunpack.c.l.b16 %v419
  %v503 = vunpack.c.l.b16 %v420
  %v504 = vunpack.c.l.b16 %v421
  %v505 = vunpack.c.l.b16 %v422
  %v506 = vunpack.c.l.b16 %v423
  %v507 = vunpack.c.l.b16 %v424
  %v508 = vunpack.c.l.b16 %v425
  %v509 = vunpack.c.l.b16 %v426
  %v510 = vunpack.c.l.b16 %v427
  %v511 = vunpack.c.l.b16 %v428
  %v512 = vunpack.c.l.b16 %v429
  %v513 = vpack.c.b16 %v482, %v481
  %v514 = vpack.c.b16 %v484, %v483
  %v515 = vpack.c.b16 %v486, %v485
  %v516 = vpack.c.b16 %v488, %v487
  %v517 = vpack.c.b16 %v490, %v489
  %v518 = vpack.c.b16 %v492, %v491
  %v519 = vpack.c.b16 %v494, %v493
  %v520 = vpack.c.b16 %v496, %v495
  %v521 = vpack.c.b16 %v498, %v497
  %v522 = vpack.c.b16 %v500, %v499
  %v523 = vpack.c.b16 %v502, %v501
  %v524 = vpack.c.b16 %v504, %v503
  %v525 = vpack.c.b16 %v506, %v505
  %v526 = vpack.c.b16 %v508, %v507
  %v527 = vpack.c.b16 %v510, %v509
  %v528 = vpack.c.b16 %v512, %v511
  %v541 = vunpack.c.l.b16 %v430
  %v542 = vunpack.c.l.b16 %v431
  %v543 = vunpack.c.l.b16 %v432
  %v544 = vunpack.c.l.b16 %v433
  %v545 = vunpack.c.l.b16 %v434
  %v546 = vunpack.c.l.b16 %v435
  %v547 = vunpack.c.l.b16 %v436
  %v548 = vunpack.c.l.b16 %v437
  %v549 = vunpack.c.l.b16 %v438
  %v550 = vunpack.c.l.b16 %v439
  %v551 = vunpack.c.l.b16 %v440
  %v552 = vunpack.c.l.b16 %v441
  %v553 = vpack.c.b16 %v542, %v541
  %v554 = vpack.c.b16 %v544, %v543
  %v555 = vpack.c.b16 %v546, %v545
  %v556 = vpack.c.b16 %v548, %v547
  %v557 = vpack.c.b16 %v550, %v549
  %v558 = vpack.c.b16 %v552, %v551
  %v566 = vsel %vm188, %v513, 0
  %v569 = vsel %vm188, %v514, 0
  %v572 = vsel %vm188, %v515, 0
  %v575 = vsel %vm188, %v516, 0
  %v578 = vsel %vm188, %v517, 0
  %v581 = vsel %vm188, %v518, 0
  %v584 = vsel %vm188, %v519, 0
  %v587 = vsel %vm188, %v520, 0
  %v590 = vsel %vm188, %v521, 0
  %v593 = vsel %vm188, %v522, 0
  %v596 = vsel %vm188, %v523, 0
  %v599 = vsel %vm188, %v524, 0
  %v602 = vsel %vm188, %v525, 0
  %v605 = vsel %vm188, %v526, 0
  %v608 = vsel %vm188, %v527, 0
  %v611 = vsel %vm188, %v528, 0
  %613 = vmatprep.subr.bf16.mxu0 0
  %614 = vmatpush1.bf16.msra.mxu0 %v553
  %615 = vmatprep.subr.bf16.mxu0 0
  %616 = vmatpush1.bf16.msra.mxu0 %v554
  %617 = vmatprep.subr.bf16.mxu0 0
  %618 = vmatpush1.bf16.msra.mxu0 %v555
  %619 = vmatprep.subr.bf16.mxu0 0
  %620 = vmatpush1.bf16.msra.mxu0 %v556
  %621 = vmatprep.subr.bf16.mxu0 0
  %622 = vmatpush1.bf16.msra.mxu0 %v557
  %623 = vmatprep.subr.bf16.mxu0 0
  %624 = vmatpush1.bf16.msra.mxu0 %v558
  %625 = vmatprep.subr.bf16.mxu0 0
  %626 = vmatpush1.bf16.msra.mxu0 0
  %627 = vmatprep.subr.bf16.mxu0 0
  %628 = vmatpush1.bf16.msra.mxu0 0
  %629 = vmatprep.subr.bf16.mxu0 0
  %630 = vmatpush1.bf16.msra.mxu0 0
  %631 = vmatprep.subr.bf16.mxu0 0
  %632 = vmatpush1.bf16.msra.mxu0 0
  %633 = vmatprep.subr.bf16.mxu0 0
  %634 = vmatpush1.bf16.msra.mxu0 0
  %635 = vmatprep.subr.bf16.mxu0 0
  %636 = vmatpush1.bf16.msra.mxu0 0
  %637 = vmatprep.subr.bf16.mxu0 0
  %638 = vmatpush1.bf16.msra.mxu0 0
  %639 = vmatprep.subr.bf16.mxu0 0
  %640 = vmatpush1.bf16.msra.mxu0 0
  %641 = vmatprep.subr.bf16.mxu0 0
  %642 = vmatpush1.bf16.msra.mxu0 0
  %643 = vmatprep.subr.bf16.mxu0 0
  %644 = vmatpush1.bf16.msra.mxu0 0
  %645 = vmatprep.mubr.bf16.mxu0 0
  %646 = vmatmul.mubr.bf16.gmra.mrb[0].mxu0 %v566
  %v647 = vpop.f32.mrb[0].mxu0
  %v648 = vadd.f32 %v447, %v647
  %v649 = vpop.f32.mrb[0].mxu0
  %v650 = vpop.f32.mrb[0].mxu0
  %v651 = vadd.f32 %v447, %v650
  %v652 = vpop.f32.mrb[0].mxu0
  %653 = vmatprep.mubr.bf16.mxu0 0
  %654 = vmatmul.mubr.bf16.gmra.mrb[0].mxu0 %v569
  %v655 = vpop.f32.mrb[0].mxu0
  %v656 = vadd.f32 %v447, %v655
  %v657 = vpop.f32.mrb[0].mxu0
  %v658 = vpop.f32.mrb[0].mxu0
  %v659 = vadd.f32 %v447, %v658
  %v660 = vpop.f32.mrb[0].mxu0
  %661 = vmatprep.mubr.bf16.mxu0 0
  %662 = vmatmul.mubr.bf16.gmra.mrb[0].mxu0 %v572
  %v663 = vpop.f32.mrb[0].mxu0
  %v664 = vadd.f32 %v447, %v663
  %v665 = vpop.f32.mrb[0].mxu0
  %v666 = vpop.f32.mrb[0].mxu0
  %v667 = vadd.f32 %v447, %v666
  %v668 = vpop.f32.mrb[0].mxu0
  %669 = vmatprep.mubr.bf16.mxu0 0
  %670 = vmatmul.mubr.bf16.gmra.mrb[0].mxu0 %v575
  %v671 = vpop.f32.mrb[0].mxu0
  %v672 = vadd.f32 %v447, %v671
  %v673 = vpop.f32.mrb[0].mxu0
  %v674 = vpop.f32.mrb[0].mxu0
  %v675 = vadd.f32 %v447, %v674
  %v676 = vpop.f32.mrb[0].mxu0
  %677 = vmatprep.mubr.bf16.mxu0 0
  %678 = vmatmul.mubr.bf16.gmra.mrb[0].mxu0 %v578
  %v679 = vpop.f32.mrb[0].mxu0
  %v680 = vadd.f32 %v447, %v679
  %v681 = vpop.f32.mrb[0].mxu0
  %v682 = vpop.f32.mrb[0].mxu0
  %v683 = vadd.f32 %v447, %v682
  %v684 = vpop.f32.mrb[0].mxu0
  %685 = vmatprep.mubr.bf16.mxu0 0
  %686 = vmatmul.mubr.bf16.gmra.mrb[0].mxu0 %v581
  %v687 = vpop.f32.mrb[0].mxu0
  %v688 = vadd.f32 %v447, %v687
  %v689 = vpop.f32.mrb[0].mxu0
  %v690 = vpop.f32.mrb[0].mxu0
  %v691 = vadd.f32 %v447, %v690
  %v692 = vpop.f32.mrb[0].mxu0
  %693 = vmatprep.mubr.bf16.mxu0 0
  %694 = vmatmul.mubr.bf16.gmra.mrb[0].mxu0 %v584
  %v695 = vpop.f32.mrb[0].mxu0
  %v696 = vadd.f32 %v447, %v695
  %v697 = vpop.f32.mrb[0].mxu0
  %v698 = vpop.f32.mrb[0].mxu0
  %v699 = vadd.f32 %v447, %v698
  %v700 = vpop.f32.mrb[0].mxu0
  %701 = vmatprep.mubr.bf16.mxu0 0
  %702 = vmatmul.mubr.bf16.gmra.mrb[0].mxu0 %v587
  %v703 = vpop.f32.mrb[0].mxu0
  %v704 = vadd.f32 %v447, %v703
  %v705 = vpop.f32.mrb[0].mxu0
  %v706 = vpop.f32.mrb[0].mxu0
  %v707 = vadd.f32 %v447, %v706
  %v708 = vpop.f32.mrb[0].mxu0
  %709 = vmatprep.mubr.bf16.mxu0 0
  %710 = vmatmul.mubr.bf16.gmra.mrb[0].mxu0 %v590
  %v711 = vpop.f32.mrb[0].mxu0
  %v712 = vadd.f32 %v447, %v711
  %v713 = vpop.f32.mrb[0].mxu0
  %v714 = vpop.f32.mrb[0].mxu0
  %v715 = vadd.f32 %v447, %v714
  %v716 = vpop.f32.mrb[0].mxu0
  %717 = vmatprep.mubr.bf16.mxu0 0
  %718 = vmatmul.mubr.bf16.gmra.mrb[0].mxu0 %v593
  %v719 = vpop.f32.mrb[0].mxu0
  %v720 = vadd.f32 %v447, %v719
  %v721 = vpop.f32.mrb[0].mxu0
  %v722 = vpop.f32.mrb[0].mxu0
  %v723 = vadd.f32 %v447, %v722
  %v724 = vpop.f32.mrb[0].mxu0
  %725 = vmatprep.mubr.bf16.mxu0 0
  %726 = vmatmul.mubr.bf16.gmra.mrb[0].mxu0 %v596
  %v727 = vpop.f32.mrb[0].mxu0
  %v728 = vadd.f32 %v447, %v727
  %v729 = vpop.f32.mrb[0].mxu0
  %v730 = vpop.f32.mrb[0].mxu0
  %v731 = vadd.f32 %v447, %v730
  %v732 = vpop.f32.mrb[0].mxu0
  %733 = vmatprep.mubr.bf16.mxu0 0
  %734 = vmatmul.mubr.bf16.gmra.mrb[0].mxu0 %v599
  %v735 = vpop.f32.mrb[0].mxu0
  %v736 = vadd.f32 %v447, %v735
  %v737 = vpop.f32.mrb[0].mxu0
  %v738 = vpop.f32.mrb[0].mxu0
  %v739 = vadd.f32 %v447, %v738
  %v740 = vpop.f32.mrb[0].mxu0
  %741 = vmatprep.mubr.bf16.mxu0 0
  %742 = vmatmul.mubr.bf16.gmra.mrb[0].mxu0 %v602
  %v743 = vpop.f32.mrb[0].mxu0
  %v744 = vadd.f32 %v447, %v743
  %v745 = vpop.f32.mrb[0].mxu0
  %v746 = vpop.f32.mrb[0].mxu0
  %v747 = vadd.f32 %v447, %v746
  %v748 = vpop.f32.mrb[0].mxu0
  %749 = vmatprep.mubr.bf16.mxu0 0
  %750 = vmatmul.mubr.bf16.gmra.mrb[0].mxu0 %v605
  %v751 = vpop.f32.mrb[0].mxu0
  %v752 = vadd.f32 %v447, %v751
  %v753 = vpop.f32.mrb[0].mxu0
  %v754 = vpop.f32.mrb[0].mxu0
  %v755 = vadd.f32 %v447, %v754
  %v756 = vpop.f32.mrb[0].mxu0
  %757 = vmatprep.mubr.bf16.mxu0 0
  %758 = vmatmul.mubr.bf16.gmra.mrb[0].mxu0 %v608
  %v759 = vpop.f32.mrb[0].mxu0
  %v760 = vadd.f32 %v447, %v759
  %v761 = vpop.f32.mrb[0].mxu0
  %v762 = vpop.f32.mrb[0].mxu0
  %v763 = vadd.f32 %v447, %v762
  %v764 = vpop.f32.mrb[0].mxu0
  %765 = vmatprep.mubr.bf16.mxu0 0
  %766 = vmatmul.mubr.bf16.gmra.mrb[0].mxu0 %v611
  %v767 = vpop.f32.mrb[0].mxu0
  %v768 = vadd.f32 %v447, %v767
  %v769 = vpop.f32.mrb[0].mxu0
  %v770 = vpop.f32.mrb[0].mxu0
  %v771 = vadd.f32 %v447, %v770
  %v772 = vpop.f32.mrb[0].mxu0
  %773 = vdwg.mxu0
  %806 = vrot.lane.b32.xlu0 %v272, 64
  %v807 = vpop.permute.xlu0 %806
  %808 = vrot.lane.b32.xlu0 %v275, 64
  %v809 = vpop.permute.xlu0 %808
  %810 = vrot.lane.b32.xlu0 %v280, 64
  %v811 = vpop.permute.xlu0 %810
  %812 = vrot.lane.b32.xlu0 %v283, 64
  %v813 = vpop.permute.xlu0 %812
  %814 = vrot.lane.b32.xlu0 %v288, 64
  %v815 = vpop.permute.xlu0 %814
  %816 = vrot.lane.b32.xlu0 %v291, 64
  %v817 = vpop.permute.xlu0 %816
  %818 = vrot.lane.b32.xlu0 %v296, 64
  %v819 = vpop.permute.xlu0 %818
  %820 = vrot.lane.b32.xlu0 %v299, 64
  %v821 = vpop.permute.xlu0 %820
  %822 = vrot.lane.b32.xlu0 %v304, 64
  %v823 = vpop.permute.xlu0 %822
  %824 = vrot.lane.b32.xlu0 %v307, 64
  %v825 = vpop.permute.xlu0 %824
  %826 = vrot.lane.b32.xlu0 %v312, 64
  %v827 = vpop.permute.xlu0 %826
  %828 = vrot.lane.b32.xlu0 %v315, 64
  %v829 = vpop.permute.xlu0 %828
  %830 = vrot.lane.b32.xlu0 %v320, 64
  %v831 = vpop.permute.xlu0 %830
  %832 = vrot.lane.b32.xlu0 %v323, 64
  %v833 = vpop.permute.xlu0 %832
  %834 = vrot.lane.b32.xlu0 %v328, 64
  %v835 = vpop.permute.xlu0 %834
  %836 = vrot.lane.b32.xlu0 %v331, 64
  %v837 = vpop.permute.xlu0 %836
  %838 = vrot.lane.b32.xlu0 %v336, 64
  %v839 = vpop.permute.xlu0 %838
  %840 = vrot.lane.b32.xlu0 %v339, 64
  %v841 = vpop.permute.xlu0 %840
  %842 = vrot.lane.b32.xlu0 %v344, 64
  %v843 = vpop.permute.xlu0 %842
  %844 = vrot.lane.b32.xlu0 %v347, 64
  %v845 = vpop.permute.xlu0 %844
  %846 = vrot.lane.b32.xlu0 %v352, 64
  %v847 = vpop.permute.xlu0 %846
  %848 = vrot.lane.b32.xlu0 %v355, 64
  %v849 = vpop.permute.xlu0 %848
  %850 = vrot.lane.b32.xlu0 %v360, 64
  %v851 = vpop.permute.xlu0 %850
  %852 = vrot.lane.b32.xlu0 %v363, 64
  %v853 = vpop.permute.xlu0 %852
  %854 = vrot.lane.b32.xlu0 %v368, 64
  %v855 = vpop.permute.xlu0 %854
  %856 = vrot.lane.b32.xlu0 %v371, 64
  %v857 = vpop.permute.xlu0 %856
  %858 = vrot.lane.b32.xlu0 %v376, 64
  %v859 = vpop.permute.xlu0 %858
  %860 = vrot.lane.b32.xlu0 %v379, 64
  %v861 = vpop.permute.xlu0 %860
  %862 = vrot.lane.b32.xlu0 %v384, 64
  %v863 = vpop.permute.xlu0 %862
  %864 = vrot.lane.b32.xlu0 %v387, 64
  %v865 = vpop.permute.xlu0 %864
  %866 = vrot.lane.b32.xlu0 %v392, 64
  %v867 = vpop.permute.xlu0 %866
  %868 = vrot.lane.b32.xlu0 %v395, 64
  %v869 = vpop.permute.xlu0 %868
  %v902 = vmul.f32 %v272, %v807
  %v903 = vmul.f32 %v275, %v809
  %v904 = vmul.f32 %v280, %v811
  %v905 = vmul.f32 %v283, %v813
  %v906 = vmul.f32 %v288, %v815
  %v907 = vmul.f32 %v291, %v817
  %v908 = vmul.f32 %v296, %v819
  %v909 = vmul.f32 %v299, %v821
  %v910 = vmul.f32 %v304, %v823
  %v911 = vmul.f32 %v307, %v825
  %v912 = vmul.f32 %v312, %v827
  %v913 = vmul.f32 %v315, %v829
  %v914 = vmul.f32 %v320, %v831
  %v915 = vmul.f32 %v323, %v833
  %v916 = vmul.f32 %v328, %v835
  %v917 = vmul.f32 %v331, %v837
  %v918 = vmul.f32 %v336, %v839
  %v919 = vmul.f32 %v339, %v841
  %v920 = vmul.f32 %v344, %v843
  %v921 = vmul.f32 %v347, %v845
  %v922 = vmul.f32 %v352, %v847
  %v923 = vmul.f32 %v355, %v849
  %v924 = vmul.f32 %v360, %v851
  %v925 = vmul.f32 %v363, %v853
  %v926 = vmul.f32 %v368, %v855
  %v927 = vmul.f32 %v371, %v857
  %v928 = vmul.f32 %v376, %v859
  %v929 = vmul.f32 %v379, %v861
  %v930 = vmul.f32 %v384, %v863
  %v931 = vmul.f32 %v387, %v865
  %v932 = vmul.f32 %v392, %v867
  %v933 = vmul.f32 %v395, %v869
  %v934 = vadd.f32 %v902, %v648
  %v935 = vadd.f32 %v903, %v651
  %v936 = vadd.f32 %v904, %v656
  %v937 = vadd.f32 %v905, %v659
  %v938 = vadd.f32 %v906, %v664
  %v939 = vadd.f32 %v907, %v667
  %v940 = vadd.f32 %v908, %v672
  %v941 = vadd.f32 %v909, %v675
  %v942 = vadd.f32 %v910, %v680
  %v943 = vadd.f32 %v911, %v683
  %v944 = vadd.f32 %v912, %v688
  %v945 = vadd.f32 %v913, %v691
  %v946 = vadd.f32 %v914, %v696
  %v947 = vadd.f32 %v915, %v699
  %v948 = vadd.f32 %v916, %v704
  %v949 = vadd.f32 %v917, %v707
  %v950 = vadd.f32 %v918, %v712
  %v951 = vadd.f32 %v919, %v715
  %v952 = vadd.f32 %v920, %v720
  %v953 = vadd.f32 %v921, %v723
  %v954 = vadd.f32 %v922, %v728
  %v955 = vadd.f32 %v923, %v731
  %v956 = vadd.f32 %v924, %v736
  %v957 = vadd.f32 %v925, %v739
  %v958 = vadd.f32 %v926, %v744
  %v959 = vadd.f32 %v927, %v747
  %v960 = vadd.f32 %v928, %v752
  %v961 = vadd.f32 %v929, %v755
  %v962 = vadd.f32 %v930, %v760
  %v963 = vadd.f32 %v931, %v763
  %v964 = vadd.f32 %v932, %v768
  %v965 = vadd.f32 %v933, %v771
  %vm966 = vcmp.gt.f32.partialorder %v934, 0.0
  %vm967 = vcmp.gt.f32.partialorder %v935, 0.0
  %vm968 = vcmp.gt.f32.partialorder %v936, 0.0
  %vm969 = vcmp.gt.f32.partialorder %v937, 0.0
  %vm970 = vcmp.gt.f32.partialorder %v938, 0.0
  %vm971 = vcmp.gt.f32.partialorder %v939, 0.0
  %vm972 = vcmp.gt.f32.partialorder %v940, 0.0
  %vm973 = vcmp.gt.f32.partialorder %v941, 0.0
  %vm974 = vcmp.gt.f32.partialorder %v942, 0.0
  %vm975 = vcmp.gt.f32.partialorder %v943, 0.0
  %vm976 = vcmp.gt.f32.partialorder %v944, 0.0
  %vm977 = vcmp.gt.f32.partialorder %v945, 0.0
  %vm978 = vcmp.gt.f32.partialorder %v946, 0.0
  %vm979 = vcmp.gt.f32.partialorder %v947, 0.0
  %vm980 = vcmp.gt.f32.partialorder %v948, 0.0
  %vm981 = vcmp.gt.f32.partialorder %v949, 0.0
  %vm982 = vcmp.gt.f32.partialorder %v950, 0.0
  %vm983 = vcmp.gt.f32.partialorder %v951, 0.0
  %vm984 = vcmp.gt.f32.partialorder %v952, 0.0
  %vm985 = vcmp.gt.f32.partialorder %v953, 0.0
  %vm986 = vcmp.gt.f32.partialorder %v954, 0.0
  %vm987 = vcmp.gt.f32.partialorder %v955, 0.0
  %vm988 = vcmp.gt.f32.partialorder %v956, 0.0
  %vm989 = vcmp.gt.f32.partialorder %v957, 0.0
  %vm990 = vcmp.gt.f32.partialorder %v958, 0.0
  %vm991 = vcmp.gt.f32.partialorder %v959, 0.0
  %vm992 = vcmp.gt.f32.partialorder %v960, 0.0
  %vm993 = vcmp.gt.f32.partialorder %v961, 0.0
  %vm994 = vcmp.gt.f32.partialorder %v962, 0.0
  %vm995 = vcmp.gt.f32.partialorder %v963, 0.0
  %vm996 = vcmp.gt.f32.partialorder %v964, 0.0
  %vm997 = vcmp.gt.f32.partialorder %v965, 0.0
  %v998 = vmul.f32 %v934, 0.01
  %v999 = vmul.f32 %v935, 0.01
  %v1000 = vmul.f32 %v936, 0.01
  %v1001 = vmul.f32 %v937, 0.01
  %v1002 = vmul.f32 %v938, 0.01
  %v1003 = vmul.f32 %v939, 0.01
  %v1004 = vmul.f32 %v940, 0.01
  %v1005 = vmul.f32 %v941, 0.01
  %v1006 = vmul.f32 %v942, 0.01
  %v1007 = vmul.f32 %v943, 0.01
  %v1008 = vmul.f32 %v944, 0.01
  %v1009 = vmul.f32 %v945, 0.01
  %v1010 = vmul.f32 %v946, 0.01
  %v1011 = vmul.f32 %v947, 0.01
  %v1012 = vmul.f32 %v948, 0.01
  %v1013 = vmul.f32 %v949, 0.01
  %v1014 = vmul.f32 %v950, 0.01
  %v1015 = vmul.f32 %v951, 0.01
  %v1016 = vmul.f32 %v952, 0.01
  %v1017 = vmul.f32 %v953, 0.01
  %v1018 = vmul.f32 %v954, 0.01
  %v1019 = vmul.f32 %v955, 0.01
  %v1020 = vmul.f32 %v956, 0.01
  %v1021 = vmul.f32 %v957, 0.01
  %v1022 = vmul.f32 %v958, 0.01
  %v1023 = vmul.f32 %v959, 0.01
  %v1024 = vmul.f32 %v960, 0.01
  %v1025 = vmul.f32 %v961, 0.01
  %v1026 = vmul.f32 %v962, 0.01
  %v1027 = vmul.f32 %v963, 0.01
  %v1028 = vmul.f32 %v964, 0.01
  %v1029 = vmul.f32 %v965, 0.01
  %v1030 = vsel %vm966, %v934, %v998
  %v1031 = vsel %vm967, %v935, %v999
  %v1032 = vsel %vm968, %v936, %v1000
  %v1033 = vsel %vm969, %v937, %v1001
  %v1034 = vsel %vm970, %v938, %v1002
  %v1035 = vsel %vm971, %v939, %v1003
  %v1036 = vsel %vm972, %v940, %v1004
  %v1037 = vsel %vm973, %v941, %v1005
  %v1038 = vsel %vm974, %v942, %v1006
  %v1039 = vsel %vm975, %v943, %v1007
  %v1040 = vsel %vm976, %v944, %v1008
  %v1041 = vsel %vm977, %v945, %v1009
  %v1042 = vsel %vm978, %v946, %v1010
  %v1043 = vsel %vm979, %v947, %v1011
  %v1044 = vsel %vm980, %v948, %v1012
  %v1045 = vsel %vm981, %v949, %v1013
  %v1046 = vsel %vm982, %v950, %v1014
  %v1047 = vsel %vm983, %v951, %v1015
  %v1048 = vsel %vm984, %v952, %v1016
  %v1049 = vsel %vm985, %v953, %v1017
  %v1050 = vsel %vm986, %v954, %v1018
  %v1051 = vsel %vm987, %v955, %v1019
  %v1052 = vsel %vm988, %v956, %v1020
  %v1053 = vsel %vm989, %v957, %v1021
  %v1054 = vsel %vm990, %v958, %v1022
  %v1055 = vsel %vm991, %v959, %v1023
  %v1056 = vsel %vm992, %v960, %v1024
  %v1057 = vsel %vm993, %v961, %v1025
  %v1058 = vsel %vm994, %v962, %v1026
  %v1059 = vsel %vm995, %v963, %v1027
  %v1060 = vsel %vm996, %v964, %v1028
  %v1061 = vsel %vm997, %v965, %v1029
  %vm1062 = vcmask 523264
  %1063 = vst.msk [vmem:[%s5] sm:$0xff] %vm1062, %v1030
  %1064 = vst.msk [vmem:[%s5 + $0x8] sm:$0xff] %vm1062, %v1031
  %1065 = vst.msk [vmem:[%s5 + $0x10] sm:$0xff] %vm1062, %v1032
  %1066 = vst.msk [vmem:[%s5 + $0x18] sm:$0xff] %vm1062, %v1033
  %1067 = vst.msk [vmem:[%s5 + $0x20] sm:$0xff] %vm1062, %v1034
  %1068 = vst.msk [vmem:[%s5 + $0x28] sm:$0xff] %vm1062, %v1035
  %1069 = vst.msk [vmem:[%s5 + $0x30] sm:$0xff] %vm1062, %v1036
  %1070 = vst.msk [vmem:[%s5 + $0x38] sm:$0xff] %vm1062, %v1037
  %1071 = vst.msk [vmem:[%s5 + $0x40] sm:$0xff] %vm1062, %v1038
  %1072 = vst.msk [vmem:[%s5 + $0x48] sm:$0xff] %vm1062, %v1039
  %1073 = vst.msk [vmem:[%s5 + $0x50] sm:$0xff] %vm1062, %v1040
  %1074 = vst.msk [vmem:[%s5 + $0x58] sm:$0xff] %vm1062, %v1041
  %1075 = vst.msk [vmem:[%s5 + $0x60] sm:$0xff] %vm1062, %v1042
  %1076 = vst.msk [vmem:[%s5 + $0x68] sm:$0xff] %vm1062, %v1043
  %1077 = vst.msk [vmem:[%s5 + $0x70] sm:$0xff] %vm1062, %v1044
  %1078 = vst.msk [vmem:[%s5 + $0x78] sm:$0xff] %vm1062, %v1045
  %1079 = vst.msk [vmem:[%s5 + $0x80] sm:$0xff] %vm1062, %v1046
  %1080 = vst.msk [vmem:[%s5 + $0x88] sm:$0xff] %vm1062, %v1047
  %1081 = vst.msk [vmem:[%s5 + $0x90] sm:$0xff] %vm1062, %v1048
  %1082 = vst.msk [vmem:[%s5 + $0x98] sm:$0xff] %vm1062, %v1049
  %1083 = vst.msk [vmem:[%s5 + $0xa0] sm:$0xff] %vm1062, %v1050
  %1084 = vst.msk [vmem:[%s5 + $0xa8] sm:$0xff] %vm1062, %v1051
  %1085 = vst.msk [vmem:[%s5 + $0xb0] sm:$0xff] %vm1062, %v1052
  %1086 = vst.msk [vmem:[%s5 + $0xb8] sm:$0xff] %vm1062, %v1053
  %1087 = vst.msk [vmem:[%s5 + $0xc0] sm:$0xff] %vm1062, %v1054
  %1088 = vst.msk [vmem:[%s5 + $0xc8] sm:$0xff] %vm1062, %v1055
  %1089 = vst.msk [vmem:[%s5 + $0xd0] sm:$0xff] %vm1062, %v1056
  %1090 = vst.msk [vmem:[%s5 + $0xd8] sm:$0xff] %vm1062, %v1057
  %1091 = vst.msk [vmem:[%s5 + $0xe0] sm:$0xff] %vm1062, %v1058
  %1092 = vst.msk [vmem:[%s5 + $0xe8] sm:$0xff] %vm1062, %v1059
  %1093 = vst.msk [vmem:[%s5 + $0xf0] sm:$0xff] %vm1062, %v1060
  %1094 = vst.msk [vmem:[%s5 + $0xf8] sm:$0xff] %vm1062, %v1061
  // Predicated region
  $region22: #{forward.10} parent=0 // pred_check
    _
  $region23: #{forward.10} parent=0 // pred_check_branch
    %1096 = sbr.rel (0) target = $region25
  $region24: #{forward.10} parent=0 // pred_region
    _
  $region25: #{forward.10} parent=0 // pred_fallthru
    _
  // Predicated region
  $region26: #{forward.10} parent=0 // pred_check
    _
  $region27: #{forward.10} parent=0 // pred_check_branch
    %1098 = sbr.rel (0) target = $region29
  $region28: #{forward.10} parent=0 // pred_region
    _
  $region29: #{forward.10} parent=0 // pred_fallthru
    _

// kernel: squeeze.13
$region0: #{squeeze.13}
  %s0 = inlined_call_operand.vmem [shape: f32[1,66,64], index: 0, kind: input, shape index: {}]
  %s1 = inlined_call_operand.vmem [shape: f32[2,33,64], index: 1, kind: output, shape index: {}]
  %v2 = vld [vmem:[%s0] sm:$0xff]
  %vm3 = vcmask 523264
  %4 = vst.msk [vmem:[%s1] sm:$0xff] %vm3, %v2
  %s5 = scalar_lea.vmem %s0, 8
  %v6 = vld [vmem:[%s5] sm:$0xff]
  %vm7 = vcmask 523264
  %s8 = scalar_lea.vmem %s1, 8
  %9 = vst.msk [vmem:[%s8] sm:$0xff] %vm7, %v6
  %s10 = scalar_lea.vmem %s0, 16
  %v11 = vld [vmem:[%s10] sm:$0xff]
  %vm12 = vcmask 523264
  %s13 = scalar_lea.vmem %s1, 16
  %14 = vst.msk [vmem:[%s13] sm:$0xff] %vm12, %v11
  %s15 = scalar_lea.vmem %s0, 24
  %v16 = vld [vmem:[%s15] sm:$0xff]
  %vm17 = vcmask 523264
  %s18 = scalar_lea.vmem %s1, 24
  %19 = vst.msk [vmem:[%s18] sm:$0xff] %vm17, %v16
  %s20 = scalar_lea.vmem %s0, 32
  %v21 = vld [vmem:[%s20] sm:$0xff]
  %vm22 = vcmask 523264
  %s23 = scalar_lea.vmem %s1, 32
  %24 = vst.msk [vmem:[%s23] ss:$8 sm:$0x3] %vm22, %v21
  %s25 = scalar_lea.vmem %s1, 39
  %26 = vst.msk [vmem:[%s25] sm:$0xfc] %vm22, %v21
  %s27 = scalar_lea.vmem %s0, 40
  %v28 = vld [vmem:[%s27] sm:$0xff]
  %vm29 = vcmask 523264
  %s30 = scalar_lea.vmem %s1, 47
  %31 = vst.msk [vmem:[%s30] sm:$0xff] %vm29, %v28
  %s32 = scalar_lea.vmem %s0, 48
  %v33 = vld [vmem:[%s32] sm:$0xff]
  %vm34 = vcmask 523264
  %s35 = scalar_lea.vmem %s1, 55
  %36 = vst.msk [vmem:[%s35] sm:$0xff] %vm34, %v33
  %s37 = scalar_lea.vmem %s0, 56
  %v38 = vld [vmem:[%s37] sm:$0xff]
  %vm39 = vcmask 523264
  %s40 = scalar_lea.vmem %s1, 63
  %41 = vst.msk [vmem:[%s40] sm:$0xff] %vm39, %v38
  %s42 = scalar_lea.vmem %s0, 64
  %v43 = vld [vmem:[%s42] sm:$0x3]
  %vm44 = vcmask 523264
  %s45 = scalar_lea.vmem %s1, 71
  %46 = vst.msk [vmem:[%s45] sm:$0x3] %vm44, %v43

// kernel: forward.11
$region0: #{forward.11}
  #allocation0 [shape = 'u32[]', space=smem, size = 0x4, offset = 0x4, fixed_abs, tag = 'smem constant byte address 0x4 - core index']
  #allocation1 [shape = 'u32[144,128]{1,0:T(1,128)}', space=vmem, size = 0x12000, scoped, tag = 'internal scratch']
  %s0 = inlined_call_operand.vmem [shape: bf16[1,66,2048], index: 0, kind: input, shape index: {}]
  %s1 = inlined_call_operand.vmem [shape: bf16[1,2048,128], index: 1, kind: input, shape index: {}]
  %s2 = inlined_call_operand.vmem [shape: bf16[1,2048,64], index: 2, kind: input, shape index: {}]
  %s3 = inlined_call_operand.vmem [shape: f32[1,1,128], index: 3, kind: input, shape index: {}]
  %s4 = inlined_call_operand.vmem [shape: f32[1,1,64], index: 4, kind: input, shape index: {}]
  %s5 = inlined_call_operand.vmem [shape: f32[1,66,64], index: 5, kind: output, shape index: {}]
  %s6 = sld [smem:[#allocation0]]
  $region30: #{forward.11} parent=0
    _
  %s8 = ssub.s32 1, %s6
  %s9 = scalar_select 0, %s8, %s6
  // Predicated region
  $region2: #{forward.11} parent=0 // pred_check
    _
  $region3: #{forward.11} parent=0 // pred_check_branch
    %11 = sbr.rel (0) target = $region5
  $region4: #{forward.11} parent=0 // pred_region
    _
  $region5: #{forward.11} parent=0 // pred_fallthru
    _
  // Predicated region
  $region6: #{forward.11} parent=0 // pred_check
    _
  $region7: #{forward.11} parent=0 // pred_check_branch
    %13 = sbr.rel (0) target = $region9
  $region8: #{forward.11} parent=0 // pred_region
    _
  $region9: #{forward.11} parent=0 // pred_fallthru
    _
  // Predicated region
  $region10: #{forward.11} parent=0 // pred_check
    _
  $region11: #{forward.11} parent=0 // pred_check_branch
    %15 = sbr.rel (0) target = $region13
  $region12: #{forward.11} parent=0 // pred_region
    _
  $region13: #{forward.11} parent=0 // pred_fallthru
    _
  // Predicated region
  $region14: #{forward.11} parent=0 // pred_check
    _
  $region15: #{forward.11} parent=0 // pred_check_branch
    %17 = sbr.rel (0) target = $region17
  $region16: #{forward.11} parent=0 // pred_region
    _
  $region17: #{forward.11} parent=0 // pred_fallthru
    _
  // Predicated region
  $region18: #{forward.11} parent=0 // pred_check
    _
  $region19: #{forward.11} parent=0 // pred_check_branch
    %19 = sbr.rel (0) target = $region21
  $region20: #{forward.11} parent=0 // pred_region
    _
  $region21: #{forward.11} parent=0 // pred_fallthru
    _
  %v21 = vld [vmem:[%s0] sm:$0xff]
  %v22 = vld [vmem:[%s0 + $0x8] sm:$0xff]
  %v23 = vld [vmem:[%s0 + $0x10] sm:$0xff]
  %v24 = vld [vmem:[%s0 + $0x18] sm:$0xff]
  %v25 = vld [vmem:[%s0 + $0x20] sm:$0xff]
  %v26 = vld [vmem:[%s0 + $0x28] sm:$0xff]
  %v27 = vld [vmem:[%s0 + $0x30] sm:$0xff]
  %v28 = vld [vmem:[%s0 + $0x38] sm:$0xff]
  %v29 = vld [vmem:[%s0 + $0x40] sm:$0xff]
  %v30 = vld [vmem:[%s0 + $0x48] sm:$0xff]
  %v31 = vld [vmem:[%s0 + $0x50] sm:$0xff]
  %v32 = vld [vmem:[%s0 + $0x58] sm:$0xff]
  %v33 = vld [vmem:[%s0 + $0x60] sm:$0xff]
  %v34 = vld [vmem:[%s0 + $0x68] sm:$0xff]
  %v35 = vld [vmem:[%s0 + $0x70] sm:$0xff]
  %v36 = vld [vmem:[%s0 + $0x78] sm:$0xff]
  %v37 = vld [vmem:[%s0 + $0x80] sm:$0xff]
  %v38 = vld [vmem:[%s0 + $0x88] sm:$0xff]
  %v39 = vld [vmem:[%s0 + $0x90] sm:$0xff]
  %v40 = vld [vmem:[%s0 + $0x98] sm:$0xff]
  %v41 = vld [vmem:[%s0 + $0xa0] sm:$0xff]
  %v42 = vld [vmem:[%s0 + $0xa8] sm:$0xff]
  %v43 = vld [vmem:[%s0 + $0xb0] sm:$0xff]
  %v44 = vld [vmem:[%s0 + $0xb8] sm:$0xff]
  %v45 = vld [vmem:[%s0 + $0xc0] sm:$0xff]
  %v46 = vld [vmem:[%s0 + $0xc8] sm:$0xff]
  %v47 = vld [vmem:[%s0 + $0xd0] sm:$0xff]
  %v48 = vld [vmem:[%s0 + $0xd8] sm:$0xff]
  %v49 = vld [vmem:[%s0 + $0xe0] sm:$0xff]
  %v50 = vld [vmem:[%s0 + $0xe8] sm:$0xff]
  %v51 = vld [vmem:[%s0 + $0xf0] sm:$0xff]
  %v52 = vld [vmem:[%s0 + $0xf8] sm:$0xff]
  %v53 = vld [vmem:[%s0 + $0x100] sm:$0xff]
  %v54 = vld [vmem:[%s0 + $0x108] sm:$0xff]
  %v55 = vld [vmem:[%s0 + $0x110] sm:$0xff]
  %v56 = vld [vmem:[%s0 + $0x118] sm:$0xff]
  %v57 = vld [vmem:[%s0 + $0x120] sm:$0xff]
  %v58 = vld [vmem:[%s0 + $0x128] sm:$0xff]
  %v59 = vld [vmem:[%s0 + $0x130] sm:$0xff]
  %v60 = vld [vmem:[%s0 + $0x138] sm:$0xff]
  %v61 = vld [vmem:[%s0 + $0x140] sm:$0xff]
  %v62 = vld [vmem:[%s0 + $0x148] sm:$0xff]
  %v63 = vld [vmem:[%s0 + $0x150] sm:$0xff]
  %v64 = vld [vmem:[%s0 + $0x158] sm:$0xff]
  %v65 = vld [vmem:[%s0 + $0x160] sm:$0xff]
  %v66 = vld [vmem:[%s0 + $0x168] sm:$0xff]
  %v67 = vld [vmem:[%s0 + $0x170] sm:$0xff]
  %v68 = vld [vmem:[%s0 + $0x178] sm:$0xff]
  %v69 = vld [vmem:[%s0 + $0x180] sm:$0xff]
  %v70 = vld [vmem:[%s0 + $0x188] sm:$0xff]
  %v71 = vld [vmem:[%s0 + $0x190] sm:$0xff]
  %v72 = vld [vmem:[%s0 + $0x198] sm:$0xff]
  %v73 = vld [vmem:[%s0 + $0x1a0] sm:$0xff]
  %v74 = vld [vmem:[%s0 + $0x1a8] sm:$0xff]
  %v75 = vld [vmem:[%s0 + $0x1b0] sm:$0xff]
  %v76 = vld [vmem:[%s0 + $0x1b8] sm:$0xff]
  %v77 = vld [vmem:[%s0 + $0x1c0] sm:$0xff]
  %v78 = vld [vmem:[%s0 + $0x1c8] sm:$0xff]
  %v79 = vld [vmem:[%s0 + $0x1d0] sm:$0xff]
  %v80 = vld [vmem:[%s0 + $0x1d8] sm:$0xff]
  %v81 = vld [vmem:[%s0 + $0x1e0] sm:$0xff]
  %v82 = vld [vmem:[%s0 + $0x1e8] sm:$0xff]
  %v83 = vld [vmem:[%s0 + $0x1f0] sm:$0xff]
  %v84 = vld [vmem:[%s0 + $0x1f8] sm:$0xff]
  %v85 = vld [vmem:[%s0 + $0x200] sm:$0x11]
  %v86 = vld [vmem:[%s0 + $0x208] sm:$0x11]
  %v87 = vld [vmem:[%s0 + $0x210] sm:$0x11]
  %v88 = vld [vmem:[%s0 + $0x218] sm:$0x11]
  %v89 = vld [vmem:[%s0 + $0x220] sm:$0x11]
  %v90 = vld [vmem:[%s0 + $0x228] sm:$0x11]
  %v91 = vld [vmem:[%s0 + $0x230] sm:$0x11]
  %v92 = vld [vmem:[%s0 + $0x238] sm:$0x11]
  %v93 = vld [vmem:[%s1] sm:$0xf]
  %v94 = vld [vmem:[%s1 + $0x4] sm:$0xf]
  %v95 = vld [vmem:[%s1 + $0x8] sm:$0xf]
  %v96 = vld [vmem:[%s1 + $0xc] sm:$0xf]
  %v97 = vld [vmem:[%s1 + $0x10] sm:$0xf]
  %v98 = vld [vmem:[%s1 + $0x14] sm:$0xf]
  %v99 = vld [vmem:[%s1 + $0x18] sm:$0xf]
  %v100 = vld [vmem:[%s1 + $0x1c] sm:$0xf]
  %v101 = vld [vmem:[%s1 + $0x20] sm:$0xf]
  %v102 = vld [vmem:[%s1 + $0x24] sm:$0xf]
  %v103 = vld [vmem:[%s1 + $0x28] sm:$0xf]
  %v104 = vld [vmem:[%s1 + $0x2c] sm:$0xf]
  %v105 = vld [vmem:[%s1 + $0x30] sm:$0xf]
  %v106 = vld [vmem:[%s1 + $0x34] sm:$0xf]
  %v107 = vld [vmem:[%s1 + $0x38] sm:$0xf]
  %v108 = vld [vmem:[%s1 + $0x3c] sm:$0xf]
  %v109 = vld [vmem:[%s1 + $0x40] sm:$0xf]
  %v110 = vld [vmem:[%s1 + $0x44] sm:$0xf]
  %v111 = vld [vmem:[%s1 + $0x48] sm:$0xf]
  %v112 = vld [vmem:[%s1 + $0x4c] sm:$0xf]
  %v113 = vld [vmem:[%s1 + $0x50] sm:$0xf]
  %v114 = vld [vmem:[%s1 + $0x54] sm:$0xf]
  %v115 = vld [vmem:[%s1 + $0x58] sm:$0xf]
  %v116 = vld [vmem:[%s1 + $0x5c] sm:$0xf]
  %v117 = vld [vmem:[%s1 + $0x60] sm:$0xf]
  %v118 = vld [vmem:[%s1 + $0x64] sm:$0xf]
  %v119 = vld [vmem:[%s1 + $0x68] sm:$0xf]
  %v120 = vld [vmem:[%s1 + $0x6c] sm:$0xf]
  %v121 = vld [vmem:[%s1 + $0x70] sm:$0xf]
  %v122 = vld [vmem:[%s1 + $0x74] sm:$0xf]
  %v123 = vld [vmem:[%s1 + $0x78] sm:$0xf]
  %v124 = vld [vmem:[%s1 + $0x7c] sm:$0xf]
  %v125 = vld [vmem:[%s1 + $0x80] sm:$0xf]
  %v126 = vld [vmem:[%s1 + $0x84] sm:$0xf]
  %v127 = vld [vmem:[%s1 + $0x88] sm:$0xf]
  %v128 = vld [vmem:[%s1 + $0x8c] sm:$0xf]
  %v129 = vld [vmem:[%s1 + $0x90] sm:$0xf]
  %v130 = vld [vmem:[%s1 + $0x94] sm:$0xf]
  %v131 = vld [vmem:[%s1 + $0x98] sm:$0xf]
  %v132 = vld [vmem:[%s1 + $0x9c] sm:$0xf]
  %v133 = vld [vmem:[%s1 + $0xa0] sm:$0xf]
  %v134 = vld [vmem:[%s1 + $0xa4] sm:$0xf]
  %v135 = vld [vmem:[%s1 + $0xa8] sm:$0xf]
  %v136 = vld [vmem:[%s1 + $0xac] sm:$0xf]
  %v137 = vld [vmem:[%s1 + $0xb0] sm:$0xf]
  %v138 = vld [vmem:[%s1 + $0xb4] sm:$0xf]
  %v139 = vld [vmem:[%s1 + $0xb8] sm:$0xf]
  %v140 = vld [vmem:[%s1 + $0xbc] sm:$0xf]
  %v141 = vld [vmem:[%s1 + $0xc0] sm:$0xf]
  %v142 = vld [vmem:[%s1 + $0xc4] sm:$0xf]
  %v143 = vld [vmem:[%s1 + $0xc8] sm:$0xf]
  %v144 = vld [vmem:[%s1 + $0xcc] sm:$0xf]
  %v145 = vld [vmem:[%s1 + $0xd0] sm:$0xf]
  %v146 = vld [vmem:[%s1 + $0xd4] sm:$0xf]
  %v147 = vld [vmem:[%s1 + $0xd8] sm:$0xf]
  %v148 = vld [vmem:[%s1 + $0xdc] sm:$0xf]
  %v149 = vld [vmem:[%s1 + $0xe0] sm:$0xf]
  %v150 = vld [vmem:[%s1 + $0xe4] sm:$0xf]
  %v151 = vld [vmem:[%s1 + $0xe8] sm:$0xf]
  %v152 = vld [vmem:[%s1 + $0xec] sm:$0xf]
  %v153 = vld [vmem:[%s1 + $0xf0] sm:$0xf]
  %v154 = vld [vmem:[%s1 + $0xf4] sm:$0xf]
  %v155 = vld [vmem:[%s1 + $0xf8] sm:$0xf]
  %v156 = vld [vmem:[%s1 + $0xfc] sm:$0xf]
  %v157 = vld [vmem:[%s1 + $0x100] sm:$0xf]
  %v158 = vld [vmem:[%s1 + $0x104] sm:$0xf]
  %v159 = vld [vmem:[%s1 + $0x108] sm:$0xf]
  %v160 = vld [vmem:[%s1 + $0x10c] sm:$0xf]
  %v161 = vld [vmem:[%s1 + $0x110] sm:$0xf]
  %v162 = vld [vmem:[%s1 + $0x114] sm:$0xf]
  %v163 = vld [vmem:[%s1 + $0x118] sm:$0xf]
  %v164 = vld [vmem:[%s1 + $0x11c] sm:$0xf]
  %v165 = vld [vmem:[%s1 + $0x120] sm:$0xf]
  %v166 = vld [vmem:[%s1 + $0x124] sm:$0xf]
  %v167 = vld [vmem:[%s1 + $0x128] sm:$0xf]
  %v168 = vld [vmem:[%s1 + $0x12c] sm:$0xf]
  %v169 = vld [vmem:[%s1 + $0x130] sm:$0xf]
  %v170 = vld [vmem:[%s1 + $0x134] sm:$0xf]
  %v171 = vld [vmem:[%s1 + $0x138] sm:$0xf]
  %v172 = vld [vmem:[%s1 + $0x13c] sm:$0xf]
  %v173 = vld [vmem:[%s1 + $0x140] sm:$0xf]
  %v174 = vld [vmem:[%s1 + $0x144] sm:$0xf]
  %v175 = vld [vmem:[%s1 + $0x148] sm:$0xf]
  %v176 = vld [vmem:[%s1 + $0x14c] sm:$0xf]
  %v177 = vld [vmem:[%s1 + $0x150] sm:$0xf]
  %v178 = vld [vmem:[%s1 + $0x154] sm:$0xf]
  %v179 = vld [vmem:[%s1 + $0x158] sm:$0xf]
  %v180 = vld [vmem:[%s1 + $0x15c] sm:$0xf]
  %v181 = vld [vmem:[%s1 + $0x160] sm:$0xf]
  %v182 = vld [vmem:[%s1 + $0x164] sm:$0xf]
  %v183 = vld [vmem:[%s1 + $0x168] sm:$0xf]
  %v184 = vld [vmem:[%s1 + $0x16c] sm:$0xf]
  %v185 = vld [vmem:[%s1 + $0x170] sm:$0xf]
  %v186 = vld [vmem:[%s1 + $0x174] sm:$0xf]
  %v187 = vld [vmem:[%s1 + $0x178] sm:$0xf]
  %v188 = vld [vmem:[%s1 + $0x17c] sm:$0xf]
  %v189 = vld [vmem:[%s1 + $0x180] sm:$0xf]
  %v190 = vld [vmem:[%s1 + $0x184] sm:$0xf]
  %v191 = vld [vmem:[%s1 + $0x188] sm:$0xf]
  %v192 = vld [vmem:[%s1 + $0x18c] sm:$0xf]
  %v193 = vld [vmem:[%s1 + $0x190] sm:$0xf]
  %v194 = vld [vmem:[%s1 + $0x194] sm:$0xf]
  %v195 = vld [vmem:[%s1 + $0x198] sm:$0xf]
  %v196 = vld [vmem:[%s1 + $0x19c] sm:$0xf]
  %v197 = vld [vmem:[%s1 + $0x1a0] sm:$0xf]
  %v198 = vld [vmem:[%s1 + $0x1a4] sm:$0xf]
  %v199 = vld [vmem:[%s1 + $0x1a8] sm:$0xf]
  %v200 = vld [vmem:[%s1 + $0x1ac] sm:$0xf]
  %v201 = vld [vmem:[%s1 + $0x1b0] sm:$0xf]
  %v202 = vld [vmem:[%s1 + $0x1b4] sm:$0xf]
  %v203 = vld [vmem:[%s1 + $0x1b8] sm:$0xf]
  %v204 = vld [vmem:[%s1 + $0x1bc] sm:$0xf]
  %v205 = vld [vmem:[%s1 + $0x1c0] sm:$0xf]
  %v206 = vld [vmem:[%s1 + $0x1c4] sm:$0xf]
  %v207 = vld [vmem:[%s1 + $0x1c8] sm:$0xf]
  %v208 = vld [vmem:[%s1 + $0x1cc] sm:$0xf]
  %v209 = vld [vmem:[%s1 + $0x1d0] sm:$0xf]
  %v210 = vld [vmem:[%s1 + $0x1d4] sm:$0xf]
  %v211 = vld [vmem:[%s1 + $0x1d8] sm:$0xf]
  %v212 = vld [vmem:[%s1 + $0x1dc] sm:$0xf]
  %v213 = vld [vmem:[%s1 + $0x1e0] sm:$0xf]
  %v214 = vld [vmem:[%s1 + $0x1e4] sm:$0xf]
  %v215 = vld [vmem:[%s1 + $0x1e8] sm:$0xf]
  %v216 = vld [vmem:[%s1 + $0x1ec] sm:$0xf]
  %v217 = vld [vmem:[%s1 + $0x1f0] sm:$0xf]
  %v218 = vld [vmem:[%s1 + $0x1f4] sm:$0xf]
  %v219 = vld [vmem:[%s1 + $0x1f8] sm:$0xf]
  %v220 = vld [vmem:[%s1 + $0x1fc] sm:$0xf]
  %v221 = vld [vmem:[%s1 + $0x200] sm:$0xf]
  %v222 = vld [vmem:[%s1 + $0x204] sm:$0xf]
  %v223 = vld [vmem:[%s1 + $0x208] sm:$0xf]
  %v224 = vld [vmem:[%s1 + $0x20c] sm:$0xf]
  %v225 = vld [vmem:[%s1 + $0x210] sm:$0xf]
  %v226 = vld [vmem:[%s1 + $0x214] sm:$0xf]
  %v227 = vld [vmem:[%s1 + $0x218] sm:$0xf]
  %v228 = vld [vmem:[%s1 + $0x21c] sm:$0xf]
  %v229 = vld [vmem:[%s1 + $0x220] sm:$0xf]
  %v230 = vld [vmem:[%s1 + $0x224] sm:$0xf]
  %v231 = vld [vmem:[%s1 + $0x228] sm:$0xf]
  %v232 = vld [vmem:[%s1 + $0x22c] sm:$0xf]
  %v233 = vld [vmem:[%s1 + $0x230] sm:$0xf]
  %v234 = vld [vmem:[%s1 + $0x234] sm:$0xf]
  %v235 = vld [vmem:[%s1 + $0x238] sm:$0xf]
  %v236 = vld [vmem:[%s1 + $0x23c] sm:$0xf]
  %v237 = vld [vmem:[%s1 + $0x240] sm:$0xf]
  %v238 = vld [vmem:[%s1 + $0x244] sm:$0xf]
  %v239 = vld [vmem:[%s1 + $0x248] sm:$0xf]
  %v240 = vld [vmem:[%s1 + $0x24c] sm:$0xf]
  %v241 = vld [vmem:[%s1 + $0x250] sm:$0xf]
  %v242 = vld [vmem:[%s1 + $0x254] sm:$0xf]
  %v243 = vld [vmem:[%s1 + $0x258] sm:$0xf]
  %v244 = vld [vmem:[%s1 + $0x25c] sm:$0xf]
  %v245 = vld [vmem:[%s1 + $0x260] sm:$0xf]
  %v246 = vld [vmem:[%s1 + $0x264] sm:$0xf]
  %v247 = vld [vmem:[%s1 + $0x268] sm:$0xf]
  %v248 = vld [vmem:[%s1 + $0x26c] sm:$0xf]
  %v249 = vld [vmem:[%s1 + $0x270] sm:$0xf]
  %v250 = vld [vmem:[%s1 + $0x274] sm:$0xf]
  %v251 = vld [vmem:[%s1 + $0x278] sm:$0xf]
  %v252 = vld [vmem:[%s1 + $0x27c] sm:$0xf]
  %v253 = vld [vmem:[%s1 + $0x280] sm:$0xf]
  %v254 = vld [vmem:[%s1 + $0x284] sm:$0xf]
  %v255 = vld [vmem:[%s1 + $0x288] sm:$0xf]
  %v256 = vld [vmem:[%s1 + $0x28c] sm:$0xf]
  %v257 = vld [vmem:[%s1 + $0x290] sm:$0xf]
  %v258 = vld [vmem:[%s1 + $0x294] sm:$0xf]
  %v259 = vld [vmem:[%s1 + $0x298] sm:$0xf]
  %v260 = vld [vmem:[%s1 + $0x29c] sm:$0xf]
  %v261 = vld [vmem:[%s1 + $0x2a0] sm:$0xf]
  %v262 = vld [vmem:[%s1 + $0x2a4] sm:$0xf]
  %v263 = vld [vmem:[%s1 + $0x2a8] sm:$0xf]
  %v264 = vld [vmem:[%s1 + $0x2ac] sm:$0xf]
  %v265 = vld [vmem:[%s1 + $0x2b0] sm:$0xf]
  %v266 = vld [vmem:[%s1 + $0x2b4] sm:$0xf]
  %v267 = vld [vmem:[%s1 + $0x2b8] sm:$0xf]
  %v268 = vld [vmem:[%s1 + $0x2bc] sm:$0xf]
  %v269 = vld [vmem:[%s1 + $0x2c0] sm:$0xf]
  %v270 = vld [vmem:[%s1 + $0x2c4] sm:$0xf]
  %v271 = vld [vmem:[%s1 + $0x2c8] sm:$0xf]
  %v272 = vld [vmem:[%s1 + $0x2cc] sm:$0xf]
  %v273 = vld [vmem:[%s1 + $0x2d0] sm:$0xf]
  %v274 = vld [vmem:[%s1 + $0x2d4] sm:$0xf]
  %v275 = vld [vmem:[%s1 + $0x2d8] sm:$0xf]
  %v276 = vld [vmem:[%s1 + $0x2dc] sm:$0xf]
  %v277 = vld [vmem:[%s1 + $0x2e0] sm:$0xf]
  %v278 = vld [vmem:[%s1 + $0x2e4] sm:$0xf]
  %v279 = vld [vmem:[%s1 + $0x2e8] sm:$0xf]
  %v280 = vld [vmem:[%s1 + $0x2ec] sm:$0xf]
  %v281 = vld [vmem:[%s1 + $0x2f0] sm:$0xf]
  %v282 = vld [vmem:[%s1 + $0x2f4] sm:$0xf]
  %v283 = vld [vmem:[%s1 + $0x2f8] sm:$0xf]
  %v284 = vld [vmem:[%s1 + $0x2fc] sm:$0xf]
  %v285 = vld [vmem:[%s1 + $0x300] sm:$0xf]
  %v286 = vld [vmem:[%s1 + $0x304] sm:$0xf]
  %v287 = vld [vmem:[%s1 + $0x308] sm:$0xf]
  %v288 = vld [vmem:[%s1 + $0x30c] sm:$0xf]
  %v289 = vld [vmem:[%s1 + $0x310] sm:$0xf]
  %v290 = vld [vmem:[%s1 + $0x314] sm:$0xf]
  %v291 = vld [vmem:[%s1 + $0x318] sm:$0xf]
  %v292 = vld [vmem:[%s1 + $0x31c] sm:$0xf]
  %v293 = vld [vmem:[%s1 + $0x320] sm:$0xf]
  %v294 = vld [vmem:[%s1 + $0x324] sm:$0xf]
  %v295 = vld [vmem:[%s1 + $0x328] sm:$0xf]
  %v296 = vld [vmem:[%s1 + $0x32c] sm:$0xf]
  %v297 = vld [vmem:[%s1 + $0x330] sm:$0xf]
  %v298 = vld [vmem:[%s1 + $0x334] sm:$0xf]
  %v299 = vld [vmem:[%s1 + $0x338] sm:$0xf]
  %v300 = vld [vmem:[%s1 + $0x33c] sm:$0xf]
  %v301 = vld [vmem:[%s1 + $0x340] sm:$0xf]
  %v302 = vld [vmem:[%s1 + $0x344] sm:$0xf]
  %v303 = vld [vmem:[%s1 + $0x348] sm:$0xf]
  %v304 = vld [vmem:[%s1 + $0x34c] sm:$0xf]
  %v305 = vld [vmem:[%s1 + $0x350] sm:$0xf]
  %v306 = vld [vmem:[%s1 + $0x354] sm:$0xf]
  %v307 = vld [vmem:[%s1 + $0x358] sm:$0xf]
  %v308 = vld [vmem:[%s1 + $0x35c] sm:$0xf]
  %v309 = vld [vmem:[%s1 + $0x360] sm:$0xf]
  %v310 = vld [vmem:[%s1 + $0x364] sm:$0xf]
  %v311 = vld [vmem:[%s1 + $0x368] sm:$0xf]
  %v312 = vld [vmem:[%s1 + $0x36c] sm:$0xf]
  %v313 = vld [vmem:[%s1 + $0x370] sm:$0xf]
  %v314 = vld [vmem:[%s1 + $0x374] sm:$0xf]
  %v315 = vld [vmem:[%s1 + $0x378] sm:$0xf]
  %v316 = vld [vmem:[%s1 + $0x37c] sm:$0xf]
  %v317 = vld [vmem:[%s1 + $0x380] sm:$0xf]
  %v318 = vld [vmem:[%s1 + $0x384] sm:$0xf]
  %v319 = vld [vmem:[%s1 + $0x388] sm:$0xf]
  %v320 = vld [vmem:[%s1 + $0x38c] sm:$0xf]
  %v321 = vld [vmem:[%s1 + $0x390] sm:$0xf]
  %v322 = vld [vmem:[%s1 + $0x394] sm:$0xf]
  %v323 = vld [vmem:[%s1 + $0x398] sm:$0xf]
  %v324 = vld [vmem:[%s1 + $0x39c] sm:$0xf]
  %v325 = vld [vmem:[%s1 + $0x3a0] sm:$0xf]
  %v326 = vld [vmem:[%s1 + $0x3a4] sm:$0xf]
  %v327 = vld [vmem:[%s1 + $0x3a8] sm:$0xf]
  %v328 = vld [vmem:[%s1 + $0x3ac] sm:$0xf]
  %v329 = vld [vmem:[%s1 + $0x3b0] sm:$0xf]
  %v330 = vld [vmem:[%s1 + $0x3b4] sm:$0xf]
  %v331 = vld [vmem:[%s1 + $0x3b8] sm:$0xf]
  %v332 = vld [vmem:[%s1 + $0x3bc] sm:$0xf]
  %v333 = vld [vmem:[%s1 + $0x3c0] sm:$0xf]
  %v334 = vld [vmem:[%s1 + $0x3c4] sm:$0xf]
  %v335 = vld [vmem:[%s1 + $0x3c8] sm:$0xf]
  %v336 = vld [vmem:[%s1 + $0x3cc] sm:$0xf]
  %v337 = vld [vmem:[%s1 + $0x3d0] sm:$0xf]
  %v338 = vld [vmem:[%s1 + $0x3d4] sm:$0xf]
  %v339 = vld [vmem:[%s1 + $0x3d8] sm:$0xf]
  %v340 = vld [vmem:[%s1 + $0x3dc] sm:$0xf]
  %v341 = vld [vmem:[%s1 + $0x3e0] sm:$0xf]
  %v342 = vld [vmem:[%s1 + $0x3e4] sm:$0xf]
  %v343 = vld [vmem:[%s1 + $0x3e8] sm:$0xf]
  %v344 = vld [vmem:[%s1 + $0x3ec] sm:$0xf]
  %v345 = vld [vmem:[%s1 + $0x3f0] sm:$0xf]
  %v346 = vld [vmem:[%s1 + $0x3f4] sm:$0xf]
  %v347 = vld [vmem:[%s1 + $0x3f8] sm:$0xf]
  %v348 = vld [vmem:[%s1 + $0x3fc] sm:$0xf]
  %v349 = vld [vmem:[%s3] sm:$0x1]
  %v351 = vlaneseq
  %v352 = vshrl.u32 %v351, 7
  %v353 = vsub.s32 0, %v352
  %v354 = vrot.slane %v349, %v353
  %v428 = vunpack.c.l.b16 %v21
  %v429 = vunpack.c.h.b16 %v21
  %v430 = vunpack.c.l.b16 %v22
  %v431 = vunpack.c.h.b16 %v22
  %v432 = vunpack.c.l.b16 %v23
  %v433 = vunpack.c.h.b16 %v23
  %v434 = vunpack.c.l.b16 %v24
  %v435 = vunpack.c.h.b16 %v24
  %v436 = vunpack.c.l.b16 %v25
  %v437 = vunpack.c.h.b16 %v25
  %v438 = vunpack.c.l.b16 %v26
  %v439 = vunpack.c.h.b16 %v26
  %v440 = vunpack.c.l.b16 %v27
  %v441 = vunpack.c.h.b16 %v27
  %v442 = vunpack.c.l.b16 %v28
  %v443 = vunpack.c.h.b16 %v28
  %v444 = vunpack.c.l.b16 %v29
  %v445 = vunpack.c.h.b16 %v29
  %v446 = vunpack.c.l.b16 %v30
  %v447 = vunpack.c.h.b16 %v30
  %v448 = vunpack.c.l.b16 %v31
  %v449 = vunpack.c.h.b16 %v31
  %v450 = vunpack.c.l.b16 %v32
  %v451 = vunpack.c.h.b16 %v32
  %v452 = vunpack.c.l.b16 %v33
  %v453 = vunpack.c.h.b16 %v33
  %v454 = vunpack.c.l.b16 %v34
  %v455 = vunpack.c.h.b16 %v34
  %v456 = vunpack.c.l.b16 %v35
  %v457 = vunpack.c.h.b16 %v35
  %v458 = vunpack.c.l.b16 %v36
  %v459 = vunpack.c.h.b16 %v36
  %v460 = vunpack.c.l.b16 %v37
  %v461 = vunpack.c.h.b16 %v37
  %v462 = vunpack.c.l.b16 %v38
  %v463 = vunpack.c.h.b16 %v38
  %v464 = vunpack.c.l.b16 %v39
  %v465 = vunpack.c.h.b16 %v39
  %v466 = vunpack.c.l.b16 %v40
  %v467 = vunpack.c.h.b16 %v40
  %v468 = vunpack.c.l.b16 %v41
  %v469 = vunpack.c.h.b16 %v41
  %v470 = vunpack.c.l.b16 %v42
  %v471 = vunpack.c.h.b16 %v42
  %v472 = vunpack.c.l.b16 %v43
  %v473 = vunpack.c.h.b16 %v43
  %v474 = vunpack.c.l.b16 %v44
  %v475 = vunpack.c.h.b16 %v44
  %v476 = vunpack.c.l.b16 %v45
  %v477 = vunpack.c.h.b16 %v45
  %v478 = vunpack.c.l.b16 %v46
  %v479 = vunpack.c.h.b16 %v46
  %v480 = vunpack.c.l.b16 %v47
  %v481 = vunpack.c.h.b16 %v47
  %v482 = vunpack.c.l.b16 %v48
  %v483 = vunpack.c.h.b16 %v48
  %v484 = vunpack.c.l.b16 %v49
  %v485 = vunpack.c.h.b16 %v49
  %v486 = vunpack.c.l.b16 %v50
  %v487 = vunpack.c.h.b16 %v50
  %v488 = vunpack.c.l.b16 %v51
  %v489 = vunpack.c.h.b16 %v51
  %v490 = vunpack.c.l.b16 %v52
  %v491 = vunpack.c.h.b16 %v52
  %v492 = vunpack.c.l.b16 %v53
  %v493 = vunpack.c.h.b16 %v53
  %v494 = vunpack.c.l.b16 %v54
  %v495 = vunpack.c.h.b16 %v54
  %v496 = vunpack.c.l.b16 %v55
  %v497 = vunpack.c.h.b16 %v55
  %v498 = vunpack.c.l.b16 %v56
  %v499 = vunpack.c.h.b16 %v56
  %v500 = vunpack.c.l.b16 %v57
  %v501 = vunpack.c.h.b16 %v57
  %v502 = vunpack.c.l.b16 %v58
  %v503 = vunpack.c.h.b16 %v58
  %v504 = vunpack.c.l.b16 %v59
  %v505 = vunpack.c.h.b16 %v59
  %v506 = vunpack.c.l.b16 %v60
  %v507 = vunpack.c.h.b16 %v60
  %v508 = vunpack.c.l.b16 %v61
  %v509 = vunpack.c.h.b16 %v61
  %v510 = vunpack.c.l.b16 %v62
  %v511 = vunpack.c.h.b16 %v62
  %v512 = vunpack.c.l.b16 %v63
  %v513 = vunpack.c.h.b16 %v63
  %v514 = vunpack.c.l.b16 %v64
  %v515 = vunpack.c.h.b16 %v64
  %v516 = vunpack.c.l.b16 %v65
  %v517 = vunpack.c.h.b16 %v65
  %v518 = vunpack.c.l.b16 %v66
  %v519 = vunpack.c.h.b16 %v66
  %v520 = vunpack.c.l.b16 %v67
  %v521 = vunpack.c.h.b16 %v67
  %v522 = vunpack.c.l.b16 %v68
  %v523 = vunpack.c.h.b16 %v68
  %v524 = vunpack.c.l.b16 %v69
  %v525 = vunpack.c.h.b16 %v69
  %v526 = vunpack.c.l.b16 %v70
  %v527 = vunpack.c.h.b16 %v70
  %v528 = vunpack.c.l.b16 %v71
  %v529 = vunpack.c.h.b16 %v71
  %v530 = vunpack.c.l.b16 %v72
  %v531 = vunpack.c.h.b16 %v72
  %v532 = vunpack.c.l.b16 %v73
  %v533 = vunpack.c.h.b16 %v73
  %v534 = vunpack.c.l.b16 %v74
  %v535 = vunpack.c.h.b16 %v74
  %v536 = vunpack.c.l.b16 %v75
  %v537 = vunpack.c.h.b16 %v75
  %v538 = vunpack.c.l.b16 %v76
  %v539 = vunpack.c.h.b16 %v76
  %v540 = vunpack.c.l.b16 %v77
  %v541 = vunpack.c.h.b16 %v77
  %v542 = vunpack.c.l.b16 %v78
  %v543 = vunpack.c.h.b16 %v78
  %v544 = vunpack.c.l.b16 %v79
  %v545 = vunpack.c.h.b16 %v79
  %v546 = vunpack.c.l.b16 %v80
  %v547 = vunpack.c.h.b16 %v80
  %v548 = vunpack.c.l.b16 %v81
  %v549 = vunpack.c.h.b16 %v81
  %v550 = vunpack.c.l.b16 %v82
  %v551 = vunpack.c.h.b16 %v82
  %v552 = vunpack.c.l.b16 %v83
  %v553 = vunpack.c.h.b16 %v83
  %v554 = vunpack.c.l.b16 %v84
  %v555 = vunpack.c.h.b16 %v84
  %v556 = vunpack.c.l.b16 %v85
  %v557 = vunpack.c.h.b16 %v85
  %v558 = vunpack.c.l.b16 %v86
  %v559 = vunpack.c.h.b16 %v86
  %v560 = vunpack.c.l.b16 %v87
  %v561 = vunpack.c.h.b16 %v87
  %v562 = vunpack.c.l.b16 %v88
  %v563 = vunpack.c.h.b16 %v88
  %v564 = vunpack.c.l.b16 %v89
  %v565 = vunpack.c.h.b16 %v89
  %v566 = vunpack.c.l.b16 %v90
  %v567 = vunpack.c.h.b16 %v90
  %v568 = vunpack.c.l.b16 %v91
  %v569 = vunpack.c.h.b16 %v91
  %v570 = vunpack.c.l.b16 %v92
  %v571 = vunpack.c.h.b16 %v92
  %v572 = vpack.c.b16 %v444, %v428
  %v573 = vpack.c.b16 %v445, %v429
  %v574 = vpack.c.b16 %v446, %v430
  %v575 = vpack.c.b16 %v447, %v431
  %v576 = vpack.c.b16 %v448, %v432
  %v577 = vpack.c.b16 %v449, %v433
  %v578 = vpack.c.b16 %v450, %v434
  %v579 = vpack.c.b16 %v451, %v435
  %v580 = vpack.c.b16 %v452, %v436
  %v581 = vpack.c.b16 %v453, %v437
  %v582 = vpack.c.b16 %v454, %v438
  %v583 = vpack.c.b16 %v455, %v439
  %v584 = vpack.c.b16 %v456, %v440
  %v585 = vpack.c.b16 %v457, %v441
  %v586 = vpack.c.b16 %v458, %v442
  %v587 = vpack.c.b16 %v459, %v443
  %v588 = vpack.c.b16 %v476, %v460
  %v589 = vpack.c.b16 %v477, %v461
  %v590 = vpack.c.b16 %v478, %v462
  %v591 = vpack.c.b16 %v479, %v463
  %v592 = vpack.c.b16 %v480, %v464
  %v593 = vpack.c.b16 %v481, %v465
  %v594 = vpack.c.b16 %v482, %v466
  %v595 = vpack.c.b16 %v483, %v467
  %v596 = vpack.c.b16 %v484, %v468
  %v597 = vpack.c.b16 %v485, %v469
  %v598 = vpack.c.b16 %v486, %v470
  %v599 = vpack.c.b16 %v487, %v471
  %v600 = vpack.c.b16 %v488, %v472
  %v601 = vpack.c.b16 %v489, %v473
  %v602 = vpack.c.b16 %v490, %v474
  %v603 = vpack.c.b16 %v491, %v475
  %v604 = vpack.c.b16 %v508, %v492
  %v605 = vpack.c.b16 %v509, %v493
  %v606 = vpack.c.b16 %v510, %v494
  %v607 = vpack.c.b16 %v511, %v495
  %v608 = vpack.c.b16 %v512, %v496
  %v609 = vpack.c.b16 %v513, %v497
  %v610 = vpack.c.b16 %v514, %v498
  %v611 = vpack.c.b16 %v515, %v499
  %v612 = vpack.c.b16 %v516, %v500
  %v613 = vpack.c.b16 %v517, %v501
  %v614 = vpack.c.b16 %v518, %v502
  %v615 = vpack.c.b16 %v519, %v503
  %v616 = vpack.c.b16 %v520, %v504
  %v617 = vpack.c.b16 %v521, %v505
  %v618 = vpack.c.b16 %v522, %v506
  %v619 = vpack.c.b16 %v523, %v507
  %v620 = vpack.c.b16 %v540, %v524
  %v621 = vpack.c.b16 %v541, %v525
  %v622 = vpack.c.b16 %v542, %v526
  %v623 = vpack.c.b16 %v543, %v527
  %v624 = vpack.c.b16 %v544, %v528
  %v625 = vpack.c.b16 %v545, %v529
  %v626 = vpack.c.b16 %v546, %v530
  %v627 = vpack.c.b16 %v547, %v531
  %v628 = vpack.c.b16 %v548, %v532
  %v629 = vpack.c.b16 %v549, %v533
  %v630 = vpack.c.b16 %v550, %v534
  %v631 = vpack.c.b16 %v551, %v535
  %v632 = vpack.c.b16 %v552, %v536
  %v633 = vpack.c.b16 %v553, %v537
  %v634 = vpack.c.b16 %v554, %v538
  %v635 = vpack.c.b16 %v555, %v539
  %v636 = vpack.c.b16 %v556, %v556
  %v637 = vpack.c.b16 %v557, %v557
  %v638 = vpack.c.b16 %v558, %v558
  %v639 = vpack.c.b16 %v559, %v559
  %v640 = vpack.c.b16 %v560, %v560
  %v641 = vpack.c.b16 %v561, %v561
  %v642 = vpack.c.b16 %v562, %v562
  %v643 = vpack.c.b16 %v563, %v563
  %v644 = vpack.c.b16 %v564, %v564
  %v645 = vpack.c.b16 %v565, %v565
  %v646 = vpack.c.b16 %v566, %v566
  %v647 = vpack.c.b16 %v567, %v567
  %v648 = vpack.c.b16 %v568, %v568
  %v649 = vpack.c.b16 %v569, %v569
  %v650 = vpack.c.b16 %v570, %v570
  %v651 = vpack.c.b16 %v571, %v571
  %v988 = vunpack.c.l.b16 %v93
  %v989 = vunpack.c.l.b16 %v94
  %v990 = vunpack.c.l.b16 %v95
  %v991 = vunpack.c.l.b16 %v96
  %v992 = vunpack.c.l.b16 %v97
  %v993 = vunpack.c.l.b16 %v98
  %v994 = vunpack.c.l.b16 %v99
  %v995 = vunpack.c.l.b16 %v100
  %v996 = vunpack.c.l.b16 %v101
  %v997 = vunpack.c.l.b16 %v102
  %v998 = vunpack.c.l.b16 %v103
  %v999 = vunpack.c.l.b16 %v104
  %v1000 = vunpack.c.l.b16 %v105
  %v1001 = vunpack.c.l.b16 %v106
  %v1002 = vunpack.c.l.b16 %v107
  %v1003 = vunpack.c.l.b16 %v108
  %v1004 = vunpack.c.l.b16 %v109
  %v1005 = vunpack.c.l.b16 %v110
  %v1006 = vunpack.c.l.b16 %v111
  %v1007 = vunpack.c.l.b16 %v112
  %v1008 = vunpack.c.l.b16 %v113
  %v1009 = vunpack.c.l.b16 %v114
  %v1010 = vunpack.c.l.b16 %v115
  %v1011 = vunpack.c.l.b16 %v116
  %v1012 = vunpack.c.l.b16 %v117
  %v1013 = vunpack.c.l.b16 %v118
  %v1014 = vunpack.c.l.b16 %v119
  %v1015 = vunpack.c.l.b16 %v120
  %v1016 = vunpack.c.l.b16 %v121
  %v1017 = vunpack.c.l.b16 %v122
  %v1018 = vunpack.c.l.b16 %v123
  %v1019 = vunpack.c.l.b16 %v124
  %v1020 = vunpack.c.l.b16 %v125
  %v1021 = vunpack.c.l.b16 %v126
  %v1022 = vunpack.c.l.b16 %v127
  %v1023 = vunpack.c.l.b16 %v128
  %v1024 = vunpack.c.l.b16 %v129
  %v1025 = vunpack.c.l.b16 %v130
  %v1026 = vunpack.c.l.b16 %v131
  %v1027 = vunpack.c.l.b16 %v132
  %v1028 = vunpack.c.l.b16 %v133
  %v1029 = vunpack.c.l.b16 %v134
  %v1030 = vunpack.c.l.b16 %v135
  %v1031 = vunpack.c.l.b16 %v136
  %v1032 = vunpack.c.l.b16 %v137
  %v1033 = vunpack.c.l.b16 %v138
  %v1034 = vunpack.c.l.b16 %v139
  %v1035 = vunpack.c.l.b16 %v140
  %v1036 = vunpack.c.l.b16 %v141
  %v1037 = vunpack.c.l.b16 %v142
  %v1038 = vunpack.c.l.b16 %v143
  %v1039 = vunpack.c.l.b16 %v144
  %v1040 = vunpack.c.l.b16 %v145
  %v1041 = vunpack.c.l.b16 %v146
  %v1042 = vunpack.c.l.b16 %v147
  %v1043 = vunpack.c.l.b16 %v148
  %v1044 = vunpack.c.l.b16 %v149
  %v1045 = vunpack.c.l.b16 %v150
  %v1046 = vunpack.c.l.b16 %v151
  %v1047 = vunpack.c.l.b16 %v152
  %v1048 = vunpack.c.l.b16 %v153
  %v1049 = vunpack.c.l.b16 %v154
  %v1050 = vunpack.c.l.b16 %v155
  %v1051 = vunpack.c.l.b16 %v156
  %v1052 = vunpack.c.l.b16 %v157
  %v1053 = vunpack.c.l.b16 %v158
  %v1054 = vunpack.c.l.b16 %v159
  %v1055 = vunpack.c.l.b16 %v160
  %v1056 = vunpack.c.l.b16 %v161
  %v1057 = vunpack.c.l.b16 %v162
  %v1058 = vunpack.c.l.b16 %v163
  %v1059 = vunpack.c.l.b16 %v164
  %v1060 = vunpack.c.l.b16 %v165
  %v1061 = vunpack.c.l.b16 %v166
  %v1062 = vunpack.c.l.b16 %v167
  %v1063 = vunpack.c.l.b16 %v168
  %v1064 = vunpack.c.l.b16 %v169
  %v1065 = vunpack.c.l.b16 %v170
  %v1066 = vunpack.c.l.b16 %v171
  %v1067 = vunpack.c.l.b16 %v172
  %v1068 = vunpack.c.l.b16 %v173
  %v1069 = vunpack.c.l.b16 %v174
  %v1070 = vunpack.c.l.b16 %v175
  %v1071 = vunpack.c.l.b16 %v176
  %v1072 = vunpack.c.l.b16 %v177
  %v1073 = vunpack.c.l.b16 %v178
  %v1074 = vunpack.c.l.b16 %v179
  %v1075 = vunpack.c.l.b16 %v180
  %v1076 = vunpack.c.l.b16 %v181
  %v1077 = vunpack.c.l.b16 %v182
  %v1078 = vunpack.c.l.b16 %v183
  %v1079 = vunpack.c.l.b16 %v184
  %v1080 = vunpack.c.l.b16 %v185
  %v1081 = vunpack.c.l.b16 %v186
  %v1082 = vunpack.c.l.b16 %v187
  %v1083 = vunpack.c.l.b16 %v188
  %v1084 = vunpack.c.l.b16 %v189
  %v1085 = vunpack.c.l.b16 %v190
  %v1086 = vunpack.c.l.b16 %v191
  %v1087 = vunpack.c.l.b16 %v192
  %v1088 = vunpack.c.l.b16 %v193
  %v1089 = vunpack.c.l.b16 %v194
  %v1090 = vunpack.c.l.b16 %v195
  %v1091 = vunpack.c.l.b16 %v196
  %v1092 = vunpack.c.l.b16 %v197
  %v1093 = vunpack.c.l.b16 %v198
  %v1094 = vunpack.c.l.b16 %v199
  %v1095 = vunpack.c.l.b16 %v200
  %v1096 = vunpack.c.l.b16 %v201
  %v1097 = vunpack.c.l.b16 %v202
  %v1098 = vunpack.c.l.b16 %v203
  %v1099 = vunpack.c.l.b16 %v204
  %v1100 = vunpack.c.l.b16 %v205
  %v1101 = vunpack.c.l.b16 %v206
  %v1102 = vunpack.c.l.b16 %v207
  %v1103 = vunpack.c.l.b16 %v208
  %v1104 = vunpack.c.l.b16 %v209
  %v1105 = vunpack.c.l.b16 %v210
  %v1106 = vunpack.c.l.b16 %v211
  %v1107 = vunpack.c.l.b16 %v212
  %v1108 = vunpack.c.l.b16 %v213
  %v1109 = vunpack.c.l.b16 %v214
  %v1110 = vunpack.c.l.b16 %v215
  %v1111 = vunpack.c.l.b16 %v216
  %v1112 = vunpack.c.l.b16 %v217
  %v1113 = vunpack.c.l.b16 %v218
  %v1114 = vunpack.c.l.b16 %v219
  %v1115 = vunpack.c.l.b16 %v220
  %v1116 = vunpack.c.l.b16 %v221
  %v1117 = vunpack.c.l.b16 %v222
  %v1118 = vunpack.c.l.b16 %v223
  %v1119 = vunpack.c.l.b16 %v224
  %v1120 = vunpack.c.l.b16 %v225
  %v1121 = vunpack.c.l.b16 %v226
  %v1122 = vunpack.c.l.b16 %v227
  %v1123 = vunpack.c.l.b16 %v228
  %v1124 = vunpack.c.l.b16 %v229
  %v1125 = vunpack.c.l.b16 %v230
  %v1126 = vunpack.c.l.b16 %v231
  %v1127 = vunpack.c.l.b16 %v232
  %v1128 = vunpack.c.l.b16 %v233
  %v1129 = vunpack.c.l.b16 %v234
  %v1130 = vunpack.c.l.b16 %v235
  %v1131 = vunpack.c.l.b16 %v236
  %v1132 = vunpack.c.l.b16 %v237
  %v1133 = vunpack.c.l.b16 %v238
  %v1134 = vunpack.c.l.b16 %v239
  %v1135 = vunpack.c.l.b16 %v240
  %v1136 = vunpack.c.l.b16 %v241
  %v1137 = vunpack.c.l.b16 %v242
  %v1138 = vunpack.c.l.b16 %v243
  %v1139 = vunpack.c.l.b16 %v244
  %v1140 = vunpack.c.l.b16 %v245
  %v1141 = vunpack.c.l.b16 %v246
  %v1142 = vunpack.c.l.b16 %v247
  %v1143 = vunpack.c.l.b16 %v248
  %v1144 = vunpack.c.l.b16 %v249
  %v1145 = vunpack.c.l.b16 %v250
  %v1146 = vunpack.c.l.b16 %v251
  %v1147 = vunpack.c.l.b16 %v252
  %v1148 = vunpack.c.l.b16 %v253
  %v1149 = vunpack.c.l.b16 %v254
  %v1150 = vunpack.c.l.b16 %v255
  %v1151 = vunpack.c.l.b16 %v256
  %v1152 = vunpack.c.l.b16 %v257
  %v1153 = vunpack.c.l.b16 %v258
  %v1154 = vunpack.c.l.b16 %v259
  %v1155 = vunpack.c.l.b16 %v260
  %v1156 = vunpack.c.l.b16 %v261
  %v1157 = vunpack.c.l.b16 %v262
  %v1158 = vunpack.c.l.b16 %v263
  %v1159 = vunpack.c.l.b16 %v264
  %v1160 = vunpack.c.l.b16 %v265
  %v1161 = vunpack.c.l.b16 %v266
  %v1162 = vunpack.c.l.b16 %v267
  %v1163 = vunpack.c.l.b16 %v268
  %v1164 = vunpack.c.l.b16 %v269
  %v1165 = vunpack.c.l.b16 %v270
  %v1166 = vunpack.c.l.b16 %v271
  %v1167 = vunpack.c.l.b16 %v272
  %v1168 = vunpack.c.l.b16 %v273
  %v1169 = vunpack.c.l.b16 %v274
  %v1170 = vunpack.c.l.b16 %v275
  %v1171 = vunpack.c.l.b16 %v276
  %v1172 = vunpack.c.l.b16 %v277
  %v1173 = vunpack.c.l.b16 %v278
  %v1174 = vunpack.c.l.b16 %v279
  %v1175 = vunpack.c.l.b16 %v280
  %v1176 = vunpack.c.l.b16 %v281
  %v1177 = vunpack.c.l.b16 %v282
  %v1178 = vunpack.c.l.b16 %v283
  %v1179 = vunpack.c.l.b16 %v284
  %v1180 = vunpack.c.l.b16 %v285
  %v1181 = vunpack.c.l.b16 %v286
  %v1182 = vunpack.c.l.b16 %v287
  %v1183 = vunpack.c.l.b16 %v288
  %v1184 = vunpack.c.l.b16 %v289
  %v1185 = vunpack.c.l.b16 %v290
  %v1186 = vunpack.c.l.b16 %v291
  %v1187 = vunpack.c.l.b16 %v292
  %v1188 = vunpack.c.l.b16 %v293
  %v1189 = vunpack.c.l.b16 %v294
  %v1190 = vunpack.c.l.b16 %v295
  %v1191 = vunpack.c.l.b16 %v296
  %v1192 = vunpack.c.l.b16 %v297
  %v1193 = vunpack.c.l.b16 %v298
  %v1194 = vunpack.c.l.b16 %v299
  %v1195 = vunpack.c.l.b16 %v300
  %v1196 = vunpack.c.l.b16 %v301
  %v1197 = vunpack.c.l.b16 %v302
  %v1198 = vunpack.c.l.b16 %v303
  %v1199 = vunpack.c.l.b16 %v304
  %v1200 = vunpack.c.l.b16 %v305
  %v1201 = vunpack.c.l.b16 %v306
  %v1202 = vunpack.c.l.b16 %v307
  %v1203 = vunpack.c.l.b16 %v308
  %v1204 = vunpack.c.l.b16 %v309
  %v1205 = vunpack.c.l.b16 %v310
  %v1206 = vunpack.c.l.b16 %v311
  %v1207 = vunpack.c.l.b16 %v312
  %v1208 = vunpack.c.l.b16 %v313
  %v1209 = vunpack.c.l.b16 %v314
  %v1210 = vunpack.c.l.b16 %v315
  %v1211 = vunpack.c.l.b16 %v316
  %v1212 = vunpack.c.l.b16 %v317
  %v1213 = vunpack.c.l.b16 %v318
  %v1214 = vunpack.c.l.b16 %v319
  %v1215 = vunpack.c.l.b16 %v320
  %v1216 = vunpack.c.l.b16 %v321
  %v1217 = vunpack.c.l.b16 %v322
  %v1218 = vunpack.c.l.b16 %v323
  %v1219 = vunpack.c.l.b16 %v324
  %v1220 = vunpack.c.l.b16 %v325
  %v1221 = vunpack.c.l.b16 %v326
  %v1222 = vunpack.c.l.b16 %v327
  %v1223 = vunpack.c.l.b16 %v328
  %v1224 = vunpack.c.l.b16 %v329
  %v1225 = vunpack.c.l.b16 %v330
  %v1226 = vunpack.c.l.b16 %v331
  %v1227 = vunpack.c.l.b16 %v332
  %v1228 = vunpack.c.l.b16 %v333
  %v1229 = vunpack.c.l.b16 %v334
  %v1230 = vunpack.c.l.b16 %v335
  %v1231 = vunpack.c.l.b16 %v336
  %v1232 = vunpack.c.l.b16 %v337
  %v1233 = vunpack.c.l.b16 %v338
  %v1234 = vunpack.c.l.b16 %v339
  %v1235 = vunpack.c.l.b16 %v340
  %v1236 = vunpack.c.l.b16 %v341
  %v1237 = vunpack.c.l.b16 %v342
  %v1238 = vunpack.c.l.b16 %v343
  %v1239 = vunpack.c.l.b16 %v344
  %v1240 = vunpack.c.l.b16 %v345
  %v1241 = vunpack.c.l.b16 %v346
  %v1242 = vunpack.c.l.b16 %v347
  %v1243 = vunpack.c.l.b16 %v348
  %v1244 = vpack.c.b16 %v989, %v988
  %v1245 = vpack.c.b16 %v991, %v990
  %v1246 = vpack.c.b16 %v993, %v992
  %v1247 = vpack.c.b16 %v995, %v994
  %v1248 = vpack.c.b16 %v997, %v996
  %v1249 = vpack.c.b16 %v999, %v998
  %v1250 = vpack.c.b16 %v1001, %v1000
  %v1251 = vpack.c.b16 %v1003, %v1002
  %v1252 = vpack.c.b16 %v1005, %v1004
  %v1253 = vpack.c.b16 %v1007, %v1006
  %v1254 = vpack.c.b16 %v1009, %v1008
  %v1255 = vpack.c.b16 %v1011, %v1010
  %v1256 = vpack.c.b16 %v1013, %v1012
  %v1257 = vpack.c.b16 %v1015, %v1014
  %v1258 = vpack.c.b16 %v1017, %v1016
  %v1259 = vpack.c.b16 %v1019, %v1018
  %v1260 = vpack.c.b16 %v1021, %v1020
  %v1261 = vpack.c.b16 %v1023, %v1022
  %v1262 = vpack.c.b16 %v1025, %v1024
  %v1263 = vpack.c.b16 %v1027, %v1026
  %v1264 = vpack.c.b16 %v1029, %v1028
  %v1265 = vpack.c.b16 %v1031, %v1030
  %v1266 = vpack.c.b16 %v1033, %v1032
  %v1267 = vpack.c.b16 %v1035, %v1034
  %v1268 = vpack.c.b16 %v1037, %v1036
  %v1269 = vpack.c.b16 %v1039, %v1038
  %v1270 = vpack.c.b16 %v1041, %v1040
  %v1271 = vpack.c.b16 %v1043, %v1042
  %v1272 = vpack.c.b16 %v1045, %v1044
  %v1273 = vpack.c.b16 %v1047, %v1046
  %v1274 = vpack.c.b16 %v1049, %v1048
  %v1275 = vpack.c.b16 %v1051, %v1050
  %v1276 = vpack.c.b16 %v1053, %v1052
  %v1277 = vpack.c.b16 %v1055, %v1054
  %v1278 = vpack.c.b16 %v1057, %v1056
  %v1279 = vpack.c.b16 %v1059, %v1058
  %v1280 = vpack.c.b16 %v1061, %v1060
  %v1281 = vpack.c.b16 %v1063, %v1062
  %v1282 = vpack.c.b16 %v1065, %v1064
  %v1283 = vpack.c.b16 %v1067, %v1066
  %v1284 = vpack.c.b16 %v1069, %v1068
  %v1285 = vpack.c.b16 %v1071, %v1070
  %v1286 = vpack.c.b16 %v1073, %v1072
  %v1287 = vpack.c.b16 %v1075, %v1074
  %v1288 = vpack.c.b16 %v1077, %v1076
  %v1289 = vpack.c.b16 %v1079, %v1078
  %v1290 = vpack.c.b16 %v1081, %v1080
  %v1291 = vpack.c.b16 %v1083, %v1082
  %v1292 = vpack.c.b16 %v1085, %v1084
  %v1293 = vpack.c.b16 %v1087, %v1086
  %v1294 = vpack.c.b16 %v1089, %v1088
  %v1295 = vpack.c.b16 %v1091, %v1090
  %v1296 = vpack.c.b16 %v1093, %v1092
  %v1297 = vpack.c.b16 %v1095, %v1094
  %v1298 = vpack.c.b16 %v1097, %v1096
  %v1299 = vpack.c.b16 %v1099, %v1098
  %v1300 = vpack.c.b16 %v1101, %v1100
  %v1301 = vpack.c.b16 %v1103, %v1102
  %v1302 = vpack.c.b16 %v1105, %v1104
  %v1303 = vpack.c.b16 %v1107, %v1106
  %v1304 = vpack.c.b16 %v1109, %v1108
  %v1305 = vpack.c.b16 %v1111, %v1110
  %v1306 = vpack.c.b16 %v1113, %v1112
  %v1307 = vpack.c.b16 %v1115, %v1114
  %v1308 = vpack.c.b16 %v1117, %v1116
  %v1309 = vpack.c.b16 %v1119, %v1118
  %v1310 = vpack.c.b16 %v1121, %v1120
  %v1311 = vpack.c.b16 %v1123, %v1122
  %v1312 = vpack.c.b16 %v1125, %v1124
  %v1313 = vpack.c.b16 %v1127, %v1126
  %v1314 = vpack.c.b16 %v1129, %v1128
  %v1315 = vpack.c.b16 %v1131, %v1130
  %v1316 = vpack.c.b16 %v1133, %v1132
  %v1317 = vpack.c.b16 %v1135, %v1134
  %v1318 = vpack.c.b16 %v1137, %v1136
  %v1319 = vpack.c.b16 %v1139, %v1138
  %v1320 = vpack.c.b16 %v1141, %v1140
  %v1321 = vpack.c.b16 %v1143, %v1142
  %v1322 = vpack.c.b16 %v1145, %v1144
  %v1323 = vpack.c.b16 %v1147, %v1146
  %v1324 = vpack.c.b16 %v1149, %v1148
  %v1325 = vpack.c.b16 %v1151, %v1150
  %v1326 = vpack.c.b16 %v1153, %v1152
  %v1327 = vpack.c.b16 %v1155, %v1154
  %v1328 = vpack.c.b16 %v1157, %v1156
  %v1329 = vpack.c.b16 %v1159, %v1158
  %v1330 = vpack.c.b16 %v1161, %v1160
  %v1331 = vpack.c.b16 %v1163, %v1162
  %v1332 = vpack.c.b16 %v1165, %v1164
  %v1333 = vpack.c.b16 %v1167, %v1166
  %v1334 = vpack.c.b16 %v1169, %v1168
  %v1335 = vpack.c.b16 %v1171, %v1170
  %v1336 = vpack.c.b16 %v1173, %v1172
  %v1337 = vpack.c.b16 %v1175, %v1174
  %v1338 = vpack.c.b16 %v1177, %v1176
  %v1339 = vpack.c.b16 %v1179, %v1178
  %v1340 = vpack.c.b16 %v1181, %v1180
  %v1341 = vpack.c.b16 %v1183, %v1182
  %v1342 = vpack.c.b16 %v1185, %v1184
  %v1343 = vpack.c.b16 %v1187, %v1186
  %v1344 = vpack.c.b16 %v1189, %v1188
  %v1345 = vpack.c.b16 %v1191, %v1190
  %v1346 = vpack.c.b16 %v1193, %v1192
  %v1347 = vpack.c.b16 %v1195, %v1194
  %v1348 = vpack.c.b16 %v1197, %v1196
  %v1349 = vpack.c.b16 %v1199, %v1198
  %v1350 = vpack.c.b16 %v1201, %v1200
  %v1351 = vpack.c.b16 %v1203, %v1202
  %v1352 = vpack.c.b16 %v1205, %v1204
  %v1353 = vpack.c.b16 %v1207, %v1206
  %v1354 = vpack.c.b16 %v1209, %v1208
  %v1355 = vpack.c.b16 %v1211, %v1210
  %v1356 = vpack.c.b16 %v1213, %v1212
  %v1357 = vpack.c.b16 %v1215, %v1214
  %v1358 = vpack.c.b16 %v1217, %v1216
  %v1359 = vpack.c.b16 %v1219, %v1218
  %v1360 = vpack.c.b16 %v1221, %v1220
  %v1361 = vpack.c.b16 %v1223, %v1222
  %v1362 = vpack.c.b16 %v1225, %v1224
  %v1363 = vpack.c.b16 %v1227, %v1226
  %v1364 = vpack.c.b16 %v1229, %v1228
  %v1365 = vpack.c.b16 %v1231, %v1230
  %v1366 = vpack.c.b16 %v1233, %v1232
  %v1367 = vpack.c.b16 %v1235, %v1234
  %v1368 = vpack.c.b16 %v1237, %v1236
  %v1369 = vpack.c.b16 %v1239, %v1238
  %v1370 = vpack.c.b16 %v1241, %v1240
  %v1371 = vpack.c.b16 %v1243, %v1242
  %1500 = vmatprep.subr.bf16.mxu0 0
  %1501 = vmatpush1.bf16.msra.mxu0 %v1244
  %1502 = vmatprep.subr.bf16.mxu0 0
  %1503 = vmatpush1.bf16.msra.mxu0 %v1245
  %1504 = vmatprep.subr.bf16.mxu0 0
  %1505 = vmatpush1.bf16.msra.mxu0 %v1246
  %1506 = vmatprep.subr.bf16.mxu0 0
  %1507 = vmatpush1.bf16.msra.mxu0 %v1247
  %1508 = vmatprep.subr.bf16.mxu0 0
  %1509 = vmatpush1.bf16.msra.mxu0 %v1248
  %1510 = vmatprep.subr.bf16.mxu0 0
  %1511 = vmatpush1.bf16.msra.mxu0 %v1249
  %1512 = vmatprep.subr.bf16.mxu0 0
  %1513 = vmatpush1.bf16.msra.mxu0 %v1250
  %1514 = vmatprep.subr.bf16.mxu0 0
  %1515 = vmatpush1.bf16.msra.mxu0 %v1251
  %1516 = vmatprep.subr.bf16.mxu0 0
  %1517 = vmatpush1.bf16.msra.mxu0 %v1252
  %1518 = vmatprep.subr.bf16.mxu0 0
  %1519 = vmatpush1.bf16.msra.mxu0 %v1253
  %1520 = vmatprep.subr.bf16.mxu0 0
  %1521 = vmatpush1.bf16.msra.mxu0 %v1254
  %1522 = vmatprep.subr.bf16.mxu0 0
  %1523 = vmatpush1.bf16.msra.mxu0 %v1255
  %1524 = vmatprep.subr.bf16.mxu0 0
  %1525 = vmatpush1.bf16.msra.mxu0 %v1256
  %1526 = vmatprep.subr.bf16.mxu0 0
  %1527 = vmatpush1.bf16.msra.mxu0 %v1257
  %1528 = vmatprep.subr.bf16.mxu0 0
  %1529 = vmatpush1.bf16.msra.mxu0 %v1258
  %1530 = vmatprep.subr.bf16.mxu0 0
  %1531 = vmatpush1.bf16.msra.mxu0 %v1259
  %1532 = vmatprep.mubr.bf16.mxu0 %v573
  %1533 = vmatmul.mubr.bf16.gmra.mrb[0].mxu0 %v572
  %v1534 = vpop.f32.mrb[0].mxu0
  %v1535 = vadd.f32 %v354, %v1534
  %v1536 = vpop.f32.mrb[0].mxu0
  %v1537 = vpop.f32.mrb[0].mxu0
  %v1538 = vadd.f32 %v354, %v1537
  %v1539 = vpop.f32.mrb[0].mxu0
  %1540 = vmatprep.mubr.bf16.mxu0 %v589
  %1541 = vmatmul.mubr.bf16.gmra.mrb[0].mxu0 %v588
  %v1542 = vpop.f32.mrb[0].mxu0
  %v1543 = vadd.f32 %v354, %v1542
  %v1544 = vpop.f32.mrb[0].mxu0
  %v1545 = vpop.f32.mrb[0].mxu0
  %v1546 = vadd.f32 %v354, %v1545
  %v1547 = vpop.f32.mrb[0].mxu0
  %1548 = vmatprep.mubr.bf16.mxu0 %v605
  %1549 = vmatmul.mubr.bf16.gmra.mrb[0].mxu0 %v604
  %v1550 = vpop.f32.mrb[0].mxu0
  %v1551 = vadd.f32 %v354, %v1550
  %v1552 = vpop.f32.mrb[0].mxu0
  %v1553 = vpop.f32.mrb[0].mxu0
  %v1554 = vadd.f32 %v354, %v1553
  %v1555 = vpop.f32.mrb[0].mxu0
  %1556 = vmatprep.mubr.bf16.mxu0 %v621
  %1557 = vmatmul.mubr.bf16.gmra.mrb[0].mxu0 %v620
  %v1558 = vpop.f32.mrb[0].mxu0
  %v1559 = vadd.f32 %v354, %v1558
  %v1560 = vpop.f32.mrb[0].mxu0
  %v1561 = vpop.f32.mrb[0].mxu0
  %v1562 = vadd.f32 %v354, %v1561
  %v1563 = vpop.f32.mrb[0].mxu0
  %1564 = vmatprep.mubr.bf16.mxu0 %v637
  %1565 = vmatmul.mubr.bf16.gmra.mrb[0].mxu0 %v636
  %v1566 = vpop.f32.mrb[0].mxu0
  %v1567 = vadd.f32 %v354, %v1566
  %v1568 = vpop.f32.mrb[0].mxu0
  %v1569 = vpop.f32.mrb[0].mxu0
  %v1570 = vpop.f32.mrb[0].mxu0
  %1571 = vdwg.mxu0
  %1572 = vmatprep.subr.bf16.mxu0 0
  %1573 = vmatpush1.bf16.msra.mxu0 %v1260
  %1574 = vmatprep.subr.bf16.mxu0 0
  %1575 = vmatpush1.bf16.msra.mxu0 %v1261
  %1576 = vmatprep.subr.bf16.mxu0 0
  %1577 = vmatpush1.bf16.msra.mxu0 %v1262
  %1578 = vmatprep.subr.bf16.mxu0 0
  %1579 = vmatpush1.bf16.msra.mxu0 %v1263
  %1580 = vmatprep.subr.bf16.mxu0 0
  %1581 = vmatpush1.bf16.msra.mxu0 %v1264
  %1582 = vmatprep.subr.bf16.mxu0 0
  %1583 = vmatpush1.bf16.msra.mxu0 %v1265
  %1584 = vmatprep.subr.bf16.mxu0 0
  %1585 = vmatpush1.bf16.msra.mxu0 %v1266
  %1586 = vmatprep.subr.bf16.mxu0 0
  %1587 = vmatpush1.bf16.msra.mxu0 %v1267
  %1588 = vmatprep.subr.bf16.mxu0 0
  %1589 = vmatpush1.bf16.msra.mxu0 %v1268
  %1590 = vmatprep.subr.bf16.mxu0 0
  %1591 = vmatpush1.bf16.msra.mxu0 %v1269
  %1592 = vmatprep.subr.bf16.mxu0 0
  %1593 = vmatpush1.bf16.msra.mxu0 %v1270
  %1594 = vmatprep.subr.bf16.mxu0 0
  %1595 = vmatpush1.bf16.msra.mxu0 %v1271
  %1596 = vmatprep.subr.bf16.mxu0 0
  %1597 = vmatpush1.bf16.msra.mxu0 %v1272
  %1598 = vmatprep.subr.bf16.mxu0 0
  %1599 = vmatpush1.bf16.msra.mxu0 %v1273
  %1600 = vmatprep.subr.bf16.mxu0 0
  %1601 = vmatpush1.bf16.msra.mxu0 %v1274
  %1602 = vmatprep.subr.bf16.mxu0 0
  %1603 = vmatpush1.bf16.msra.mxu0 %v1275
  %1604 = vmatprep.mubr.bf16.mxu0 %v575
  %1605 = vmatmul.mubr.bf16.gmra.mrb[0].mxu0 %v574
  %v1606 = vpop.f32.mrb[0].mxu0
  %v1607 = vadd.f32 %v1535, %v1606
  %v1608 = vpop.f32.mrb[0].mxu0
  %v1609 = vpop.f32.mrb[0].mxu0
  %v1610 = vadd.f32 %v1538, %v1609
  %v1611 = vpop.f32.mrb[0].mxu0
  %1612 = vmatprep.mubr.bf16.mxu0 %v591
  %1613 = vmatmul.mubr.bf16.gmra.mrb[0].mxu0 %v590
  %v1614 = vpop.f32.mrb[0].mxu0
  %v1615 = vadd.f32 %v1543, %v1614
  %v1616 = vpop.f32.mrb[0].mxu0
  %v1617 = vpop.f32.mrb[0].mxu0
  %v1618 = vadd.f32 %v1546, %v1617
  %v1619 = vpop.f32.mrb[0].mxu0
  %1620 = vmatprep.mubr.bf16.mxu0 %v607
  %1621 = vmatmul.mubr.bf16.gmra.mrb[0].mxu0 %v606
  %v1622 = vpop.f32.mrb[0].mxu0
  %v1623 = vadd.f32 %v1551, %v1622
  %v1624 = vpop.f32.mrb[0].mxu0
  %v1625 = vpop.f32.mrb[0].mxu0
  %v1626 = vadd.f32 %v1554, %v1625
  %v1627 = vpop.f32.mrb[0].mxu0
  %1628 = vmatprep.mubr.bf16.mxu0 %v623
  %1629 = vmatmul.mubr.bf16.gmra.mrb[0].mxu0 %v622
  %v1630 = vpop.f32.mrb[0].mxu0
  %v1631 = vadd.f32 %v1559, %v1630
  %v1632 = vpop.f32.mrb[0].mxu0
  %v1633 = vpop.f32.mrb[0].mxu0
  %v1634 = vadd.f32 %v1562, %v1633
  %v1635 = vpop.f32.mrb[0].mxu0
  %1636 = vmatprep.mubr.bf16.mxu0 %v639
  %1637 = vmatmul.mubr.bf16.gmra.mrb[0].mxu0 %v638
  %v1638 = vpop.f32.mrb[0].mxu0
  %v1639 = vadd.f32 %v1567, %v1638
  %v1640 = vpop.f32.mrb[0].mxu0
  %v1641 = vpop.f32.mrb[0].mxu0
  %v1642 = vpop.f32.mrb[0].mxu0
  %1643 = vdwg.mxu0
  %1644 = vmatprep.subr.bf16.mxu0 0
  %1645 = vmatpush1.bf16.msra.mxu0 %v1276
  %1646 = vmatprep.subr.bf16.mxu0 0
  %1647 = vmatpush1.bf16.msra.mxu0 %v1277
  %1648 = vmatprep.subr.bf16.mxu0 0
  %1649 = vmatpush1.bf16.msra.mxu0 %v1278
  %1650 = vmatprep.subr.bf16.mxu0 0
  %1651 = vmatpush1.bf16.msra.mxu0 %v1279
  %1652 = vmatprep.subr.bf16.mxu0 0
  %1653 = vmatpush1.bf16.msra.mxu0 %v1280
  %1654 = vmatprep.subr.bf16.mxu0 0
  %1655 = vmatpush1.bf16.msra.mxu0 %v1281
  %1656 = vmatprep.subr.bf16.mxu0 0
  %1657 = vmatpush1.bf16.msra.mxu0 %v1282
  %1658 = vmatprep.subr.bf16.mxu0 0
  %1659 = vmatpush1.bf16.msra.mxu0 %v1283
  %1660 = vmatprep.subr.bf16.mxu0 0
  %1661 = vmatpush1.bf16.msra.mxu0 %v1284
  %1662 = vmatprep.subr.bf16.mxu0 0
  %1663 = vmatpush1.bf16.msra.mxu0 %v1285
  %1664 = vmatprep.subr.bf16.mxu0 0
  %1665 = vmatpush1.bf16.msra.mxu0 %v1286
  %1666 = vmatprep.subr.bf16.mxu0 0
  %1667 = vmatpush1.bf16.msra.mxu0 %v1287
  %1668 = vmatprep.subr.bf16.mxu0 0
  %1669 = vmatpush1.bf16.msra.mxu0 %v1288
  %1670 = vmatprep.subr.bf16.mxu0 0
  %1671 = vmatpush1.bf16.msra.mxu0 %v1289
  %1672 = vmatprep.subr.bf16.mxu0 0
  %1673 = vmatpush1.bf16.msra.mxu0 %v1290
  %1674 = vmatprep.subr.bf16.mxu0 0
  %1675 = vmatpush1.bf16.msra.mxu0 %v1291
  %1676 = vmatprep.mubr.bf16.mxu0 %v577
  %1677 = vmatmul.mubr.bf16.gmra.mrb[0].mxu0 %v576
  %v1678 = vpop.f32.mrb[0].mxu0
  %v1679 = vadd.f32 %v1607, %v1678
  %v1680 = vpop.f32.mrb[0].mxu0
  %v1681 = vpop.f32.mrb[0].mxu0
  %v1682 = vadd.f32 %v1610, %v1681
  %v1683 = vpop.f32.mrb[0].mxu0
  %1684 = vmatprep.mubr.bf16.mxu0 %v593
  %1685 = vmatmul.mubr.bf16.gmra.mrb[0].mxu0 %v592
  %v1686 = vpop.f32.mrb[0].mxu0
  %v1687 = vadd.f32 %v1615, %v1686
  %v1688 = vpop.f32.mrb[0].mxu0
  %v1689 = vpop.f32.mrb[0].mxu0
  %v1690 = vadd.f32 %v1618, %v1689
  %v1691 = vpop.f32.mrb[0].mxu0
  %1692 = vmatprep.mubr.bf16.mxu0 %v609
  %1693 = vmatmul.mubr.bf16.gmra.mrb[0].mxu0 %v608
  %v1694 = vpop.f32.mrb[0].mxu0
  %v1695 = vadd.f32 %v1623, %v1694
  %v1696 = vpop.f32.mrb[0].mxu0
  %v1697 = vpop.f32.mrb[0].mxu0
  %v1698 = vadd.f32 %v1626, %v1697
  %v1699 = vpop.f32.mrb[0].mxu0
  %1700 = vmatprep.mubr.bf16.mxu0 %v625
  %1701 = vmatmul.mubr.bf16.gmra.mrb[0].mxu0 %v624
  %v1702 = vpop.f32.mrb[0].mxu0
  %v1703 = vadd.f32 %v1631, %v1702
  %v1704 = vpop.f32.mrb[0].mxu0
  %v1705 = vpop.f32.mrb[0].mxu0
  %v1706 = vadd.f32 %v1634, %v1705
  %v1707 = vpop.f32.mrb[0].mxu0
  %1708 = vmatprep.mubr.bf16.mxu0 %v641
  %1709 = vmatmul.mubr.bf16.gmra.mrb[0].mxu0 %v640
  %v1710 = vpop.f32.mrb[0].mxu0
  %v1711 = vadd.f32 %v1639, %v1710
  %v1712 = vpop.f32.mrb[0].mxu0
  %v1713 = vpop.f32.mrb[0].mxu0
  %v1714 = vpop.f32.mrb[0].mxu0
  %1715 = vdwg.mxu0
  %1716 = vmatprep.subr.bf16.mxu0 0
  %1717 = vmatpush1.bf16.msra.mxu0 %v1292
  %1718 = vmatprep.subr.bf16.mxu0 0
  %1719 = vmatpush1.bf16.msra.mxu0 %v1293
  %1720 = vmatprep.subr.bf16.mxu0 0
  %1721 = vmatpush1.bf16.msra.mxu0 %v1294
  %1722 = vmatprep.subr.bf16.mxu0 0
  %1723 = vmatpush1.bf16.msra.mxu0 %v1295
  %1724 = vmatprep.subr.bf16.mxu0 0
  %1725 = vmatpush1.bf16.msra.mxu0 %v1296
  %1726 = vmatprep.subr.bf16.mxu0 0
  %1727 = vmatpush1.bf16.msra.mxu0 %v1297
  %1728 = vmatprep.subr.bf16.mxu0 0
  %1729 = vmatpush1.bf16.msra.mxu0 %v1298
  %1730 = vmatprep.subr.bf16.mxu0 0
  %1731 = vmatpush1.bf16.msra.mxu0 %v1299
  %1732 = vmatprep.subr.bf16.mxu0 0
  %1733 = vmatpush1.bf16.msra.mxu0 %v1300
  %1734 = vmatprep.subr.bf16.mxu0 0
  %1735 = vmatpush1.bf16.msra.mxu0 %v1301
  %1736 = vmatprep.subr.bf16.mxu0 0
  %1737 = vmatpush1.bf16.msra.mxu0 %v1302
  %1738 = vmatprep.subr.bf16.mxu0 0
  %1739 = vmatpush1.bf16.msra.mxu0 %v1303
  %1740 = vmatprep.subr.bf16.mxu0 0
  %1741 = vmatpush1.bf16.msra.mxu0 %v1304
  %1742 = vmatprep.subr.bf16.mxu0 0
  %1743 = vmatpush1.bf16.msra.mxu0 %v1305
  %1744 = vmatprep.subr.bf16.mxu0 0
  %1745 = vmatpush1.bf16.msra.mxu0 %v1306
  %1746 = vmatprep.subr.bf16.mxu0 0
  %1747 = vmatpush1.bf16.msra.mxu0 %v1307
  %1748 = vmatprep.mubr.bf16.mxu0 %v579
  %1749 = vmatmul.mubr.bf16.gmra.mrb[0].mxu0 %v578
  %v1750 = vpop.f32.mrb[0].mxu0
  %v1751 = vadd.f32 %v1679, %v1750
  %v1752 = vpop.f32.mrb[0].mxu0
  %v1753 = vpop.f32.mrb[0].mxu0
  %v1754 = vadd.f32 %v1682, %v1753
  %v1755 = vpop.f32.mrb[0].mxu0
  %1756 = vmatprep.mubr.bf16.mxu0 %v595
  %1757 = vmatmul.mubr.bf16.gmra.mrb[0].mxu0 %v594
  %v1758 = vpop.f32.mrb[0].mxu0
  %v1759 = vadd.f32 %v1687, %v1758
  %v1760 = vpop.f32.mrb[0].mxu0
  %v1761 = vpop.f32.mrb[0].mxu0
  %v1762 = vadd.f32 %v1690, %v1761
  %v1763 = vpop.f32.mrb[0].mxu0
  %1764 = vmatprep.mubr.bf16.mxu0 %v611
  %1765 = vmatmul.mubr.bf16.gmra.mrb[0].mxu0 %v610
  %v1766 = vpop.f32.mrb[0].mxu0
  %v1767 = vadd.f32 %v1695, %v1766
  %v1768 = vpop.f32.mrb[0].mxu0
  %v1769 = vpop.f32.mrb[0].mxu0
  %v1770 = vadd.f32 %v1698, %v1769
  %v1771 = vpop.f32.mrb[0].mxu0
  %1772 = vmatprep.mubr.bf16.mxu0 %v627
  %1773 = vmatmul.mubr.bf16.gmra.mrb[0].mxu0 %v626
  %v1774 = vpop.f32.mrb[0].mxu0
  %v1775 = vadd.f32 %v1703, %v1774
  %v1776 = vpop.f32.mrb[0].mxu0
  %v1777 = vpop.f32.mrb[0].mxu0
  %v1778 = vadd.f32 %v1706, %v1777
  %v1779 = vpop.f32.mrb[0].mxu0
  %1780 = vmatprep.mubr.bf16.mxu0 %v643
  %1781 = vmatmul.mubr.bf16.gmra.mrb[0].mxu0 %v642
  %v1782 = vpop.f32.mrb[0].mxu0
  %v1783 = vadd.f32 %v1711, %v1782
  %v1784 = vpop.f32.mrb[0].mxu0
  %v1785 = vpop.f32.mrb[0].mxu0
  %v1786 = vpop.f32.mrb[0].mxu0
  %1787 = vdwg.mxu0
  %1788 = vmatprep.subr.bf16.mxu0 0
  %1789 = vmatpush1.bf16.msra.mxu0 %v1308
  %1790 = vmatprep.subr.bf16.mxu0 0
  %1791 = vmatpush1.bf16.msra.mxu0 %v1309
  %1792 = vmatprep.subr.bf16.mxu0 0
  %1793 = vmatpush1.bf16.msra.mxu0 %v1310
  %1794 = vmatprep.subr.bf16.mxu0 0
  %1795 = vmatpush1.bf16.msra.mxu0 %v1311
  %1796 = vmatprep.subr.bf16.mxu0 0
  %1797 = vmatpush1.bf16.msra.mxu0 %v1312
  %1798 = vmatprep.subr.bf16.mxu0 0
  %1799 = vmatpush1.bf16.msra.mxu0 %v1313
  %1800 = vmatprep.subr.bf16.mxu0 0
  %1801 = vmatpush1.bf16.msra.mxu0 %v1314
  %1802 = vmatprep.subr.bf16.mxu0 0
  %1803 = vmatpush1.bf16.msra.mxu0 %v1315
  %1804 = vmatprep.subr.bf16.mxu0 0
  %1805 = vmatpush1.bf16.msra.mxu0 %v1316
  %1806 = vmatprep.subr.bf16.mxu0 0
  %1807 = vmatpush1.bf16.msra.mxu0 %v1317
  %1808 = vmatprep.subr.bf16.mxu0 0
  %1809 = vmatpush1.bf16.msra.mxu0 %v1318
  %1810 = vmatprep.subr.bf16.mxu0 0
  %1811 = vmatpush1.bf16.msra.mxu0 %v1319
  %1812 = vmatprep.subr.bf16.mxu0 0
  %1813 = vmatpush1.bf16.msra.mxu0 %v1320
  %1814 = vmatprep.subr.bf16.mxu0 0
  %1815 = vmatpush1.bf16.msra.mxu0 %v1321
  %1816 = vmatprep.subr.bf16.mxu0 0
  %1817 = vmatpush1.bf16.msra.mxu0 %v1322
  %1818 = vmatprep.subr.bf16.mxu0 0
  %1819 = vmatpush1.bf16.msra.mxu0 %v1323
  %1820 = vmatprep.mubr.bf16.mxu0 %v581
  %1821 = vmatmul.mubr.bf16.gmra.mrb[0].mxu0 %v580
  %v1822 = vpop.f32.mrb[0].mxu0
  %v1823 = vadd.f32 %v1751, %v1822
  %v1824 = vpop.f32.mrb[0].mxu0
  %v1825 = vpop.f32.mrb[0].mxu0
  %v1826 = vadd.f32 %v1754, %v1825
  %v1827 = vpop.f32.mrb[0].mxu0
  %1828 = vmatprep.mubr.bf16.mxu0 %v597
  %1829 = vmatmul.mubr.bf16.gmra.mrb[0].mxu0 %v596
  %v1830 = vpop.f32.mrb[0].mxu0
  %v1831 = vadd.f32 %v1759, %v1830
  %v1832 = vpop.f32.mrb[0].mxu0
  %v1833 = vpop.f32.mrb[0].mxu0
  %v1834 = vadd.f32 %v1762, %v1833
  %v1835 = vpop.f32.mrb[0].mxu0
  %1836 = vmatprep.mubr.bf16.mxu0 %v613
  %1837 = vmatmul.mubr.bf16.gmra.mrb[0].mxu0 %v612
  %v1838 = vpop.f32.mrb[0].mxu0
  %v1839 = vadd.f32 %v1767, %v1838
  %v1840 = vpop.f32.mrb[0].mxu0
  %v1841 = vpop.f32.mrb[0].mxu0
  %v1842 = vadd.f32 %v1770, %v1841
  %v1843 = vpop.f32.mrb[0].mxu0
  %1844 = vmatprep.mubr.bf16.mxu0 %v629
  %1845 = vmatmul.mubr.bf16.gmra.mrb[0].mxu0 %v628
  %v1846 = vpop.f32.mrb[0].mxu0
  %v1847 = vadd.f32 %v1775, %v1846
  %v1848 = vpop.f32.mrb[0].mxu0
  %v1849 = vpop.f32.mrb[0].mxu0
  %v1850 = vadd.f32 %v1778, %v1849
  %v1851 = vpop.f32.mrb[0].mxu0
  %1852 = vmatprep.mubr.bf16.mxu0 %v645
  %1853 = vmatmul.mubr.bf16.gmra.mrb[0].mxu0 %v644
  %v1854 = vpop.f32.mrb[0].mxu0
  %v1855 = vadd.f32 %v1783, %v1854
  %v1856 = vpop.f32.mrb[0].mxu0
  %v1857 = vpop.f32.mrb[0].mxu0
  %v1858 = vpop.f32.mrb[0].mxu0
  %1859 = vdwg.mxu0
  %1860 = vmatprep.subr.bf16.mxu0 0
  %1861 = vmatpush1.bf16.msra.mxu0 %v1324
  %1862 = vmatprep.subr.bf16.mxu0 0
  %1863 = vmatpush1.bf16.msra.mxu0 %v1325
  %1864 = vmatprep.subr.bf16.mxu0 0
  %1865 = vmatpush1.bf16.msra.mxu0 %v1326
  %1866 = vmatprep.subr.bf16.mxu0 0
  %1867 = vmatpush1.bf16.msra.mxu0 %v1327
  %1868 = vmatprep.subr.bf16.mxu0 0
  %1869 = vmatpush1.bf16.msra.mxu0 %v1328
  %1870 = vmatprep.subr.bf16.mxu0 0
  %1871 = vmatpush1.bf16.msra.mxu0 %v1329
  %1872 = vmatprep.subr.bf16.mxu0 0
  %1873 = vmatpush1.bf16.msra.mxu0 %v1330
  %1874 = vmatprep.subr.bf16.mxu0 0
  %1875 = vmatpush1.bf16.msra.mxu0 %v1331
  %1876 = vmatprep.subr.bf16.mxu0 0
  %1877 = vmatpush1.bf16.msra.mxu0 %v1332
  %1878 = vmatprep.subr.bf16.mxu0 0
  %1879 = vmatpush1.bf16.msra.mxu0 %v1333
  %1880 = vmatprep.subr.bf16.mxu0 0
  %1881 = vmatpush1.bf16.msra.mxu0 %v1334
  %1882 = vmatprep.subr.bf16.mxu0 0
  %1883 = vmatpush1.bf16.msra.mxu0 %v1335
  %1884 = vmatprep.subr.bf16.mxu0 0
  %1885 = vmatpush1.bf16.msra.mxu0 %v1336
  %1886 = vmatprep.subr.bf16.mxu0 0
  %1887 = vmatpush1.bf16.msra.mxu0 %v1337
  %1888 = vmatprep.subr.bf16.mxu0 0
  %1889 = vmatpush1.bf16.msra.mxu0 %v1338
  %1890 = vmatprep.subr.bf16.mxu0 0
  %1891 = vmatpush1.bf16.msra.mxu0 %v1339
  %1892 = vmatprep.mubr.bf16.mxu0 %v583
  %1893 = vmatmul.mubr.bf16.gmra.mrb[0].mxu0 %v582
  %v1894 = vpop.f32.mrb[0].mxu0
  %v1895 = vadd.f32 %v1823, %v1894
  %v1896 = vpop.f32.mrb[0].mxu0
  %v1897 = vpop.f32.mrb[0].mxu0
  %v1898 = vadd.f32 %v1826, %v1897
  %v1899 = vpop.f32.mrb[0].mxu0
  %1900 = vmatprep.mubr.bf16.mxu0 %v599
  %1901 = vmatmul.mubr.bf16.gmra.mrb[0].mxu0 %v598
  %v1902 = vpop.f32.mrb[0].mxu0
  %v1903 = vadd.f32 %v1831, %v1902
  %v1904 = vpop.f32.mrb[0].mxu0
  %v1905 = vpop.f32.mrb[0].mxu0
  %v1906 = vadd.f32 %v1834, %v1905
  %v1907 = vpop.f32.mrb[0].mxu0
  %1908 = vmatprep.mubr.bf16.mxu0 %v615
  %1909 = vmatmul.mubr.bf16.gmra.mrb[0].mxu0 %v614
  %v1910 = vpop.f32.mrb[0].mxu0
  %v1911 = vadd.f32 %v1839, %v1910
  %v1912 = vpop.f32.mrb[0].mxu0
  %v1913 = vpop.f32.mrb[0].mxu0
  %v1914 = vadd.f32 %v1842, %v1913
  %v1915 = vpop.f32.mrb[0].mxu0
  %1916 = vmatprep.mubr.bf16.mxu0 %v631
  %1917 = vmatmul.mubr.bf16.gmra.mrb[0].mxu0 %v630
  %v1918 = vpop.f32.mrb[0].mxu0
  %v1919 = vadd.f32 %v1847, %v1918
  %v1920 = vpop.f32.mrb[0].mxu0
  %v1921 = vpop.f32.mrb[0].mxu0
  %v1922 = vadd.f32 %v1850, %v1921
  %v1923 = vpop.f32.mrb[0].mxu0
  %1924 = vmatprep.mubr.bf16.mxu0 %v647
  %1925 = vmatmul.mubr.bf16.gmra.mrb[0].mxu0 %v646
  %v1926 = vpop.f32.mrb[0].mxu0
  %v1927 = vadd.f32 %v1855, %v1926
  %v1928 = vpop.f32.mrb[0].mxu0
  %v1929 = vpop.f32.mrb[0].mxu0
  %v1930 = vpop.f32.mrb[0].mxu0
  %1931 = vdwg.mxu0
  %1932 = vmatprep.subr.bf16.mxu0 0
  %1933 = vmatpush1.bf16.msra.mxu0 %v1340
  %1934 = vmatprep.subr.bf16.mxu0 0
  %1935 = vmatpush1.bf16.msra.mxu0 %v1341
  %1936 = vmatprep.subr.bf16.mxu0 0
  %1937 = vmatpush1.bf16.msra.mxu0 %v1342
  %1938 = vmatprep.subr.bf16.mxu0 0
  %1939 = vmatpush1.bf16.msra.mxu0 %v1343
  %1940 = vmatprep.subr.bf16.mxu0 0
  %1941 = vmatpush1.bf16.msra.mxu0 %v1344
  %1942 = vmatprep.subr.bf16.mxu0 0
  %1943 = vmatpush1.bf16.msra.mxu0 %v1345
  %1944 = vmatprep.subr.bf16.mxu0 0
  %1945 = vmatpush1.bf16.msra.mxu0 %v1346
  %1946 = vmatprep.subr.bf16.mxu0 0
  %1947 = vmatpush1.bf16.msra.mxu0 %v1347
  %1948 = vmatprep.subr.bf16.mxu0 0
  %1949 = vmatpush1.bf16.msra.mxu0 %v1348
  %1950 = vmatprep.subr.bf16.mxu0 0
  %1951 = vmatpush1.bf16.msra.mxu0 %v1349
  %1952 = vmatprep.subr.bf16.mxu0 0
  %1953 = vmatpush1.bf16.msra.mxu0 %v1350
  %1954 = vmatprep.subr.bf16.mxu0 0
  %1955 = vmatpush1.bf16.msra.mxu0 %v1351
  %1956 = vmatprep.subr.bf16.mxu0 0
  %1957 = vmatpush1.bf16.msra.mxu0 %v1352
  %1958 = vmatprep.subr.bf16.mxu0 0
  %1959 = vmatpush1.bf16.msra.mxu0 %v1353
  %1960 = vmatprep.subr.bf16.mxu0 0
  %1961 = vmatpush1.bf16.msra.mxu0 %v1354
  %1962 = vmatprep.subr.bf16.mxu0 0
  %1963 = vmatpush1.bf16.msra.mxu0 %v1355
  %1964 = vmatprep.mubr.bf16.mxu0 %v585
  %1965 = vmatmul.mubr.bf16.gmra.mrb[0].mxu0 %v584
  %v1966 = vpop.f32.mrb[0].mxu0
  %v1967 = vadd.f32 %v1895, %v1966
  %v1968 = vpop.f32.mrb[0].mxu0
  %v1969 = vpop.f32.mrb[0].mxu0
  %v1970 = vadd.f32 %v1898, %v1969
  %v1971 = vpop.f32.mrb[0].mxu0
  %1972 = vmatprep.mubr.bf16.mxu0 %v601
  %1973 = vmatmul.mubr.bf16.gmra.mrb[0].mxu0 %v600
  %v1974 = vpop.f32.mrb[0].mxu0
  %v1975 = vadd.f32 %v1903, %v1974
  %v1976 = vpop.f32.mrb[0].mxu0
  %v1977 = vpop.f32.mrb[0].mxu0
  %v1978 = vadd.f32 %v1906, %v1977
  %v1979 = vpop.f32.mrb[0].mxu0
  %1980 = vmatprep.mubr.bf16.mxu0 %v617
  %1981 = vmatmul.mubr.bf16.gmra.mrb[0].mxu0 %v616
  %v1982 = vpop.f32.mrb[0].mxu0
  %v1983 = vadd.f32 %v1911, %v1982
  %v1984 = vpop.f32.mrb[0].mxu0
  %v1985 = vpop.f32.mrb[0].mxu0
  %v1986 = vadd.f32 %v1914, %v1985
  %v1987 = vpop.f32.mrb[0].mxu0
  %1988 = vmatprep.mubr.bf16.mxu0 %v633
  %1989 = vmatmul.mubr.bf16.gmra.mrb[0].mxu0 %v632
  %v1990 = vpop.f32.mrb[0].mxu0
  %v1991 = vadd.f32 %v1919, %v1990
  %v1992 = vpop.f32.mrb[0].mxu0
  %v1993 = vpop.f32.mrb[0].mxu0
  %v1994 = vadd.f32 %v1922, %v1993
  %v1995 = vpop.f32.mrb[0].mxu0
  %1996 = vmatprep.mubr.bf16.mxu0 %v649
  %1997 = vmatmul.mubr.bf16.gmra.mrb[0].mxu0 %v648
  %v1998 = vpop.f32.mrb[0].mxu0
  %v1999 = vadd.f32 %v1927, %v1998
  %v2000 = vpop.f32.mrb[0].mxu0
  %v2001 = vpop.f32.mrb[0].mxu0
  %v2002 = vpop.f32.mrb[0].mxu0
  %2003 = vdwg.mxu0
  %2004 = vmatprep.subr.bf16.mxu0 0
  %2005 = vmatpush1.bf16.msra.mxu0 %v1356
  %2006 = vmatprep.subr.bf16.mxu0 0
  %2007 = vmatpush1.bf16.msra.mxu0 %v1357
  %2008 = vmatprep.subr.bf16.mxu0 0
  %2009 = vmatpush1.bf16.msra.mxu0 %v1358
  %2010 = vmatprep.subr.bf16.mxu0 0
  %2011 = vmatpush1.bf16.msra.mxu0 %v1359
  %2012 = vmatprep.subr.bf16.mxu0 0
  %2013 = vmatpush1.bf16.msra.mxu0 %v1360
  %2014 = vmatprep.subr.bf16.mxu0 0
  %2015 = vmatpush1.bf16.msra.mxu0 %v1361
  %2016 = vmatprep.subr.bf16.mxu0 0
  %2017 = vmatpush1.bf16.msra.mxu0 %v1362
  %2018 = vmatprep.subr.bf16.mxu0 0
  %2019 = vmatpush1.bf16.msra.mxu0 %v1363
  %2020 = vmatprep.subr.bf16.mxu0 0
  %2021 = vmatpush1.bf16.msra.mxu0 %v1364
  %2022 = vmatprep.subr.bf16.mxu0 0
  %2023 = vmatpush1.bf16.msra.mxu0 %v1365
  %2024 = vmatprep.subr.bf16.mxu0 0
  %2025 = vmatpush1.bf16.msra.mxu0 %v1366
  %2026 = vmatprep.subr.bf16.mxu0 0
  %2027 = vmatpush1.bf16.msra.mxu0 %v1367
  %2028 = vmatprep.subr.bf16.mxu0 0
  %2029 = vmatpush1.bf16.msra.mxu0 %v1368
  %2030 = vmatprep.subr.bf16.mxu0 0
  %2031 = vmatpush1.bf16.msra.mxu0 %v1369
  %2032 = vmatprep.subr.bf16.mxu0 0
  %2033 = vmatpush1.bf16.msra.mxu0 %v1370
  %2034 = vmatprep.subr.bf16.mxu0 0
  %2035 = vmatpush1.bf16.msra.mxu0 %v1371
  %2036 = vmatprep.mubr.bf16.mxu0 %v587
  %2037 = vmatmul.mubr.bf16.gmra.mrb[0].mxu0 %v586
  %v2038 = vpop.f32.mrb[0].mxu0
  %v2039 = vadd.f32 %v1967, %v2038
  %v2040 = vpop.f32.mrb[0].mxu0
  %v2041 = vpop.f32.mrb[0].mxu0
  %v2042 = vadd.f32 %v1970, %v2041
  %v2043 = vpop.f32.mrb[0].mxu0
  %2044 = vmatprep.mubr.bf16.mxu0 %v603
  %2045 = vmatmul.mubr.bf16.gmra.mrb[0].mxu0 %v602
  %v2046 = vpop.f32.mrb[0].mxu0
  %v2047 = vadd.f32 %v1975, %v2046
  %v2048 = vpop.f32.mrb[0].mxu0
  %v2049 = vpop.f32.mrb[0].mxu0
  %v2050 = vadd.f32 %v1978, %v2049
  %v2051 = vpop.f32.mrb[0].mxu0
  %2052 = vmatprep.mubr.bf16.mxu0 %v619
  %2053 = vmatmul.mubr.bf16.gmra.mrb[0].mxu0 %v618
  %v2054 = vpop.f32.mrb[0].mxu0
  %v2055 = vadd.f32 %v1983, %v2054
  %v2056 = vpop.f32.mrb[0].mxu0
  %v2057 = vpop.f32.mrb[0].mxu0
  %v2058 = vadd.f32 %v1986, %v2057
  %v2059 = vpop.f32.mrb[0].mxu0
  %2060 = vmatprep.mubr.bf16.mxu0 %v635
  %2061 = vmatmul.mubr.bf16.gmra.mrb[0].mxu0 %v634
  %v2062 = vpop.f32.mrb[0].mxu0
  %v2063 = vadd.f32 %v1991, %v2062
  %v2064 = vpop.f32.mrb[0].mxu0
  %v2065 = vpop.f32.mrb[0].mxu0
  %v2066 = vadd.f32 %v1994, %v2065
  %v2067 = vpop.f32.mrb[0].mxu0
  %2068 = vmatprep.mubr.bf16.mxu0 %v651
  %2069 = vmatmul.mubr.bf16.gmra.mrb[0].mxu0 %v650
  %v2070 = vpop.f32.mrb[0].mxu0
  %v2071 = vadd.f32 %v1999, %v2070
  %v2072 = vpop.f32.mrb[0].mxu0
  %v2073 = vpop.f32.mrb[0].mxu0
  %v2074 = vpop.f32.mrb[0].mxu0
  %2075 = vdwg.mxu0
  %v2076 = vmul.bf16 %v21, %v21
  %v2077 = vmul.bf16 %v22, %v22
  %v2078 = vmul.bf16 %v23, %v23
  %v2079 = vmul.bf16 %v24, %v24
  %v2080 = vmul.bf16 %v25, %v25
  %v2081 = vmul.bf16 %v26, %v26
  %v2082 = vmul.bf16 %v27, %v27
  %v2083 = vmul.bf16 %v28, %v28
  %v2084 = vmul.bf16 %v29, %v29
  %v2085 = vmul.bf16 %v30, %v30
  %v2086 = vmul.bf16 %v31, %v31
  %v2087 = vmul.bf16 %v32, %v32
  %v2088 = vmul.bf16 %v33, %v33
  %v2089 = vmul.bf16 %v34, %v34
  %v2090 = vmul.bf16 %v35, %v35
  %v2091 = vmul.bf16 %v36, %v36
  %v2092 = vmul.bf16 %v37, %v37
  %v2093 = vmul.bf16 %v38, %v38
  %v2094 = vmul.bf16 %v39, %v39
  %v2095 = vmul.bf16 %v40, %v40
  %v2096 = vmul.bf16 %v41, %v41
  %v2097 = vmul.bf16 %v42, %v42
  %v2098 = vmul.bf16 %v43, %v43
  %v2099 = vmul.bf16 %v44, %v44
  %v2100 = vmul.bf16 %v45, %v45
  %v2101 = vmul.bf16 %v46, %v46
  %v2102 = vmul.bf16 %v47, %v47
  %v2103 = vmul.bf16 %v48, %v48
  %v2104 = vmul.bf16 %v49, %v49
  %v2105 = vmul.bf16 %v50, %v50
  %v2106 = vmul.bf16 %v51, %v51
  %v2107 = vmul.bf16 %v52, %v52
  %v2108 = vmul.bf16 %v53, %v53
  %v2109 = vmul.bf16 %v54, %v54
  %v2110 = vmul.bf16 %v55, %v55
  %v2111 = vmul.bf16 %v56, %v56
  %v2112 = vmul.bf16 %v57, %v57
  %v2113 = vmul.bf16 %v58, %v58
  %v2114 = vmul.bf16 %v59, %v59
  %v2115 = vmul.bf16 %v60, %v60
  %v2116 = vmul.bf16 %v61, %v61
  %v2117 = vmul.bf16 %v62, %v62
  %v2118 = vmul.bf16 %v63, %v63
  %v2119 = vmul.bf16 %v64, %v64
  %v2120 = vmul.bf16 %v65, %v65
  %v2121 = vmul.bf16 %v66, %v66
  %v2122 = vmul.bf16 %v67, %v67
  %v2123 = vmul.bf16 %v68, %v68
  %v2124 = vmul.bf16 %v69, %v69
  %v2125 = vmul.bf16 %v70, %v70
  %v2126 = vmul.bf16 %v71, %v71
  %v2127 = vmul.bf16 %v72, %v72
  %v2128 = vmul.bf16 %v73, %v73
  %v2129 = vmul.bf16 %v74, %v74
  %v2130 = vmul.bf16 %v75, %v75
  %v2131 = vmul.bf16 %v76, %v76
  %v2132 = vmul.bf16 %v77, %v77
  %v2133 = vmul.bf16 %v78, %v78
  %v2134 = vmul.bf16 %v79, %v79
  %v2135 = vmul.bf16 %v80, %v80
  %v2136 = vmul.bf16 %v81, %v81
  %v2137 = vmul.bf16 %v82, %v82
  %v2138 = vmul.bf16 %v83, %v83
  %v2139 = vmul.bf16 %v84, %v84
  %v2140 = vmul.bf16 %v85, %v85
  %v2141 = vmul.bf16 %v86, %v86
  %v2142 = vmul.bf16 %v87, %v87
  %v2143 = vmul.bf16 %v88, %v88
  %v2144 = vmul.bf16 %v89, %v89
  %v2145 = vmul.bf16 %v90, %v90
  %v2146 = vmul.bf16 %v91, %v91
  %v2147 = vmul.bf16 %v92, %v92
  %v2148 = vld [vmem:[%s2] sm:$0xf]
  %v2149 = vld [vmem:[%s2 + $0x4] sm:$0xf]
  %v2150 = vld [vmem:[%s2 + $0x8] sm:$0xf]
  %v2151 = vld [vmem:[%s2 + $0xc] sm:$0xf]
  %v2152 = vld [vmem:[%s2 + $0x10] sm:$0xf]
  %v2153 = vld [vmem:[%s2 + $0x14] sm:$0xf]
  %v2154 = vld [vmem:[%s2 + $0x18] sm:$0xf]
  %v2155 = vld [vmem:[%s2 + $0x1c] sm:$0xf]
  %v2156 = vld [vmem:[%s2 + $0x20] sm:$0xf]
  %v2157 = vld [vmem:[%s2 + $0x24] sm:$0xf]
  %v2158 = vld [vmem:[%s2 + $0x28] sm:$0xf]
  %v2159 = vld [vmem:[%s2 + $0x2c] sm:$0xf]
  %v2160 = vld [vmem:[%s2 + $0x30] sm:$0xf]
  %v2161 = vld [vmem:[%s2 + $0x34] sm:$0xf]
  %v2162 = vld [vmem:[%s2 + $0x38] sm:$0xf]
  %v2163 = vld [vmem:[%s2 + $0x3c] sm:$0xf]
  %v2164 = vld [vmem:[%s2 + $0x40] sm:$0xf]
  %v2165 = vld [vmem:[%s2 + $0x44] sm:$0xf]
  %v2166 = vld [vmem:[%s2 + $0x48] sm:$0xf]
  %v2167 = vld [vmem:[%s2 + $0x4c] sm:$0xf]
  %v2168 = vld [vmem:[%s2 + $0x50] sm:$0xf]
  %v2169 = vld [vmem:[%s2 + $0x54] sm:$0xf]
  %v2170 = vld [vmem:[%s2 + $0x58] sm:$0xf]
  %v2171 = vld [vmem:[%s2 + $0x5c] sm:$0xf]
  %v2172 = vld [vmem:[%s2 + $0x60] sm:$0xf]
  %v2173 = vld [vmem:[%s2 + $0x64] sm:$0xf]
  %v2174 = vld [vmem:[%s2 + $0x68] sm:$0xf]
  %v2175 = vld [vmem:[%s2 + $0x6c] sm:$0xf]
  %v2176 = vld [vmem:[%s2 + $0x70] sm:$0xf]
  %v2177 = vld [vmem:[%s2 + $0x74] sm:$0xf]
  %v2178 = vld [vmem:[%s2 + $0x78] sm:$0xf]
  %v2179 = vld [vmem:[%s2 + $0x7c] sm:$0xf]
  %v2180 = vld [vmem:[%s2 + $0x80] sm:$0xf]
  %v2181 = vld [vmem:[%s2 + $0x84] sm:$0xf]
  %v2182 = vld [vmem:[%s2 + $0x88] sm:$0xf]
  %v2183 = vld [vmem:[%s2 + $0x8c] sm:$0xf]
  %v2184 = vld [vmem:[%s2 + $0x90] sm:$0xf]
  %v2185 = vld [vmem:[%s2 + $0x94] sm:$0xf]
  %v2186 = vld [vmem:[%s2 + $0x98] sm:$0xf]
  %v2187 = vld [vmem:[%s2 + $0x9c] sm:$0xf]
  %v2188 = vld [vmem:[%s2 + $0xa0] sm:$0xf]
  %v2189 = vld [vmem:[%s2 + $0xa4] sm:$0xf]
  %v2190 = vld [vmem:[%s2 + $0xa8] sm:$0xf]
  %v2191 = vld [vmem:[%s2 + $0xac] sm:$0xf]
  %v2192 = vld [vmem:[%s2 + $0xb0] sm:$0xf]
  %v2193 = vld [vmem:[%s2 + $0xb4] sm:$0xf]
  %v2194 = vld [vmem:[%s2 + $0xb8] sm:$0xf]
  %v2195 = vld [vmem:[%s2 + $0xbc] sm:$0xf]
  %v2196 = vld [vmem:[%s2 + $0xc0] sm:$0xf]
  %v2197 = vld [vmem:[%s2 + $0xc4] sm:$0xf]
  %v2198 = vld [vmem:[%s2 + $0xc8] sm:$0xf]
  %v2199 = vld [vmem:[%s2 + $0xcc] sm:$0xf]
  %v2200 = vld [vmem:[%s2 + $0xd0] sm:$0xf]
  %v2201 = vld [vmem:[%s2 + $0xd4] sm:$0xf]
  %v2202 = vld [vmem:[%s2 + $0xd8] sm:$0xf]
  %v2203 = vld [vmem:[%s2 + $0xdc] sm:$0xf]
  %v2204 = vld [vmem:[%s2 + $0xe0] sm:$0xf]
  %v2205 = vld [vmem:[%s2 + $0xe4] sm:$0xf]
  %v2206 = vld [vmem:[%s2 + $0xe8] sm:$0xf]
  %v2207 = vld [vmem:[%s2 + $0xec] sm:$0xf]
  %v2208 = vld [vmem:[%s2 + $0xf0] sm:$0xf]
  %v2209 = vld [vmem:[%s2 + $0xf4] sm:$0xf]
  %v2210 = vld [vmem:[%s2 + $0xf8] sm:$0xf]
  %v2211 = vld [vmem:[%s2 + $0xfc] sm:$0xf]
  %v2212 = vld [vmem:[%s2 + $0x100] sm:$0xf]
  %v2213 = vld [vmem:[%s2 + $0x104] sm:$0xf]
  %v2214 = vld [vmem:[%s2 + $0x108] sm:$0xf]
  %v2215 = vld [vmem:[%s2 + $0x10c] sm:$0xf]
  %v2216 = vld [vmem:[%s2 + $0x110] sm:$0xf]
  %v2217 = vld [vmem:[%s2 + $0x114] sm:$0xf]
  %v2218 = vld [vmem:[%s2 + $0x118] sm:$0xf]
  %v2219 = vld [vmem:[%s2 + $0x11c] sm:$0xf]
  %v2220 = vld [vmem:[%s2 + $0x120] sm:$0xf]
  %v2221 = vld [vmem:[%s2 + $0x124] sm:$0xf]
  %v2222 = vld [vmem:[%s2 + $0x128] sm:$0xf]
  %v2223 = vld [vmem:[%s2 + $0x12c] sm:$0xf]
  %v2224 = vld [vmem:[%s2 + $0x130] sm:$0xf]
  %v2225 = vld [vmem:[%s2 + $0x134] sm:$0xf]
  %v2226 = vld [vmem:[%s2 + $0x138] sm:$0xf]
  %v2227 = vld [vmem:[%s2 + $0x13c] sm:$0xf]
  %v2228 = vld [vmem:[%s2 + $0x140] sm:$0xf]
  %v2229 = vld [vmem:[%s2 + $0x144] sm:$0xf]
  %v2230 = vld [vmem:[%s2 + $0x148] sm:$0xf]
  %v2231 = vld [vmem:[%s2 + $0x14c] sm:$0xf]
  %v2232 = vld [vmem:[%s2 + $0x150] sm:$0xf]
  %v2233 = vld [vmem:[%s2 + $0x154] sm:$0xf]
  %v2234 = vld [vmem:[%s2 + $0x158] sm:$0xf]
  %v2235 = vld [vmem:[%s2 + $0x15c] sm:$0xf]
  %v2236 = vld [vmem:[%s2 + $0x160] sm:$0xf]
  %v2237 = vld [vmem:[%s2 + $0x164] sm:$0xf]
  %v2238 = vld [vmem:[%s2 + $0x168] sm:$0xf]
  %v2239 = vld [vmem:[%s2 + $0x16c] sm:$0xf]
  %v2240 = vld [vmem:[%s2 + $0x170] sm:$0xf]
  %v2241 = vld [vmem:[%s2 + $0x174] sm:$0xf]
  %v2242 = vld [vmem:[%s2 + $0x178] sm:$0xf]
  %v2243 = vld [vmem:[%s2 + $0x17c] sm:$0xf]
  %v2244 = vld [vmem:[%s2 + $0x180] sm:$0xf]
  %v2245 = vld [vmem:[%s2 + $0x184] sm:$0xf]
  %v2246 = vld [vmem:[%s2 + $0x188] sm:$0xf]
  %v2247 = vld [vmem:[%s2 + $0x18c] sm:$0xf]
  %v2248 = vld [vmem:[%s2 + $0x190] sm:$0xf]
  %v2249 = vld [vmem:[%s2 + $0x194] sm:$0xf]
  %v2250 = vld [vmem:[%s2 + $0x198] sm:$0xf]
  %v2251 = vld [vmem:[%s2 + $0x19c] sm:$0xf]
  %v2252 = vld [vmem:[%s2 + $0x1a0] sm:$0xf]
  %v2253 = vld [vmem:[%s2 + $0x1a4] sm:$0xf]
  %v2254 = vld [vmem:[%s2 + $0x1a8] sm:$0xf]
  %v2255 = vld [vmem:[%s2 + $0x1ac] sm:$0xf]
  %v2256 = vld [vmem:[%s2 + $0x1b0] sm:$0xf]
  %v2257 = vld [vmem:[%s2 + $0x1b4] sm:$0xf]
  %v2258 = vld [vmem:[%s2 + $0x1b8] sm:$0xf]
  %v2259 = vld [vmem:[%s2 + $0x1bc] sm:$0xf]
  %v2260 = vld [vmem:[%s2 + $0x1c0] sm:$0xf]
  %v2261 = vld [vmem:[%s2 + $0x1c4] sm:$0xf]
  %v2262 = vld [vmem:[%s2 + $0x1c8] sm:$0xf]
  %v2263 = vld [vmem:[%s2 + $0x1cc] sm:$0xf]
  %v2264 = vld [vmem:[%s2 + $0x1d0] sm:$0xf]
  %v2265 = vld [vmem:[%s2 + $0x1d4] sm:$0xf]
  %v2266 = vld [vmem:[%s2 + $0x1d8] sm:$0xf]
  %v2267 = vld [vmem:[%s2 + $0x1dc] sm:$0xf]
  %v2268 = vld [vmem:[%s2 + $0x1e0] sm:$0xf]
  %v2269 = vld [vmem:[%s2 + $0x1e4] sm:$0xf]
  %v2270 = vld [vmem:[%s2 + $0x1e8] sm:$0xf]
  %v2271 = vld [vmem:[%s2 + $0x1ec] sm:$0xf]
  %v2272 = vld [vmem:[%s2 + $0x1f0] sm:$0xf]
  %v2273 = vld [vmem:[%s2 + $0x1f4] sm:$0xf]
  %v2274 = vld [vmem:[%s2 + $0x1f8] sm:$0xf]
  %v2275 = vld [vmem:[%s2 + $0x1fc] sm:$0xf]
  %v2276 = vld [vmem:[%s2 + $0x200] sm:$0xf]
  %v2277 = vld [vmem:[%s2 + $0x204] sm:$0xf]
  %v2278 = vld [vmem:[%s2 + $0x208] sm:$0xf]
  %v2279 = vld [vmem:[%s2 + $0x20c] sm:$0xf]
  %v2280 = vld [vmem:[%s2 + $0x210] sm:$0xf]
  %v2281 = vld [vmem:[%s2 + $0x214] sm:$0xf]
  %v2282 = vld [vmem:[%s2 + $0x218] sm:$0xf]
  %v2283 = vld [vmem:[%s2 + $0x21c] sm:$0xf]
  %v2284 = vld [vmem:[%s2 + $0x220] sm:$0xf]
  %v2285 = vld [vmem:[%s2 + $0x224] sm:$0xf]
  %v2286 = vld [vmem:[%s2 + $0x228] sm:$0xf]
  %v2287 = vld [vmem:[%s2 + $0x22c] sm:$0xf]
  %v2288 = vld [vmem:[%s2 + $0x230] sm:$0xf]
  %v2289 = vld [vmem:[%s2 + $0x234] sm:$0xf]
  %v2290 = vld [vmem:[%s2 + $0x238] sm:$0xf]
  %v2291 = vld [vmem:[%s2 + $0x23c] sm:$0xf]
  %v2292 = vld [vmem:[%s2 + $0x240] sm:$0xf]
  %v2293 = vld [vmem:[%s2 + $0x244] sm:$0xf]
  %v2294 = vld [vmem:[%s2 + $0x248] sm:$0xf]
  %v2295 = vld [vmem:[%s2 + $0x24c] sm:$0xf]
  %v2296 = vld [vmem:[%s2 + $0x250] sm:$0xf]
  %v2297 = vld [vmem:[%s2 + $0x254] sm:$0xf]
  %v2298 = vld [vmem:[%s2 + $0x258] sm:$0xf]
  %v2299 = vld [vmem:[%s2 + $0x25c] sm:$0xf]
  %v2300 = vld [vmem:[%s2 + $0x260] sm:$0xf]
  %v2301 = vld [vmem:[%s2 + $0x264] sm:$0xf]
  %v2302 = vld [vmem:[%s2 + $0x268] sm:$0xf]
  %v2303 = vld [vmem:[%s2 + $0x26c] sm:$0xf]
  %v2304 = vld [vmem:[%s2 + $0x270] sm:$0xf]
  %v2305 = vld [vmem:[%s2 + $0x274] sm:$0xf]
  %v2306 = vld [vmem:[%s2 + $0x278] sm:$0xf]
  %v2307 = vld [vmem:[%s2 + $0x27c] sm:$0xf]
  %v2308 = vld [vmem:[%s2 + $0x280] sm:$0xf]
  %v2309 = vld [vmem:[%s2 + $0x284] sm:$0xf]
  %v2310 = vld [vmem:[%s2 + $0x288] sm:$0xf]
  %v2311 = vld [vmem:[%s2 + $0x28c] sm:$0xf]
  %v2312 = vld [vmem:[%s2 + $0x290] sm:$0xf]
  %v2313 = vld [vmem:[%s2 + $0x294] sm:$0xf]
  %v2314 = vld [vmem:[%s2 + $0x298] sm:$0xf]
  %v2315 = vld [vmem:[%s2 + $0x29c] sm:$0xf]
  %v2316 = vld [vmem:[%s2 + $0x2a0] sm:$0xf]
  %v2317 = vld [vmem:[%s2 + $0x2a4] sm:$0xf]
  %v2318 = vld [vmem:[%s2 + $0x2a8] sm:$0xf]
  %v2319 = vld [vmem:[%s2 + $0x2ac] sm:$0xf]
  %v2320 = vld [vmem:[%s2 + $0x2b0] sm:$0xf]
  %v2321 = vld [vmem:[%s2 + $0x2b4] sm:$0xf]
  %v2322 = vld [vmem:[%s2 + $0x2b8] sm:$0xf]
  %v2323 = vld [vmem:[%s2 + $0x2bc] sm:$0xf]
  %v2324 = vld [vmem:[%s2 + $0x2c0] sm:$0xf]
  %v2325 = vld [vmem:[%s2 + $0x2c4] sm:$0xf]
  %v2326 = vld [vmem:[%s2 + $0x2c8] sm:$0xf]
  %v2327 = vld [vmem:[%s2 + $0x2cc] sm:$0xf]
  %v2328 = vld [vmem:[%s2 + $0x2d0] sm:$0xf]
  %v2329 = vld [vmem:[%s2 + $0x2d4] sm:$0xf]
  %v2330 = vld [vmem:[%s2 + $0x2d8] sm:$0xf]
  %v2331 = vld [vmem:[%s2 + $0x2dc] sm:$0xf]
  %v2332 = vld [vmem:[%s2 + $0x2e0] sm:$0xf]
  %v2333 = vld [vmem:[%s2 + $0x2e4] sm:$0xf]
  %v2334 = vld [vmem:[%s2 + $0x2e8] sm:$0xf]
  %v2335 = vld [vmem:[%s2 + $0x2ec] sm:$0xf]
  %v2336 = vld [vmem:[%s2 + $0x2f0] sm:$0xf]
  %v2337 = vld [vmem:[%s2 + $0x2f4] sm:$0xf]
  %v2338 = vld [vmem:[%s2 + $0x2f8] sm:$0xf]
  %v2339 = vld [vmem:[%s2 + $0x2fc] sm:$0xf]
  %v2340 = vld [vmem:[%s2 + $0x300] sm:$0xf]
  %v2341 = vld [vmem:[%s2 + $0x304] sm:$0xf]
  %v2342 = vld [vmem:[%s2 + $0x308] sm:$0xf]
  %v2343 = vld [vmem:[%s2 + $0x30c] sm:$0xf]
  %v2344 = vld [vmem:[%s2 + $0x310] sm:$0xf]
  %v2345 = vld [vmem:[%s2 + $0x314] sm:$0xf]
  %v2346 = vld [vmem:[%s2 + $0x318] sm:$0xf]
  %v2347 = vld [vmem:[%s2 + $0x31c] sm:$0xf]
  %v2348 = vld [vmem:[%s2 + $0x320] sm:$0xf]
  %v2349 = vld [vmem:[%s2 + $0x324] sm:$0xf]
  %v2350 = vld [vmem:[%s2 + $0x328] sm:$0xf]
  %v2351 = vld [vmem:[%s2 + $0x32c] sm:$0xf]
  %v2352 = vld [vmem:[%s2 + $0x330] sm:$0xf]
  %v2353 = vld [vmem:[%s2 + $0x334] sm:$0xf]
  %v2354 = vld [vmem:[%s2 + $0x338] sm:$0xf]
  %v2355 = vld [vmem:[%s2 + $0x33c] sm:$0xf]
  %v2356 = vld [vmem:[%s2 + $0x340] sm:$0xf]
  %v2357 = vld [vmem:[%s2 + $0x344] sm:$0xf]
  %v2358 = vld [vmem:[%s2 + $0x348] sm:$0xf]
  %v2359 = vld [vmem:[%s2 + $0x34c] sm:$0xf]
  %v2360 = vld [vmem:[%s2 + $0x350] sm:$0xf]
  %v2361 = vld [vmem:[%s2 + $0x354] sm:$0xf]
  %v2362 = vld [vmem:[%s2 + $0x358] sm:$0xf]
  %v2363 = vld [vmem:[%s2 + $0x35c] sm:$0xf]
  %v2364 = vld [vmem:[%s2 + $0x360] sm:$0xf]
  %v2365 = vld [vmem:[%s2 + $0x364] sm:$0xf]
  %v2366 = vld [vmem:[%s2 + $0x368] sm:$0xf]
  %v2367 = vld [vmem:[%s2 + $0x36c] sm:$0xf]
  %v2368 = vld [vmem:[%s2 + $0x370] sm:$0xf]
  %v2369 = vld [vmem:[%s2 + $0x374] sm:$0xf]
  %v2370 = vld [vmem:[%s2 + $0x378] sm:$0xf]
  %v2371 = vld [vmem:[%s2 + $0x37c] sm:$0xf]
  %v2372 = vld [vmem:[%s2 + $0x380] sm:$0xf]
  %v2373 = vld [vmem:[%s2 + $0x384] sm:$0xf]
  %v2374 = vld [vmem:[%s2 + $0x388] sm:$0xf]
  %v2375 = vld [vmem:[%s2 + $0x38c] sm:$0xf]
  %v2376 = vld [vmem:[%s2 + $0x390] sm:$0xf]
  %v2377 = vld [vmem:[%s2 + $0x394] sm:$0xf]
  %v2378 = vld [vmem:[%s2 + $0x398] sm:$0xf]
  %v2379 = vld [vmem:[%s2 + $0x39c] sm:$0xf]
  %v2380 = vld [vmem:[%s2 + $0x3a0] sm:$0xf]
  %v2381 = vld [vmem:[%s2 + $0x3a4] sm:$0xf]
  %v2382 = vld [vmem:[%s2 + $0x3a8] sm:$0xf]
  %v2383 = vld [vmem:[%s2 + $0x3ac] sm:$0xf]
  %v2384 = vld [vmem:[%s2 + $0x3b0] sm:$0xf]
  %v2385 = vld [vmem:[%s2 + $0x3b4] sm:$0xf]
  %v2386 = vld [vmem:[%s2 + $0x3b8] sm:$0xf]
  %v2387 = vld [vmem:[%s2 + $0x3bc] sm:$0xf]
  %v2388 = vld [vmem:[%s2 + $0x3c0] sm:$0xf]
  %v2389 = vld [vmem:[%s2 + $0x3c4] sm:$0xf]
  %v2390 = vld [vmem:[%s2 + $0x3c8] sm:$0xf]
  %v2391 = vld [vmem:[%s2 + $0x3cc] sm:$0xf]
  %v2392 = vld [vmem:[%s2 + $0x3d0] sm:$0xf]
  %v2393 = vld [vmem:[%s2 + $0x3d4] sm:$0xf]
  %v2394 = vld [vmem:[%s2 + $0x3d8] sm:$0xf]
  %v2395 = vld [vmem:[%s2 + $0x3dc] sm:$0xf]
  %v2396 = vld [vmem:[%s2 + $0x3e0] sm:$0xf]
  %v2397 = vld [vmem:[%s2 + $0x3e4] sm:$0xf]
  %v2398 = vld [vmem:[%s2 + $0x3e8] sm:$0xf]
  %v2399 = vld [vmem:[%s2 + $0x3ec] sm:$0xf]
  %v2400 = vld [vmem:[%s2 + $0x3f0] sm:$0xf]
  %v2401 = vld [vmem:[%s2 + $0x3f4] sm:$0xf]
  %v2402 = vld [vmem:[%s2 + $0x3f8] sm:$0xf]
  %v2403 = vld [vmem:[%s2 + $0x3fc] sm:$0xf]
  %v2404 = vld [vmem:[%s4] sm:$0x1]
  %v2406 = vlaneseq
  %v2407 = vshrl.u32 %v2406, 7
  %v2408 = vsub.s32 0, %v2407
  %v2409 = vrot.slane %v2404, %v2408
  %v2483 = vunpack.c.l.b16 %v2076
  %v2484 = vunpack.c.h.b16 %v2076
  %v2485 = vunpack.c.l.b16 %v2077
  %v2486 = vunpack.c.h.b16 %v2077
  %v2487 = vunpack.c.l.b16 %v2078
  %v2488 = vunpack.c.h.b16 %v2078
  %v2489 = vunpack.c.l.b16 %v2079
  %v2490 = vunpack.c.h.b16 %v2079
  %v2491 = vunpack.c.l.b16 %v2080
  %v2492 = vunpack.c.h.b16 %v2080
  %v2493 = vunpack.c.l.b16 %v2081
  %v2494 = vunpack.c.h.b16 %v2081
  %v2495 = vunpack.c.l.b16 %v2082
  %v2496 = vunpack.c.h.b16 %v2082
  %v2497 = vunpack.c.l.b16 %v2083
  %v2498 = vunpack.c.h.b16 %v2083
  %v2499 = vunpack.c.l.b16 %v2084
  %v2500 = vunpack.c.h.b16 %v2084
  %v2501 = vunpack.c.l.b16 %v2085
  %v2502 = vunpack.c.h.b16 %v2085
  %v2503 = vunpack.c.l.b16 %v2086
  %v2504 = vunpack.c.h.b16 %v2086
  %v2505 = vunpack.c.l.b16 %v2087
  %v2506 = vunpack.c.h.b16 %v2087
  %v2507 = vunpack.c.l.b16 %v2088
  %v2508 = vunpack.c.h.b16 %v2088
  %v2509 = vunpack.c.l.b16 %v2089
  %v2510 = vunpack.c.h.b16 %v2089
  %v2511 = vunpack.c.l.b16 %v2090
  %v2512 = vunpack.c.h.b16 %v2090
  %v2513 = vunpack.c.l.b16 %v2091
  %v2514 = vunpack.c.h.b16 %v2091
  %v2515 = vunpack.c.l.b16 %v2092
  %v2516 = vunpack.c.h.b16 %v2092
  %v2517 = vunpack.c.l.b16 %v2093
  %v2518 = vunpack.c.h.b16 %v2093
  %v2519 = vunpack.c.l.b16 %v2094
  %v2520 = vunpack.c.h.b16 %v2094
  %v2521 = vunpack.c.l.b16 %v2095
  %v2522 = vunpack.c.h.b16 %v2095
  %v2523 = vunpack.c.l.b16 %v2096
  %v2524 = vunpack.c.h.b16 %v2096
  %v2525 = vunpack.c.l.b16 %v2097
  %v2526 = vunpack.c.h.b16 %v2097
  %v2527 = vunpack.c.l.b16 %v2098
  %v2528 = vunpack.c.h.b16 %v2098
  %v2529 = vunpack.c.l.b16 %v2099
  %v2530 = vunpack.c.h.b16 %v2099
  %v2531 = vunpack.c.l.b16 %v2100
  %v2532 = vunpack.c.h.b16 %v2100
  %v2533 = vunpack.c.l.b16 %v2101
  %v2534 = vunpack.c.h.b16 %v2101
  %v2535 = vunpack.c.l.b16 %v2102
  %v2536 = vunpack.c.h.b16 %v2102
  %v2537 = vunpack.c.l.b16 %v2103
  %v2538 = vunpack.c.h.b16 %v2103
  %v2539 = vunpack.c.l.b16 %v2104
  %v2540 = vunpack.c.h.b16 %v2104
  %v2541 = vunpack.c.l.b16 %v2105
  %v2542 = vunpack.c.h.b16 %v2105
  %v2543 = vunpack.c.l.b16 %v2106
  %v2544 = vunpack.c.h.b16 %v2106
  %v2545 = vunpack.c.l.b16 %v2107
  %v2546 = vunpack.c.h.b16 %v2107
  %v2547 = vunpack.c.l.b16 %v2108
  %v2548 = vunpack.c.h.b16 %v2108
  %v2549 = vunpack.c.l.b16 %v2109
  %v2550 = vunpack.c.h.b16 %v2109
  %v2551 = vunpack.c.l.b16 %v2110
  %v2552 = vunpack.c.h.b16 %v2110
  %v2553 = vunpack.c.l.b16 %v2111
  %v2554 = vunpack.c.h.b16 %v2111
  %v2555 = vunpack.c.l.b16 %v2112
  %v2556 = vunpack.c.h.b16 %v2112
  %v2557 = vunpack.c.l.b16 %v2113
  %v2558 = vunpack.c.h.b16 %v2113
  %v2559 = vunpack.c.l.b16 %v2114
  %v2560 = vunpack.c.h.b16 %v2114
  %v2561 = vunpack.c.l.b16 %v2115
  %v2562 = vunpack.c.h.b16 %v2115
  %v2563 = vunpack.c.l.b16 %v2116
  %v2564 = vunpack.c.h.b16 %v2116
  %v2565 = vunpack.c.l.b16 %v2117
  %v2566 = vunpack.c.h.b16 %v2117
  %v2567 = vunpack.c.l.b16 %v2118
  %v2568 = vunpack.c.h.b16 %v2118
  %v2569 = vunpack.c.l.b16 %v2119
  %v2570 = vunpack.c.h.b16 %v2119
  %v2571 = vunpack.c.l.b16 %v2120
  %v2572 = vunpack.c.h.b16 %v2120
  %v2573 = vunpack.c.l.b16 %v2121
  %v2574 = vunpack.c.h.b16 %v2121
  %v2575 = vunpack.c.l.b16 %v2122
  %v2576 = vunpack.c.h.b16 %v2122
  %v2577 = vunpack.c.l.b16 %v2123
  %v2578 = vunpack.c.h.b16 %v2123
  %v2579 = vunpack.c.l.b16 %v2124
  %v2580 = vunpack.c.h.b16 %v2124
  %v2581 = vunpack.c.l.b16 %v2125
  %v2582 = vunpack.c.h.b16 %v2125
  %v2583 = vunpack.c.l.b16 %v2126
  %v2584 = vunpack.c.h.b16 %v2126
  %v2585 = vunpack.c.l.b16 %v2127
  %v2586 = vunpack.c.h.b16 %v2127
  %v2587 = vunpack.c.l.b16 %v2128
  %v2588 = vunpack.c.h.b16 %v2128
  %v2589 = vunpack.c.l.b16 %v2129
  %v2590 = vunpack.c.h.b16 %v2129
  %v2591 = vunpack.c.l.b16 %v2130
  %v2592 = vunpack.c.h.b16 %v2130
  %v2593 = vunpack.c.l.b16 %v2131
  %v2594 = vunpack.c.h.b16 %v2131
  %v2595 = vunpack.c.l.b16 %v2132
  %v2596 = vunpack.c.h.b16 %v2132
  %v2597 = vunpack.c.l.b16 %v2133
  %v2598 = vunpack.c.h.b16 %v2133
  %v2599 = vunpack.c.l.b16 %v2134
  %v2600 = vunpack.c.h.b16 %v2134
  %v2601 = vunpack.c.l.b16 %v2135
  %v2602 = vunpack.c.h.b16 %v2135
  %v2603 = vunpack.c.l.b16 %v2136
  %v2604 = vunpack.c.h.b16 %v2136
  %v2605 = vunpack.c.l.b16 %v2137
  %v2606 = vunpack.c.h.b16 %v2137
  %v2607 = vunpack.c.l.b16 %v2138
  %v2608 = vunpack.c.h.b16 %v2138
  %v2609 = vunpack.c.l.b16 %v2139
  %v2610 = vunpack.c.h.b16 %v2139
  %v2611 = vunpack.c.l.b16 %v2140
  %v2612 = vunpack.c.h.b16 %v2140
  %v2613 = vunpack.c.l.b16 %v2141
  %v2614 = vunpack.c.h.b16 %v2141
  %v2615 = vunpack.c.l.b16 %v2142
  %v2616 = vunpack.c.h.b16 %v2142
  %v2617 = vunpack.c.l.b16 %v2143
  %v2618 = vunpack.c.h.b16 %v2143
  %v2619 = vunpack.c.l.b16 %v2144
  %v2620 = vunpack.c.h.b16 %v2144
  %v2621 = vunpack.c.l.b16 %v2145
  %v2622 = vunpack.c.h.b16 %v2145
  %v2623 = vunpack.c.l.b16 %v2146
  %v2624 = vunpack.c.h.b16 %v2146
  %v2625 = vunpack.c.l.b16 %v2147
  %v2626 = vunpack.c.h.b16 %v2147
  %v2627 = vpack.c.b16 %v2499, %v2483
  %v2628 = vpack.c.b16 %v2500, %v2484
  %v2629 = vpack.c.b16 %v2501, %v2485
  %v2630 = vpack.c.b16 %v2502, %v2486
  %v2631 = vpack.c.b16 %v2503, %v2487
  %v2632 = vpack.c.b16 %v2504, %v2488
  %v2633 = vpack.c.b16 %v2505, %v2489
  %v2634 = vpack.c.b16 %v2506, %v2490
  %v2635 = vpack.c.b16 %v2507, %v2491
  %v2636 = vpack.c.b16 %v2508, %v2492
  %v2637 = vpack.c.b16 %v2509, %v2493
  %v2638 = vpack.c.b16 %v2510, %v2494
  %v2639 = vpack.c.b16 %v2511, %v2495
  %v2640 = vpack.c.b16 %v2512, %v2496
  %v2641 = vpack.c.b16 %v2513, %v2497
  %v2642 = vpack.c.b16 %v2514, %v2498
  %v2643 = vpack.c.b16 %v2531, %v2515
  %v2644 = vpack.c.b16 %v2532, %v2516
  %v2645 = vpack.c.b16 %v2533, %v2517
  %v2646 = vpack.c.b16 %v2534, %v2518
  %v2647 = vpack.c.b16 %v2535, %v2519
  %v2648 = vpack.c.b16 %v2536, %v2520
  %v2649 = vpack.c.b16 %v2537, %v2521
  %v2650 = vpack.c.b16 %v2538, %v2522
  %v2651 = vpack.c.b16 %v2539, %v2523
  %v2652 = vpack.c.b16 %v2540, %v2524
  %v2653 = vpack.c.b16 %v2541, %v2525
  %v2654 = vpack.c.b16 %v2542, %v2526
  %v2655 = vpack.c.b16 %v2543, %v2527
  %v2656 = vpack.c.b16 %v2544, %v2528
  %v2657 = vpack.c.b16 %v2545, %v2529
  %v2658 = vpack.c.b16 %v2546, %v2530
  %v2659 = vpack.c.b16 %v2563, %v2547
  %v2660 = vpack.c.b16 %v2564, %v2548
  %v2661 = vpack.c.b16 %v2565, %v2549
  %v2662 = vpack.c.b16 %v2566, %v2550
  %v2663 = vpack.c.b16 %v2567, %v2551
  %v2664 = vpack.c.b16 %v2568, %v2552
  %v2665 = vpack.c.b16 %v2569, %v2553
  %v2666 = vpack.c.b16 %v2570, %v2554
  %v2667 = vpack.c.b16 %v2571, %v2555
  %v2668 = vpack.c.b16 %v2572, %v2556
  %v2669 = vpack.c.b16 %v2573, %v2557
  %v2670 = vpack.c.b16 %v2574, %v2558
  %v2671 = vpack.c.b16 %v2575, %v2559
  %v2672 = vpack.c.b16 %v2576, %v2560
  %v2673 = vpack.c.b16 %v2577, %v2561
  %v2674 = vpack.c.b16 %v2578, %v2562
  %v2675 = vpack.c.b16 %v2595, %v2579
  %v2676 = vpack.c.b16 %v2596, %v2580
  %v2677 = vpack.c.b16 %v2597, %v2581
  %v2678 = vpack.c.b16 %v2598, %v2582
  %v2679 = vpack.c.b16 %v2599, %v2583
  %v2680 = vpack.c.b16 %v2600, %v2584
  %v2681 = vpack.c.b16 %v2601, %v2585
  %v2682 = vpack.c.b16 %v2602, %v2586
  %v2683 = vpack.c.b16 %v2603, %v2587
  %v2684 = vpack.c.b16 %v2604, %v2588
  %v2685 = vpack.c.b16 %v2605, %v2589
  %v2686 = vpack.c.b16 %v2606, %v2590
  %v2687 = vpack.c.b16 %v2607, %v2591
  %v2688 = vpack.c.b16 %v2608, %v2592
  %v2689 = vpack.c.b16 %v2609, %v2593
  %v2690 = vpack.c.b16 %v2610, %v2594
  %v2691 = vpack.c.b16 %v2611, %v2611
  %v2692 = vpack.c.b16 %v2612, %v2612
  %v2693 = vpack.c.b16 %v2613, %v2613
  %v2694 = vpack.c.b16 %v2614, %v2614
  %v2695 = vpack.c.b16 %v2615, %v2615
  %v2696 = vpack.c.b16 %v2616, %v2616
  %v2697 = vpack.c.b16 %v2617, %v2617
  %v2698 = vpack.c.b16 %v2618, %v2618
  %v2699 = vpack.c.b16 %v2619, %v2619
  %v2700 = vpack.c.b16 %v2620, %v2620
  %v2701 = vpack.c.b16 %v2621, %v2621
  %v2702 = vpack.c.b16 %v2622, %v2622
  %v2703 = vpack.c.b16 %v2623, %v2623
  %v2704 = vpack.c.b16 %v2624, %v2624
  %v2705 = vpack.c.b16 %v2625, %v2625
  %v2706 = vpack.c.b16 %v2626, %v2626
  %v3043 = vunpack.c.l.b16 %v2148
  %v3044 = vunpack.c.l.b16 %v2149
  %v3045 = vunpack.c.l.b16 %v2150
  %v3046 = vunpack.c.l.b16 %v2151
  %v3047 = vunpack.c.l.b16 %v2152
  %v3048 = vunpack.c.l.b16 %v2153
  %v3049 = vunpack.c.l.b16 %v2154
  %v3050 = vunpack.c.l.b16 %v2155
  %v3051 = vunpack.c.l.b16 %v2156
  %v3052 = vunpack.c.l.b16 %v2157
  %v3053 = vunpack.c.l.b16 %v2158
  %v3054 = vunpack.c.l.b16 %v2159
  %v3055 = vunpack.c.l.b16 %v2160
  %v3056 = vunpack.c.l.b16 %v2161
  %v3057 = vunpack.c.l.b16 %v2162
  %v3058 = vunpack.c.l.b16 %v2163
  %v3059 = vunpack.c.l.b16 %v2164
  %v3060 = vunpack.c.l.b16 %v2165
  %v3061 = vunpack.c.l.b16 %v2166
  %v3062 = vunpack.c.l.b16 %v2167
  %v3063 = vunpack.c.l.b16 %v2168
  %v3064 = vunpack.c.l.b16 %v2169
  %v3065 = vunpack.c.l.b16 %v2170
  %v3066 = vunpack.c.l.b16 %v2171
  %v3067 = vunpack.c.l.b16 %v2172
  %v3068 = vunpack.c.l.b16 %v2173
  %v3069 = vunpack.c.l.b16 %v2174
  %v3070 = vunpack.c.l.b16 %v2175
  %v3071 = vunpack.c.l.b16 %v2176
  %v3072 = vunpack.c.l.b16 %v2177
  %v3073 = vunpack.c.l.b16 %v2178
  %v3074 = vunpack.c.l.b16 %v2179
  %v3075 = vunpack.c.l.b16 %v2180
  %v3076 = vunpack.c.l.b16 %v2181
  %v3077 = vunpack.c.l.b16 %v2182
  %v3078 = vunpack.c.l.b16 %v2183
  %v3079 = vunpack.c.l.b16 %v2184
  %v3080 = vunpack.c.l.b16 %v2185
  %v3081 = vunpack.c.l.b16 %v2186
  %v3082 = vunpack.c.l.b16 %v2187
  %v3083 = vunpack.c.l.b16 %v2188
  %v3084 = vunpack.c.l.b16 %v2189
  %v3085 = vunpack.c.l.b16 %v2190
  %v3086 = vunpack.c.l.b16 %v2191
  %v3087 = vunpack.c.l.b16 %v2192
  %v3088 = vunpack.c.l.b16 %v2193
  %v3089 = vunpack.c.l.b16 %v2194
  %v3090 = vunpack.c.l.b16 %v2195
  %v3091 = vunpack.c.l.b16 %v2196
  %v3092 = vunpack.c.l.b16 %v2197
  %v3093 = vunpack.c.l.b16 %v2198
  %v3094 = vunpack.c.l.b16 %v2199
  %v3095 = vunpack.c.l.b16 %v2200
  %v3096 = vunpack.c.l.b16 %v2201
  %v3097 = vunpack.c.l.b16 %v2202
  %v3098 = vunpack.c.l.b16 %v2203
  %v3099 = vunpack.c.l.b16 %v2204
  %v3100 = vunpack.c.l.b16 %v2205
  %v3101 = vunpack.c.l.b16 %v2206
  %v3102 = vunpack.c.l.b16 %v2207
  %v3103 = vunpack.c.l.b16 %v2208
  %v3104 = vunpack.c.l.b16 %v2209
  %v3105 = vunpack.c.l.b16 %v2210
  %v3106 = vunpack.c.l.b16 %v2211
  %v3107 = vunpack.c.l.b16 %v2212
  %v3108 = vunpack.c.l.b16 %v2213
  %v3109 = vunpack.c.l.b16 %v2214
  %v3110 = vunpack.c.l.b16 %v2215
  %v3111 = vunpack.c.l.b16 %v2216
  %v3112 = vunpack.c.l.b16 %v2217
  %v3113 = vunpack.c.l.b16 %v2218
  %v3114 = vunpack.c.l.b16 %v2219
  %v3115 = vunpack.c.l.b16 %v2220
  %v3116 = vunpack.c.l.b16 %v2221
  %v3117 = vunpack.c.l.b16 %v2222
  %v3118 = vunpack.c.l.b16 %v2223
  %v3119 = vunpack.c.l.b16 %v2224
  %v3120 = vunpack.c.l.b16 %v2225
  %v3121 = vunpack.c.l.b16 %v2226
  %v3122 = vunpack.c.l.b16 %v2227
  %v3123 = vunpack.c.l.b16 %v2228
  %v3124 = vunpack.c.l.b16 %v2229
  %v3125 = vunpack.c.l.b16 %v2230
  %v3126 = vunpack.c.l.b16 %v2231
  %v3127 = vunpack.c.l.b16 %v2232
  %v3128 = vunpack.c.l.b16 %v2233
  %v3129 = vunpack.c.l.b16 %v2234
  %v3130 = vunpack.c.l.b16 %v2235
  %v3131 = vunpack.c.l.b16 %v2236
  %v3132 = vunpack.c.l.b16 %v2237
  %v3133 = vunpack.c.l.b16 %v2238
  %v3134 = vunpack.c.l.b16 %v2239
  %v3135 = vunpack.c.l.b16 %v2240
  %v3136 = vunpack.c.l.b16 %v2241
  %v3137 = vunpack.c.l.b16 %v2242
  %v3138 = vunpack.c.l.b16 %v2243
  %v3139 = vunpack.c.l.b16 %v2244
  %v3140 = vunpack.c.l.b16 %v2245
  %v3141 = vunpack.c.l.b16 %v2246
  %v3142 = vunpack.c.l.b16 %v2247
  %v3143 = vunpack.c.l.b16 %v2248
  %v3144 = vunpack.c.l.b16 %v2249
  %v3145 = vunpack.c.l.b16 %v2250
  %v3146 = vunpack.c.l.b16 %v2251
  %v3147 = vunpack.c.l.b16 %v2252
  %v3148 = vunpack.c.l.b16 %v2253
  %v3149 = vunpack.c.l.b16 %v2254
  %v3150 = vunpack.c.l.b16 %v2255
  %v3151 = vunpack.c.l.b16 %v2256
  %v3152 = vunpack.c.l.b16 %v2257
  %v3153 = vunpack.c.l.b16 %v2258
  %v3154 = vunpack.c.l.b16 %v2259
  %v3155 = vunpack.c.l.b16 %v2260
  %v3156 = vunpack.c.l.b16 %v2261
  %v3157 = vunpack.c.l.b16 %v2262
  %v3158 = vunpack.c.l.b16 %v2263
  %v3159 = vunpack.c.l.b16 %v2264
  %v3160 = vunpack.c.l.b16 %v2265
  %v3161 = vunpack.c.l.b16 %v2266
  %v3162 = vunpack.c.l.b16 %v2267
  %v3163 = vunpack.c.l.b16 %v2268
  %v3164 = vunpack.c.l.b16 %v2269
  %v3165 = vunpack.c.l.b16 %v2270
  %v3166 = vunpack.c.l.b16 %v2271
  %v3167 = vunpack.c.l.b16 %v2272
  %v3168 = vunpack.c.l.b16 %v2273
  %v3169 = vunpack.c.l.b16 %v2274
  %v3170 = vunpack.c.l.b16 %v2275
  %v3171 = vunpack.c.l.b16 %v2276
  %v3172 = vunpack.c.l.b16 %v2277
  %v3173 = vunpack.c.l.b16 %v2278
  %v3174 = vunpack.c.l.b16 %v2279
  %v3175 = vunpack.c.l.b16 %v2280
  %v3176 = vunpack.c.l.b16 %v2281
  %v3177 = vunpack.c.l.b16 %v2282
  %v3178 = vunpack.c.l.b16 %v2283
  %v3179 = vunpack.c.l.b16 %v2284
  %v3180 = vunpack.c.l.b16 %v2285
  %v3181 = vunpack.c.l.b16 %v2286
  %v3182 = vunpack.c.l.b16 %v2287
  %v3183 = vunpack.c.l.b16 %v2288
  %v3184 = vunpack.c.l.b16 %v2289
  %v3185 = vunpack.c.l.b16 %v2290
  %v3186 = vunpack.c.l.b16 %v2291
  %v3187 = vunpack.c.l.b16 %v2292
  %v3188 = vunpack.c.l.b16 %v2293
  %v3189 = vunpack.c.l.b16 %v2294
  %v3190 = vunpack.c.l.b16 %v2295
  %v3191 = vunpack.c.l.b16 %v2296
  %v3192 = vunpack.c.l.b16 %v2297
  %v3193 = vunpack.c.l.b16 %v2298
  %v3194 = vunpack.c.l.b16 %v2299
  %v3195 = vunpack.c.l.b16 %v2300
  %v3196 = vunpack.c.l.b16 %v2301
  %v3197 = vunpack.c.l.b16 %v2302
  %v3198 = vunpack.c.l.b16 %v2303
  %v3199 = vunpack.c.l.b16 %v2304
  %v3200 = vunpack.c.l.b16 %v2305
  %v3201 = vunpack.c.l.b16 %v2306
  %v3202 = vunpack.c.l.b16 %v2307
  %v3203 = vunpack.c.l.b16 %v2308
  %v3204 = vunpack.c.l.b16 %v2309
  %v3205 = vunpack.c.l.b16 %v2310
  %v3206 = vunpack.c.l.b16 %v2311
  %v3207 = vunpack.c.l.b16 %v2312
  %v3208 = vunpack.c.l.b16 %v2313
  %v3209 = vunpack.c.l.b16 %v2314
  %v3210 = vunpack.c.l.b16 %v2315
  %v3211 = vunpack.c.l.b16 %v2316
  %v3212 = vunpack.c.l.b16 %v2317
  %v3213 = vunpack.c.l.b16 %v2318
  %v3214 = vunpack.c.l.b16 %v2319
  %v3215 = vunpack.c.l.b16 %v2320
  %v3216 = vunpack.c.l.b16 %v2321
  %v3217 = vunpack.c.l.b16 %v2322
  %v3218 = vunpack.c.l.b16 %v2323
  %v3219 = vunpack.c.l.b16 %v2324
  %v3220 = vunpack.c.l.b16 %v2325
  %v3221 = vunpack.c.l.b16 %v2326
  %v3222 = vunpack.c.l.b16 %v2327
  %v3223 = vunpack.c.l.b16 %v2328
  %v3224 = vunpack.c.l.b16 %v2329
  %v3225 = vunpack.c.l.b16 %v2330
  %v3226 = vunpack.c.l.b16 %v2331
  %v3227 = vunpack.c.l.b16 %v2332
  %v3228 = vunpack.c.l.b16 %v2333
  %v3229 = vunpack.c.l.b16 %v2334
  %v3230 = vunpack.c.l.b16 %v2335
  %v3231 = vunpack.c.l.b16 %v2336
  %v3232 = vunpack.c.l.b16 %v2337
  %v3233 = vunpack.c.l.b16 %v2338
  %v3234 = vunpack.c.l.b16 %v2339
  %v3235 = vunpack.c.l.b16 %v2340
  %v3236 = vunpack.c.l.b16 %v2341
  %v3237 = vunpack.c.l.b16 %v2342
  %v3238 = vunpack.c.l.b16 %v2343
  %v3239 = vunpack.c.l.b16 %v2344
  %v3240 = vunpack.c.l.b16 %v2345
  %v3241 = vunpack.c.l.b16 %v2346
  %v3242 = vunpack.c.l.b16 %v2347
  %v3243 = vunpack.c.l.b16 %v2348
  %v3244 = vunpack.c.l.b16 %v2349
  %v3245 = vunpack.c.l.b16 %v2350
  %v3246 = vunpack.c.l.b16 %v2351
  %v3247 = vunpack.c.l.b16 %v2352
  %v3248 = vunpack.c.l.b16 %v2353
  %v3249 = vunpack.c.l.b16 %v2354
  %v3250 = vunpack.c.l.b16 %v2355
  %v3251 = vunpack.c.l.b16 %v2356
  %v3252 = vunpack.c.l.b16 %v2357
  %v3253 = vunpack.c.l.b16 %v2358
  %v3254 = vunpack.c.l.b16 %v2359
  %v3255 = vunpack.c.l.b16 %v2360
  %v3256 = vunpack.c.l.b16 %v2361
  %v3257 = vunpack.c.l.b16 %v2362
  %v3258 = vunpack.c.l.b16 %v2363
  %v3259 = vunpack.c.l.b16 %v2364
  %v3260 = vunpack.c.l.b16 %v2365
  %v3261 = vunpack.c.l.b16 %v2366
  %v3262 = vunpack.c.l.b16 %v2367
  %v3263 = vunpack.c.l.b16 %v2368
  %v3264 = vunpack.c.l.b16 %v2369
  %v3265 = vunpack.c.l.b16 %v2370
  %v3266 = vunpack.c.l.b16 %v2371
  %v3267 = vunpack.c.l.b16 %v2372
  %v3268 = vunpack.c.l.b16 %v2373
  %v3269 = vunpack.c.l.b16 %v2374
  %v3270 = vunpack.c.l.b16 %v2375
  %v3271 = vunpack.c.l.b16 %v2376
  %v3272 = vunpack.c.l.b16 %v2377
  %v3273 = vunpack.c.l.b16 %v2378
  %v3274 = vunpack.c.l.b16 %v2379
  %v3275 = vunpack.c.l.b16 %v2380
  %v3276 = vunpack.c.l.b16 %v2381
  %v3277 = vunpack.c.l.b16 %v2382
  %v3278 = vunpack.c.l.b16 %v2383
  %v3279 = vunpack.c.l.b16 %v2384
  %v3280 = vunpack.c.l.b16 %v2385
  %v3281 = vunpack.c.l.b16 %v2386
  %v3282 = vunpack.c.l.b16 %v2387
  %v3283 = vunpack.c.l.b16 %v2388
  %v3284 = vunpack.c.l.b16 %v2389
  %v3285 = vunpack.c.l.b16 %v2390
  %v3286 = vunpack.c.l.b16 %v2391
  %v3287 = vunpack.c.l.b16 %v2392
  %v3288 = vunpack.c.l.b16 %v2393
  %v3289 = vunpack.c.l.b16 %v2394
  %v3290 = vunpack.c.l.b16 %v2395
  %v3291 = vunpack.c.l.b16 %v2396
  %v3292 = vunpack.c.l.b16 %v2397
  %v3293 = vunpack.c.l.b16 %v2398
  %v3294 = vunpack.c.l.b16 %v2399
  %v3295 = vunpack.c.l.b16 %v2400
  %v3296 = vunpack.c.l.b16 %v2401
  %v3297 = vunpack.c.l.b16 %v2402
  %v3298 = vunpack.c.l.b16 %v2403
  %v3299 = vpack.c.b16 %v3044, %v3043
  %v3300 = vpack.c.b16 %v3046, %v3045
  %v3301 = vpack.c.b16 %v3048, %v3047
  %v3302 = vpack.c.b16 %v3050, %v3049
  %v3303 = vpack.c.b16 %v3052, %v3051
  %v3304 = vpack.c.b16 %v3054, %v3053
  %v3305 = vpack.c.b16 %v3056, %v3055
  %v3306 = vpack.c.b16 %v3058, %v3057
  %v3307 = vpack.c.b16 %v3060, %v3059
  %v3308 = vpack.c.b16 %v3062, %v3061
  %v3309 = vpack.c.b16 %v3064, %v3063
  %v3310 = vpack.c.b16 %v3066, %v3065
  %v3311 = vpack.c.b16 %v3068, %v3067
  %v3312 = vpack.c.b16 %v3070, %v3069
  %v3313 = vpack.c.b16 %v3072, %v3071
  %v3314 = vpack.c.b16 %v3074, %v3073
  %v3315 = vpack.c.b16 %v3076, %v3075
  %v3316 = vpack.c.b16 %v3078, %v3077
  %v3317 = vpack.c.b16 %v3080, %v3079
  %v3318 = vpack.c.b16 %v3082, %v3081
  %v3319 = vpack.c.b16 %v3084, %v3083
  %v3320 = vpack.c.b16 %v3086, %v3085
  %v3321 = vpack.c.b16 %v3088, %v3087
  %v3322 = vpack.c.b16 %v3090, %v3089
  %v3323 = vpack.c.b16 %v3092, %v3091
  %v3324 = vpack.c.b16 %v3094, %v3093
  %v3325 = vpack.c.b16 %v3096, %v3095
  %v3326 = vpack.c.b16 %v3098, %v3097
  %v3327 = vpack.c.b16 %v3100, %v3099
  %v3328 = vpack.c.b16 %v3102, %v3101
  %v3329 = vpack.c.b16 %v3104, %v3103
  %v3330 = vpack.c.b16 %v3106, %v3105
  %v3331 = vpack.c.b16 %v3108, %v3107
  %v3332 = vpack.c.b16 %v3110, %v3109
  %v3333 = vpack.c.b16 %v3112, %v3111
  %v3334 = vpack.c.b16 %v3114, %v3113
  %v3335 = vpack.c.b16 %v3116, %v3115
  %v3336 = vpack.c.b16 %v3118, %v3117
  %v3337 = vpack.c.b16 %v3120, %v3119
  %v3338 = vpack.c.b16 %v3122, %v3121
  %v3339 = vpack.c.b16 %v3124, %v3123
  %v3340 = vpack.c.b16 %v3126, %v3125
  %v3341 = vpack.c.b16 %v3128, %v3127
  %v3342 = vpack.c.b16 %v3130, %v3129
  %v3343 = vpack.c.b16 %v3132, %v3131
  %v3344 = vpack.c.b16 %v3134, %v3133
  %v3345 = vpack.c.b16 %v3136, %v3135
  %v3346 = vpack.c.b16 %v3138, %v3137
  %v3347 = vpack.c.b16 %v3140, %v3139
  %v3348 = vpack.c.b16 %v3142, %v3141
  %v3349 = vpack.c.b16 %v3144, %v3143
  %v3350 = vpack.c.b16 %v3146, %v3145
  %v3351 = vpack.c.b16 %v3148, %v3147
  %v3352 = vpack.c.b16 %v3150, %v3149
  %v3353 = vpack.c.b16 %v3152, %v3151
  %v3354 = vpack.c.b16 %v3154, %v3153
  %v3355 = vpack.c.b16 %v3156, %v3155
  %v3356 = vpack.c.b16 %v3158, %v3157
  %v3357 = vpack.c.b16 %v3160, %v3159
  %v3358 = vpack.c.b16 %v3162, %v3161
  %v3359 = vpack.c.b16 %v3164, %v3163
  %v3360 = vpack.c.b16 %v3166, %v3165
  %v3361 = vpack.c.b16 %v3168, %v3167
  %v3362 = vpack.c.b16 %v3170, %v3169
  %v3363 = vpack.c.b16 %v3172, %v3171
  %v3364 = vpack.c.b16 %v3174, %v3173
  %v3365 = vpack.c.b16 %v3176, %v3175
  %v3366 = vpack.c.b16 %v3178, %v3177
  %v3367 = vpack.c.b16 %v3180, %v3179
  %v3368 = vpack.c.b16 %v3182, %v3181
  %v3369 = vpack.c.b16 %v3184, %v3183
  %v3370 = vpack.c.b16 %v3186, %v3185
  %v3371 = vpack.c.b16 %v3188, %v3187
  %v3372 = vpack.c.b16 %v3190, %v3189
  %v3373 = vpack.c.b16 %v3192, %v3191
  %v3374 = vpack.c.b16 %v3194, %v3193
  %v3375 = vpack.c.b16 %v3196, %v3195
  %v3376 = vpack.c.b16 %v3198, %v3197
  %v3377 = vpack.c.b16 %v3200, %v3199
  %v3378 = vpack.c.b16 %v3202, %v3201
  %v3379 = vpack.c.b16 %v3204, %v3203
  %v3380 = vpack.c.b16 %v3206, %v3205
  %v3381 = vpack.c.b16 %v3208, %v3207
  %v3382 = vpack.c.b16 %v3210, %v3209
  %v3383 = vpack.c.b16 %v3212, %v3211
  %v3384 = vpack.c.b16 %v3214, %v3213
  %v3385 = vpack.c.b16 %v3216, %v3215
  %v3386 = vpack.c.b16 %v3218, %v3217
  %v3387 = vpack.c.b16 %v3220, %v3219
  %v3388 = vpack.c.b16 %v3222, %v3221
  %v3389 = vpack.c.b16 %v3224, %v3223
  %v3390 = vpack.c.b16 %v3226, %v3225
  %v3391 = vpack.c.b16 %v3228, %v3227
  %v3392 = vpack.c.b16 %v3230, %v3229
  %v3393 = vpack.c.b16 %v3232, %v3231
  %v3394 = vpack.c.b16 %v3234, %v3233
  %v3395 = vpack.c.b16 %v3236, %v3235
  %v3396 = vpack.c.b16 %v3238, %v3237
  %v3397 = vpack.c.b16 %v3240, %v3239
  %v3398 = vpack.c.b16 %v3242, %v3241
  %v3399 = vpack.c.b16 %v3244, %v3243
  %v3400 = vpack.c.b16 %v3246, %v3245
  %v3401 = vpack.c.b16 %v3248, %v3247
  %v3402 = vpack.c.b16 %v3250, %v3249
  %v3403 = vpack.c.b16 %v3252, %v3251
  %v3404 = vpack.c.b16 %v3254, %v3253
  %v3405 = vpack.c.b16 %v3256, %v3255
  %v3406 = vpack.c.b16 %v3258, %v3257
  %v3407 = vpack.c.b16 %v3260, %v3259
  %v3408 = vpack.c.b16 %v3262, %v3261
  %v3409 = vpack.c.b16 %v3264, %v3263
  %v3410 = vpack.c.b16 %v3266, %v3265
  %v3411 = vpack.c.b16 %v3268, %v3267
  %v3412 = vpack.c.b16 %v3270, %v3269
  %v3413 = vpack.c.b16 %v3272, %v3271
  %v3414 = vpack.c.b16 %v3274, %v3273
  %v3415 = vpack.c.b16 %v3276, %v3275
  %v3416 = vpack.c.b16 %v3278, %v3277
  %v3417 = vpack.c.b16 %v3280, %v3279
  %v3418 = vpack.c.b16 %v3282, %v3281
  %v3419 = vpack.c.b16 %v3284, %v3283
  %v3420 = vpack.c.b16 %v3286, %v3285
  %v3421 = vpack.c.b16 %v3288, %v3287
  %v3422 = vpack.c.b16 %v3290, %v3289
  %v3423 = vpack.c.b16 %v3292, %v3291
  %v3424 = vpack.c.b16 %v3294, %v3293
  %v3425 = vpack.c.b16 %v3296, %v3295
  %v3426 = vpack.c.b16 %v3298, %v3297
  %3555 = vmatprep.subr.bf16.mxu0 0
  %3556 = vmatpush1.bf16.msra.mxu0 %v3299
  %3557 = vmatprep.subr.bf16.mxu0 0
  %3558 = vmatpush1.bf16.msra.mxu0 %v3300
  %3559 = vmatprep.subr.bf16.mxu0 0
  %3560 = vmatpush1.bf16.msra.mxu0 %v3301
  %3561 = vmatprep.subr.bf16.mxu0 0
  %3562 = vmatpush1.bf16.msra.mxu0 %v3302
  %3563 = vmatprep.subr.bf16.mxu0 0
  %3564 = vmatpush1.bf16.msra.mxu0 %v3303
  %3565 = vmatprep.subr.bf16.mxu0 0
  %3566 = vmatpush1.bf16.msra.mxu0 %v3304
  %3567 = vmatprep.subr.bf16.mxu0 0
  %3568 = vmatpush1.bf16.msra.mxu0 %v3305
  %3569 = vmatprep.subr.bf16.mxu0 0
  %3570 = vmatpush1.bf16.msra.mxu0 %v3306
  %3571 = vmatprep.subr.bf16.mxu0 0
  %3572 = vmatpush1.bf16.msra.mxu0 %v3307
  %3573 = vmatprep.subr.bf16.mxu0 0
  %3574 = vmatpush1.bf16.msra.mxu0 %v3308
  %3575 = vmatprep.subr.bf16.mxu0 0
  %3576 = vmatpush1.bf16.msra.mxu0 %v3309
  %3577 = vmatprep.subr.bf16.mxu0 0
  %3578 = vmatpush1.bf16.msra.mxu0 %v3310
  %3579 = vmatprep.subr.bf16.mxu0 0
  %3580 = vmatpush1.bf16.msra.mxu0 %v3311
  %3581 = vmatprep.subr.bf16.mxu0 0
  %3582 = vmatpush1.bf16.msra.mxu0 %v3312
  %3583 = vmatprep.subr.bf16.mxu0 0
  %3584 = vmatpush1.bf16.msra.mxu0 %v3313
  %3585 = vmatprep.subr.bf16.mxu0 0
  %3586 = vmatpush1.bf16.msra.mxu0 %v3314
  %3587 = vmatprep.mubr.bf16.mxu0 %v2628
  %3588 = vmatmul.mubr.bf16.gmra.mrb[0].mxu0 %v2627
  %v3589 = vpop.f32.mrb[0].mxu0
  %v3590 = vadd.f32 %v2409, %v3589
  %v3591 = vpop.f32.mrb[0].mxu0
  %v3592 = vpop.f32.mrb[0].mxu0
  %v3593 = vadd.f32 %v2409, %v3592
  %v3594 = vpop.f32.mrb[0].mxu0
  %3595 = vmatprep.mubr.bf16.mxu0 %v2644
  %3596 = vmatmul.mubr.bf16.gmra.mrb[0].mxu0 %v2643
  %v3597 = vpop.f32.mrb[0].mxu0
  %v3598 = vadd.f32 %v2409, %v3597
  %v3599 = vpop.f32.mrb[0].mxu0
  %v3600 = vpop.f32.mrb[0].mxu0
  %v3601 = vadd.f32 %v2409, %v3600
  %v3602 = vpop.f32.mrb[0].mxu0
  %3603 = vmatprep.mubr.bf16.mxu0 %v2660
  %3604 = vmatmul.mubr.bf16.gmra.mrb[0].mxu0 %v2659
  %v3605 = vpop.f32.mrb[0].mxu0
  %v3606 = vadd.f32 %v2409, %v3605
  %v3607 = vpop.f32.mrb[0].mxu0
  %v3608 = vpop.f32.mrb[0].mxu0
  %v3609 = vadd.f32 %v2409, %v3608
  %v3610 = vpop.f32.mrb[0].mxu0
  %3611 = vmatprep.mubr.bf16.mxu0 %v2676
  %3612 = vmatmul.mubr.bf16.gmra.mrb[0].mxu0 %v2675
  %v3613 = vpop.f32.mrb[0].mxu0
  %v3614 = vadd.f32 %v2409, %v3613
  %v3615 = vpop.f32.mrb[0].mxu0
  %v3616 = vpop.f32.mrb[0].mxu0
  %v3617 = vadd.f32 %v2409, %v3616
  %v3618 = vpop.f32.mrb[0].mxu0
  %3619 = vmatprep.mubr.bf16.mxu0 %v2692
  %3620 = vmatmul.mubr.bf16.gmra.mrb[0].mxu0 %v2691
  %v3621 = vpop.f32.mrb[0].mxu0
  %v3622 = vadd.f32 %v2409, %v3621
  %v3623 = vpop.f32.mrb[0].mxu0
  %v3624 = vpop.f32.mrb[0].mxu0
  %v3625 = vpop.f32.mrb[0].mxu0
  %3626 = vdwg.mxu0
  %3627 = vmatprep.subr.bf16.mxu0 0
  %3628 = vmatpush1.bf16.msra.mxu0 %v3315
  %3629 = vmatprep.subr.bf16.mxu0 0
  %3630 = vmatpush1.bf16.msra.mxu0 %v3316
  %3631 = vmatprep.subr.bf16.mxu0 0
  %3632 = vmatpush1.bf16.msra.mxu0 %v3317
  %3633 = vmatprep.subr.bf16.mxu0 0
  %3634 = vmatpush1.bf16.msra.mxu0 %v3318
  %3635 = vmatprep.subr.bf16.mxu0 0
  %3636 = vmatpush1.bf16.msra.mxu0 %v3319
  %3637 = vmatprep.subr.bf16.mxu0 0
  %3638 = vmatpush1.bf16.msra.mxu0 %v3320
  %3639 = vmatprep.subr.bf16.mxu0 0
  %3640 = vmatpush1.bf16.msra.mxu0 %v3321
  %3641 = vmatprep.subr.bf16.mxu0 0
  %3642 = vmatpush1.bf16.msra.mxu0 %v3322
  %3643 = vmatprep.subr.bf16.mxu0 0
  %3644 = vmatpush1.bf16.msra.mxu0 %v3323
  %3645 = vmatprep.subr.bf16.mxu0 0
  %3646 = vmatpush1.bf16.msra.mxu0 %v3324
  %3647 = vmatprep.subr.bf16.mxu0 0
  %3648 = vmatpush1.bf16.msra.mxu0 %v3325
  %3649 = vmatprep.subr.bf16.mxu0 0
  %3650 = vmatpush1.bf16.msra.mxu0 %v3326
  %3651 = vmatprep.subr.bf16.mxu0 0
  %3652 = vmatpush1.bf16.msra.mxu0 %v3327
  %3653 = vmatprep.subr.bf16.mxu0 0
  %3654 = vmatpush1.bf16.msra.mxu0 %v3328
  %3655 = vmatprep.subr.bf16.mxu0 0
  %3656 = vmatpush1.bf16.msra.mxu0 %v3329
  %3657 = vmatprep.subr.bf16.mxu0 0
  %3658 = vmatpush1.bf16.msra.mxu0 %v3330
  %3659 = vmatprep.mubr.bf16.mxu0 %v2630
  %3660 = vmatmul.mubr.bf16.gmra.mrb[0].mxu0 %v2629
  %v3661 = vpop.f32.mrb[0].mxu0
  %v3662 = vadd.f32 %v3590, %v3661
  %v3663 = vpop.f32.mrb[0].mxu0
  %v3664 = vpop.f32.mrb[0].mxu0
  %v3665 = vadd.f32 %v3593, %v3664
  %v3666 = vpop.f32.mrb[0].mxu0
  %3667 = vmatprep.mubr.bf16.mxu0 %v2646
  %3668 = vmatmul.mubr.bf16.gmra.mrb[0].mxu0 %v2645
  %v3669 = vpop.f32.mrb[0].mxu0
  %v3670 = vadd.f32 %v3598, %v3669
  %v3671 = vpop.f32.mrb[0].mxu0
  %v3672 = vpop.f32.mrb[0].mxu0
  %v3673 = vadd.f32 %v3601, %v3672
  %v3674 = vpop.f32.mrb[0].mxu0
  %3675 = vmatprep.mubr.bf16.mxu0 %v2662
  %3676 = vmatmul.mubr.bf16.gmra.mrb[0].mxu0 %v2661
  %v3677 = vpop.f32.mrb[0].mxu0
  %v3678 = vadd.f32 %v3606, %v3677
  %v3679 = vpop.f32.mrb[0].mxu0
  %v3680 = vpop.f32.mrb[0].mxu0
  %v3681 = vadd.f32 %v3609, %v3680
  %v3682 = vpop.f32.mrb[0].mxu0
  %3683 = vmatprep.mubr.bf16.mxu0 %v2678
  %3684 = vmatmul.mubr.bf16.gmra.mrb[0].mxu0 %v2677
  %v3685 = vpop.f32.mrb[0].mxu0
  %v3686 = vadd.f32 %v3614, %v3685
  %v3687 = vpop.f32.mrb[0].mxu0
  %v3688 = vpop.f32.mrb[0].mxu0
  %v3689 = vadd.f32 %v3617, %v3688
  %v3690 = vpop.f32.mrb[0].mxu0
  %3691 = vmatprep.mubr.bf16.mxu0 %v2694
  %3692 = vmatmul.mubr.bf16.gmra.mrb[0].mxu0 %v2693
  %v3693 = vpop.f32.mrb[0].mxu0
  %v3694 = vadd.f32 %v3622, %v3693
  %v3695 = vpop.f32.mrb[0].mxu0
  %v3696 = vpop.f32.mrb[0].mxu0
  %v3697 = vpop.f32.mrb[0].mxu0
  %3698 = vdwg.mxu0
  %3699 = vmatprep.subr.bf16.mxu0 0
  %3700 = vmatpush1.bf16.msra.mxu0 %v3331
  %3701 = vmatprep.subr.bf16.mxu0 0
  %3702 = vmatpush1.bf16.msra.mxu0 %v3332
  %3703 = vmatprep.subr.bf16.mxu0 0
  %3704 = vmatpush1.bf16.msra.mxu0 %v3333
  %3705 = vmatprep.subr.bf16.mxu0 0
  %3706 = vmatpush1.bf16.msra.mxu0 %v3334
  %3707 = vmatprep.subr.bf16.mxu0 0
  %3708 = vmatpush1.bf16.msra.mxu0 %v3335
  %3709 = vmatprep.subr.bf16.mxu0 0
  %3710 = vmatpush1.bf16.msra.mxu0 %v3336
  %3711 = vmatprep.subr.bf16.mxu0 0
  %3712 = vmatpush1.bf16.msra.mxu0 %v3337
  %3713 = vmatprep.subr.bf16.mxu0 0
  %3714 = vmatpush1.bf16.msra.mxu0 %v3338
  %3715 = vmatprep.subr.bf16.mxu0 0
  %3716 = vmatpush1.bf16.msra.mxu0 %v3339
  %3717 = vmatprep.subr.bf16.mxu0 0
  %3718 = vmatpush1.bf16.msra.mxu0 %v3340
  %3719 = vmatprep.subr.bf16.mxu0 0
  %3720 = vmatpush1.bf16.msra.mxu0 %v3341
  %3721 = vmatprep.subr.bf16.mxu0 0
  %3722 = vmatpush1.bf16.msra.mxu0 %v3342
  %3723 = vmatprep.subr.bf16.mxu0 0
  %3724 = vmatpush1.bf16.msra.mxu0 %v3343
  %3725 = vmatprep.subr.bf16.mxu0 0
  %3726 = vmatpush1.bf16.msra.mxu0 %v3344
  %3727 = vmatprep.subr.bf16.mxu0 0
  %3728 = vmatpush1.bf16.msra.mxu0 %v3345
  %3729 = vmatprep.subr.bf16.mxu0 0
  %3730 = vmatpush1.bf16.msra.mxu0 %v3346
  %3731 = vmatprep.mubr.bf16.mxu0 %v2632
  %3732 = vmatmul.mubr.bf16.gmra.mrb[0].mxu0 %v2631
  %v3733 = vpop.f32.mrb[0].mxu0
  %v3734 = vadd.f32 %v3662, %v3733
  %v3735 = vpop.f32.mrb[0].mxu0
  %v3736 = vpop.f32.mrb[0].mxu0
  %v3737 = vadd.f32 %v3665, %v3736
  %v3738 = vpop.f32.mrb[0].mxu0
  %3739 = vmatprep.mubr.bf16.mxu0 %v2648
  %3740 = vmatmul.mubr.bf16.gmra.mrb[0].mxu0 %v2647
  %v3741 = vpop.f32.mrb[0].mxu0
  %v3742 = vadd.f32 %v3670, %v3741
  %v3743 = vpop.f32.mrb[0].mxu0
  %v3744 = vpop.f32.mrb[0].mxu0
  %v3745 = vadd.f32 %v3673, %v3744
  %v3746 = vpop.f32.mrb[0].mxu0
  %3747 = vmatprep.mubr.bf16.mxu0 %v2664
  %3748 = vmatmul.mubr.bf16.gmra.mrb[0].mxu0 %v2663
  %v3749 = vpop.f32.mrb[0].mxu0
  %v3750 = vadd.f32 %v3678, %v3749
  %v3751 = vpop.f32.mrb[0].mxu0
  %v3752 = vpop.f32.mrb[0].mxu0
  %v3753 = vadd.f32 %v3681, %v3752
  %v3754 = vpop.f32.mrb[0].mxu0
  %3755 = vmatprep.mubr.bf16.mxu0 %v2680
  %3756 = vmatmul.mubr.bf16.gmra.mrb[0].mxu0 %v2679
  %v3757 = vpop.f32.mrb[0].mxu0
  %v3758 = vadd.f32 %v3686, %v3757
  %v3759 = vpop.f32.mrb[0].mxu0
  %v3760 = vpop.f32.mrb[0].mxu0
  %v3761 = vadd.f32 %v3689, %v3760
  %v3762 = vpop.f32.mrb[0].mxu0
  %3763 = vmatprep.mubr.bf16.mxu0 %v2696
  %3764 = vmatmul.mubr.bf16.gmra.mrb[0].mxu0 %v2695
  %v3765 = vpop.f32.mrb[0].mxu0
  %v3766 = vadd.f32 %v3694, %v3765
  %v3767 = vpop.f32.mrb[0].mxu0
  %v3768 = vpop.f32.mrb[0].mxu0
  %v3769 = vpop.f32.mrb[0].mxu0
  %3770 = vdwg.mxu0
  %3771 = vmatprep.subr.bf16.mxu0 0
  %3772 = vmatpush1.bf16.msra.mxu0 %v3347
  %3773 = vmatprep.subr.bf16.mxu0 0
  %3774 = vmatpush1.bf16.msra.mxu0 %v3348
  %3775 = vmatprep.subr.bf16.mxu0 0
  %3776 = vmatpush1.bf16.msra.mxu0 %v3349
  %3777 = vmatprep.subr.bf16.mxu0 0
  %3778 = vmatpush1.bf16.msra.mxu0 %v3350
  %3779 = vmatprep.subr.bf16.mxu0 0
  %3780 = vmatpush1.bf16.msra.mxu0 %v3351
  %3781 = vmatprep.subr.bf16.mxu0 0
  %3782 = vmatpush1.bf16.msra.mxu0 %v3352
  %3783 = vmatprep.subr.bf16.mxu0 0
  %3784 = vmatpush1.bf16.msra.mxu0 %v3353
  %3785 = vmatprep.subr.bf16.mxu0 0
  %3786 = vmatpush1.bf16.msra.mxu0 %v3354
  %3787 = vmatprep.subr.bf16.mxu0 0
  %3788 = vmatpush1.bf16.msra.mxu0 %v3355
  %3789 = vmatprep.subr.bf16.mxu0 0
  %3790 = vmatpush1.bf16.msra.mxu0 %v3356
  %3791 = vmatprep.subr.bf16.mxu0 0
  %3792 = vmatpush1.bf16.msra.mxu0 %v3357
  %3793 = vmatprep.subr.bf16.mxu0 0
  %3794 = vmatpush1.bf16.msra.mxu0 %v3358
  %3795 = vmatprep.subr.bf16.mxu0 0
  %3796 = vmatpush1.bf16.msra.mxu0 %v3359
  %3797 = vmatprep.subr.bf16.mxu0 0
  %3798 = vmatpush1.bf16.msra.mxu0 %v3360
  %3799 = vmatprep.subr.bf16.mxu0 0
  %3800 = vmatpush1.bf16.msra.mxu0 %v3361
  %3801 = vmatprep.subr.bf16.mxu0 0
  %3802 = vmatpush1.bf16.msra.mxu0 %v3362
  %3803 = vmatprep.mubr.bf16.mxu0 %v2634
  %3804 = vmatmul.mubr.bf16.gmra.mrb[0].mxu0 %v2633
  %v3805 = vpop.f32.mrb[0].mxu0
  %v3806 = vadd.f32 %v3734, %v3805
  %v3807 = vpop.f32.mrb[0].mxu0
  %v3808 = vpop.f32.mrb[0].mxu0
  %v3809 = vadd.f32 %v3737, %v3808
  %v3810 = vpop.f32.mrb[0].mxu0
  %3811 = vmatprep.mubr.bf16.mxu0 %v2650
  %3812 = vmatmul.mubr.bf16.gmra.mrb[0].mxu0 %v2649
  %v3813 = vpop.f32.mrb[0].mxu0
  %v3814 = vadd.f32 %v3742, %v3813
  %v3815 = vpop.f32.mrb[0].mxu0
  %v3816 = vpop.f32.mrb[0].mxu0
  %v3817 = vadd.f32 %v3745, %v3816
  %v3818 = vpop.f32.mrb[0].mxu0
  %3819 = vmatprep.mubr.bf16.mxu0 %v2666
  %3820 = vmatmul.mubr.bf16.gmra.mrb[0].mxu0 %v2665
  %v3821 = vpop.f32.mrb[0].mxu0
  %v3822 = vadd.f32 %v3750, %v3821
  %v3823 = vpop.f32.mrb[0].mxu0
  %v3824 = vpop.f32.mrb[0].mxu0
  %v3825 = vadd.f32 %v3753, %v3824
  %v3826 = vpop.f32.mrb[0].mxu0
  %3827 = vmatprep.mubr.bf16.mxu0 %v2682
  %3828 = vmatmul.mubr.bf16.gmra.mrb[0].mxu0 %v2681
  %v3829 = vpop.f32.mrb[0].mxu0
  %v3830 = vadd.f32 %v3758, %v3829
  %v3831 = vpop.f32.mrb[0].mxu0
  %v3832 = vpop.f32.mrb[0].mxu0
  %v3833 = vadd.f32 %v3761, %v3832
  %v3834 = vpop.f32.mrb[0].mxu0
  %3835 = vmatprep.mubr.bf16.mxu0 %v2698
  %3836 = vmatmul.mubr.bf16.gmra.mrb[0].mxu0 %v2697
  %v3837 = vpop.f32.mrb[0].mxu0
  %v3838 = vadd.f32 %v3766, %v3837
  %v3839 = vpop.f32.mrb[0].mxu0
  %v3840 = vpop.f32.mrb[0].mxu0
  %v3841 = vpop.f32.mrb[0].mxu0
  %3842 = vdwg.mxu0
  %3843 = vmatprep.subr.bf16.mxu0 0
  %3844 = vmatpush1.bf16.msra.mxu0 %v3363
  %3845 = vmatprep.subr.bf16.mxu0 0
  %3846 = vmatpush1.bf16.msra.mxu0 %v3364
  %3847 = vmatprep.subr.bf16.mxu0 0
  %3848 = vmatpush1.bf16.msra.mxu0 %v3365
  %3849 = vmatprep.subr.bf16.mxu0 0
  %3850 = vmatpush1.bf16.msra.mxu0 %v3366
  %3851 = vmatprep.subr.bf16.mxu0 0
  %3852 = vmatpush1.bf16.msra.mxu0 %v3367
  %3853 = vmatprep.subr.bf16.mxu0 0
  %3854 = vmatpush1.bf16.msra.mxu0 %v3368
  %3855 = vmatprep.subr.bf16.mxu0 0
  %3856 = vmatpush1.bf16.msra.mxu0 %v3369
  %3857 = vmatprep.subr.bf16.mxu0 0
  %3858 = vmatpush1.bf16.msra.mxu0 %v3370
  %3859 = vmatprep.subr.bf16.mxu0 0
  %3860 = vmatpush1.bf16.msra.mxu0 %v3371
  %3861 = vmatprep.subr.bf16.mxu0 0
  %3862 = vmatpush1.bf16.msra.mxu0 %v3372
  %3863 = vmatprep.subr.bf16.mxu0 0
  %3864 = vmatpush1.bf16.msra.mxu0 %v3373
  %3865 = vmatprep.subr.bf16.mxu0 0
  %3866 = vmatpush1.bf16.msra.mxu0 %v3374
  %3867 = vmatprep.subr.bf16.mxu0 0
  %3868 = vmatpush1.bf16.msra.mxu0 %v3375
  %3869 = vmatprep.subr.bf16.mxu0 0
  %3870 = vmatpush1.bf16.msra.mxu0 %v3376
  %3871 = vmatprep.subr.bf16.mxu0 0
  %3872 = vmatpush1.bf16.msra.mxu0 %v3377
  %3873 = vmatprep.subr.bf16.mxu0 0
  %3874 = vmatpush1.bf16.msra.mxu0 %v3378
  %3875 = vmatprep.mubr.bf16.mxu0 %v2636
  %3876 = vmatmul.mubr.bf16.gmra.mrb[0].mxu0 %v2635
  %v3877 = vpop.f32.mrb[0].mxu0
  %v3878 = vadd.f32 %v3806, %v3877
  %v3879 = vpop.f32.mrb[0].mxu0
  %v3880 = vpop.f32.mrb[0].mxu0
  %v3881 = vadd.f32 %v3809, %v3880
  %v3882 = vpop.f32.mrb[0].mxu0
  %3883 = vmatprep.mubr.bf16.mxu0 %v2652
  %3884 = vmatmul.mubr.bf16.gmra.mrb[0].mxu0 %v2651
  %v3885 = vpop.f32.mrb[0].mxu0
  %v3886 = vadd.f32 %v3814, %v3885
  %v3887 = vpop.f32.mrb[0].mxu0
  %v3888 = vpop.f32.mrb[0].mxu0
  %v3889 = vadd.f32 %v3817, %v3888
  %v3890 = vpop.f32.mrb[0].mxu0
  %3891 = vmatprep.mubr.bf16.mxu0 %v2668
  %3892 = vmatmul.mubr.bf16.gmra.mrb[0].mxu0 %v2667
  %v3893 = vpop.f32.mrb[0].mxu0
  %v3894 = vadd.f32 %v3822, %v3893
  %v3895 = vpop.f32.mrb[0].mxu0
  %v3896 = vpop.f32.mrb[0].mxu0
  %v3897 = vadd.f32 %v3825, %v3896
  %v3898 = vpop.f32.mrb[0].mxu0
  %3899 = vmatprep.mubr.bf16.mxu0 %v2684
  %3900 = vmatmul.mubr.bf16.gmra.mrb[0].mxu0 %v2683
  %v3901 = vpop.f32.mrb[0].mxu0
  %v3902 = vadd.f32 %v3830, %v3901
  %v3903 = vpop.f32.mrb[0].mxu0
  %v3904 = vpop.f32.mrb[0].mxu0
  %v3905 = vadd.f32 %v3833, %v3904
  %v3906 = vpop.f32.mrb[0].mxu0
  %3907 = vmatprep.mubr.bf16.mxu0 %v2700
  %3908 = vmatmul.mubr.bf16.gmra.mrb[0].mxu0 %v2699
  %v3909 = vpop.f32.mrb[0].mxu0
  %v3910 = vadd.f32 %v3838, %v3909
  %v3911 = vpop.f32.mrb[0].mxu0
  %v3912 = vpop.f32.mrb[0].mxu0
  %v3913 = vpop.f32.mrb[0].mxu0
  %3914 = vdwg.mxu0
  %3915 = vmatprep.subr.bf16.mxu0 0
  %3916 = vmatpush1.bf16.msra.mxu0 %v3379
  %3917 = vmatprep.subr.bf16.mxu0 0
  %3918 = vmatpush1.bf16.msra.mxu0 %v3380
  %3919 = vmatprep.subr.bf16.mxu0 0
  %3920 = vmatpush1.bf16.msra.mxu0 %v3381
  %3921 = vmatprep.subr.bf16.mxu0 0
  %3922 = vmatpush1.bf16.msra.mxu0 %v3382
  %3923 = vmatprep.subr.bf16.mxu0 0
  %3924 = vmatpush1.bf16.msra.mxu0 %v3383
  %3925 = vmatprep.subr.bf16.mxu0 0
  %3926 = vmatpush1.bf16.msra.mxu0 %v3384
  %3927 = vmatprep.subr.bf16.mxu0 0
  %3928 = vmatpush1.bf16.msra.mxu0 %v3385
  %3929 = vmatprep.subr.bf16.mxu0 0
  %3930 = vmatpush1.bf16.msra.mxu0 %v3386
  %3931 = vmatprep.subr.bf16.mxu0 0
  %3932 = vmatpush1.bf16.msra.mxu0 %v3387
  %3933 = vmatprep.subr.bf16.mxu0 0
  %3934 = vmatpush1.bf16.msra.mxu0 %v3388
  %3935 = vmatprep.subr.bf16.mxu0 0
  %3936 = vmatpush1.bf16.msra.mxu0 %v3389
  %3937 = vmatprep.subr.bf16.mxu0 0
  %3938 = vmatpush1.bf16.msra.mxu0 %v3390
  %3939 = vmatprep.subr.bf16.mxu0 0
  %3940 = vmatpush1.bf16.msra.mxu0 %v3391
  %3941 = vmatprep.subr.bf16.mxu0 0
  %3942 = vmatpush1.bf16.msra.mxu0 %v3392
  %3943 = vmatprep.subr.bf16.mxu0 0
  %3944 = vmatpush1.bf16.msra.mxu0 %v3393
  %3945 = vmatprep.subr.bf16.mxu0 0
  %3946 = vmatpush1.bf16.msra.mxu0 %v3394
  %3947 = vmatprep.mubr.bf16.mxu0 %v2638
  %3948 = vmatmul.mubr.bf16.gmra.mrb[0].mxu0 %v2637
  %v3949 = vpop.f32.mrb[0].mxu0
  %v3950 = vadd.f32 %v3878, %v3949
  %v3951 = vpop.f32.mrb[0].mxu0
  %v3952 = vpop.f32.mrb[0].mxu0
  %v3953 = vadd.f32 %v3881, %v3952
  %v3954 = vpop.f32.mrb[0].mxu0
  %3955 = vmatprep.mubr.bf16.mxu0 %v2654
  %3956 = vmatmul.mubr.bf16.gmra.mrb[0].mxu0 %v2653
  %v3957 = vpop.f32.mrb[0].mxu0
  %v3958 = vadd.f32 %v3886, %v3957
  %v3959 = vpop.f32.mrb[0].mxu0
  %v3960 = vpop.f32.mrb[0].mxu0
  %v3961 = vadd.f32 %v3889, %v3960
  %v3962 = vpop.f32.mrb[0].mxu0
  %3963 = vmatprep.mubr.bf16.mxu0 %v2670
  %3964 = vmatmul.mubr.bf16.gmra.mrb[0].mxu0 %v2669
  %v3965 = vpop.f32.mrb[0].mxu0
  %v3966 = vadd.f32 %v3894, %v3965
  %v3967 = vpop.f32.mrb[0].mxu0
  %v3968 = vpop.f32.mrb[0].mxu0
  %v3969 = vadd.f32 %v3897, %v3968
  %v3970 = vpop.f32.mrb[0].mxu0
  %3971 = vmatprep.mubr.bf16.mxu0 %v2686
  %3972 = vmatmul.mubr.bf16.gmra.mrb[0].mxu0 %v2685
  %v3973 = vpop.f32.mrb[0].mxu0
  %v3974 = vadd.f32 %v3902, %v3973
  %v3975 = vpop.f32.mrb[0].mxu0
  %v3976 = vpop.f32.mrb[0].mxu0
  %v3977 = vadd.f32 %v3905, %v3976
  %v3978 = vpop.f32.mrb[0].mxu0
  %3979 = vmatprep.mubr.bf16.mxu0 %v2702
  %3980 = vmatmul.mubr.bf16.gmra.mrb[0].mxu0 %v2701
  %v3981 = vpop.f32.mrb[0].mxu0
  %v3982 = vadd.f32 %v3910, %v3981
  %v3983 = vpop.f32.mrb[0].mxu0
  %v3984 = vpop.f32.mrb[0].mxu0
  %v3985 = vpop.f32.mrb[0].mxu0
  %3986 = vdwg.mxu0
  %3987 = vmatprep.subr.bf16.mxu0 0
  %3988 = vmatpush1.bf16.msra.mxu0 %v3395
  %3989 = vmatprep.subr.bf16.mxu0 0
  %3990 = vmatpush1.bf16.msra.mxu0 %v3396
  %3991 = vmatprep.subr.bf16.mxu0 0
  %3992 = vmatpush1.bf16.msra.mxu0 %v3397
  %3993 = vmatprep.subr.bf16.mxu0 0
  %3994 = vmatpush1.bf16.msra.mxu0 %v3398
  %3995 = vmatprep.subr.bf16.mxu0 0
  %3996 = vmatpush1.bf16.msra.mxu0 %v3399
  %3997 = vmatprep.subr.bf16.mxu0 0
  %3998 = vmatpush1.bf16.msra.mxu0 %v3400
  %3999 = vmatprep.subr.bf16.mxu0 0
  %4000 = vmatpush1.bf16.msra.mxu0 %v3401
  %4001 = vmatprep.subr.bf16.mxu0 0
  %4002 = vmatpush1.bf16.msra.mxu0 %v3402
  %4003 = vmatprep.subr.bf16.mxu0 0
  %4004 = vmatpush1.bf16.msra.mxu0 %v3403
  %4005 = vmatprep.subr.bf16.mxu0 0
  %4006 = vmatpush1.bf16.msra.mxu0 %v3404
  %4007 = vmatprep.subr.bf16.mxu0 0
  %4008 = vmatpush1.bf16.msra.mxu0 %v3405
  %4009 = vmatprep.subr.bf16.mxu0 0
  %4010 = vmatpush1.bf16.msra.mxu0 %v3406
  %4011 = vmatprep.subr.bf16.mxu0 0
  %4012 = vmatpush1.bf16.msra.mxu0 %v3407
  %4013 = vmatprep.subr.bf16.mxu0 0
  %4014 = vmatpush1.bf16.msra.mxu0 %v3408
  %4015 = vmatprep.subr.bf16.mxu0 0
  %4016 = vmatpush1.bf16.msra.mxu0 %v3409
  %4017 = vmatprep.subr.bf16.mxu0 0
  %4018 = vmatpush1.bf16.msra.mxu0 %v3410
  %4019 = vmatprep.mubr.bf16.mxu0 %v2640
  %4020 = vmatmul.mubr.bf16.gmra.mrb[0].mxu0 %v2639
  %v4021 = vpop.f32.mrb[0].mxu0
  %v4022 = vadd.f32 %v3950, %v4021
  %v4023 = vpop.f32.mrb[0].mxu0
  %v4024 = vpop.f32.mrb[0].mxu0
  %v4025 = vadd.f32 %v3953, %v4024
  %v4026 = vpop.f32.mrb[0].mxu0
  %4027 = vmatprep.mubr.bf16.mxu0 %v2656
  %4028 = vmatmul.mubr.bf16.gmra.mrb[0].mxu0 %v2655
  %v4029 = vpop.f32.mrb[0].mxu0
  %v4030 = vadd.f32 %v3958, %v4029
  %v4031 = vpop.f32.mrb[0].mxu0
  %v4032 = vpop.f32.mrb[0].mxu0
  %v4033 = vadd.f32 %v3961, %v4032
  %v4034 = vpop.f32.mrb[0].mxu0
  %4035 = vmatprep.mubr.bf16.mxu0 %v2672
  %4036 = vmatmul.mubr.bf16.gmra.mrb[0].mxu0 %v2671
  %v4037 = vpop.f32.mrb[0].mxu0
  %v4038 = vadd.f32 %v3966, %v4037
  %v4039 = vpop.f32.mrb[0].mxu0
  %v4040 = vpop.f32.mrb[0].mxu0
  %v4041 = vadd.f32 %v3969, %v4040
  %v4042 = vpop.f32.mrb[0].mxu0
  %4043 = vmatprep.mubr.bf16.mxu0 %v2688
  %4044 = vmatmul.mubr.bf16.gmra.mrb[0].mxu0 %v2687
  %v4045 = vpop.f32.mrb[0].mxu0
  %v4046 = vadd.f32 %v3974, %v4045
  %v4047 = vpop.f32.mrb[0].mxu0
  %v4048 = vpop.f32.mrb[0].mxu0
  %v4049 = vadd.f32 %v3977, %v4048
  %v4050 = vpop.f32.mrb[0].mxu0
  %4051 = vmatprep.mubr.bf16.mxu0 %v2704
  %4052 = vmatmul.mubr.bf16.gmra.mrb[0].mxu0 %v2703
  %v4053 = vpop.f32.mrb[0].mxu0
  %v4054 = vadd.f32 %v3982, %v4053
  %v4055 = vpop.f32.mrb[0].mxu0
  %v4056 = vpop.f32.mrb[0].mxu0
  %v4057 = vpop.f32.mrb[0].mxu0
  %4058 = vdwg.mxu0
  %4059 = vmatprep.subr.bf16.mxu0 0
  %4060 = vmatpush1.bf16.msra.mxu0 %v3411
  %4061 = vmatprep.subr.bf16.mxu0 0
  %4062 = vmatpush1.bf16.msra.mxu0 %v3412
  %4063 = vmatprep.subr.bf16.mxu0 0
  %4064 = vmatpush1.bf16.msra.mxu0 %v3413
  %4065 = vmatprep.subr.bf16.mxu0 0
  %4066 = vmatpush1.bf16.msra.mxu0 %v3414
  %4067 = vmatprep.subr.bf16.mxu0 0
  %4068 = vmatpush1.bf16.msra.mxu0 %v3415
  %4069 = vmatprep.subr.bf16.mxu0 0
  %4070 = vmatpush1.bf16.msra.mxu0 %v3416
  %4071 = vmatprep.subr.bf16.mxu0 0
  %4072 = vmatpush1.bf16.msra.mxu0 %v3417
  %4073 = vmatprep.subr.bf16.mxu0 0
  %4074 = vmatpush1.bf16.msra.mxu0 %v3418
  %4075 = vmatprep.subr.bf16.mxu0 0
  %4076 = vmatpush1.bf16.msra.mxu0 %v3419
  %4077 = vmatprep.subr.bf16.mxu0 0
  %4078 = vmatpush1.bf16.msra.mxu0 %v3420
  %4079 = vmatprep.subr.bf16.mxu0 0
  %4080 = vmatpush1.bf16.msra.mxu0 %v3421
  %4081 = vmatprep.subr.bf16.mxu0 0
  %4082 = vmatpush1.bf16.msra.mxu0 %v3422
  %4083 = vmatprep.subr.bf16.mxu0 0
  %4084 = vmatpush1.bf16.msra.mxu0 %v3423
  %4085 = vmatprep.subr.bf16.mxu0 0
  %4086 = vmatpush1.bf16.msra.mxu0 %v3424
  %4087 = vmatprep.subr.bf16.mxu0 0
  %4088 = vmatpush1.bf16.msra.mxu0 %v3425
  %4089 = vmatprep.subr.bf16.mxu0 0
  %4090 = vmatpush1.bf16.msra.mxu0 %v3426
  %4091 = vmatprep.mubr.bf16.mxu0 %v2642
  %4092 = vmatmul.mubr.bf16.gmra.mrb[0].mxu0 %v2641
  %v4093 = vpop.f32.mrb[0].mxu0
  %v4094 = vadd.f32 %v4022, %v4093
  %v4095 = vpop.f32.mrb[0].mxu0
  %v4096 = vpop.f32.mrb[0].mxu0
  %v4097 = vadd.f32 %v4025, %v4096
  %v4098 = vpop.f32.mrb[0].mxu0
  %4099 = vmatprep.mubr.bf16.mxu0 %v2658
  %4100 = vmatmul.mubr.bf16.gmra.mrb[0].mxu0 %v2657
  %v4101 = vpop.f32.mrb[0].mxu0
  %v4102 = vadd.f32 %v4030, %v4101
  %v4103 = vpop.f32.mrb[0].mxu0
  %v4104 = vpop.f32.mrb[0].mxu0
  %v4105 = vadd.f32 %v4033, %v4104
  %v4106 = vpop.f32.mrb[0].mxu0
  %4107 = vmatprep.mubr.bf16.mxu0 %v2674
  %4108 = vmatmul.mubr.bf16.gmra.mrb[0].mxu0 %v2673
  %v4109 = vpop.f32.mrb[0].mxu0
  %v4110 = vadd.f32 %v4038, %v4109
  %v4111 = vpop.f32.mrb[0].mxu0
  %v4112 = vpop.f32.mrb[0].mxu0
  %v4113 = vadd.f32 %v4041, %v4112
  %v4114 = vpop.f32.mrb[0].mxu0
  %4115 = vmatprep.mubr.bf16.mxu0 %v2690
  %4116 = vmatmul.mubr.bf16.gmra.mrb[0].mxu0 %v2689
  %v4117 = vpop.f32.mrb[0].mxu0
  %v4118 = vadd.f32 %v4046, %v4117
  %v4119 = vpop.f32.mrb[0].mxu0
  %v4120 = vpop.f32.mrb[0].mxu0
  %v4121 = vadd.f32 %v4049, %v4120
  %v4122 = vpop.f32.mrb[0].mxu0
  %4123 = vmatprep.mubr.bf16.mxu0 %v2706
  %4124 = vmatmul.mubr.bf16.gmra.mrb[0].mxu0 %v2705
  %v4125 = vpop.f32.mrb[0].mxu0
  %v4126 = vadd.f32 %v4054, %v4125
  %v4127 = vpop.f32.mrb[0].mxu0
  %v4128 = vpop.f32.mrb[0].mxu0
  %v4129 = vpop.f32.mrb[0].mxu0
  %4130 = vdwg.mxu0
  %4140 = vrot.lane.b32.xlu0 %v2039, 64
  %v4141 = vpop.permute.xlu0 %4140
  %4142 = vrot.lane.b32.xlu0 %v2042, 64
  %v4143 = vpop.permute.xlu0 %4142
  %4144 = vrot.lane.b32.xlu0 %v2047, 64
  %v4145 = vpop.permute.xlu0 %4144
  %4146 = vrot.lane.b32.xlu0 %v2050, 64
  %v4147 = vpop.permute.xlu0 %4146
  %4148 = vrot.lane.b32.xlu0 %v2055, 64
  %v4149 = vpop.permute.xlu0 %4148
  %4150 = vrot.lane.b32.xlu0 %v2058, 64
  %v4151 = vpop.permute.xlu0 %4150
  %4152 = vrot.lane.b32.xlu0 %v2063, 64
  %v4153 = vpop.permute.xlu0 %4152
  %4154 = vrot.lane.b32.xlu0 %v2066, 64
  %v4155 = vpop.permute.xlu0 %4154
  %4156 = vrot.lane.b32.xlu0 %v2071, 64
  %v4157 = vpop.permute.xlu0 %4156
  %v4167 = vmul.f32 %v2039, %v4141
  %v4168 = vmul.f32 %v2042, %v4143
  %v4169 = vmul.f32 %v2047, %v4145
  %v4170 = vmul.f32 %v2050, %v4147
  %v4171 = vmul.f32 %v2055, %v4149
  %v4172 = vmul.f32 %v2058, %v4151
  %v4173 = vmul.f32 %v2063, %v4153
  %v4174 = vmul.f32 %v2066, %v4155
  %v4175 = vmul.f32 %v2071, %v4157
  %v4176 = vadd.f32 %v4167, %v4094
  %v4177 = vadd.f32 %v4168, %v4097
  %v4178 = vadd.f32 %v4169, %v4102
  %v4179 = vadd.f32 %v4170, %v4105
  %v4180 = vadd.f32 %v4171, %v4110
  %v4181 = vadd.f32 %v4172, %v4113
  %v4182 = vadd.f32 %v4173, %v4118
  %v4183 = vadd.f32 %v4174, %v4121
  %v4184 = vadd.f32 %v4175, %v4126
  %vm4185 = vcmp.gt.f32.partialorder %v4176, 0.0
  %vm4186 = vcmp.gt.f32.partialorder %v4177, 0.0
  %vm4187 = vcmp.gt.f32.partialorder %v4178, 0.0
  %vm4188 = vcmp.gt.f32.partialorder %v4179, 0.0
  %vm4189 = vcmp.gt.f32.partialorder %v4180, 0.0
  %vm4190 = vcmp.gt.f32.partialorder %v4181, 0.0
  %vm4191 = vcmp.gt.f32.partialorder %v4182, 0.0
  %vm4192 = vcmp.gt.f32.partialorder %v4183, 0.0
  %vm4193 = vcmp.gt.f32.partialorder %v4184, 0.0
  %v4194 = vmul.f32 %v4176, 0.01
  %v4195 = vmul.f32 %v4177, 0.01
  %v4196 = vmul.f32 %v4178, 0.01
  %v4197 = vmul.f32 %v4179, 0.01
  %v4198 = vmul.f32 %v4180, 0.01
  %v4199 = vmul.f32 %v4181, 0.01
  %v4200 = vmul.f32 %v4182, 0.01
  %v4201 = vmul.f32 %v4183, 0.01
  %v4202 = vmul.f32 %v4184, 0.01
  %v4203 = vsel %vm4185, %v4176, %v4194
  %v4204 = vsel %vm4186, %v4177, %v4195
  %v4205 = vsel %vm4187, %v4178, %v4196
  %v4206 = vsel %vm4188, %v4179, %v4197
  %v4207 = vsel %vm4189, %v4180, %v4198
  %v4208 = vsel %vm4190, %v4181, %v4199
  %v4209 = vsel %vm4191, %v4182, %v4200
  %v4210 = vsel %vm4192, %v4183, %v4201
  %v4211 = vsel %vm4193, %v4184, %v4202
  %vm4212 = vcmask 523264
  %4213 = vst.msk [vmem:[%s5] sm:$0xff] %vm4212, %v4203
  %4214 = vst.msk [vmem:[%s5 + $0x8] sm:$0xff] %vm4212, %v4204
  %4215 = vst.msk [vmem:[%s5 + $0x10] sm:$0xff] %vm4212, %v4205
  %4216 = vst.msk [vmem:[%s5 + $0x18] sm:$0xff] %vm4212, %v4206
  %4217 = vst.msk [vmem:[%s5 + $0x20] sm:$0xff] %vm4212, %v4207
  %4218 = vst.msk [vmem:[%s5 + $0x28] sm:$0xff] %vm4212, %v4208
  %4219 = vst.msk [vmem:[%s5 + $0x30] sm:$0xff] %vm4212, %v4209
  %4220 = vst.msk [vmem:[%s5 + $0x38] sm:$0xff] %vm4212, %v4210
  %vm4221 = vcmask 517120
  %4222 = vst.msk [vmem:[%s5 + $0x40] sm:$0x3] %vm4221, %v4211
  // Predicated region
  $region22: #{forward.11} parent=0 // pred_check
    _
  $region23: #{forward.11} parent=0 // pred_check_branch
    %4224 = sbr.rel (0) target = $region25
  $region24: #{forward.11} parent=0 // pred_region
    _
  $region25: #{forward.11} parent=0 // pred_fallthru
    _
  // Predicated region
  $region26: #{forward.11} parent=0 // pred_check
    _
  $region27: #{forward.11} parent=0 // pred_check_branch
    %4226 = sbr.rel (0) target = $region29
  $region28: #{forward.11} parent=0 // pred_region
    _
  $region29: #{forward.11} parent=0 // pred_fallthru
    _

// kernel: forward.7
$region0: #{forward.7}
  #allocation0 [shape = 'u32[]', space=smem, size = 0x4, offset = 0x4, fixed_abs, tag = 'smem constant byte address 0x4 - core index']
  #allocation1 [shape = 'u32[144,128]{1,0:T(1,128)}', space=vmem, size = 0x12000, scoped, tag = 'internal scratch']
  %s0 = inlined_call_operand.vmem [shape: bf16[3,128,48], index: 0, kind: input, shape index: {}]
  %s1 = inlined_call_operand.vmem [shape: bf16[3,48,32], index: 1, kind: input, shape index: {}]
  %s2 = inlined_call_operand.vmem [shape: f32[3,1,32], index: 2, kind: input, shape index: {}]
  %s3 = inlined_call_operand.vmem [shape: f32[3,128,32], index: 3, kind: output, shape index: {}]
  %s4 = sld [smem:[#allocation0]]
  $region45: #{forward.7} parent=0
    _
  %s6 = ssub.s32 1, %s4
  %s7 = scalar_select 0, %s6, %s4
  loop: start=0, step=1, limit=5
  $region2: #{forward.7} parent=0 // loop_pre_header
    _
  $region3: #{forward.7} parent=0 // loop_header
    %s9 = sphi 0, %s13
    %p10 = scmp.ge.s32.totalorder %s9, 5
    %s16 = sphi 0, %s28
    %s17 = sphi 0, %s24
    %s18 = sphi 0, %s16
    %s19 = sphi 0, %s17
    %s20 = sphi 0, %s18
    %s21 = sphi 0, %s19
    %s33 = sphi 0, %s35
    %s36 = sphi 0, %s33
    %s37 = sphi 0, %s36
    %s53 = sphi 0, %s37
    %s59 = sphi 0, %s61
    %s62 = sphi 0, %s59
    %s63 = sphi 0, %s62
    %s79 = sphi 0, %s63
    %s85 = sphi 0, %s87
    %s88 = sphi 0, %s85
    %s89 = sphi 0, %s88
    %s105 = sphi 0, %s89
    %s113 = sphi 0, %s115
    %s116 = sphi 0, %s113
    %s117 = sphi 0, %s116
    %s133 = sphi 0, %s117
  $region4: #{forward.7} parent=0 // loop_header_branch
    %12 = sbr.rel (%p10) target = $region8
  $region5: #{forward.7} parent=0 // loop_body
    %s14 = ssub.s32 %s9, 1
    %s15 = ssub.s32 %s9, 2
    %s22 = sadd.s32 1, %s17
    %p23 = scmp.ge.s32.totalorder %s22, 1
    %s24 = scalar_select %p23, 0, %s22
    %s25 = sadd.s32 1, %s16
    %s26 = scalar_select %p23, %s25, %s16
    %p27 = scmp.ge.s32.totalorder %s26, 3
    %s28 = scalar_select %p27, 0, %s26
    %s29 = ssub.s32 %s16, %s28
    %s30 = ssub.s32 %s17, %s24
    %s31 = sor.u32 %s29, %s30
    %p32 = scmp.eq.s32.totalorder %s31, 0
    %s34 = sadd.s32 %s33, 1
    %s35 = scalar_select %p32, %s33, %s34
    %p38 = pneg %p32
    %p39 = scmp.eq.s32.totalorder %s9, 2
    %p40 = por %p38, %p39
    %p41 = scmp.ne.s32.totalorder %s33, %s36
    %p42 = scmp.eq.s32.totalorder %s9, 0
    %p43 = por %p41, %p42
    %p44 = scmp.ne.s32.totalorder %s33, %s36
    %p45 = scmp.eq.s32.totalorder %s14, 2
    %p46 = por %p44, %p45
    %p47 = scmp.ne.s32.totalorder %s36, %s37
    %p48 = scmp.eq.s32.totalorder %s14, 0
    %p49 = por %p47, %p48
    %p50 = scmp.ne.s32.totalorder %s36, %s37
    %p51 = scmp.eq.s32.totalorder %s15, 2
    %p52 = por %p50, %p51
    %p54 = scmp.ne.s32.totalorder %s37, %s53
    %p55 = scmp.eq.s32.totalorder %s15, 0
    %p56 = por %p54, %p55
    %s57 = ssub.s32 %s16, %s28
    %p58 = scmp.eq.s32.totalorder %s57, 0
    %s60 = sadd.s32 %s59, 1
    %s61 = scalar_select %p58, %s59, %s60
    %p64 = pneg %p58
    %p65 = scmp.eq.s32.totalorder %s9, 2
    %p66 = por %p64, %p65
    %p67 = scmp.ne.s32.totalorder %s59, %s62
    %p68 = scmp.eq.s32.totalorder %s9, 0
    %p69 = por %p67, %p68
    %p70 = scmp.ne.s32.totalorder %s59, %s62
    %p71 = scmp.eq.s32.totalorder %s14, 2
    %p72 = por %p70, %p71
    %p73 = scmp.ne.s32.totalorder %s62, %s63
    %p74 = scmp.eq.s32.totalorder %s14, 0
    %p75 = por %p73, %p74
    %p76 = scmp.ne.s32.totalorder %s62, %s63
    %p77 = scmp.eq.s32.totalorder %s15, 2
    %p78 = por %p76, %p77
    %p80 = scmp.ne.s32.totalorder %s63, %s79
    %p81 = scmp.eq.s32.totalorder %s15, 0
    %p82 = por %p80, %p81
    %s83 = ssub.s32 %s16, %s28
    %p84 = scmp.eq.s32.totalorder %s83, 0
    %s86 = sadd.s32 %s85, 1
    %s87 = scalar_select %p84, %s85, %s86
    %p90 = pneg %p84
    %p91 = scmp.eq.s32.totalorder %s9, 2
    %p92 = por %p90, %p91
    %p93 = scmp.ne.s32.totalorder %s85, %s88
    %p94 = scmp.eq.s32.totalorder %s9, 0
    %p95 = por %p93, %p94
    %p96 = scmp.ne.s32.totalorder %s85, %s88
    %p97 = scmp.eq.s32.totalorder %s14, 2
    %p98 = por %p96, %p97
    %p99 = scmp.ne.s32.totalorder %s88, %s89
    %p100 = scmp.eq.s32.totalorder %s14, 0
    %p101 = por %p99, %p100
    %p102 = scmp.ne.s32.totalorder %s88, %s89
    %p103 = scmp.eq.s32.totalorder %s15, 2
    %p104 = por %p102, %p103
    %p106 = scmp.ne.s32.totalorder %s89, %s105
    %p107 = scmp.eq.s32.totalorder %s15, 0
    %p108 = por %p106, %p107
    %s109 = ssub.s32 %s16, %s28
    %s110 = ssub.s32 %s17, %s24
    %s111 = sor.u32 %s109, %s110
    %p112 = scmp.eq.s32.totalorder %s111, 0
    %s114 = sadd.s32 %s113, 1
    %s115 = scalar_select %p112, %s113, %s114
    %p118 = pneg %p112
    %p119 = scmp.eq.s32.totalorder %s9, 2
    %p120 = por %p118, %p119
    %p121 = scmp.ne.s32.totalorder %s113, %s116
    %p122 = scmp.eq.s32.totalorder %s9, 0
    %p123 = por %p121, %p122
    %p124 = scmp.ne.s32.totalorder %s113, %s116
    %p125 = scmp.eq.s32.totalorder %s14, 2
    %p126 = por %p124, %p125
    %p127 = scmp.ne.s32.totalorder %s116, %s117
    %p128 = scmp.eq.s32.totalorder %s14, 0
    %p129 = por %p127, %p128
    %p130 = scmp.ne.s32.totalorder %s116, %s117
    %p131 = scmp.eq.s32.totalorder %s15, 2
    %p132 = por %p130, %p131
    %p134 = scmp.ne.s32.totalorder %s117, %s133
    %p135 = scmp.eq.s32.totalorder %s15, 0
    %p136 = por %p134, %p135
    %p137 = scmp.le.s32.totalorder 1, %s9
    %p138 = scmp.lt.s32.totalorder %s9, 4
    %p139 = pnand %p137, %p138
    %p140 = pneg %p139
    // Predicated region
    $region9: #{forward.7} parent=5 // pred_check
      _
    $region10: #{forward.7} parent=5 // pred_check_branch
      %142 = sbr.rel (%p139) target = $region12
    $region11: #{forward.7} parent=5 // pred_region
      %s143 = ssub.s32 %s9, 1
    $region12: #{forward.7} parent=5 // pred_fallthru
      _
    %p144 = scmp.lt.s32.totalorder %s9, 3
    // Predicated region
    $region13: #{forward.7} parent=5 // pred_check
      %p145 = pneg %p144
    $region14: #{forward.7} parent=5 // pred_check_branch
      %147 = sbr.rel (%p145) target = $region16
    $region15: #{forward.7} parent=5 // pred_region
      // Predicated region
      $region17: #{forward.7} parent=15 // pred_check
        %p148 = pneg %p43
      $region18: #{forward.7} parent=15 // pred_check_branch
        %150 = sbr.rel (%p148) target = $region20
      $region19: #{forward.7} parent=15 // pred_region
        %s151 = smul.u32 16, %s17
        %p152 = scmp.lt.s32.totalorder %s16, 2
        %s153 = scalar_select %p152, %s16, 2
        %p154 = scmp.lt.s32.totalorder %s151, 15
        %s155 = scalar_select %p154, %s151, 15
        %s156 = smul.addr %s153, 16
        %s157 = sadd.s32 %s155, %s156
        %s158 = smul.addr %s157, 4
        %s159 = scalar_lea.vmem %s0, %s158
        %s160 = smul.u32 16, %s17
      $region20: #{forward.7} parent=15 // pred_fallthru
        _
      // Predicated region
      $region21: #{forward.7} parent=15 // pred_check
        %p161 = pneg %p69
      $region22: #{forward.7} parent=15 // pred_check_branch
        %163 = sbr.rel (%p161) target = $region24
      $region23: #{forward.7} parent=15 // pred_region
        %p164 = scmp.lt.s32.totalorder %s16, 2
        %s165 = scalar_select %p164, %s16, 2
        %s166 = smul.addr %s165, 6
        %s167 = smul.addr %s166, 4
        %s168 = scalar_lea.vmem %s1, %s167
      $region24: #{forward.7} parent=15 // pred_fallthru
        _
      // Predicated region
      $region25: #{forward.7} parent=15 // pred_check
        %p169 = pneg %p95
      $region26: #{forward.7} parent=15 // pred_check_branch
        %171 = sbr.rel (%p169) target = $region28
      $region27: #{forward.7} parent=15 // pred_region
        %p172 = scmp.lt.s32.totalorder %s16, 2
        %s173 = scalar_select %p172, %s16, 2
        %s174 = scalar_lea.vmem %s2, %s173
      $region28: #{forward.7} parent=15 // pred_fallthru
        _
    $region16: #{forward.7} parent=5 // pred_fallthru
      _
    %p175 = scmp.le.s32.totalorder 1, %s9
    %p176 = scmp.lt.s32.totalorder %s9, 4
    %p177 = pnand %p175, %p176
    %p178 = pneg %p177
    // Predicated region
    $region29: #{forward.7} parent=5 // pred_check
      _
    $region30: #{forward.7} parent=5 // pred_check_branch
      %180 = sbr.rel (%p177) target = $region32
    $region31: #{forward.7} parent=5 // pred_region
      %s181 = ssub.s32 %s9, 1
      %s182 = smul.u32 16, %s19
      %p183 = scmp.lt.s32.totalorder %s18, 2
      %s184 = scalar_select %p183, %s18, 2
      %p185 = scmp.lt.s32.totalorder %s182, 15
      %s186 = scalar_select %p185, %s182, 15
      %s187 = smul.addr %s184, 16
      %s188 = sadd.s32 %s186, %s187
      %s189 = smul.addr %s188, 4
      %s190 = scalar_lea.vmem %s0, %s189
      %p191 = pneg %p49
      %p192 = pneg %p46
      %p193 = scmp.lt.s32.totalorder %s18, 2
      %s194 = scalar_select %p193, %s18, 2
      %s195 = smul.addr %s194, 6
      %s196 = smul.addr %s195, 4
      %s197 = scalar_lea.vmem %s1, %s196
      %p198 = pneg %p75
      %p199 = pneg %p72
      %p200 = scmp.lt.s32.totalorder %s18, 2
      %s201 = scalar_select %p200, %s18, 2
      %s202 = scalar_lea.vmem %s2, %s201
      %p203 = pneg %p101
      %p204 = pneg %p98
      %p205 = pneg %p129
      %p206 = pneg %p126
      %s207 = smul.u32 16, %s19
      %p208 = scmp.lt.s32.totalorder %s18, 2
      %s209 = scalar_select %p208, %s18, 2
      %p210 = scmp.lt.s32.totalorder %s207, 15
      %s211 = scalar_select %p210, %s207, 15
      %s212 = smul.addr %s209, 16
      %s213 = sadd.s32 %s211, %s212
      %s214 = smul.addr %s213, 8
      %s215 = scalar_lea.vmem %s3, %s214
      %s216 = smul.u32 16, %s19
      %p217 = scmp.lt.s32.totalorder %s18, 2
      %s218 = scalar_select %p217, %s18, 2
      %p219 = scmp.lt.s32.totalorder %s216, 15
      %s220 = scalar_select %p219, %s216, 15
      %s221 = smul.addr %s218, 16
      %s222 = sadd.s32 %s220, %s221
      %s223 = smul.addr %s222, 4
      %s224 = scalar_lea.vmem %s0, %s223
      %s225 = smul.u32 16, %s19
      %p226 = scmp.lt.s32.totalorder %s18, 2
      %s227 = scalar_select %p226, %s18, 2
      %s228 = smul.addr %s227, 6
      %s229 = smul.addr %s228, 4
      %s230 = scalar_lea.vmem %s1, %s229
      %p231 = scmp.lt.s32.totalorder %s18, 2
      %s232 = scalar_select %p231, %s18, 2
      %s233 = scalar_lea.vmem %s2, %s232
      %s234 = smul.u32 16, %s19
      %p235 = scmp.lt.s32.totalorder %s18, 2
      %s236 = scalar_select %p235, %s18, 2
      %p237 = scmp.lt.s32.totalorder %s234, 15
      %s238 = scalar_select %p237, %s234, 15
      %s239 = smul.addr %s236, 16
      %s240 = sadd.s32 %s238, %s239
      %s241 = smul.addr %s240, 8
      %s242 = scalar_lea.vmem %s3, %s241
      %s243 = smul.u32 16, %s19
      %v245 = vld [vmem:[%s224] sm:$0xf]
      %v246 = vld [vmem:[%s224 + $0x4] sm:$0xf]
      %v247 = vld [vmem:[%s224 + $0x8] sm:$0xf]
      %v248 = vld [vmem:[%s224 + $0xc] sm:$0xf]
      %v249 = vld [vmem:[%s224 + $0x10] sm:$0xf]
      %v250 = vld [vmem:[%s224 + $0x14] sm:$0xf]
      %v251 = vld [vmem:[%s224 + $0x18] sm:$0xf]
      %v252 = vld [vmem:[%s224 + $0x1c] sm:$0xf]
      %v253 = vld [vmem:[%s224 + $0x20] sm:$0xf]
      %v254 = vld [vmem:[%s224 + $0x24] sm:$0xf]
      %v255 = vld [vmem:[%s224 + $0x28] sm:$0xf]
      %v256 = vld [vmem:[%s224 + $0x2c] sm:$0xf]
      %v257 = vld [vmem:[%s224 + $0x30] sm:$0xf]
      %v258 = vld [vmem:[%s224 + $0x34] sm:$0xf]
      %v259 = vld [vmem:[%s224 + $0x38] sm:$0xf]
      %v260 = vld [vmem:[%s224 + $0x3c] sm:$0xf]
      %v261 = vld [vmem:[%s230] sm:$0xf]
      %v262 = vld [vmem:[%s230 + $0x4] sm:$0xf]
      %v263 = vld [vmem:[%s230 + $0x8] sm:$0xf]
      %v264 = vld [vmem:[%s230 + $0xc] sm:$0xf]
      %v265 = vld [vmem:[%s230 + $0x10] sm:$0xf]
      %v266 = vld [vmem:[%s230 + $0x14] sm:$0xf]
      %v267 = vld [vmem:[%s233] sm:$0x1]
      %v269 = vlaneseq
      %v270 = vshrl.u32 %v269, 7
      %v271 = vsub.s32 0, %v270
      %v272 = vrot.slane %v267, %v271
      %v290 = vunpack.c.l.b16 %v245
      %v291 = vunpack.c.l.b16 %v246
      %v292 = vunpack.c.l.b16 %v247
      %v293 = vunpack.c.l.b16 %v248
      %v294 = vunpack.c.l.b16 %v249
      %v295 = vunpack.c.l.b16 %v250
      %v296 = vunpack.c.l.b16 %v251
      %v297 = vunpack.c.l.b16 %v252
      %v298 = vunpack.c.l.b16 %v253
      %v299 = vunpack.c.l.b16 %v254
      %v300 = vunpack.c.l.b16 %v255
      %v301 = vunpack.c.l.b16 %v256
      %v302 = vunpack.c.l.b16 %v257
      %v303 = vunpack.c.l.b16 %v258
      %v304 = vunpack.c.l.b16 %v259
      %v305 = vunpack.c.l.b16 %v260
      %v306 = vpack.c.b16 %v291, %v290
      %v307 = vpack.c.b16 %v293, %v292
      %v308 = vpack.c.b16 %v295, %v294
      %v309 = vpack.c.b16 %v297, %v296
      %v310 = vpack.c.b16 %v299, %v298
      %v311 = vpack.c.b16 %v301, %v300
      %v312 = vpack.c.b16 %v303, %v302
      %v313 = vpack.c.b16 %v305, %v304
      %v320 = vunpack.c.l.b16 %v261
      %v321 = vunpack.c.l.b16 %v262
      %v322 = vunpack.c.l.b16 %v263
      %v323 = vunpack.c.l.b16 %v264
      %v324 = vunpack.c.l.b16 %v265
      %v325 = vunpack.c.l.b16 %v266
      %v326 = vpack.c.b16 %v321, %v320
      %v327 = vpack.c.b16 %v323, %v322
      %v328 = vpack.c.b16 %v325, %v324
      %vm332 = vcmask 392192
      %v334 = vsel %vm332, %v306, 0
      %v337 = vsel %vm332, %v307, 0
      %v340 = vsel %vm332, %v308, 0
      %v343 = vsel %vm332, %v309, 0
      %v346 = vsel %vm332, %v310, 0
      %v349 = vsel %vm332, %v311, 0
      %v352 = vsel %vm332, %v312, 0
      %v355 = vsel %vm332, %v313, 0
      %357 = vmatprep.subr.bf16.mxu0 0
      %358 = vmatpush1.bf16.msra.mxu0 %v326
      %359 = vmatprep.subr.bf16.mxu0 0
      %360 = vmatpush1.bf16.msra.mxu0 %v327
      %361 = vmatprep.subr.bf16.mxu0 0
      %362 = vmatpush1.bf16.msra.mxu0 %v328
      %363 = vmatprep.subr.bf16.mxu0 0
      %364 = vmatpush1.bf16.msra.mxu0 0
      %365 = vmatprep.subr.bf16.mxu0 0
      %366 = vmatpush1.bf16.msra.mxu0 0
      %367 = vmatprep.subr.bf16.mxu0 0
      %368 = vmatpush1.bf16.msra.mxu0 0
      %369 = vmatprep.subr.bf16.mxu0 0
      %370 = vmatpush1.bf16.msra.mxu0 0
      %371 = vmatprep.subr.bf16.mxu0 0
      %372 = vmatpush1.bf16.msra.mxu0 0
      %373 = vmatprep.subr.bf16.mxu0 0
      %374 = vmatpush1.bf16.msra.mxu0 0
      %375 = vmatprep.subr.bf16.mxu0 0
      %376 = vmatpush1.bf16.msra.mxu0 0
      %377 = vmatprep.subr.bf16.mxu0 0
      %378 = vmatpush1.bf16.msra.mxu0 0
      %379 = vmatprep.subr.bf16.mxu0 0
      %380 = vmatpush1.bf16.msra.mxu0 0
      %381 = vmatprep.subr.bf16.mxu0 0
      %382 = vmatpush1.bf16.msra.mxu0 0
      %383 = vmatprep.subr.bf16.mxu0 0
      %384 = vmatpush1.bf16.msra.mxu0 0
      %385 = vmatprep.subr.bf16.mxu0 0
      %386 = vmatpush1.bf16.msra.mxu0 0
      %387 = vmatprep.subr.bf16.mxu0 0
      %388 = vmatpush1.bf16.msra.mxu0 0
      %389 = vmatprep.mubr.bf16.mxu0 0
      %390 = vmatmul.mubr.bf16.gmra.mrb[0].mxu0 %v334
      %v391 = vpop.f32.mrb[0].mxu0
      %v392 = vadd.f32 %v272, %v391
      %v393 = vpop.f32.mrb[0].mxu0
      %v394 = vpop.f32.mrb[0].mxu0
      %v395 = vadd.f32 %v272, %v394
      %v396 = vpop.f32.mrb[0].mxu0
      %397 = vmatprep.mubr.bf16.mxu0 0
      %398 = vmatmul.mubr.bf16.gmra.mrb[0].mxu0 %v337
      %v399 = vpop.f32.mrb[0].mxu0
      %v400 = vadd.f32 %v272, %v399
      %v401 = vpop.f32.mrb[0].mxu0
      %v402 = vpop.f32.mrb[0].mxu0
      %v403 = vadd.f32 %v272, %v402
      %v404 = vpop.f32.mrb[0].mxu0
      %405 = vmatprep.mubr.bf16.mxu0 0
      %406 = vmatmul.mubr.bf16.gmra.mrb[0].mxu0 %v340
      %v407 = vpop.f32.mrb[0].mxu0
      %v408 = vadd.f32 %v272, %v407
      %v409 = vpop.f32.mrb[0].mxu0
      %v410 = vpop.f32.mrb[0].mxu0
      %v411 = vadd.f32 %v272, %v410
      %v412 = vpop.f32.mrb[0].mxu0
      %413 = vmatprep.mubr.bf16.mxu0 0
      %414 = vmatmul.mubr.bf16.gmra.mrb[0].mxu0 %v343
      %v415 = vpop.f32.mrb[0].mxu0
      %v416 = vadd.f32 %v272, %v415
      %v417 = vpop.f32.mrb[0].mxu0
      %v418 = vpop.f32.mrb[0].mxu0
      %v419 = vadd.f32 %v272, %v418
      %v420 = vpop.f32.mrb[0].mxu0
      %421 = vmatprep.mubr.bf16.mxu0 0
      %422 = vmatmul.mubr.bf16.gmra.mrb[0].mxu0 %v346
      %v423 = vpop.f32.mrb[0].mxu0
      %v424 = vadd.f32 %v272, %v423
      %v425 = vpop.f32.mrb[0].mxu0
      %v426 = vpop.f32.mrb[0].mxu0
      %v427 = vadd.f32 %v272, %v426
      %v428 = vpop.f32.mrb[0].mxu0
      %429 = vmatprep.mubr.bf16.mxu0 0
      %430 = vmatmul.mubr.bf16.gmra.mrb[0].mxu0 %v349
      %v431 = vpop.f32.mrb[0].mxu0
      %v432 = vadd.f32 %v272, %v431
      %v433 = vpop.f32.mrb[0].mxu0
      %v434 = vpop.f32.mrb[0].mxu0
      %v435 = vadd.f32 %v272, %v434
      %v436 = vpop.f32.mrb[0].mxu0
      %437 = vmatprep.mubr.bf16.mxu0 0
      %438 = vmatmul.mubr.bf16.gmra.mrb[0].mxu0 %v352
      %v439 = vpop.f32.mrb[0].mxu0
      %v440 = vadd.f32 %v272, %v439
      %v441 = vpop.f32.mrb[0].mxu0
      %v442 = vpop.f32.mrb[0].mxu0
      %v443 = vadd.f32 %v272, %v442
      %v444 = vpop.f32.mrb[0].mxu0
      %445 = vmatprep.mubr.bf16.mxu0 0
      %446 = vmatmul.mubr.bf16.gmra.mrb[0].mxu0 %v355
      %v447 = vpop.f32.mrb[0].mxu0
      %v448 = vadd.f32 %v272, %v447
      %v449 = vpop.f32.mrb[0].mxu0
      %v450 = vpop.f32.mrb[0].mxu0
      %v451 = vadd.f32 %v272, %v450
      %v452 = vpop.f32.mrb[0].mxu0
      %453 = vdwg.mxu0
      %vm454 = vcmp.gt.f32.partialorder %v392, 0.0
      %vm455 = vcmp.gt.f32.partialorder %v395, 0.0
      %vm456 = vcmp.gt.f32.partialorder %v400, 0.0
      %vm457 = vcmp.gt.f32.partialorder %v403, 0.0
      %vm458 = vcmp.gt.f32.partialorder %v408, 0.0
      %vm459 = vcmp.gt.f32.partialorder %v411, 0.0
      %vm460 = vcmp.gt.f32.partialorder %v416, 0.0
      %vm461 = vcmp.gt.f32.partialorder %v419, 0.0
      %vm462 = vcmp.gt.f32.partialorder %v424, 0.0
      %vm463 = vcmp.gt.f32.partialorder %v427, 0.0
      %vm464 = vcmp.gt.f32.partialorder %v432, 0.0
      %vm465 = vcmp.gt.f32.partialorder %v435, 0.0
      %vm466 = vcmp.gt.f32.partialorder %v440, 0.0
      %vm467 = vcmp.gt.f32.partialorder %v443, 0.0
      %vm468 = vcmp.gt.f32.partialorder %v448, 0.0
      %vm469 = vcmp.gt.f32.partialorder %v451, 0.0
      %v470 = vmul.f32 %v392, 0.01
      %v471 = vmul.f32 %v395, 0.01
      %v472 = vmul.f32 %v400, 0.01
      %v473 = vmul.f32 %v403, 0.01
      %v474 = vmul.f32 %v408, 0.01
      %v475 = vmul.f32 %v411, 0.01
      %v476 = vmul.f32 %v416, 0.01
      %v477 = vmul.f32 %v419, 0.01
      %v478 = vmul.f32 %v424, 0.01
      %v479 = vmul.f32 %v427, 0.01
      %v480 = vmul.f32 %v432, 0.01
      %v481 = vmul.f32 %v435, 0.01
      %v482 = vmul.f32 %v440, 0.01
      %v483 = vmul.f32 %v443, 0.01
      %v484 = vmul.f32 %v448, 0.01
      %v485 = vmul.f32 %v451, 0.01
      %v486 = vsel %vm454, %v392, %v470
      %v487 = vsel %vm455, %v395, %v471
      %v488 = vsel %vm456, %v400, %v472
      %v489 = vsel %vm457, %v403, %v473
      %v490 = vsel %vm458, %v408, %v474
      %v491 = vsel %vm459, %v411, %v475
      %v492 = vsel %vm460, %v416, %v476
      %v493 = vsel %vm461, %v419, %v477
      %v494 = vsel %vm462, %v424, %v478
      %v495 = vsel %vm463, %v427, %v479
      %v496 = vsel %vm464, %v432, %v480
      %v497 = vsel %vm465, %v435, %v481
      %v498 = vsel %vm466, %v440, %v482
      %v499 = vsel %vm467, %v443, %v483
      %v500 = vsel %vm468, %v448, %v484
      %v501 = vsel %vm469, %v451, %v485
      %vm502 = vcmask 261120
      %503 = vst.msk [vmem:[%s242] sm:$0xff] %vm502, %v486
      %504 = vst.msk [vmem:[%s242 + $0x8] sm:$0xff] %vm502, %v487
      %505 = vst.msk [vmem:[%s242 + $0x10] sm:$0xff] %vm502, %v488
      %506 = vst.msk [vmem:[%s242 + $0x18] sm:$0xff] %vm502, %v489
      %507 = vst.msk [vmem:[%s242 + $0x20] sm:$0xff] %vm502, %v490
      %508 = vst.msk [vmem:[%s242 + $0x28] sm:$0xff] %vm502, %v491
      %509 = vst.msk [vmem:[%s242 + $0x30] sm:$0xff] %vm502, %v492
      %510 = vst.msk [vmem:[%s242 + $0x38] sm:$0xff] %vm502, %v493
      %511 = vst.msk [vmem:[%s242 + $0x40] sm:$0xff] %vm502, %v494
      %512 = vst.msk [vmem:[%s242 + $0x48] sm:$0xff] %vm502, %v495
      %513 = vst.msk [vmem:[%s242 + $0x50] sm:$0xff] %vm502, %v496
      %514 = vst.msk [vmem:[%s242 + $0x58] sm:$0xff] %vm502, %v497
      %515 = vst.msk [vmem:[%s242 + $0x60] sm:$0xff] %vm502, %v498
      %516 = vst.msk [vmem:[%s242 + $0x68] sm:$0xff] %vm502, %v499
      %517 = vst.msk [vmem:[%s242 + $0x70] sm:$0xff] %vm502, %v500
      %518 = vst.msk [vmem:[%s242 + $0x78] sm:$0xff] %vm502, %v501
      %s519 = smul.u32 16, %s19
      %p520 = scmp.lt.s32.totalorder %s18, 2
      %s521 = scalar_select %p520, %s18, 2
      %p522 = scmp.lt.s32.totalorder %s519, 15
      %s523 = scalar_select %p522, %s519, 15
      %s524 = smul.addr %s521, 16
      %s525 = sadd.s32 %s523, %s524
      %s526 = smul.addr %s525, 8
      %s527 = scalar_lea.vmem %s3, %s526
      // Predicated region
      $region33: #{forward.7} parent=31 // pred_check
        %p528 = pneg %p126
      $region34: #{forward.7} parent=31 // pred_check_branch
        %530 = sbr.rel (%p528) target = $region36
      $region35: #{forward.7} parent=31 // pred_region
        %s531 = smul.u32 16, %s19
      $region36: #{forward.7} parent=31 // pred_fallthru
        _
    $region32: #{forward.7} parent=5 // pred_fallthru
      _
    %p532 = scmp.le.s32.totalorder 2, %s9
    // Predicated region
    $region37: #{forward.7} parent=5 // pred_check
      %p533 = pneg %p532
    $region38: #{forward.7} parent=5 // pred_check_branch
      %535 = sbr.rel (%p533) target = $region40
    $region39: #{forward.7} parent=5 // pred_region
      %s536 = ssub.s32 %s9, 2
      // Predicated region
      $region41: #{forward.7} parent=39 // pred_check
        %p537 = pneg %p132
      $region42: #{forward.7} parent=39 // pred_check_branch
        %539 = sbr.rel (%p537) target = $region44
      $region43: #{forward.7} parent=39 // pred_region
        %s540 = smul.u32 16, %s21
        %p541 = scmp.lt.s32.totalorder %s20, 2
        %s542 = scalar_select %p541, %s20, 2
        %p543 = scmp.lt.s32.totalorder %s540, 15
        %s544 = scalar_select %p543, %s540, 15
        %s545 = smul.addr %s542, 16
        %s546 = sadd.s32 %s544, %s545
        %s547 = smul.addr %s546, 8
        %s548 = scalar_lea.vmem %s3, %s547
      $region44: #{forward.7} parent=39 // pred_fallthru
        _
    $region40: #{forward.7} parent=5 // pred_fallthru
      _
  $region6: #{forward.7} parent=0 // loop_footer
    %s13 = sadd.s32 1, %s9
  $region7: #{forward.7} parent=0 // loop_footer_branch
    %8 = sbr.rel target = $region3
  $region8: #{forward.7} parent=0 // loop_exit
    _

// kernel: forward.8
$region0: #{forward.8}
  #allocation0 [shape = 'u32[]', space=smem, size = 0x4, offset = 0x4, fixed_abs, tag = 'smem constant byte address 0x4 - core index']
  #allocation1 [shape = 'u32[144,128]{1,0:T(1,128)}', space=vmem, size = 0x12000, scoped, tag = 'internal scratch']
  %s0 = inlined_call_operand.vmem [shape: bf16[3,64,96], index: 0, kind: input, shape index: {}]
  %s1 = inlined_call_operand.vmem [shape: bf16[3,96,128], index: 1, kind: input, shape index: {}]
  %s2 = inlined_call_operand.vmem [shape: bf16[3,96,64], index: 2, kind: input, shape index: {}]
  %s3 = inlined_call_operand.vmem [shape: f32[3,1,128], index: 3, kind: input, shape index: {}]
  %s4 = inlined_call_operand.vmem [shape: f32[3,1,64], index: 4, kind: input, shape index: {}]
  %s5 = inlined_call_operand.vmem [shape: f32[3,64,64], index: 5, kind: output, shape index: {}]
  %s6 = sld [smem:[#allocation0]]
  $region53: #{forward.8} parent=0
    _
  %s8 = ssub.s32 1, %s6
  %s9 = scalar_select 0, %s8, %s6
  loop: start=0, step=1, limit=5
  $region2: #{forward.8} parent=0 // loop_pre_header
    _
  $region3: #{forward.8} parent=0 // loop_header
    %s11 = sphi 0, %s15
    %p12 = scmp.ge.s32.totalorder %s11, 5
    %s18 = sphi 0, %s30
    %s19 = sphi 0, %s26
    %s20 = sphi 0, %s18
    %s21 = sphi 0, %s19
    %s22 = sphi 0, %s20
    %s23 = sphi 0, %s21
    %s35 = sphi 0, %s37
    %s38 = sphi 0, %s35
    %s39 = sphi 0, %s38
    %s55 = sphi 0, %s39
    %s61 = sphi 0, %s63
    %s64 = sphi 0, %s61
    %s65 = sphi 0, %s64
    %s81 = sphi 0, %s65
    %s87 = sphi 0, %s89
    %s90 = sphi 0, %s87
    %s91 = sphi 0, %s90
    %s107 = sphi 0, %s91
    %s113 = sphi 0, %s115
    %s116 = sphi 0, %s113
    %s117 = sphi 0, %s116
    %s133 = sphi 0, %s117
    %s139 = sphi 0, %s141
    %s142 = sphi 0, %s139
    %s143 = sphi 0, %s142
    %s159 = sphi 0, %s143
    %s167 = sphi 0, %s169
    %s170 = sphi 0, %s167
    %s171 = sphi 0, %s170
    %s187 = sphi 0, %s171
  $region4: #{forward.8} parent=0 // loop_header_branch
    %14 = sbr.rel (%p12) target = $region8
  $region5: #{forward.8} parent=0 // loop_body
    %s16 = ssub.s32 %s11, 1
    %s17 = ssub.s32 %s11, 2
    %s24 = sadd.s32 1, %s19
    %p25 = scmp.ge.s32.totalorder %s24, 1
    %s26 = scalar_select %p25, 0, %s24
    %s27 = sadd.s32 1, %s18
    %s28 = scalar_select %p25, %s27, %s18
    %p29 = scmp.ge.s32.totalorder %s28, 3
    %s30 = scalar_select %p29, 0, %s28
    %s31 = ssub.s32 %s18, %s30
    %s32 = ssub.s32 %s19, %s26
    %s33 = sor.u32 %s31, %s32
    %p34 = scmp.eq.s32.totalorder %s33, 0
    %s36 = sadd.s32 %s35, 1
    %s37 = scalar_select %p34, %s35, %s36
    %p40 = pneg %p34
    %p41 = scmp.eq.s32.totalorder %s11, 2
    %p42 = por %p40, %p41
    %p43 = scmp.ne.s32.totalorder %s35, %s38
    %p44 = scmp.eq.s32.totalorder %s11, 0
    %p45 = por %p43, %p44
    %p46 = scmp.ne.s32.totalorder %s35, %s38
    %p47 = scmp.eq.s32.totalorder %s16, 2
    %p48 = por %p46, %p47
    %p49 = scmp.ne.s32.totalorder %s38, %s39
    %p50 = scmp.eq.s32.totalorder %s16, 0
    %p51 = por %p49, %p50
    %p52 = scmp.ne.s32.totalorder %s38, %s39
    %p53 = scmp.eq.s32.totalorder %s17, 2
    %p54 = por %p52, %p53
    %p56 = scmp.ne.s32.totalorder %s39, %s55
    %p57 = scmp.eq.s32.totalorder %s17, 0
    %p58 = por %p56, %p57
    %s59 = ssub.s32 %s18, %s30
    %p60 = scmp.eq.s32.totalorder %s59, 0
    %s62 = sadd.s32 %s61, 1
    %s63 = scalar_select %p60, %s61, %s62
    %p66 = pneg %p60
    %p67 = scmp.eq.s32.totalorder %s11, 2
    %p68 = por %p66, %p67
    %p69 = scmp.ne.s32.totalorder %s61, %s64
    %p70 = scmp.eq.s32.totalorder %s11, 0
    %p71 = por %p69, %p70
    %p72 = scmp.ne.s32.totalorder %s61, %s64
    %p73 = scmp.eq.s32.totalorder %s16, 2
    %p74 = por %p72, %p73
    %p75 = scmp.ne.s32.totalorder %s64, %s65
    %p76 = scmp.eq.s32.totalorder %s16, 0
    %p77 = por %p75, %p76
    %p78 = scmp.ne.s32.totalorder %s64, %s65
    %p79 = scmp.eq.s32.totalorder %s17, 2
    %p80 = por %p78, %p79
    %p82 = scmp.ne.s32.totalorder %s65, %s81
    %p83 = scmp.eq.s32.totalorder %s17, 0
    %p84 = por %p82, %p83
    %s85 = ssub.s32 %s18, %s30
    %p86 = scmp.eq.s32.totalorder %s85, 0
    %s88 = sadd.s32 %s87, 1
    %s89 = scalar_select %p86, %s87, %s88
    %p92 = pneg %p86
    %p93 = scmp.eq.s32.totalorder %s11, 2
    %p94 = por %p92, %p93
    %p95 = scmp.ne.s32.totalorder %s87, %s90
    %p96 = scmp.eq.s32.totalorder %s11, 0
    %p97 = por %p95, %p96
    %p98 = scmp.ne.s32.totalorder %s87, %s90
    %p99 = scmp.eq.s32.totalorder %s16, 2
    %p100 = por %p98, %p99
    %p101 = scmp.ne.s32.totalorder %s90, %s91
    %p102 = scmp.eq.s32.totalorder %s16, 0
    %p103 = por %p101, %p102
    %p104 = scmp.ne.s32.totalorder %s90, %s91
    %p105 = scmp.eq.s32.totalorder %s17, 2
    %p106 = por %p104, %p105
    %p108 = scmp.ne.s32.totalorder %s91, %s107
    %p109 = scmp.eq.s32.totalorder %s17, 0
    %p110 = por %p108, %p109
    %s111 = ssub.s32 %s18, %s30
    %p112 = scmp.eq.s32.totalorder %s111, 0
    %s114 = sadd.s32 %s113, 1
    %s115 = scalar_select %p112, %s113, %s114
    %p118 = pneg %p112
    %p119 = scmp.eq.s32.totalorder %s11, 2
    %p120 = por %p118, %p119
    %p121 = scmp.ne.s32.totalorder %s113, %s116
    %p122 = scmp.eq.s32.totalorder %s11, 0
    %p123 = por %p121, %p122
    %p124 = scmp.ne.s32.totalorder %s113, %s116
    %p125 = scmp.eq.s32.totalorder %s16, 2
    %p126 = por %p124, %p125
    %p127 = scmp.ne.s32.totalorder %s116, %s117
    %p128 = scmp.eq.s32.totalorder %s16, 0
    %p129 = por %p127, %p128
    %p130 = scmp.ne.s32.totalorder %s116, %s117
    %p131 = scmp.eq.s32.totalorder %s17, 2
    %p132 = por %p130, %p131
    %p134 = scmp.ne.s32.totalorder %s117, %s133
    %p135 = scmp.eq.s32.totalorder %s17, 0
    %p136 = por %p134, %p135
    %s137 = ssub.s32 %s18, %s30
    %p138 = scmp.eq.s32.totalorder %s137, 0
    %s140 = sadd.s32 %s139, 1
    %s141 = scalar_select %p138, %s139, %s140
    %p144 = pneg %p138
    %p145 = scmp.eq.s32.totalorder %s11, 2
    %p146 = por %p144, %p145
    %p147 = scmp.ne.s32.totalorder %s139, %s142
    %p148 = scmp.eq.s32.totalorder %s11, 0
    %p149 = por %p147, %p148
    %p150 = scmp.ne.s32.totalorder %s139, %s142
    %p151 = scmp.eq.s32.totalorder %s16, 2
    %p152 = por %p150, %p151
    %p153 = scmp.ne.s32.totalorder %s142, %s143
    %p154 = scmp.eq.s32.totalorder %s16, 0
    %p155 = por %p153, %p154
    %p156 = scmp.ne.s32.totalorder %s142, %s143
    %p157 = scmp.eq.s32.totalorder %s17, 2
    %p158 = por %p156, %p157
    %p160 = scmp.ne.s32.totalorder %s143, %s159
    %p161 = scmp.eq.s32.totalorder %s17, 0
    %p162 = por %p160, %p161
    %s163 = ssub.s32 %s18, %s30
    %s164 = ssub.s32 %s19, %s26
    %s165 = sor.u32 %s163, %s164
    %p166 = scmp.eq.s32.totalorder %s165, 0
    %s168 = sadd.s32 %s167, 1
    %s169 = scalar_select %p166, %s167, %s168
    %p172 = pneg %p166
    %p173 = scmp.eq.s32.totalorder %s11, 2
    %p174 = por %p172, %p173
    %p175 = scmp.ne.s32.totalorder %s167, %s170
    %p176 = scmp.eq.s32.totalorder %s11, 0
    %p177 = por %p175, %p176
    %p178 = scmp.ne.s32.totalorder %s167, %s170
    %p179 = scmp.eq.s32.totalorder %s16, 2
    %p180 = por %p178, %p179
    %p181 = scmp.ne.s32.totalorder %s170, %s171
    %p182 = scmp.eq.s32.totalorder %s16, 0
    %p183 = por %p181, %p182
    %p184 = scmp.ne.s32.totalorder %s170, %s171
    %p185 = scmp.eq.s32.totalorder %s17, 2
    %p186 = por %p184, %p185
    %p188 = scmp.ne.s32.totalorder %s171, %s187
    %p189 = scmp.eq.s32.totalorder %s17, 0
    %p190 = por %p188, %p189
    %p191 = scmp.le.s32.totalorder 1, %s11
    %p192 = scmp.lt.s32.totalorder %s11, 4
    %p193 = pnand %p191, %p192
    %p194 = pneg %p193
    // Predicated region
    $region9: #{forward.8} parent=5 // pred_check
      _
    $region10: #{forward.8} parent=5 // pred_check_branch
      %196 = sbr.rel (%p193) target = $region12
    $region11: #{forward.8} parent=5 // pred_region
      %s197 = ssub.s32 %s11, 1
    $region12: #{forward.8} parent=5 // pred_fallthru
      _
    %p198 = scmp.lt.s32.totalorder %s11, 3
    // Predicated region
    $region13: #{forward.8} parent=5 // pred_check
      %p199 = pneg %p198
    $region14: #{forward.8} parent=5 // pred_check_branch
      %201 = sbr.rel (%p199) target = $region16
    $region15: #{forward.8} parent=5 // pred_region
      // Predicated region
      $region17: #{forward.8} parent=15 // pred_check
        %p202 = pneg %p45
      $region18: #{forward.8} parent=15 // pred_check_branch
        %204 = sbr.rel (%p202) target = $region20
      $region19: #{forward.8} parent=15 // pred_region
        %s205 = smul.u32 8, %s19
        %p206 = scmp.lt.s32.totalorder %s18, 2
        %s207 = scalar_select %p206, %s18, 2
        %p208 = scmp.lt.s32.totalorder %s205, 7
        %s209 = scalar_select %p208, %s205, 7
        %s210 = smul.addr %s207, 8
        %s211 = sadd.s32 %s209, %s210
        %s212 = smul.addr %s211, 4
        %s213 = scalar_lea.vmem %s0, %s212
        %s214 = smul.u32 8, %s19
      $region20: #{forward.8} parent=15 // pred_fallthru
        _
      // Predicated region
      $region21: #{forward.8} parent=15 // pred_check
        %p215 = pneg %p71
      $region22: #{forward.8} parent=15 // pred_check_branch
        %217 = sbr.rel (%p215) target = $region24
      $region23: #{forward.8} parent=15 // pred_region
        %p218 = scmp.lt.s32.totalorder %s18, 2
        %s219 = scalar_select %p218, %s18, 2
        %s220 = smul.addr %s219, 12
        %s221 = smul.addr %s220, 4
        %s222 = scalar_lea.vmem %s1, %s221
      $region24: #{forward.8} parent=15 // pred_fallthru
        _
      // Predicated region
      $region25: #{forward.8} parent=15 // pred_check
        %p223 = pneg %p97
      $region26: #{forward.8} parent=15 // pred_check_branch
        %225 = sbr.rel (%p223) target = $region28
      $region27: #{forward.8} parent=15 // pred_region
        %p226 = scmp.lt.s32.totalorder %s18, 2
        %s227 = scalar_select %p226, %s18, 2
        %s228 = smul.addr %s227, 12
        %s229 = smul.addr %s228, 4
        %s230 = scalar_lea.vmem %s2, %s229
      $region28: #{forward.8} parent=15 // pred_fallthru
        _
      // Predicated region
      $region29: #{forward.8} parent=15 // pred_check
        %p231 = pneg %p123
      $region30: #{forward.8} parent=15 // pred_check_branch
        %233 = sbr.rel (%p231) target = $region32
      $region31: #{forward.8} parent=15 // pred_region
        %p234 = scmp.lt.s32.totalorder %s18, 2
        %s235 = scalar_select %p234, %s18, 2
        %s236 = scalar_lea.vmem %s3, %s235
      $region32: #{forward.8} parent=15 // pred_fallthru
        _
      // Predicated region
      $region33: #{forward.8} parent=15 // pred_check
        %p237 = pneg %p149
      $region34: #{forward.8} parent=15 // pred_check_branch
        %239 = sbr.rel (%p237) target = $region36
      $region35: #{forward.8} parent=15 // pred_region
        %p240 = scmp.lt.s32.totalorder %s18, 2
        %s241 = scalar_select %p240, %s18, 2
        %s242 = scalar_lea.vmem %s4, %s241
      $region36: #{forward.8} parent=15 // pred_fallthru
        _
    $region16: #{forward.8} parent=5 // pred_fallthru
      _
    %p243 = scmp.le.s32.totalorder 1, %s11
    %p244 = scmp.lt.s32.totalorder %s11, 4
    %p245 = pnand %p243, %p244
    %p246 = pneg %p245
    // Predicated region
    $region37: #{forward.8} parent=5 // pred_check
      _
    $region38: #{forward.8} parent=5 // pred_check_branch
      %248 = sbr.rel (%p245) target = $region40
    $region39: #{forward.8} parent=5 // pred_region
      %s249 = ssub.s32 %s11, 1
      %s250 = smul.u32 8, %s21
      %p251 = scmp.lt.s32.totalorder %s20, 2
      %s252 = scalar_select %p251, %s20, 2
      %p253 = scmp.lt.s32.totalorder %s250, 7
      %s254 = scalar_select %p253, %s250, 7
      %s255 = smul.addr %s252, 8
      %s256 = sadd.s32 %s254, %s255
      %s257 = smul.addr %s256, 4
      %s258 = scalar_lea.vmem %s0, %s257
      %p259 = pneg %p51
      %p260 = pneg %p48
      %p261 = scmp.lt.s32.totalorder %s20, 2
      %s262 = scalar_select %p261, %s20, 2
      %s263 = smul.addr %s262, 12
      %s264 = smul.addr %s263, 4
      %s265 = scalar_lea.vmem %s1, %s264
      %p266 = pneg %p77
      %p267 = pneg %p74
      %p268 = scmp.lt.s32.totalorder %s20, 2
      %s269 = scalar_select %p268, %s20, 2
      %s270 = smul.addr %s269, 12
      %s271 = smul.addr %s270, 4
      %s272 = scalar_lea.vmem %s2, %s271
      %p273 = pneg %p103
      %p274 = pneg %p100
      %p275 = scmp.lt.s32.totalorder %s20, 2
      %s276 = scalar_select %p275, %s20, 2
      %s277 = scalar_lea.vmem %s3, %s276
      %p278 = pneg %p129
      %p279 = pneg %p126
      %p280 = scmp.lt.s32.totalorder %s20, 2
      %s281 = scalar_select %p280, %s20, 2
      %s282 = scalar_lea.vmem %s4, %s281
      %p283 = pneg %p155
      %p284 = pneg %p152
      %p285 = pneg %p183
      %p286 = pneg %p180
      %s287 = smul.u32 8, %s21
      %p288 = scmp.lt.s32.totalorder %s20, 2
      %s289 = scalar_select %p288, %s20, 2
      %p290 = scmp.lt.s32.totalorder %s287, 7
      %s291 = scalar_select %p290, %s287, 7
      %s292 = smul.addr %s289, 8
      %s293 = sadd.s32 %s291, %s292
      %s294 = smul.addr %s293, 8
      %s295 = scalar_lea.vmem %s5, %s294
      %s296 = smul.u32 8, %s21
      %p297 = scmp.lt.s32.totalorder %s20, 2
      %s298 = scalar_select %p297, %s20, 2
      %p299 = scmp.lt.s32.totalorder %s296, 7
      %s300 = scalar_select %p299, %s296, 7
      %s301 = smul.addr %s298, 8
      %s302 = sadd.s32 %s300, %s301
      %s303 = smul.addr %s302, 4
      %s304 = scalar_lea.vmem %s0, %s303
      %s305 = smul.u32 8, %s21
      %p306 = scmp.lt.s32.totalorder %s20, 2
      %s307 = scalar_select %p306, %s20, 2
      %s308 = smul.addr %s307, 12
      %s309 = smul.addr %s308, 4
      %s310 = scalar_lea.vmem %s1, %s309
      %p311 = scmp.lt.s32.totalorder %s20, 2
      %s312 = scalar_select %p311, %s20, 2
      %s313 = smul.addr %s312, 12
      %s314 = smul.addr %s313, 4
      %s315 = scalar_lea.vmem %s2, %s314
      %p316 = scmp.lt.s32.totalorder %s20, 2
      %s317 = scalar_select %p316, %s20, 2
      %s318 = scalar_lea.vmem %s3, %s317
      %p319 = scmp.lt.s32.totalorder %s20, 2
      %s320 = scalar_select %p319, %s20, 2
      %s321 = scalar_lea.vmem %s4, %s320
      %s322 = smul.u32 8, %s21
      %p323 = scmp.lt.s32.totalorder %s20, 2
      %s324 = scalar_select %p323, %s20, 2
      %p325 = scmp.lt.s32.totalorder %s322, 7
      %s326 = scalar_select %p325, %s322, 7
      %s327 = smul.addr %s324, 8
      %s328 = sadd.s32 %s326, %s327
      %s329 = smul.addr %s328, 8
      %s330 = scalar_lea.vmem %s5, %s329
      %s331 = smul.u32 8, %s21
      %v333 = vld [vmem:[%s304] sm:$0xf]
      %v334 = vld [vmem:[%s304 + $0x4] sm:$0xf]
      %v335 = vld [vmem:[%s304 + $0x8] sm:$0xf]
      %v336 = vld [vmem:[%s304 + $0xc] sm:$0xf]
      %v337 = vld [vmem:[%s304 + $0x10] sm:$0xf]
      %v338 = vld [vmem:[%s304 + $0x14] sm:$0xf]
      %v339 = vld [vmem:[%s304 + $0x18] sm:$0xf]
      %v340 = vld [vmem:[%s304 + $0x1c] sm:$0xf]
      %v341 = vld [vmem:[%s310] sm:$0xf]
      %v342 = vld [vmem:[%s310 + $0x4] sm:$0xf]
      %v343 = vld [vmem:[%s310 + $0x8] sm:$0xf]
      %v344 = vld [vmem:[%s310 + $0xc] sm:$0xf]
      %v345 = vld [vmem:[%s310 + $0x10] sm:$0xf]
      %v346 = vld [vmem:[%s310 + $0x14] sm:$0xf]
      %v347 = vld [vmem:[%s310 + $0x18] sm:$0xf]
      %v348 = vld [vmem:[%s310 + $0x1c] sm:$0xf]
      %v349 = vld [vmem:[%s310 + $0x20] sm:$0xf]
      %v350 = vld [vmem:[%s310 + $0x24] sm:$0xf]
      %v351 = vld [vmem:[%s310 + $0x28] sm:$0xf]
      %v352 = vld [vmem:[%s310 + $0x2c] sm:$0xf]
      %v353 = vld [vmem:[%s318] sm:$0x1]
      %v355 = vlaneseq
      %v356 = vshrl.u32 %v355, 7
      %v357 = vsub.s32 0, %v356
      %v358 = vrot.slane %v353, %v357
      %v368 = vunpack.c.l.b16 %v333
      %v369 = vunpack.c.l.b16 %v334
      %v370 = vunpack.c.l.b16 %v335
      %v371 = vunpack.c.l.b16 %v336
      %v372 = vunpack.c.l.b16 %v337
      %v373 = vunpack.c.l.b16 %v338
      %v374 = vunpack.c.l.b16 %v339
      %v375 = vunpack.c.l.b16 %v340
      %v376 = vpack.c.b16 %v369, %v368
      %v377 = vpack.c.b16 %v371, %v370
      %v378 = vpack.c.b16 %v373, %v372
      %v379 = vpack.c.b16 %v375, %v374
      %v392 = vunpack.c.l.b16 %v341
      %v393 = vunpack.c.l.b16 %v342
      %v394 = vunpack.c.l.b16 %v343
      %v395 = vunpack.c.l.b16 %v344
      %v396 = vunpack.c.l.b16 %v345
      %v397 = vunpack.c.l.b16 %v346
      %v398 = vunpack.c.l.b16 %v347
      %v399 = vunpack.c.l.b16 %v348
      %v400 = vunpack.c.l.b16 %v349
      %v401 = vunpack.c.l.b16 %v350
      %v402 = vunpack.c.l.b16 %v351
      %v403 = vunpack.c.l.b16 %v352
      %v404 = vpack.c.b16 %v393, %v392
      %v405 = vpack.c.b16 %v395, %v394
      %v406 = vpack.c.b16 %v397, %v396
      %v407 = vpack.c.b16 %v399, %v398
      %v408 = vpack.c.b16 %v401, %v400
      %v409 = vpack.c.b16 %v403, %v402
      %vm416 = vcmask 785408
      %v418 = vsel %vm416, %v376, 0
      %v421 = vsel %vm416, %v377, 0
      %v424 = vsel %vm416, %v378, 0
      %v427 = vsel %vm416, %v379, 0
      %429 = vmatprep.subr.bf16.mxu0 0
      %430 = vmatpush1.bf16.msra.mxu0 %v404
      %431 = vmatprep.subr.bf16.mxu0 0
      %432 = vmatpush1.bf16.msra.mxu0 %v405
      %433 = vmatprep.subr.bf16.mxu0 0
      %434 = vmatpush1.bf16.msra.mxu0 %v406
      %435 = vmatprep.subr.bf16.mxu0 0
      %436 = vmatpush1.bf16.msra.mxu0 %v407
      %437 = vmatprep.subr.bf16.mxu0 0
      %438 = vmatpush1.bf16.msra.mxu0 %v408
      %439 = vmatprep.subr.bf16.mxu0 0
      %440 = vmatpush1.bf16.msra.mxu0 %v409
      %441 = vmatprep.subr.bf16.mxu0 0
      %442 = vmatpush1.bf16.msra.mxu0 0
      %443 = vmatprep.subr.bf16.mxu0 0
      %444 = vmatpush1.bf16.msra.mxu0 0
      %445 = vmatprep.subr.bf16.mxu0 0
      %446 = vmatpush1.bf16.msra.mxu0 0
      %447 = vmatprep.subr.bf16.mxu0 0
      %448 = vmatpush1.bf16.msra.mxu0 0
      %449 = vmatprep.subr.bf16.mxu0 0
      %450 = vmatpush1.bf16.msra.mxu0 0
      %451 = vmatprep.subr.bf16.mxu0 0
      %452 = vmatpush1.bf16.msra.mxu0 0
      %453 = vmatprep.subr.bf16.mxu0 0
      %454 = vmatpush1.bf16.msra.mxu0 0
      %455 = vmatprep.subr.bf16.mxu0 0
      %456 = vmatpush1.bf16.msra.mxu0 0
      %457 = vmatprep.subr.bf16.mxu0 0
      %458 = vmatpush1.bf16.msra.mxu0 0
      %459 = vmatprep.subr.bf16.mxu0 0
      %460 = vmatpush1.bf16.msra.mxu0 0
      %461 = vmatprep.mubr.bf16.mxu0 0
      %462 = vmatmul.mubr.bf16.gmra.mrb[0].mxu0 %v418
      %v463 = vpop.f32.mrb[0].mxu0
      %v464 = vadd.f32 %v358, %v463
      %v465 = vpop.f32.mrb[0].mxu0
      %v466 = vpop.f32.mrb[0].mxu0
      %v467 = vadd.f32 %v358, %v466
      %v468 = vpop.f32.mrb[0].mxu0
      %469 = vmatprep.mubr.bf16.mxu0 0
      %470 = vmatmul.mubr.bf16.gmra.mrb[0].mxu0 %v421
      %v471 = vpop.f32.mrb[0].mxu0
      %v472 = vadd.f32 %v358, %v471
      %v473 = vpop.f32.mrb[0].mxu0
      %v474 = vpop.f32.mrb[0].mxu0
      %v475 = vadd.f32 %v358, %v474
      %v476 = vpop.f32.mrb[0].mxu0
      %477 = vmatprep.mubr.bf16.mxu0 0
      %478 = vmatmul.mubr.bf16.gmra.mrb[0].mxu0 %v424
      %v479 = vpop.f32.mrb[0].mxu0
      %v480 = vadd.f32 %v358, %v479
      %v481 = vpop.f32.mrb[0].mxu0
      %v482 = vpop.f32.mrb[0].mxu0
      %v483 = vadd.f32 %v358, %v482
      %v484 = vpop.f32.mrb[0].mxu0
      %485 = vmatprep.mubr.bf16.mxu0 0
      %486 = vmatmul.mubr.bf16.gmra.mrb[0].mxu0 %v427
      %v487 = vpop.f32.mrb[0].mxu0
      %v488 = vadd.f32 %v358, %v487
      %v489 = vpop.f32.mrb[0].mxu0
      %v490 = vpop.f32.mrb[0].mxu0
      %v491 = vadd.f32 %v358, %v490
      %v492 = vpop.f32.mrb[0].mxu0
      %493 = vdwg.mxu0
      %v494 = vmul.bf16 %v333, %v333
      %v495 = vmul.bf16 %v334, %v334
      %v496 = vmul.bf16 %v335, %v335
      %v497 = vmul.bf16 %v336, %v336
      %v498 = vmul.bf16 %v337, %v337
      %v499 = vmul.bf16 %v338, %v338
      %v500 = vmul.bf16 %v339, %v339
      %v501 = vmul.bf16 %v340, %v340
      %v502 = vld [vmem:[%s315] sm:$0xf]
      %v503 = vld [vmem:[%s315 + $0x4] sm:$0xf]
      %v504 = vld [vmem:[%s315 + $0x8] sm:$0xf]
      %v505 = vld [vmem:[%s315 + $0xc] sm:$0xf]
      %v506 = vld [vmem:[%s315 + $0x10] sm:$0xf]
      %v507 = vld [vmem:[%s315 + $0x14] sm:$0xf]
      %v508 = vld [vmem:[%s315 + $0x18] sm:$0xf]
      %v509 = vld [vmem:[%s315 + $0x1c] sm:$0xf]
      %v510 = vld [vmem:[%s315 + $0x20] sm:$0xf]
      %v511 = vld [vmem:[%s315 + $0x24] sm:$0xf]
      %v512 = vld [vmem:[%s315 + $0x28] sm:$0xf]
      %v513 = vld [vmem:[%s315 + $0x2c] sm:$0xf]
      %v514 = vld [vmem:[%s321] sm:$0x1]
      %v516 = vlaneseq
      %v517 = vshrl.u32 %v516, 7
      %v518 = vsub.s32 0, %v517
      %v519 = vrot.slane %v514, %v518
      %v529 = vunpack.c.l.b16 %v494
      %v530 = vunpack.c.l.b16 %v495
      %v531 = vunpack.c.l.b16 %v496
      %v532 = vunpack.c.l.b16 %v497
      %v533 = vunpack.c.l.b16 %v498
      %v534 = vunpack.c.l.b16 %v499
      %v535 = vunpack.c.l.b16 %v500
      %v536 = vunpack.c.l.b16 %v501
      %v537 = vpack.c.b16 %v530, %v529
      %v538 = vpack.c.b16 %v532, %v531
      %v539 = vpack.c.b16 %v534, %v533
      %v540 = vpack.c.b16 %v536, %v535
      %v553 = vunpack.c.l.b16 %v502
      %v554 = vunpack.c.l.b16 %v503
      %v555 = vunpack.c.l.b16 %v504
      %v556 = vunpack.c.l.b16 %v505
      %v557 = vunpack.c.l.b16 %v506
      %v558 = vunpack.c.l.b16 %v507
      %v559 = vunpack.c.l.b16 %v508
      %v560 = vunpack.c.l.b16 %v509
      %v561 = vunpack.c.l.b16 %v510
      %v562 = vunpack.c.l.b16 %v511
      %v563 = vunpack.c.l.b16 %v512
      %v564 = vunpack.c.l.b16 %v513
      %v565 = vpack.c.b16 %v554, %v553
      %v566 = vpack.c.b16 %v556, %v555
      %v567 = vpack.c.b16 %v558, %v557
      %v568 = vpack.c.b16 %v560, %v559
      %v569 = vpack.c.b16 %v562, %v561
      %v570 = vpack.c.b16 %v564, %v563
      %v578 = vsel %vm416, %v537, 0
      %v581 = vsel %vm416, %v538, 0
      %v584 = vsel %vm416, %v539, 0
      %v587 = vsel %vm416, %v540, 0
      %589 = vmatprep.subr.bf16.mxu0 0
      %590 = vmatpush1.bf16.msra.mxu0 %v565
      %591 = vmatprep.subr.bf16.mxu0 0
      %592 = vmatpush1.bf16.msra.mxu0 %v566
      %593 = vmatprep.subr.bf16.mxu0 0
      %594 = vmatpush1.bf16.msra.mxu0 %v567
      %595 = vmatprep.subr.bf16.mxu0 0
      %596 = vmatpush1.bf16.msra.mxu0 %v568
      %597 = vmatprep.subr.bf16.mxu0 0
      %598 = vmatpush1.bf16.msra.mxu0 %v569
      %599 = vmatprep.subr.bf16.mxu0 0
      %600 = vmatpush1.bf16.msra.mxu0 %v570
      %601 = vmatprep.subr.bf16.mxu0 0
      %602 = vmatpush1.bf16.msra.mxu0 0
      %603 = vmatprep.subr.bf16.mxu0 0
      %604 = vmatpush1.bf16.msra.mxu0 0
      %605 = vmatprep.subr.bf16.mxu0 0
      %606 = vmatpush1.bf16.msra.mxu0 0
      %607 = vmatprep.subr.bf16.mxu0 0
      %608 = vmatpush1.bf16.msra.mxu0 0
      %609 = vmatprep.subr.bf16.mxu0 0
      %610 = vmatpush1.bf16.msra.mxu0 0
      %611 = vmatprep.subr.bf16.mxu0 0
      %612 = vmatpush1.bf16.msra.mxu0 0
      %613 = vmatprep.subr.bf16.mxu0 0
      %614 = vmatpush1.bf16.msra.mxu0 0
      %615 = vmatprep.subr.bf16.mxu0 0
      %616 = vmatpush1.bf16.msra.mxu0 0
      %617 = vmatprep.subr.bf16.mxu0 0
      %618 = vmatpush1.bf16.msra.mxu0 0
      %619 = vmatprep.subr.bf16.mxu0 0
      %620 = vmatpush1.bf16.msra.mxu0 0
      %621 = vmatprep.mubr.bf16.mxu0 0
      %622 = vmatmul.mubr.bf16.gmra.mrb[0].mxu0 %v578
      %v623 = vpop.f32.mrb[0].mxu0
      %v624 = vadd.f32 %v519, %v623
      %v625 = vpop.f32.mrb[0].mxu0
      %v626 = vpop.f32.mrb[0].mxu0
      %v627 = vadd.f32 %v519, %v626
      %v628 = vpop.f32.mrb[0].mxu0
      %629 = vmatprep.mubr.bf16.mxu0 0
      %630 = vmatmul.mubr.bf16.gmra.mrb[0].mxu0 %v581
      %v631 = vpop.f32.mrb[0].mxu0
      %v632 = vadd.f32 %v519, %v631
      %v633 = vpop.f32.mrb[0].mxu0
      %v634 = vpop.f32.mrb[0].mxu0
      %v635 = vadd.f32 %v519, %v634
      %v636 = vpop.f32.mrb[0].mxu0
      %637 = vmatprep.mubr.bf16.mxu0 0
      %638 = vmatmul.mubr.bf16.gmra.mrb[0].mxu0 %v584
      %v639 = vpop.f32.mrb[0].mxu0
      %v640 = vadd.f32 %v519, %v639
      %v641 = vpop.f32.mrb[0].mxu0
      %v642 = vpop.f32.mrb[0].mxu0
      %v643 = vadd.f32 %v519, %v642
      %v644 = vpop.f32.mrb[0].mxu0
      %645 = vmatprep.mubr.bf16.mxu0 0
      %646 = vmatmul.mubr.bf16.gmra.mrb[0].mxu0 %v587
      %v647 = vpop.f32.mrb[0].mxu0
      %v648 = vadd.f32 %v519, %v647
      %v649 = vpop.f32.mrb[0].mxu0
      %v650 = vpop.f32.mrb[0].mxu0
      %v651 = vadd.f32 %v519, %v650
      %v652 = vpop.f32.mrb[0].mxu0
      %653 = vdwg.mxu0
      %662 = vrot.lane.b32.xlu0 %v464, 64
      %v663 = vpop.permute.xlu0 %662
      %664 = vrot.lane.b32.xlu0 %v467, 64
      %v665 = vpop.permute.xlu0 %664
      %666 = vrot.lane.b32.xlu0 %v472, 64
      %v667 = vpop.permute.xlu0 %666
      %668 = vrot.lane.b32.xlu0 %v475, 64
      %v669 = vpop.permute.xlu0 %668
      %670 = vrot.lane.b32.xlu0 %v480, 64
      %v671 = vpop.permute.xlu0 %670
      %672 = vrot.lane.b32.xlu0 %v483, 64
      %v673 = vpop.permute.xlu0 %672
      %674 = vrot.lane.b32.xlu0 %v488, 64
      %v675 = vpop.permute.xlu0 %674
      %676 = vrot.lane.b32.xlu0 %v491, 64
      %v677 = vpop.permute.xlu0 %676
      %v686 = vmul.f32 %v464, %v663
      %v687 = vmul.f32 %v467, %v665
      %v688 = vmul.f32 %v472, %v667
      %v689 = vmul.f32 %v475, %v669
      %v690 = vmul.f32 %v480, %v671
      %v691 = vmul.f32 %v483, %v673
      %v692 = vmul.f32 %v488, %v675
      %v693 = vmul.f32 %v491, %v677
      %v694 = vadd.f32 %v686, %v624
      %v695 = vadd.f32 %v687, %v627
      %v696 = vadd.f32 %v688, %v632
      %v697 = vadd.f32 %v689, %v635
      %v698 = vadd.f32 %v690, %v640
      %v699 = vadd.f32 %v691, %v643
      %v700 = vadd.f32 %v692, %v648
      %v701 = vadd.f32 %v693, %v651
      %vm702 = vcmp.gt.f32.partialorder %v694, 0.0
      %vm703 = vcmp.gt.f32.partialorder %v695, 0.0
      %vm704 = vcmp.gt.f32.partialorder %v696, 0.0
      %vm705 = vcmp.gt.f32.partialorder %v697, 0.0
      %vm706 = vcmp.gt.f32.partialorder %v698, 0.0
      %vm707 = vcmp.gt.f32.partialorder %v699, 0.0
      %vm708 = vcmp.gt.f32.partialorder %v700, 0.0
      %vm709 = vcmp.gt.f32.partialorder %v701, 0.0
      %v710 = vmul.f32 %v694, 0.01
      %v711 = vmul.f32 %v695, 0.01
      %v712 = vmul.f32 %v696, 0.01
      %v713 = vmul.f32 %v697, 0.01
      %v714 = vmul.f32 %v698, 0.01
      %v715 = vmul.f32 %v699, 0.01
      %v716 = vmul.f32 %v700, 0.01
      %v717 = vmul.f32 %v701, 0.01
      %v718 = vsel %vm702, %v694, %v710
      %v719 = vsel %vm703, %v695, %v711
      %v720 = vsel %vm704, %v696, %v712
      %v721 = vsel %vm705, %v697, %v713
      %v722 = vsel %vm706, %v698, %v714
      %v723 = vsel %vm707, %v699, %v715
      %v724 = vsel %vm708, %v700, %v716
      %v725 = vsel %vm709, %v701, %v717
      %vm726 = vcmask 523264
      %727 = vst.msk [vmem:[%s330] sm:$0xff] %vm726, %v718
      %728 = vst.msk [vmem:[%s330 + $0x8] sm:$0xff] %vm726, %v719
      %729 = vst.msk [vmem:[%s330 + $0x10] sm:$0xff] %vm726, %v720
      %730 = vst.msk [vmem:[%s330 + $0x18] sm:$0xff] %vm726, %v721
      %731 = vst.msk [vmem:[%s330 + $0x20] sm:$0xff] %vm726, %v722
      %732 = vst.msk [vmem:[%s330 + $0x28] sm:$0xff] %vm726, %v723
      %733 = vst.msk [vmem:[%s330 + $0x30] sm:$0xff] %vm726, %v724
      %734 = vst.msk [vmem:[%s330 + $0x38] sm:$0xff] %vm726, %v725
      %s735 = smul.u32 8, %s21
      %p736 = scmp.lt.s32.totalorder %s20, 2
      %s737 = scalar_select %p736, %s20, 2
      %p738 = scmp.lt.s32.totalorder %s735, 7
      %s739 = scalar_select %p738, %s735, 7
      %s740 = smul.addr %s737, 8
      %s741 = sadd.s32 %s739, %s740
      %s742 = smul.addr %s741, 8
      %s743 = scalar_lea.vmem %s5, %s742
      // Predicated region
      $region41: #{forward.8} parent=39 // pred_check
        %p744 = pneg %p180
      $region42: #{forward.8} parent=39 // pred_check_branch
        %746 = sbr.rel (%p744) target = $region44
      $region43: #{forward.8} parent=39 // pred_region
        %s747 = smul.u32 8, %s21
      $region44: #{forward.8} parent=39 // pred_fallthru
        _
    $region40: #{forward.8} parent=5 // pred_fallthru
      _
    %p748 = scmp.le.s32.totalorder 2, %s11
    // Predicated region
    $region45: #{forward.8} parent=5 // pred_check
      %p749 = pneg %p748
    $region46: #{forward.8} parent=5 // pred_check_branch
      %751 = sbr.rel (%p749) target = $region48
    $region47: #{forward.8} parent=5 // pred_region
      %s752 = ssub.s32 %s11, 2
      // Predicated region
      $region49: #{forward.8} parent=47 // pred_check
        %p753 = pneg %p186
      $region50: #{forward.8} parent=47 // pred_check_branch
        %755 = sbr.rel (%p753) target = $region52
      $region51: #{forward.8} parent=47 // pred_region
        %s756 = smul.u32 8, %s23
        %p757 = scmp.lt.s32.totalorder %s22, 2
        %s758 = scalar_select %p757, %s22, 2
        %p759 = scmp.lt.s32.totalorder %s756, 7
        %s760 = scalar_select %p759, %s756, 7
        %s761 = smul.addr %s758, 8
        %s762 = sadd.s32 %s760, %s761
        %s763 = smul.addr %s762, 8
        %s764 = scalar_lea.vmem %s5, %s763
      $region52: #{forward.8} parent=47 // pred_fallthru
        _
    $region48: #{forward.8} parent=5 // pred_fallthru
      _
  $region6: #{forward.8} parent=0 // loop_footer
    %s15 = sadd.s32 1, %s11
  $region7: #{forward.8} parent=0 // loop_footer_branch
    %10 = sbr.rel target = $region3
  $region8: #{forward.8} parent=0 // loop_exit
    _

</llo_original>
